<compile_context>
chip_gen: v7x
topology: tpu7x:2x2x1
jax: 0.10.0
libtpu: 0.0.40
codegen_flags: <defaults>
</compile_context>

<pallas_src>
import functools

import jax
import jax.numpy as jnp
from jax.experimental import pallas as pl
from jax.experimental.pallas import tpu as pltpu

NUM_CLASSES = 9
IN_FEATURES = 224 * 224 * 3              # 150528 = 128 * 1176

NUM_SPLITS = 2                           # cross-TensorCore K split (v7x); harmless on 1-TC chips
STEPS_PER_SPLIT = 2                      # K grid steps per split
TK = IN_FEATURES // (NUM_SPLITS * STEPS_PER_SPLIT)   # 37632 (multiple of 128)
ACC_WIDTH = 768                          # lane width of the partial-sum accumulator (multiple of 128)


def _ff_kernel(x_ref, w_ref, o_ref, acc_ref):
    """VPU multiply-accumulate GEMV tile.

    x_ref:   (B, TK)  f32 input tile, K on lanes
    w_ref:   (N, TK)  f32 weight tile (PyTorch (N, K) layout -> lane-dense)
    o_ref:   (1, B, N) f32 per-split partial result (resident across the K axis)
    acc_ref: (B, N, ACC_WIDTH) f32 scratch; partial sums folded modulo ACC_WIDTH
    """
    k = pl.program_id(1)

    @pl.when(k == 0)
    def _init():
        acc_ref[...] = jnp.zeros_like(acc_ref)

    batch = x_ref.shape[0]
    tk = x_ref.shape[1]
    aw = acc_ref.shape[-1]
    folds = tk // aw                     # static Python int

    for b in range(batch):               # B is tiny and static -> unrolled
        # Fused MAC chain over static, 128-aligned lane slices of x and w.
        # `part` (N, ACC_WIDTH) stays register/VMEM-local; only one accumulator
        # read-modify-write per batch row per grid step.
        part = x_ref[b:b + 1, 0:aw] * w_ref[:, 0:aw]
        for f in range(1, folds):
            lo = f * aw
            part = part + x_ref[b:b + 1, lo:lo + aw] * w_ref[:, lo:lo + aw]
        acc_ref[b, :, :] += part

    @pl.when(k == pl.num_programs(1) - 1)
    def _finalize():
        # The only cross-lane reduction: (B, N, ACC_WIDTH) -> (B, N) partial.
        o_ref[0, :, :] = jnp.sum(acc_ref[...], axis=-1)


@functools.partial(jax.jit, static_argnames=("tk", "num_splits", "acc_width"))
def single_layer_ff(x_nchw, w_nk, b_n, *, tk=TK, num_splits=NUM_SPLITS,
                    acc_width=ACC_WIDTH):
    """Forward pass of SingleLayerFF.

    x_nchw: (B, 3, 224, 224) f32 (same layout as the PyTorch module input)
    w_nk:   (N, K) f32 - PyTorch nn.Linear weight layout, used as-is
    b_n:    (N,)   f32
    returns (B, N) f32 == x.view(B, -1) @ w_nk.T + b_n
    """
    batch = x_nchw.shape[0]
    n_out, k_feat = w_nk.shape

    assert k_feat % (num_splits * tk) == 0, "K must divide evenly into splits * tk"
    assert tk % acc_width == 0 and acc_width % 128 == 0 and tk % 128 == 0
    steps = k_feat // (num_splits * tk)

    x_flat = x_nchw.reshape(batch, k_feat)    # identical to torch x.view(B, -1)

    partials = pl.pallas_call(
        _ff_kernel,
        out_shape=jax.ShapeDtypeStruct((num_splits, batch, n_out), jnp.float32),
        grid_spec=pltpu.PrefetchScalarGridSpec(
            num_scalar_prefetch=0,
            grid=(num_splits, steps),
            in_specs=[
                # x tile: K on lanes; global K-block index = s * steps + k
                pl.BlockSpec((batch, tk), lambda s, k: (0, s * steps + k)),
                # weight tile: lane-dense (N, tk)
                pl.BlockSpec((n_out, tk), lambda s, k: (0, s * steps + k)),
            ],
            # One partial per split; resident across the (arbitrary) K axis.
            out_specs=pl.BlockSpec((1, batch, n_out), lambda s, k: (s, 0, 0)),
            scratch_shapes=[pltpu.VMEM((batch, n_out, acc_width), jnp.float32)],
        ),
        compiler_params=pltpu.CompilerParams(
            # Leading split axis parallel (shards over the two v7x TensorCores),
            # K axis is a reduction -> arbitrary.
            dimension_semantics=("parallel", "arbitrary"),
            vmem_limit_bytes=32 * 1024 * 1024,   # ~7.3 MiB used (padded); headroom everywhere
        ),
    )(x_flat, w_nk)

    # Tiny epilogue (36 partials + 9 biases), fused by XLA in the same jit.
    return partials.sum(axis=0) + b_n[None, :]


if __name__ == "__main__":
    key = jax.random.PRNGKey(0)
    kx, kw, kb = jax.random.split(key, 3)

    B = 2
    # Input shape is dictated by the module: fc expects 224*224*3 flattened features.
    x = jax.random.normal(kx, (B, 3, 224, 224), dtype=jnp.float32)

    # PyTorch nn.Linear default init: U(-1/sqrt(K), 1/sqrt(K)); weight stays (N, K).
    bound = 1.0 / jnp.sqrt(jnp.float32(IN_FEATURES))
    w_nk = jax.random.uniform(
        kw, (NUM_CLASSES, IN_FEATURES), minval=-bound, maxval=bound, dtype=jnp.float32)
    b_n = jax.random.uniform(
        kb, (NUM_CLASSES,), minval=-bound, maxval=bound, dtype=jnp.float32)

    out = jax.block_until_ready(single_layer_ff(x, w_nk, b_n))

    # Reference: same math as torch (x.view(B, -1) @ W.T + b).
    ref = x.reshape(B, -1) @ w_nk.T + b_n
    assert out.shape == (B, NUM_CLASSES)
    assert jnp.allclose(out, ref, atol=1e-3, rtol=1e-3)

    print("KERNEL_OK")
</pallas_src>

<mosaic_0001>
module attributes {stable_mosaic.version = 11 : i64} {
  func.func @_ff_kernel(%arg0: i32, %arg1: i32, %arg2: memref<2x37632xf32, #tpu.memory_space<vmem>>, %arg3: memref<9x37632xf32, #tpu.memory_space<vmem>>, %arg4: memref<1x2x9xf32, #tpu.memory_space<vmem>>, %arg5: memref<2x9x768xf32, #tpu.memory_space<vmem>>) attributes {dimension_semantics = [#tpu.dimension_semantics<parallel>, #tpu.dimension_semantics<arbitrary>], iteration_bounds = array<i64: 2, 2>, scalar_prefetch = 0 : i64, scratch_operands = 1 : i64, tpu.core_type = #tpu.core_type<tc>, window_params = [{transform_indices = @transform_0, window_bounds = array<i64: 2, 37632>}, {transform_indices = @transform_1, window_bounds = array<i64: 9, 37632>}, {transform_indices = @transform_2, window_bounds = array<i64: 1, 2, 9>}]} {
    %c0_i32 = arith.constant 0 : i32
    %0 = arith.cmpi eq, %arg1, %c0_i32 : i32
    %1 = arith.extui %0 : i1 to i32
    %c0_i32_0 = arith.constant 0 : i32
    %2 = arith.cmpi ne, %1, %c0_i32_0 : i32
    scf.if %2 {
      %cst = arith.constant 0.000000e+00 : f32
      %506 = vector.broadcast %cst : f32 to vector<2x9x768xf32>
      %c0_356 = arith.constant 0 : index
      %c0_357 = arith.constant 0 : index
      %c0_358 = arith.constant 0 : index
      %507 = vector.load %arg5[%c0_356, %c0_357, %c0_358] : memref<2x9x768xf32, #tpu.memory_space<vmem>>, vector<2x9x768xf32>
      tpu.vector_store %arg5[%c0_356, %c0_357, %c0_358], %506 {strides = array<i32>} : memref<2x9x768xf32, #tpu.memory_space<vmem>>, vector<2x9x768xf32>,
    } else {
    }
    %c0 = arith.constant 0 : index
    %c0_1 = arith.constant 0 : index
    %3 = vector.load %arg2[%c0, %c0_1] : memref<2x37632xf32, #tpu.memory_space<vmem>>, vector<1x768xf32>
    %c0_2 = arith.constant 0 : index
    %c0_3 = arith.constant 0 : index
    %4 = vector.load %arg3[%c0_2, %c0_3] : memref<9x37632xf32, #tpu.memory_space<vmem>>, vector<9x768xf32>
    %5 = vector.broadcast %3 : vector<1x768xf32> to vector<9x768xf32>
    %6 = arith.mulf %5, %4 : vector<9x768xf32>
    %c0_4 = arith.constant 0 : index
    %c768 = arith.constant 768 : index
    %7 = vector.load %arg2[%c0_4, %c768] : memref<2x37632xf32, #tpu.memory_space<vmem>>, vector<1x768xf32>
    %c0_5 = arith.constant 0 : index
    %c768_6 = arith.constant 768 : index
    %8 = vector.load %arg3[%c0_5, %c768_6] : memref<9x37632xf32, #tpu.memory_space<vmem>>, vector<9x768xf32>
    %9 = vector.broadcast %7 : vector<1x768xf32> to vector<9x768xf32>
    %10 = arith.mulf %9, %8 : vector<9x768xf32>
    %11 = arith.addf %6, %10 : vector<9x768xf32>
    %c0_7 = arith.constant 0 : index
    %c1536 = arith.constant 1536 : index
    %12 = vector.load %arg2[%c0_7, %c1536] : memref<2x37632xf32, #tpu.memory_space<vmem>>, vector<1x768xf32>
    %c0_8 = arith.constant 0 : index
    %c1536_9 = arith.constant 1536 : index
    %13 = vector.load %arg3[%c0_8, %c1536_9] : memref<9x37632xf32, #tpu.memory_space<vmem>>, vector<9x768xf32>
    %14 = vector.broadcast %12 : vector<1x768xf32> to vector<9x768xf32>
    %15 = arith.mulf %14, %13 : vector<9x768xf32>
    %16 = arith.addf %11, %15 : vector<9x768xf32>
    %c0_10 = arith.constant 0 : index
    %c2304 = arith.constant 2304 : index
    %17 = vector.load %arg2[%c0_10, %c2304] : memref<2x37632xf32, #tpu.memory_space<vmem>>, vector<1x768xf32>
    %c0_11 = arith.constant 0 : index
    %c2304_12 = arith.constant 2304 : index
    %18 = vector.load %arg3[%c0_11, %c2304_12] : memref<9x37632xf32, #tpu.memory_space<vmem>>, vector<9x768xf32>
    %19 = vector.broadcast %17 : vector<1x768xf32> to vector<9x768xf32>
    %20 = arith.mulf %19, %18 : vector<9x768xf32>
    %21 = arith.addf %16, %20 : vector<9x768xf32>
    %c0_13 = arith.constant 0 : index
    %c3072 = arith.constant 3072 : index
    %22 = vector.load %arg2[%c0_13, %c3072] : memref<2x37632xf32, #tpu.memory_space<vmem>>, vector<1x768xf32>
    %c0_14 = arith.constant 0 : index
    %c3072_15 = arith.constant 3072 : index
    %23 = vector.load %arg3[%c0_14, %c3072_15] : memref<9x37632xf32, #tpu.memory_space<vmem>>, vector<9x768xf32>
    %24 = vector.broadcast %22 : vector<1x768xf32> to vector<9x768xf32>
    %25 = arith.mulf %24, %23 : vector<9x768xf32>
    %26 = arith.addf %21, %25 : vector<9x768xf32>
    %c0_16 = arith.constant 0 : index
    %c3840 = arith.constant 3840 : index
    %27 = vector.load %arg2[%c0_16, %c3840] : memref<2x37632xf32, #tpu.memory_space<vmem>>, vector<1x768xf32>
    %c0_17 = arith.constant 0 : index
    %c3840_18 = arith.constant 3840 : index
    %28 = vector.load %arg3[%c0_17, %c3840_18] : memref<9x37632xf32, #tpu.memory_space<vmem>>, vector<9x768xf32>
    %29 = vector.broadcast %27 : vector<1x768xf32> to vector<9x768xf32>
    %30 = arith.mulf %29, %28 : vector<9x768xf32>
    %31 = arith.addf %26, %30 : vector<9x768xf32>
    %c0_19 = arith.constant 0 : index
    %c4608 = arith.constant 4608 : index
    %32 = vector.load %arg2[%c0_19, %c4608] : memref<2x37632xf32, #tpu.memory_space<vmem>>, vector<1x768xf32>
    %c0_20 = arith.constant 0 : index
    %c4608_21 = arith.constant 4608 : index
    %33 = vector.load %arg3[%c0_20, %c4608_21] : memref<9x37632xf32, #tpu.memory_space<vmem>>, vector<9x768xf32>
    %34 = vector.broadcast %32 : vector<1x768xf32> to vector<9x768xf32>
    %35 = arith.mulf %34, %33 : vector<9x768xf32>
    %36 = arith.addf %31, %35 : vector<9x768xf32>
    %c0_22 = arith.constant 0 : index
    %c5376 = arith.constant 5376 : index
    %37 = vector.load %arg2[%c0_22, %c5376] : memref<2x37632xf32, #tpu.memory_space<vmem>>, vector<1x768xf32>
    %c0_23 = arith.constant 0 : index
    %c5376_24 = arith.constant 5376 : index
    %38 = vector.load %arg3[%c0_23, %c5376_24] : memref<9x37632xf32, #tpu.memory_space<vmem>>, vector<9x768xf32>
    %39 = vector.broadcast %37 : vector<1x768xf32> to vector<9x768xf32>
    %40 = arith.mulf %39, %38 : vector<9x768xf32>
    %41 = arith.addf %36, %40 : vector<9x768xf32>
    %c0_25 = arith.constant 0 : index
    %c6144 = arith.constant 6144 : index
    %42 = vector.load %arg2[%c0_25, %c6144] : memref<2x37632xf32, #tpu.memory_space<vmem>>, vector<1x768xf32>
    %c0_26 = arith.constant 0 : index
    %c6144_27 = arith.constant 6144 : index
    %43 = vector.load %arg3[%c0_26, %c6144_27] : memref<9x37632xf32, #tpu.memory_space<vmem>>, vector<9x768xf32>
    %44 = vector.broadcast %42 : vector<1x768xf32> to vector<9x768xf32>
    %45 = arith.mulf %44, %43 : vector<9x768xf32>
    %46 = arith.addf %41, %45 : vector<9x768xf32>
    %c0_28 = arith.constant 0 : index
    %c6912 = arith.constant 6912 : index
    %47 = vector.load %arg2[%c0_28, %c6912] : memref<2x37632xf32, #tpu.memory_space<vmem>>, vector<1x768xf32>
    %c0_29 = arith.constant 0 : index
    %c6912_30 = arith.constant 6912 : index
    %48 = vector.load %arg3[%c0_29, %c6912_30] : memref<9x37632xf32, #tpu.memory_space<vmem>>, vector<9x768xf32>
    %49 = vector.broadcast %47 : vector<1x768xf32> to vector<9x768xf32>
    %50 = arith.mulf %49, %48 : vector<9x768xf32>
    %51 = arith.addf %46, %50 : vector<9x768xf32>
    %c0_31 = arith.constant 0 : index
    %c7680 = arith.constant 7680 : index
    %52 = vector.load %arg2[%c0_31, %c7680] : memref<2x37632xf32, #tpu.memory_space<vmem>>, vector<1x768xf32>
    %c0_32 = arith.constant 0 : index
    %c7680_33 = arith.constant 7680 : index
    %53 = vector.load %arg3[%c0_32, %c7680_33] : memref<9x37632xf32, #tpu.memory_space<vmem>>, vector<9x768xf32>
    %54 = vector.broadcast %52 : vector<1x768xf32> to vector<9x768xf32>
    %55 = arith.mulf %54, %53 : vector<9x768xf32>
    %56 = arith.addf %51, %55 : vector<9x768xf32>
    %c0_34 = arith.constant 0 : index
    %c8448 = arith.constant 8448 : index
    %57 = vector.load %arg2[%c0_34, %c8448] : memref<2x37632xf32, #tpu.memory_space<vmem>>, vector<1x768xf32>
    %c0_35 = arith.constant 0 : index
    %c8448_36 = arith.constant 8448 : index
    %58 = vector.load %arg3[%c0_35, %c8448_36] : memref<9x37632xf32, #tpu.memory_space<vmem>>, vector<9x768xf32>
    %59 = vector.broadcast %57 : vector<1x768xf32> to vector<9x768xf32>
    %60 = arith.mulf %59, %58 : vector<9x768xf32>
    %61 = arith.addf %56, %60 : vector<9x768xf32>
    %c0_37 = arith.constant 0 : index
    %c9216 = arith.constant 9216 : index
    %62 = vector.load %arg2[%c0_37, %c9216] : memref<2x37632xf32, #tpu.memory_space<vmem>>, vector<1x768xf32>
    %c0_38 = arith.constant 0 : index
    %c9216_39 = arith.constant 9216 : index
    %63 = vector.load %arg3[%c0_38, %c9216_39] : memref<9x37632xf32, #tpu.memory_space<vmem>>, vector<9x768xf32>
    %64 = vector.broadcast %62 : vector<1x768xf32> to vector<9x768xf32>
    %65 = arith.mulf %64, %63 : vector<9x768xf32>
    %66 = arith.addf %61, %65 : vector<9x768xf32>
    %c0_40 = arith.constant 0 : index
    %c9984 = arith.constant 9984 : index
    %67 = vector.load %arg2[%c0_40, %c9984] : memref<2x37632xf32, #tpu.memory_space<vmem>>, vector<1x768xf32>
    %c0_41 = arith.constant 0 : index
    %c9984_42 = arith.constant 9984 : index
    %68 = vector.load %arg3[%c0_41, %c9984_42] : memref<9x37632xf32, #tpu.memory_space<vmem>>, vector<9x768xf32>
    %69 = vector.broadcast %67 : vector<1x768xf32> to vector<9x768xf32>
    %70 = arith.mulf %69, %68 : vector<9x768xf32>
    %71 = arith.addf %66, %70 : vector<9x768xf32>
    %c0_43 = arith.constant 0 : index
    %c10752 = arith.constant 10752 : index
    %72 = vector.load %arg2[%c0_43, %c10752] : memref<2x37632xf32, #tpu.memory_space<vmem>>, vector<1x768xf32>
    %c0_44 = arith.constant 0 : index
    %c10752_45 = arith.constant 10752 : index
    %73 = vector.load %arg3[%c0_44, %c10752_45] : memref<9x37632xf32, #tpu.memory_space<vmem>>, vector<9x768xf32>
    %74 = vector.broadcast %72 : vector<1x768xf32> to vector<9x768xf32>
    %75 = arith.mulf %74, %73 : vector<9x768xf32>
    %76 = arith.addf %71, %75 : vector<9x768xf32>
    %c0_46 = arith.constant 0 : index
    %c11520 = arith.constant 11520 : index
    %77 = vector.load %arg2[%c0_46, %c11520] : memref<2x37632xf32, #tpu.memory_space<vmem>>, vector<1x768xf32>
    %c0_47 = arith.constant 0 : index
    %c11520_48 = arith.constant 11520 : index
    %78 = vector.load %arg3[%c0_47, %c11520_48] : memref<9x37632xf32, #tpu.memory_space<vmem>>, vector<9x768xf32>
    %79 = vector.broadcast %77 : vector<1x768xf32> to vector<9x768xf32>
    %80 = arith.mulf %79, %78 : vector<9x768xf32>
    %81 = arith.addf %76, %80 : vector<9x768xf32>
    %c0_49 = arith.constant 0 : index
    %c12288 = arith.constant 12288 : index
    %82 = vector.load %arg2[%c0_49, %c12288] : memref<2x37632xf32, #tpu.memory_space<vmem>>, vector<1x768xf32>
    %c0_50 = arith.constant 0 : index
    %c12288_51 = arith.constant 12288 : index
    %83 = vector.load %arg3[%c0_50, %c12288_51] : memref<9x37632xf32, #tpu.memory_space<vmem>>, vector<9x768xf32>
    %84 = vector.broadcast %82 : vector<1x768xf32> to vector<9x768xf32>
    %85 = arith.mulf %84, %83 : vector<9x768xf32>
    %86 = arith.addf %81, %85 : vector<9x768xf32>
    %c0_52 = arith.constant 0 : index
    %c13056 = arith.constant 13056 : index
    %87 = vector.load %arg2[%c0_52, %c13056] : memref<2x37632xf32, #tpu.memory_space<vmem>>, vector<1x768xf32>
    %c0_53 = arith.constant 0 : index
    %c13056_54 = arith.constant 13056 : index
    %88 = vector.load %arg3[%c0_53, %c13056_54] : memref<9x37632xf32, #tpu.memory_space<vmem>>, vector<9x768xf32>
    %89 = vector.broadcast %87 : vector<1x768xf32> to vector<9x768xf32>
    %90 = arith.mulf %89, %88 : vector<9x768xf32>
    %91 = arith.addf %86, %90 : vector<9x768xf32>
    %c0_55 = arith.constant 0 : index
    %c13824 = arith.constant 13824 : index
    %92 = vector.load %arg2[%c0_55, %c13824] : memref<2x37632xf32, #tpu.memory_space<vmem>>, vector<1x768xf32>
    %c0_56 = arith.constant 0 : index
    %c13824_57 = arith.constant 13824 : index
    %93 = vector.load %arg3[%c0_56, %c13824_57] : memref<9x37632xf32, #tpu.memory_space<vmem>>, vector<9x768xf32>
    %94 = vector.broadcast %92 : vector<1x768xf32> to vector<9x768xf32>
    %95 = arith.mulf %94, %93 : vector<9x768xf32>
    %96 = arith.addf %91, %95 : vector<9x768xf32>
    %c0_58 = arith.constant 0 : index
    %c14592 = arith.constant 14592 : index
    %97 = vector.load %arg2[%c0_58, %c14592] : memref<2x37632xf32, #tpu.memory_space<vmem>>, vector<1x768xf32>
    %c0_59 = arith.constant 0 : index
    %c14592_60 = arith.constant 14592 : index
    %98 = vector.load %arg3[%c0_59, %c14592_60] : memref<9x37632xf32, #tpu.memory_space<vmem>>, vector<9x768xf32>
    %99 = vector.broadcast %97 : vector<1x768xf32> to vector<9x768xf32>
    %100 = arith.mulf %99, %98 : vector<9x768xf32>
    %101 = arith.addf %96, %100 : vector<9x768xf32>
    %c0_61 = arith.constant 0 : index
    %c15360 = arith.constant 15360 : index
    %102 = vector.load %arg2[%c0_61, %c15360] : memref<2x37632xf32, #tpu.memory_space<vmem>>, vector<1x768xf32>
    %c0_62 = arith.constant 0 : index
    %c15360_63 = arith.constant 15360 : index
    %103 = vector.load %arg3[%c0_62, %c15360_63] : memref<9x37632xf32, #tpu.memory_space<vmem>>, vector<9x768xf32>
    %104 = vector.broadcast %102 : vector<1x768xf32> to vector<9x768xf32>
    %105 = arith.mulf %104, %103 : vector<9x768xf32>
    %106 = arith.addf %101, %105 : vector<9x768xf32>
    %c0_64 = arith.constant 0 : index
    %c16128 = arith.constant 16128 : index
    %107 = vector.load %arg2[%c0_64, %c16128] : memref<2x37632xf32, #tpu.memory_space<vmem>>, vector<1x768xf32>
    %c0_65 = arith.constant 0 : index
    %c16128_66 = arith.constant 16128 : index
    %108 = vector.load %arg3[%c0_65, %c16128_66] : memref<9x37632xf32, #tpu.memory_space<vmem>>, vector<9x768xf32>
    %109 = vector.broadcast %107 : vector<1x768xf32> to vector<9x768xf32>
    %110 = arith.mulf %109, %108 : vector<9x768xf32>
    %111 = arith.addf %106, %110 : vector<9x768xf32>
    %c0_67 = arith.constant 0 : index
    %c16896 = arith.constant 16896 : index
    %112 = vector.load %arg2[%c0_67, %c16896] : memref<2x37632xf32, #tpu.memory_space<vmem>>, vector<1x768xf32>
    %c0_68 = arith.constant 0 : index
    %c16896_69 = arith.constant 16896 : index
    %113 = vector.load %arg3[%c0_68, %c16896_69] : memref<9x37632xf32, #tpu.memory_space<vmem>>, vector<9x768xf32>
    %114 = vector.broadcast %112 : vector<1x768xf32> to vector<9x768xf32>
    %115 = arith.mulf %114, %113 : vector<9x768xf32>
    %116 = arith.addf %111, %115 : vector<9x768xf32>
    %c0_70 = arith.constant 0 : index
    %c17664 = arith.constant 17664 : index
    %117 = vector.load %arg2[%c0_70, %c17664] : memref<2x37632xf32, #tpu.memory_space<vmem>>, vector<1x768xf32>
    %c0_71 = arith.constant 0 : index
    %c17664_72 = arith.constant 17664 : index
    %118 = vector.load %arg3[%c0_71, %c17664_72] : memref<9x37632xf32, #tpu.memory_space<vmem>>, vector<9x768xf32>
    %119 = vector.broadcast %117 : vector<1x768xf32> to vector<9x768xf32>
    %120 = arith.mulf %119, %118 : vector<9x768xf32>
    %121 = arith.addf %116, %120 : vector<9x768xf32>
    %c0_73 = arith.constant 0 : index
    %c18432 = arith.constant 18432 : index
    %122 = vector.load %arg2[%c0_73, %c18432] : memref<2x37632xf32, #tpu.memory_space<vmem>>, vector<1x768xf32>
    %c0_74 = arith.constant 0 : index
    %c18432_75 = arith.constant 18432 : index
    %123 = vector.load %arg3[%c0_74, %c18432_75] : memref<9x37632xf32, #tpu.memory_space<vmem>>, vector<9x768xf32>
    %124 = vector.broadcast %122 : vector<1x768xf32> to vector<9x768xf32>
    %125 = arith.mulf %124, %123 : vector<9x768xf32>
    %126 = arith.addf %121, %125 : vector<9x768xf32>
    %c0_76 = arith.constant 0 : index
    %c19200 = arith.constant 19200 : index
    %127 = vector.load %arg2[%c0_76, %c19200] : memref<2x37632xf32, #tpu.memory_space<vmem>>, vector<1x768xf32>
    %c0_77 = arith.constant 0 : index
    %c19200_78 = arith.constant 19200 : index
    %128 = vector.load %arg3[%c0_77, %c19200_78] : memref<9x37632xf32, #tpu.memory_space<vmem>>, vector<9x768xf32>
    %129 = vector.broadcast %127 : vector<1x768xf32> to vector<9x768xf32>
    %130 = arith.mulf %129, %128 : vector<9x768xf32>
    %131 = arith.addf %126, %130 : vector<9x768xf32>
    %c0_79 = arith.constant 0 : index
    %c19968 = arith.constant 19968 : index
    %132 = vector.load %arg2[%c0_79, %c19968] : memref<2x37632xf32, #tpu.memory_space<vmem>>, vector<1x768xf32>
    %c0_80 = arith.constant 0 : index
    %c19968_81 = arith.constant 19968 : index
    %133 = vector.load %arg3[%c0_80, %c19968_81] : memref<9x37632xf32, #tpu.memory_space<vmem>>, vector<9x768xf32>
    %134 = vector.broadcast %132 : vector<1x768xf32> to vector<9x768xf32>
    %135 = arith.mulf %134, %133 : vector<9x768xf32>
    %136 = arith.addf %131, %135 : vector<9x768xf32>
    %c0_82 = arith.constant 0 : index
    %c20736 = arith.constant 20736 : index
    %137 = vector.load %arg2[%c0_82, %c20736] : memref<2x37632xf32, #tpu.memory_space<vmem>>, vector<1x768xf32>
    %c0_83 = arith.constant 0 : index
    %c20736_84 = arith.constant 20736 : index
    %138 = vector.load %arg3[%c0_83, %c20736_84] : memref<9x37632xf32, #tpu.memory_space<vmem>>, vector<9x768xf32>
    %139 = vector.broadcast %137 : vector<1x768xf32> to vector<9x768xf32>
    %140 = arith.mulf %139, %138 : vector<9x768xf32>
    %141 = arith.addf %136, %140 : vector<9x768xf32>
    %c0_85 = arith.constant 0 : index
    %c21504 = arith.constant 21504 : index
    %142 = vector.load %arg2[%c0_85, %c21504] : memref<2x37632xf32, #tpu.memory_space<vmem>>, vector<1x768xf32>
    %c0_86 = arith.constant 0 : index
    %c21504_87 = arith.constant 21504 : index
    %143 = vector.load %arg3[%c0_86, %c21504_87] : memref<9x37632xf32, #tpu.memory_space<vmem>>, vector<9x768xf32>
    %144 = vector.broadcast %142 : vector<1x768xf32> to vector<9x768xf32>
    %145 = arith.mulf %144, %143 : vector<9x768xf32>
    %146 = arith.addf %141, %145 : vector<9x768xf32>
    %c0_88 = arith.constant 0 : index
    %c22272 = arith.constant 22272 : index
    %147 = vector.load %arg2[%c0_88, %c22272] : memref<2x37632xf32, #tpu.memory_space<vmem>>, vector<1x768xf32>
    %c0_89 = arith.constant 0 : index
    %c22272_90 = arith.constant 22272 : index
    %148 = vector.load %arg3[%c0_89, %c22272_90] : memref<9x37632xf32, #tpu.memory_space<vmem>>, vector<9x768xf32>
    %149 = vector.broadcast %147 : vector<1x768xf32> to vector<9x768xf32>
    %150 = arith.mulf %149, %148 : vector<9x768xf32>
    %151 = arith.addf %146, %150 : vector<9x768xf32>
    %c0_91 = arith.constant 0 : index
    %c23040 = arith.constant 23040 : index
    %152 = vector.load %arg2[%c0_91, %c23040] : memref<2x37632xf32, #tpu.memory_space<vmem>>, vector<1x768xf32>
    %c0_92 = arith.constant 0 : index
    %c23040_93 = arith.constant 23040 : index
    %153 = vector.load %arg3[%c0_92, %c23040_93] : memref<9x37632xf32, #tpu.memory_space<vmem>>, vector<9x768xf32>
    %154 = vector.broadcast %152 : vector<1x768xf32> to vector<9x768xf32>
    %155 = arith.mulf %154, %153 : vector<9x768xf32>
    %156 = arith.addf %151, %155 : vector<9x768xf32>
    %c0_94 = arith.constant 0 : index
    %c23808 = arith.constant 23808 : index
    %157 = vector.load %arg2[%c0_94, %c23808] : memref<2x37632xf32, #tpu.memory_space<vmem>>, vector<1x768xf32>
    %c0_95 = arith.constant 0 : index
    %c23808_96 = arith.constant 23808 : index
    %158 = vector.load %arg3[%c0_95, %c23808_96] : memref<9x37632xf32, #tpu.memory_space<vmem>>, vector<9x768xf32>
    %159 = vector.broadcast %157 : vector<1x768xf32> to vector<9x768xf32>
    %160 = arith.mulf %159, %158 : vector<9x768xf32>
    %161 = arith.addf %156, %160 : vector<9x768xf32>
    %c0_97 = arith.constant 0 : index
    %c24576 = arith.constant 24576 : index
    %162 = vector.load %arg2[%c0_97, %c24576] : memref<2x37632xf32, #tpu.memory_space<vmem>>, vector<1x768xf32>
    %c0_98 = arith.constant 0 : index
    %c24576_99 = arith.constant 24576 : index
    %163 = vector.load %arg3[%c0_98, %c24576_99] : memref<9x37632xf32, #tpu.memory_space<vmem>>, vector<9x768xf32>
    %164 = vector.broadcast %162 : vector<1x768xf32> to vector<9x768xf32>
    %165 = arith.mulf %164, %163 : vector<9x768xf32>
    %166 = arith.addf %161, %165 : vector<9x768xf32>
    %c0_100 = arith.constant 0 : index
    %c25344 = arith.constant 25344 : index
    %167 = vector.load %arg2[%c0_100, %c25344] : memref<2x37632xf32, #tpu.memory_space<vmem>>, vector<1x768xf32>
    %c0_101 = arith.constant 0 : index
    %c25344_102 = arith.constant 25344 : index
    %168 = vector.load %arg3[%c0_101, %c25344_102] : memref<9x37632xf32, #tpu.memory_space<vmem>>, vector<9x768xf32>
    %169 = vector.broadcast %167 : vector<1x768xf32> to vector<9x768xf32>
    %170 = arith.mulf %169, %168 : vector<9x768xf32>
    %171 = arith.addf %166, %170 : vector<9x768xf32>
    %c0_103 = arith.constant 0 : index
    %c26112 = arith.constant 26112 : index
    %172 = vector.load %arg2[%c0_103, %c26112] : memref<2x37632xf32, #tpu.memory_space<vmem>>, vector<1x768xf32>
    %c0_104 = arith.constant 0 : index
    %c26112_105 = arith.constant 26112 : index
    %173 = vector.load %arg3[%c0_104, %c26112_105] : memref<9x37632xf32, #tpu.memory_space<vmem>>, vector<9x768xf32>
    %174 = vector.broadcast %172 : vector<1x768xf32> to vector<9x768xf32>
    %175 = arith.mulf %174, %173 : vector<9x768xf32>
    %176 = arith.addf %171, %175 : vector<9x768xf32>
    %c0_106 = arith.constant 0 : index
    %c26880 = arith.constant 26880 : index
    %177 = vector.load %arg2[%c0_106, %c26880] : memref<2x37632xf32, #tpu.memory_space<vmem>>, vector<1x768xf32>
    %c0_107 = arith.constant 0 : index
    %c26880_108 = arith.constant 26880 : index
    %178 = vector.load %arg3[%c0_107, %c26880_108] : memref<9x37632xf32, #tpu.memory_space<vmem>>, vector<9x768xf32>
    %179 = vector.broadcast %177 : vector<1x768xf32> to vector<9x768xf32>
    %180 = arith.mulf %179, %178 : vector<9x768xf32>
    %181 = arith.addf %176, %180 : vector<9x768xf32>
    %c0_109 = arith.constant 0 : index
    %c27648 = arith.constant 27648 : index
    %182 = vector.load %arg2[%c0_109, %c27648] : memref<2x37632xf32, #tpu.memory_space<vmem>>, vector<1x768xf32>
    %c0_110 = arith.constant 0 : index
    %c27648_111 = arith.constant 27648 : index
    %183 = vector.load %arg3[%c0_110, %c27648_111] : memref<9x37632xf32, #tpu.memory_space<vmem>>, vector<9x768xf32>
    %184 = vector.broadcast %182 : vector<1x768xf32> to vector<9x768xf32>
    %185 = arith.mulf %184, %183 : vector<9x768xf32>
    %186 = arith.addf %181, %185 : vector<9x768xf32>
    %c0_112 = arith.constant 0 : index
    %c28416 = arith.constant 28416 : index
    %187 = vector.load %arg2[%c0_112, %c28416] : memref<2x37632xf32, #tpu.memory_space<vmem>>, vector<1x768xf32>
    %c0_113 = arith.constant 0 : index
    %c28416_114 = arith.constant 28416 : index
    %188 = vector.load %arg3[%c0_113, %c28416_114] : memref<9x37632xf32, #tpu.memory_space<vmem>>, vector<9x768xf32>
    %189 = vector.broadcast %187 : vector<1x768xf32> to vector<9x768xf32>
    %190 = arith.mulf %189, %188 : vector<9x768xf32>
    %191 = arith.addf %186, %190 : vector<9x768xf32>
    %c0_115 = arith.constant 0 : index
    %c29184 = arith.constant 29184 : index
    %192 = vector.load %arg2[%c0_115, %c29184] : memref<2x37632xf32, #tpu.memory_space<vmem>>, vector<1x768xf32>
    %c0_116 = arith.constant 0 : index
    %c29184_117 = arith.constant 29184 : index
    %193 = vector.load %arg3[%c0_116, %c29184_117] : memref<9x37632xf32, #tpu.memory_space<vmem>>, vector<9x768xf32>
    %194 = vector.broadcast %192 : vector<1x768xf32> to vector<9x768xf32>
    %195 = arith.mulf %194, %193 : vector<9x768xf32>
    %196 = arith.addf %191, %195 : vector<9x768xf32>
    %c0_118 = arith.constant 0 : index
    %c29952 = arith.constant 29952 : index
    %197 = vector.load %arg2[%c0_118, %c29952] : memref<2x37632xf32, #tpu.memory_space<vmem>>, vector<1x768xf32>
    %c0_119 = arith.constant 0 : index
    %c29952_120 = arith.constant 29952 : index
    %198 = vector.load %arg3[%c0_119, %c29952_120] : memref<9x37632xf32, #tpu.memory_space<vmem>>, vector<9x768xf32>
    %199 = vector.broadcast %197 : vector<1x768xf32> to vector<9x768xf32>
    %200 = arith.mulf %199, %198 : vector<9x768xf32>
    %201 = arith.addf %196, %200 : vector<9x768xf32>
    %c0_121 = arith.constant 0 : index
    %c30720 = arith.constant 30720 : index
    %202 = vector.load %arg2[%c0_121, %c30720] : memref<2x37632xf32, #tpu.memory_space<vmem>>, vector<1x768xf32>
    %c0_122 = arith.constant 0 : index
    %c30720_123 = arith.constant 30720 : index
    %203 = vector.load %arg3[%c0_122, %c30720_123] : memref<9x37632xf32, #tpu.memory_space<vmem>>, vector<9x768xf32>
    %204 = vector.broadcast %202 : vector<1x768xf32> to vector<9x768xf32>
    %205 = arith.mulf %204, %203 : vector<9x768xf32>
    %206 = arith.addf %201, %205 : vector<9x768xf32>
    %c0_124 = arith.constant 0 : index
    %c31488 = arith.constant 31488 : index
    %207 = vector.load %arg2[%c0_124, %c31488] : memref<2x37632xf32, #tpu.memory_space<vmem>>, vector<1x768xf32>
    %c0_125 = arith.constant 0 : index
    %c31488_126 = arith.constant 31488 : index
    %208 = vector.load %arg3[%c0_125, %c31488_126] : memref<9x37632xf32, #tpu.memory_space<vmem>>, vector<9x768xf32>
    %209 = vector.broadcast %207 : vector<1x768xf32> to vector<9x768xf32>
    %210 = arith.mulf %209, %208 : vector<9x768xf32>
    %211 = arith.addf %206, %210 : vector<9x768xf32>
    %c0_127 = arith.constant 0 : index
    %c32256 = arith.constant 32256 : index
    %212 = vector.load %arg2[%c0_127, %c32256] : memref<2x37632xf32, #tpu.memory_space<vmem>>, vector<1x768xf32>
    %c0_128 = arith.constant 0 : index
    %c32256_129 = arith.constant 32256 : index
    %213 = vector.load %arg3[%c0_128, %c32256_129] : memref<9x37632xf32, #tpu.memory_space<vmem>>, vector<9x768xf32>
    %214 = vector.broadcast %212 : vector<1x768xf32> to vector<9x768xf32>
    %215 = arith.mulf %214, %213 : vector<9x768xf32>
    %216 = arith.addf %211, %215 : vector<9x768xf32>
    %c0_130 = arith.constant 0 : index
    %c33024 = arith.constant 33024 : index
    %217 = vector.load %arg2[%c0_130, %c33024] : memref<2x37632xf32, #tpu.memory_space<vmem>>, vector<1x768xf32>
    %c0_131 = arith.constant 0 : index
    %c33024_132 = arith.constant 33024 : index
    %218 = vector.load %arg3[%c0_131, %c33024_132] : memref<9x37632xf32, #tpu.memory_space<vmem>>, vector<9x768xf32>
    %219 = vector.broadcast %217 : vector<1x768xf32> to vector<9x768xf32>
    %220 = arith.mulf %219, %218 : vector<9x768xf32>
    %221 = arith.addf %216, %220 : vector<9x768xf32>
    %c0_133 = arith.constant 0 : index
    %c33792 = arith.constant 33792 : index
    %222 = vector.load %arg2[%c0_133, %c33792] : memref<2x37632xf32, #tpu.memory_space<vmem>>, vector<1x768xf32>
    %c0_134 = arith.constant 0 : index
    %c33792_135 = arith.constant 33792 : index
    %223 = vector.load %arg3[%c0_134, %c33792_135] : memref<9x37632xf32, #tpu.memory_space<vmem>>, vector<9x768xf32>
    %224 = vector.broadcast %222 : vector<1x768xf32> to vector<9x768xf32>
    %225 = arith.mulf %224, %223 : vector<9x768xf32>
    %226 = arith.addf %221, %225 : vector<9x768xf32>
    %c0_136 = arith.constant 0 : index
    %c34560 = arith.constant 34560 : index
    %227 = vector.load %arg2[%c0_136, %c34560] : memref<2x37632xf32, #tpu.memory_space<vmem>>, vector<1x768xf32>
    %c0_137 = arith.constant 0 : index
    %c34560_138 = arith.constant 34560 : index
    %228 = vector.load %arg3[%c0_137, %c34560_138] : memref<9x37632xf32, #tpu.memory_space<vmem>>, vector<9x768xf32>
    %229 = vector.broadcast %227 : vector<1x768xf32> to vector<9x768xf32>
    %230 = arith.mulf %229, %228 : vector<9x768xf32>
    %231 = arith.addf %226, %230 : vector<9x768xf32>
    %c0_139 = arith.constant 0 : index
    %c35328 = arith.constant 35328 : index
    %232 = vector.load %arg2[%c0_139, %c35328] : memref<2x37632xf32, #tpu.memory_space<vmem>>, vector<1x768xf32>
    %c0_140 = arith.constant 0 : index
    %c35328_141 = arith.constant 35328 : index
    %233 = vector.load %arg3[%c0_140, %c35328_141] : memref<9x37632xf32, #tpu.memory_space<vmem>>, vector<9x768xf32>
    %234 = vector.broadcast %232 : vector<1x768xf32> to vector<9x768xf32>
    %235 = arith.mulf %234, %233 : vector<9x768xf32>
    %236 = arith.addf %231, %235 : vector<9x768xf32>
    %c0_142 = arith.constant 0 : index
    %c36096 = arith.constant 36096 : index
    %237 = vector.load %arg2[%c0_142, %c36096] : memref<2x37632xf32, #tpu.memory_space<vmem>>, vector<1x768xf32>
    %c0_143 = arith.constant 0 : index
    %c36096_144 = arith.constant 36096 : index
    %238 = vector.load %arg3[%c0_143, %c36096_144] : memref<9x37632xf32, #tpu.memory_space<vmem>>, vector<9x768xf32>
    %239 = vector.broadcast %237 : vector<1x768xf32> to vector<9x768xf32>
    %240 = arith.mulf %239, %238 : vector<9x768xf32>
    %241 = arith.addf %236, %240 : vector<9x768xf32>
    %c0_145 = arith.constant 0 : index
    %c36864 = arith.constant 36864 : index
    %242 = vector.load %arg2[%c0_145, %c36864] : memref<2x37632xf32, #tpu.memory_space<vmem>>, vector<1x768xf32>
    %c0_146 = arith.constant 0 : index
    %c36864_147 = arith.constant 36864 : index
    %243 = vector.load %arg3[%c0_146, %c36864_147] : memref<9x37632xf32, #tpu.memory_space<vmem>>, vector<9x768xf32>
    %244 = vector.broadcast %242 : vector<1x768xf32> to vector<9x768xf32>
    %245 = arith.mulf %244, %243 : vector<9x768xf32>
    %246 = arith.addf %241, %245 : vector<9x768xf32>
    %c0_148 = arith.constant 0 : index
    %c0_149 = arith.constant 0 : index
    %c0_150 = arith.constant 0 : index
    %247 = vector.load %arg5[%c0_148, %c0_149, %c0_150] : memref<2x9x768xf32, #tpu.memory_space<vmem>>, vector<1x9x768xf32>
    %248 = vector.shape_cast %247 : vector<1x9x768xf32> to vector<9x768xf32>
    %249 = arith.addf %248, %246 : vector<9x768xf32>
    %c0_151 = arith.constant 0 : index
    %c0_152 = arith.constant 0 : index
    %c0_153 = arith.constant 0 : index
    %250 = vector.load %arg5[%c0_151, %c0_152, %c0_153] : memref<2x9x768xf32, #tpu.memory_space<vmem>>, vector<1x9x768xf32>
    %251 = vector.shape_cast %250 : vector<1x9x768xf32> to vector<9x768xf32>
    %252 = vector.shape_cast %249 : vector<9x768xf32> to vector<1x9x768xf32>
    tpu.vector_store %arg5[%c0_151, %c0_152, %c0_153], %252 {strides = array<i32>} : memref<2x9x768xf32, #tpu.memory_space<vmem>>, vector<1x9x768xf32>,
    %c1 = arith.constant 1 : index
    %c0_154 = arith.constant 0 : index
    %253 = vector.load %arg2[%c1, %c0_154] : memref<2x37632xf32, #tpu.memory_space<vmem>>, vector<1x768xf32>
    %c0_155 = arith.constant 0 : index
    %c0_156 = arith.constant 0 : index
    %254 = vector.load %arg3[%c0_155, %c0_156] : memref<9x37632xf32, #tpu.memory_space<vmem>>, vector<9x768xf32>
    %255 = vector.broadcast %253 : vector<1x768xf32> to vector<9x768xf32>
    %256 = arith.mulf %255, %254 : vector<9x768xf32>
    %c1_157 = arith.constant 1 : index
    %c768_158 = arith.constant 768 : index
    %257 = vector.load %arg2[%c1_157, %c768_158] : memref<2x37632xf32, #tpu.memory_space<vmem>>, vector<1x768xf32>
    %c0_159 = arith.constant 0 : index
    %c768_160 = arith.constant 768 : index
    %258 = vector.load %arg3[%c0_159, %c768_160] : memref<9x37632xf32, #tpu.memory_space<vmem>>, vector<9x768xf32>
    %259 = vector.broadcast %257 : vector<1x768xf32> to vector<9x768xf32>
    %260 = arith.mulf %259, %258 : vector<9x768xf32>
    %261 = arith.addf %256, %260 : vector<9x768xf32>
    %c1_161 = arith.constant 1 : index
    %c1536_162 = arith.constant 1536 : index
    %262 = vector.load %arg2[%c1_161, %c1536_162] : memref<2x37632xf32, #tpu.memory_space<vmem>>, vector<1x768xf32>
    %c0_163 = arith.constant 0 : index
    %c1536_164 = arith.constant 1536 : index
    %263 = vector.load %arg3[%c0_163, %c1536_164] : memref<9x37632xf32, #tpu.memory_space<vmem>>, vector<9x768xf32>
    %264 = vector.broadcast %262 : vector<1x768xf32> to vector<9x768xf32>
    %265 = arith.mulf %264, %263 : vector<9x768xf32>
    %266 = arith.addf %261, %265 : vector<9x768xf32>
    %c1_165 = arith.constant 1 : index
    %c2304_166 = arith.constant 2304 : index
    %267 = vector.load %arg2[%c1_165, %c2304_166] : memref<2x37632xf32, #tpu.memory_space<vmem>>, vector<1x768xf32>
    %c0_167 = arith.constant 0 : index
    %c2304_168 = arith.constant 2304 : index
    %268 = vector.load %arg3[%c0_167, %c2304_168] : memref<9x37632xf32, #tpu.memory_space<vmem>>, vector<9x768xf32>
    %269 = vector.broadcast %267 : vector<1x768xf32> to vector<9x768xf32>
    %270 = arith.mulf %269, %268 : vector<9x768xf32>
    %271 = arith.addf %266, %270 : vector<9x768xf32>
    %c1_169 = arith.constant 1 : index
    %c3072_170 = arith.constant 3072 : index
    %272 = vector.load %arg2[%c1_169, %c3072_170] : memref<2x37632xf32, #tpu.memory_space<vmem>>, vector<1x768xf32>
    %c0_171 = arith.constant 0 : index
    %c3072_172 = arith.constant 3072 : index
    %273 = vector.load %arg3[%c0_171, %c3072_172] : memref<9x37632xf32, #tpu.memory_space<vmem>>, vector<9x768xf32>
    %274 = vector.broadcast %272 : vector<1x768xf32> to vector<9x768xf32>
    %275 = arith.mulf %274, %273 : vector<9x768xf32>
    %276 = arith.addf %271, %275 : vector<9x768xf32>
    %c1_173 = arith.constant 1 : index
    %c3840_174 = arith.constant 3840 : index
    %277 = vector.load %arg2[%c1_173, %c3840_174] : memref<2x37632xf32, #tpu.memory_space<vmem>>, vector<1x768xf32>
    %c0_175 = arith.constant 0 : index
    %c3840_176 = arith.constant 3840 : index
    %278 = vector.load %arg3[%c0_175, %c3840_176] : memref<9x37632xf32, #tpu.memory_space<vmem>>, vector<9x768xf32>
    %279 = vector.broadcast %277 : vector<1x768xf32> to vector<9x768xf32>
    %280 = arith.mulf %279, %278 : vector<9x768xf32>
    %281 = arith.addf %276, %280 : vector<9x768xf32>
    %c1_177 = arith.constant 1 : index
    %c4608_178 = arith.constant 4608 : index
    %282 = vector.load %arg2[%c1_177, %c4608_178] : memref<2x37632xf32, #tpu.memory_space<vmem>>, vector<1x768xf32>
    %c0_179 = arith.constant 0 : index
    %c4608_180 = arith.constant 4608 : index
    %283 = vector.load %arg3[%c0_179, %c4608_180] : memref<9x37632xf32, #tpu.memory_space<vmem>>, vector<9x768xf32>
    %284 = vector.broadcast %282 : vector<1x768xf32> to vector<9x768xf32>
    %285 = arith.mulf %284, %283 : vector<9x768xf32>
    %286 = arith.addf %281, %285 : vector<9x768xf32>
    %c1_181 = arith.constant 1 : index
    %c5376_182 = arith.constant 5376 : index
    %287 = vector.load %arg2[%c1_181, %c5376_182] : memref<2x37632xf32, #tpu.memory_space<vmem>>, vector<1x768xf32>
    %c0_183 = arith.constant 0 : index
    %c5376_184 = arith.constant 5376 : index
    %288 = vector.load %arg3[%c0_183, %c5376_184] : memref<9x37632xf32, #tpu.memory_space<vmem>>, vector<9x768xf32>
    %289 = vector.broadcast %287 : vector<1x768xf32> to vector<9x768xf32>
    %290 = arith.mulf %289, %288 : vector<9x768xf32>
    %291 = arith.addf %286, %290 : vector<9x768xf32>
    %c1_185 = arith.constant 1 : index
    %c6144_186 = arith.constant 6144 : index
    %292 = vector.load %arg2[%c1_185, %c6144_186] : memref<2x37632xf32, #tpu.memory_space<vmem>>, vector<1x768xf32>
    %c0_187 = arith.constant 0 : index
    %c6144_188 = arith.constant 6144 : index
    %293 = vector.load %arg3[%c0_187, %c6144_188] : memref<9x37632xf32, #tpu.memory_space<vmem>>, vector<9x768xf32>
    %294 = vector.broadcast %292 : vector<1x768xf32> to vector<9x768xf32>
    %295 = arith.mulf %294, %293 : vector<9x768xf32>
    %296 = arith.addf %291, %295 : vector<9x768xf32>
    %c1_189 = arith.constant 1 : index
    %c6912_190 = arith.constant 6912 : index
    %297 = vector.load %arg2[%c1_189, %c6912_190] : memref<2x37632xf32, #tpu.memory_space<vmem>>, vector<1x768xf32>
    %c0_191 = arith.constant 0 : index
    %c6912_192 = arith.constant 6912 : index
    %298 = vector.load %arg3[%c0_191, %c6912_192] : memref<9x37632xf32, #tpu.memory_space<vmem>>, vector<9x768xf32>
    %299 = vector.broadcast %297 : vector<1x768xf32> to vector<9x768xf32>
    %300 = arith.mulf %299, %298 : vector<9x768xf32>
    %301 = arith.addf %296, %300 : vector<9x768xf32>
    %c1_193 = arith.constant 1 : index
    %c7680_194 = arith.constant 7680 : index
    %302 = vector.load %arg2[%c1_193, %c7680_194] : memref<2x37632xf32, #tpu.memory_space<vmem>>, vector<1x768xf32>
    %c0_195 = arith.constant 0 : index
    %c7680_196 = arith.constant 7680 : index
    %303 = vector.load %arg3[%c0_195, %c7680_196] : memref<9x37632xf32, #tpu.memory_space<vmem>>, vector<9x768xf32>
    %304 = vector.broadcast %302 : vector<1x768xf32> to vector<9x768xf32>
    %305 = arith.mulf %304, %303 : vector<9x768xf32>
    %306 = arith.addf %301, %305 : vector<9x768xf32>
    %c1_197 = arith.constant 1 : index
    %c8448_198 = arith.constant 8448 : index
    %307 = vector.load %arg2[%c1_197, %c8448_198] : memref<2x37632xf32, #tpu.memory_space<vmem>>, vector<1x768xf32>
    %c0_199 = arith.constant 0 : index
    %c8448_200 = arith.constant 8448 : index
    %308 = vector.load %arg3[%c0_199, %c8448_200] : memref<9x37632xf32, #tpu.memory_space<vmem>>, vector<9x768xf32>
    %309 = vector.broadcast %307 : vector<1x768xf32> to vector<9x768xf32>
    %310 = arith.mulf %309, %308 : vector<9x768xf32>
    %311 = arith.addf %306, %310 : vector<9x768xf32>
    %c1_201 = arith.constant 1 : index
    %c9216_202 = arith.constant 9216 : index
    %312 = vector.load %arg2[%c1_201, %c9216_202] : memref<2x37632xf32, #tpu.memory_space<vmem>>, vector<1x768xf32>
    %c0_203 = arith.constant 0 : index
    %c9216_204 = arith.constant 9216 : index
    %313 = vector.load %arg3[%c0_203, %c9216_204] : memref<9x37632xf32, #tpu.memory_space<vmem>>, vector<9x768xf32>
    %314 = vector.broadcast %312 : vector<1x768xf32> to vector<9x768xf32>
    %315 = arith.mulf %314, %313 : vector<9x768xf32>
    %316 = arith.addf %311, %315 : vector<9x768xf32>
    %c1_205 = arith.constant 1 : index
    %c9984_206 = arith.constant 9984 : index
    %317 = vector.load %arg2[%c1_205, %c9984_206] : memref<2x37632xf32, #tpu.memory_space<vmem>>, vector<1x768xf32>
    %c0_207 = arith.constant 0 : index
    %c9984_208 = arith.constant 9984 : index
    %318 = vector.load %arg3[%c0_207, %c9984_208] : memref<9x37632xf32, #tpu.memory_space<vmem>>, vector<9x768xf32>
    %319 = vector.broadcast %317 : vector<1x768xf32> to vector<9x768xf32>
    %320 = arith.mulf %319, %318 : vector<9x768xf32>
    %321 = arith.addf %316, %320 : vector<9x768xf32>
    %c1_209 = arith.constant 1 : index
    %c10752_210 = arith.constant 10752 : index
    %322 = vector.load %arg2[%c1_209, %c10752_210] : memref<2x37632xf32, #tpu.memory_space<vmem>>, vector<1x768xf32>
    %c0_211 = arith.constant 0 : index
    %c10752_212 = arith.constant 10752 : index
    %323 = vector.load %arg3[%c0_211, %c10752_212] : memref<9x37632xf32, #tpu.memory_space<vmem>>, vector<9x768xf32>
    %324 = vector.broadcast %322 : vector<1x768xf32> to vector<9x768xf32>
    %325 = arith.mulf %324, %323 : vector<9x768xf32>
    %326 = arith.addf %321, %325 : vector<9x768xf32>
    %c1_213 = arith.constant 1 : index
    %c11520_214 = arith.constant 11520 : index
    %327 = vector.load %arg2[%c1_213, %c11520_214] : memref<2x37632xf32, #tpu.memory_space<vmem>>, vector<1x768xf32>
    %c0_215 = arith.constant 0 : index
    %c11520_216 = arith.constant 11520 : index
    %328 = vector.load %arg3[%c0_215, %c11520_216] : memref<9x37632xf32, #tpu.memory_space<vmem>>, vector<9x768xf32>
    %329 = vector.broadcast %327 : vector<1x768xf32> to vector<9x768xf32>
    %330 = arith.mulf %329, %328 : vector<9x768xf32>
    %331 = arith.addf %326, %330 : vector<9x768xf32>
    %c1_217 = arith.constant 1 : index
    %c12288_218 = arith.constant 12288 : index
    %332 = vector.load %arg2[%c1_217, %c12288_218] : memref<2x37632xf32, #tpu.memory_space<vmem>>, vector<1x768xf32>
    %c0_219 = arith.constant 0 : index
    %c12288_220 = arith.constant 12288 : index
    %333 = vector.load %arg3[%c0_219, %c12288_220] : memref<9x37632xf32, #tpu.memory_space<vmem>>, vector<9x768xf32>
    %334 = vector.broadcast %332 : vector<1x768xf32> to vector<9x768xf32>
    %335 = arith.mulf %334, %333 : vector<9x768xf32>
    %336 = arith.addf %331, %335 : vector<9x768xf32>
    %c1_221 = arith.constant 1 : index
    %c13056_222 = arith.constant 13056 : index
    %337 = vector.load %arg2[%c1_221, %c13056_222] : memref<2x37632xf32, #tpu.memory_space<vmem>>, vector<1x768xf32>
    %c0_223 = arith.constant 0 : index
    %c13056_224 = arith.constant 13056 : index
    %338 = vector.load %arg3[%c0_223, %c13056_224] : memref<9x37632xf32, #tpu.memory_space<vmem>>, vector<9x768xf32>
    %339 = vector.broadcast %337 : vector<1x768xf32> to vector<9x768xf32>
    %340 = arith.mulf %339, %338 : vector<9x768xf32>
    %341 = arith.addf %336, %340 : vector<9x768xf32>
    %c1_225 = arith.constant 1 : index
    %c13824_226 = arith.constant 13824 : index
    %342 = vector.load %arg2[%c1_225, %c13824_226] : memref<2x37632xf32, #tpu.memory_space<vmem>>, vector<1x768xf32>
    %c0_227 = arith.constant 0 : index
    %c13824_228 = arith.constant 13824 : index
    %343 = vector.load %arg3[%c0_227, %c13824_228] : memref<9x37632xf32, #tpu.memory_space<vmem>>, vector<9x768xf32>
    %344 = vector.broadcast %342 : vector<1x768xf32> to vector<9x768xf32>
    %345 = arith.mulf %344, %343 : vector<9x768xf32>
    %346 = arith.addf %341, %345 : vector<9x768xf32>
    %c1_229 = arith.constant 1 : index
    %c14592_230 = arith.constant 14592 : index
    %347 = vector.load %arg2[%c1_229, %c14592_230] : memref<2x37632xf32, #tpu.memory_space<vmem>>, vector<1x768xf32>
    %c0_231 = arith.constant 0 : index
    %c14592_232 = arith.constant 14592 : index
    %348 = vector.load %arg3[%c0_231, %c14592_232] : memref<9x37632xf32, #tpu.memory_space<vmem>>, vector<9x768xf32>
    %349 = vector.broadcast %347 : vector<1x768xf32> to vector<9x768xf32>
    %350 = arith.mulf %349, %348 : vector<9x768xf32>
    %351 = arith.addf %346, %350 : vector<9x768xf32>
    %c1_233 = arith.constant 1 : index
    %c15360_234 = arith.constant 15360 : index
    %352 = vector.load %arg2[%c1_233, %c15360_234] : memref<2x37632xf32, #tpu.memory_space<vmem>>, vector<1x768xf32>
    %c0_235 = arith.constant 0 : index
    %c15360_236 = arith.constant 15360 : index
    %353 = vector.load %arg3[%c0_235, %c15360_236] : memref<9x37632xf32, #tpu.memory_space<vmem>>, vector<9x768xf32>
    %354 = vector.broadcast %352 : vector<1x768xf32> to vector<9x768xf32>
    %355 = arith.mulf %354, %353 : vector<9x768xf32>
    %356 = arith.addf %351, %355 : vector<9x768xf32>
    %c1_237 = arith.constant 1 : index
    %c16128_238 = arith.constant 16128 : index
    %357 = vector.load %arg2[%c1_237, %c16128_238] : memref<2x37632xf32, #tpu.memory_space<vmem>>, vector<1x768xf32>
    %c0_239 = arith.constant 0 : index
    %c16128_240 = arith.constant 16128 : index
    %358 = vector.load %arg3[%c0_239, %c16128_240] : memref<9x37632xf32, #tpu.memory_space<vmem>>, vector<9x768xf32>
    %359 = vector.broadcast %357 : vector<1x768xf32> to vector<9x768xf32>
    %360 = arith.mulf %359, %358 : vector<9x768xf32>
    %361 = arith.addf %356, %360 : vector<9x768xf32>
    %c1_241 = arith.constant 1 : index
    %c16896_242 = arith.constant 16896 : index
    %362 = vector.load %arg2[%c1_241, %c16896_242] : memref<2x37632xf32, #tpu.memory_space<vmem>>, vector<1x768xf32>
    %c0_243 = arith.constant 0 : index
    %c16896_244 = arith.constant 16896 : index
    %363 = vector.load %arg3[%c0_243, %c16896_244] : memref<9x37632xf32, #tpu.memory_space<vmem>>, vector<9x768xf32>
    %364 = vector.broadcast %362 : vector<1x768xf32> to vector<9x768xf32>
    %365 = arith.mulf %364, %363 : vector<9x768xf32>
    %366 = arith.addf %361, %365 : vector<9x768xf32>
    %c1_245 = arith.constant 1 : index
    %c17664_246 = arith.constant 17664 : index
    %367 = vector.load %arg2[%c1_245, %c17664_246] : memref<2x37632xf32, #tpu.memory_space<vmem>>, vector<1x768xf32>
    %c0_247 = arith.constant 0 : index
    %c17664_248 = arith.constant 17664 : index
    %368 = vector.load %arg3[%c0_247, %c17664_248] : memref<9x37632xf32, #tpu.memory_space<vmem>>, vector<9x768xf32>
    %369 = vector.broadcast %367 : vector<1x768xf32> to vector<9x768xf32>
    %370 = arith.mulf %369, %368 : vector<9x768xf32>
    %371 = arith.addf %366, %370 : vector<9x768xf32>
    %c1_249 = arith.constant 1 : index
    %c18432_250 = arith.constant 18432 : index
    %372 = vector.load %arg2[%c1_249, %c18432_250] : memref<2x37632xf32, #tpu.memory_space<vmem>>, vector<1x768xf32>
    %c0_251 = arith.constant 0 : index
    %c18432_252 = arith.constant 18432 : index
    %373 = vector.load %arg3[%c0_251, %c18432_252] : memref<9x37632xf32, #tpu.memory_space<vmem>>, vector<9x768xf32>
    %374 = vector.broadcast %372 : vector<1x768xf32> to vector<9x768xf32>
    %375 = arith.mulf %374, %373 : vector<9x768xf32>
    %376 = arith.addf %371, %375 : vector<9x768xf32>
    %c1_253 = arith.constant 1 : index
    %c19200_254 = arith.constant 19200 : index
    %377 = vector.load %arg2[%c1_253, %c19200_254] : memref<2x37632xf32, #tpu.memory_space<vmem>>, vector<1x768xf32>
    %c0_255 = arith.constant 0 : index
    %c19200_256 = arith.constant 19200 : index
    %378 = vector.load %arg3[%c0_255, %c19200_256] : memref<9x37632xf32, #tpu.memory_space<vmem>>, vector<9x768xf32>
    %379 = vector.broadcast %377 : vector<1x768xf32> to vector<9x768xf32>
    %380 = arith.mulf %379, %378 : vector<9x768xf32>
    %381 = arith.addf %376, %380 : vector<9x768xf32>
    %c1_257 = arith.constant 1 : index
    %c19968_258 = arith.constant 19968 : index
    %382 = vector.load %arg2[%c1_257, %c19968_258] : memref<2x37632xf32, #tpu.memory_space<vmem>>, vector<1x768xf32>
    %c0_259 = arith.constant 0 : index
    %c19968_260 = arith.constant 19968 : index
    %383 = vector.load %arg3[%c0_259, %c19968_260] : memref<9x37632xf32, #tpu.memory_space<vmem>>, vector<9x768xf32>
    %384 = vector.broadcast %382 : vector<1x768xf32> to vector<9x768xf32>
    %385 = arith.mulf %384, %383 : vector<9x768xf32>
    %386 = arith.addf %381, %385 : vector<9x768xf32>
    %c1_261 = arith.constant 1 : index
    %c20736_262 = arith.constant 20736 : index
    %387 = vector.load %arg2[%c1_261, %c20736_262] : memref<2x37632xf32, #tpu.memory_space<vmem>>, vector<1x768xf32>
    %c0_263 = arith.constant 0 : index
    %c20736_264 = arith.constant 20736 : index
    %388 = vector.load %arg3[%c0_263, %c20736_264] : memref<9x37632xf32, #tpu.memory_space<vmem>>, vector<9x768xf32>
    %389 = vector.broadcast %387 : vector<1x768xf32> to vector<9x768xf32>
    %390 = arith.mulf %389, %388 : vector<9x768xf32>
    %391 = arith.addf %386, %390 : vector<9x768xf32>
    %c1_265 = arith.constant 1 : index
    %c21504_266 = arith.constant 21504 : index
    %392 = vector.load %arg2[%c1_265, %c21504_266] : memref<2x37632xf32, #tpu.memory_space<vmem>>, vector<1x768xf32>
    %c0_267 = arith.constant 0 : index
    %c21504_268 = arith.constant 21504 : index
    %393 = vector.load %arg3[%c0_267, %c21504_268] : memref<9x37632xf32, #tpu.memory_space<vmem>>, vector<9x768xf32>
    %394 = vector.broadcast %392 : vector<1x768xf32> to vector<9x768xf32>
    %395 = arith.mulf %394, %393 : vector<9x768xf32>
    %396 = arith.addf %391, %395 : vector<9x768xf32>
    %c1_269 = arith.constant 1 : index
    %c22272_270 = arith.constant 22272 : index
    %397 = vector.load %arg2[%c1_269, %c22272_270] : memref<2x37632xf32, #tpu.memory_space<vmem>>, vector<1x768xf32>
    %c0_271 = arith.constant 0 : index
    %c22272_272 = arith.constant 22272 : index
    %398 = vector.load %arg3[%c0_271, %c22272_272] : memref<9x37632xf32, #tpu.memory_space<vmem>>, vector<9x768xf32>
    %399 = vector.broadcast %397 : vector<1x768xf32> to vector<9x768xf32>
    %400 = arith.mulf %399, %398 : vector<9x768xf32>
    %401 = arith.addf %396, %400 : vector<9x768xf32>
    %c1_273 = arith.constant 1 : index
    %c23040_274 = arith.constant 23040 : index
    %402 = vector.load %arg2[%c1_273, %c23040_274] : memref<2x37632xf32, #tpu.memory_space<vmem>>, vector<1x768xf32>
    %c0_275 = arith.constant 0 : index
    %c23040_276 = arith.constant 23040 : index
    %403 = vector.load %arg3[%c0_275, %c23040_276] : memref<9x37632xf32, #tpu.memory_space<vmem>>, vector<9x768xf32>
    %404 = vector.broadcast %402 : vector<1x768xf32> to vector<9x768xf32>
    %405 = arith.mulf %404, %403 : vector<9x768xf32>
    %406 = arith.addf %401, %405 : vector<9x768xf32>
    %c1_277 = arith.constant 1 : index
    %c23808_278 = arith.constant 23808 : index
    %407 = vector.load %arg2[%c1_277, %c23808_278] : memref<2x37632xf32, #tpu.memory_space<vmem>>, vector<1x768xf32>
    %c0_279 = arith.constant 0 : index
    %c23808_280 = arith.constant 23808 : index
    %408 = vector.load %arg3[%c0_279, %c23808_280] : memref<9x37632xf32, #tpu.memory_space<vmem>>, vector<9x768xf32>
    %409 = vector.broadcast %407 : vector<1x768xf32> to vector<9x768xf32>
    %410 = arith.mulf %409, %408 : vector<9x768xf32>
    %411 = arith.addf %406, %410 : vector<9x768xf32>
    %c1_281 = arith.constant 1 : index
    %c24576_282 = arith.constant 24576 : index
    %412 = vector.load %arg2[%c1_281, %c24576_282] : memref<2x37632xf32, #tpu.memory_space<vmem>>, vector<1x768xf32>
    %c0_283 = arith.constant 0 : index
    %c24576_284 = arith.constant 24576 : index
    %413 = vector.load %arg3[%c0_283, %c24576_284] : memref<9x37632xf32, #tpu.memory_space<vmem>>, vector<9x768xf32>
    %414 = vector.broadcast %412 : vector<1x768xf32> to vector<9x768xf32>
    %415 = arith.mulf %414, %413 : vector<9x768xf32>
    %416 = arith.addf %411, %415 : vector<9x768xf32>
    %c1_285 = arith.constant 1 : index
    %c25344_286 = arith.constant 25344 : index
    %417 = vector.load %arg2[%c1_285, %c25344_286] : memref<2x37632xf32, #tpu.memory_space<vmem>>, vector<1x768xf32>
    %c0_287 = arith.constant 0 : index
    %c25344_288 = arith.constant 25344 : index
    %418 = vector.load %arg3[%c0_287, %c25344_288] : memref<9x37632xf32, #tpu.memory_space<vmem>>, vector<9x768xf32>
    %419 = vector.broadcast %417 : vector<1x768xf32> to vector<9x768xf32>
    %420 = arith.mulf %419, %418 : vector<9x768xf32>
    %421 = arith.addf %416, %420 : vector<9x768xf32>
    %c1_289 = arith.constant 1 : index
    %c26112_290 = arith.constant 26112 : index
    %422 = vector.load %arg2[%c1_289, %c26112_290] : memref<2x37632xf32, #tpu.memory_space<vmem>>, vector<1x768xf32>
    %c0_291 = arith.constant 0 : index
    %c26112_292 = arith.constant 26112 : index
    %423 = vector.load %arg3[%c0_291, %c26112_292] : memref<9x37632xf32, #tpu.memory_space<vmem>>, vector<9x768xf32>
    %424 = vector.broadcast %422 : vector<1x768xf32> to vector<9x768xf32>
    %425 = arith.mulf %424, %423 : vector<9x768xf32>
    %426 = arith.addf %421, %425 : vector<9x768xf32>
    %c1_293 = arith.constant 1 : index
    %c26880_294 = arith.constant 26880 : index
    %427 = vector.load %arg2[%c1_293, %c26880_294] : memref<2x37632xf32, #tpu.memory_space<vmem>>, vector<1x768xf32>
    %c0_295 = arith.constant 0 : index
    %c26880_296 = arith.constant 26880 : index
    %428 = vector.load %arg3[%c0_295, %c26880_296] : memref<9x37632xf32, #tpu.memory_space<vmem>>, vector<9x768xf32>
    %429 = vector.broadcast %427 : vector<1x768xf32> to vector<9x768xf32>
    %430 = arith.mulf %429, %428 : vector<9x768xf32>
    %431 = arith.addf %426, %430 : vector<9x768xf32>
    %c1_297 = arith.constant 1 : index
    %c27648_298 = arith.constant 27648 : index
    %432 = vector.load %arg2[%c1_297, %c27648_298] : memref<2x37632xf32, #tpu.memory_space<vmem>>, vector<1x768xf32>
    %c0_299 = arith.constant 0 : index
    %c27648_300 = arith.constant 27648 : index
    %433 = vector.load %arg3[%c0_299, %c27648_300] : memref<9x37632xf32, #tpu.memory_space<vmem>>, vector<9x768xf32>
    %434 = vector.broadcast %432 : vector<1x768xf32> to vector<9x768xf32>
    %435 = arith.mulf %434, %433 : vector<9x768xf32>
    %436 = arith.addf %431, %435 : vector<9x768xf32>
    %c1_301 = arith.constant 1 : index
    %c28416_302 = arith.constant 28416 : index
    %437 = vector.load %arg2[%c1_301, %c28416_302] : memref<2x37632xf32, #tpu.memory_space<vmem>>, vector<1x768xf32>
    %c0_303 = arith.constant 0 : index
    %c28416_304 = arith.constant 28416 : index
    %438 = vector.load %arg3[%c0_303, %c28416_304] : memref<9x37632xf32, #tpu.memory_space<vmem>>, vector<9x768xf32>
    %439 = vector.broadcast %437 : vector<1x768xf32> to vector<9x768xf32>
    %440 = arith.mulf %439, %438 : vector<9x768xf32>
    %441 = arith.addf %436, %440 : vector<9x768xf32>
    %c1_305 = arith.constant 1 : index
    %c29184_306 = arith.constant 29184 : index
    %442 = vector.load %arg2[%c1_305, %c29184_306] : memref<2x37632xf32, #tpu.memory_space<vmem>>, vector<1x768xf32>
    %c0_307 = arith.constant 0 : index
    %c29184_308 = arith.constant 29184 : index
    %443 = vector.load %arg3[%c0_307, %c29184_308] : memref<9x37632xf32, #tpu.memory_space<vmem>>, vector<9x768xf32>
    %444 = vector.broadcast %442 : vector<1x768xf32> to vector<9x768xf32>
    %445 = arith.mulf %444, %443 : vector<9x768xf32>
    %446 = arith.addf %441, %445 : vector<9x768xf32>
    %c1_309 = arith.constant 1 : index
    %c29952_310 = arith.constant 29952 : index
    %447 = vector.load %arg2[%c1_309, %c29952_310] : memref<2x37632xf32, #tpu.memory_space<vmem>>, vector<1x768xf32>
    %c0_311 = arith.constant 0 : index
    %c29952_312 = arith.constant 29952 : index
    %448 = vector.load %arg3[%c0_311, %c29952_312] : memref<9x37632xf32, #tpu.memory_space<vmem>>, vector<9x768xf32>
    %449 = vector.broadcast %447 : vector<1x768xf32> to vector<9x768xf32>
    %450 = arith.mulf %449, %448 : vector<9x768xf32>
    %451 = arith.addf %446, %450 : vector<9x768xf32>
    %c1_313 = arith.constant 1 : index
    %c30720_314 = arith.constant 30720 : index
    %452 = vector.load %arg2[%c1_313, %c30720_314] : memref<2x37632xf32, #tpu.memory_space<vmem>>, vector<1x768xf32>
    %c0_315 = arith.constant 0 : index
    %c30720_316 = arith.constant 30720 : index
    %453 = vector.load %arg3[%c0_315, %c30720_316] : memref<9x37632xf32, #tpu.memory_space<vmem>>, vector<9x768xf32>
    %454 = vector.broadcast %452 : vector<1x768xf32> to vector<9x768xf32>
    %455 = arith.mulf %454, %453 : vector<9x768xf32>
    %456 = arith.addf %451, %455 : vector<9x768xf32>
    %c1_317 = arith.constant 1 : index
    %c31488_318 = arith.constant 31488 : index
    %457 = vector.load %arg2[%c1_317, %c31488_318] : memref<2x37632xf32, #tpu.memory_space<vmem>>, vector<1x768xf32>
    %c0_319 = arith.constant 0 : index
    %c31488_320 = arith.constant 31488 : index
    %458 = vector.load %arg3[%c0_319, %c31488_320] : memref<9x37632xf32, #tpu.memory_space<vmem>>, vector<9x768xf32>
    %459 = vector.broadcast %457 : vector<1x768xf32> to vector<9x768xf32>
    %460 = arith.mulf %459, %458 : vector<9x768xf32>
    %461 = arith.addf %456, %460 : vector<9x768xf32>
    %c1_321 = arith.constant 1 : index
    %c32256_322 = arith.constant 32256 : index
    %462 = vector.load %arg2[%c1_321, %c32256_322] : memref<2x37632xf32, #tpu.memory_space<vmem>>, vector<1x768xf32>
    %c0_323 = arith.constant 0 : index
    %c32256_324 = arith.constant 32256 : index
    %463 = vector.load %arg3[%c0_323, %c32256_324] : memref<9x37632xf32, #tpu.memory_space<vmem>>, vector<9x768xf32>
    %464 = vector.broadcast %462 : vector<1x768xf32> to vector<9x768xf32>
    %465 = arith.mulf %464, %463 : vector<9x768xf32>
    %466 = arith.addf %461, %465 : vector<9x768xf32>
    %c1_325 = arith.constant 1 : index
    %c33024_326 = arith.constant 33024 : index
    %467 = vector.load %arg2[%c1_325, %c33024_326] : memref<2x37632xf32, #tpu.memory_space<vmem>>, vector<1x768xf32>
    %c0_327 = arith.constant 0 : index
    %c33024_328 = arith.constant 33024 : index
    %468 = vector.load %arg3[%c0_327, %c33024_328] : memref<9x37632xf32, #tpu.memory_space<vmem>>, vector<9x768xf32>
    %469 = vector.broadcast %467 : vector<1x768xf32> to vector<9x768xf32>
    %470 = arith.mulf %469, %468 : vector<9x768xf32>
    %471 = arith.addf %466, %470 : vector<9x768xf32>
    %c1_329 = arith.constant 1 : index
    %c33792_330 = arith.constant 33792 : index
    %472 = vector.load %arg2[%c1_329, %c33792_330] : memref<2x37632xf32, #tpu.memory_space<vmem>>, vector<1x768xf32>
    %c0_331 = arith.constant 0 : index
    %c33792_332 = arith.constant 33792 : index
    %473 = vector.load %arg3[%c0_331, %c33792_332] : memref<9x37632xf32, #tpu.memory_space<vmem>>, vector<9x768xf32>
    %474 = vector.broadcast %472 : vector<1x768xf32> to vector<9x768xf32>
    %475 = arith.mulf %474, %473 : vector<9x768xf32>
    %476 = arith.addf %471, %475 : vector<9x768xf32>
    %c1_333 = arith.constant 1 : index
    %c34560_334 = arith.constant 34560 : index
    %477 = vector.load %arg2[%c1_333, %c34560_334] : memref<2x37632xf32, #tpu.memory_space<vmem>>, vector<1x768xf32>
    %c0_335 = arith.constant 0 : index
    %c34560_336 = arith.constant 34560 : index
    %478 = vector.load %arg3[%c0_335, %c34560_336] : memref<9x37632xf32, #tpu.memory_space<vmem>>, vector<9x768xf32>
    %479 = vector.broadcast %477 : vector<1x768xf32> to vector<9x768xf32>
    %480 = arith.mulf %479, %478 : vector<9x768xf32>
    %481 = arith.addf %476, %480 : vector<9x768xf32>
    %c1_337 = arith.constant 1 : index
    %c35328_338 = arith.constant 35328 : index
    %482 = vector.load %arg2[%c1_337, %c35328_338] : memref<2x37632xf32, #tpu.memory_space<vmem>>, vector<1x768xf32>
    %c0_339 = arith.constant 0 : index
    %c35328_340 = arith.constant 35328 : index
    %483 = vector.load %arg3[%c0_339, %c35328_340] : memref<9x37632xf32, #tpu.memory_space<vmem>>, vector<9x768xf32>
    %484 = vector.broadcast %482 : vector<1x768xf32> to vector<9x768xf32>
    %485 = arith.mulf %484, %483 : vector<9x768xf32>
    %486 = arith.addf %481, %485 : vector<9x768xf32>
    %c1_341 = arith.constant 1 : index
    %c36096_342 = arith.constant 36096 : index
    %487 = vector.load %arg2[%c1_341, %c36096_342] : memref<2x37632xf32, #tpu.memory_space<vmem>>, vector<1x768xf32>
    %c0_343 = arith.constant 0 : index
    %c36096_344 = arith.constant 36096 : index
    %488 = vector.load %arg3[%c0_343, %c36096_344] : memref<9x37632xf32, #tpu.memory_space<vmem>>, vector<9x768xf32>
    %489 = vector.broadcast %487 : vector<1x768xf32> to vector<9x768xf32>
    %490 = arith.mulf %489, %488 : vector<9x768xf32>
    %491 = arith.addf %486, %490 : vector<9x768xf32>
    %c1_345 = arith.constant 1 : index
    %c36864_346 = arith.constant 36864 : index
    %492 = vector.load %arg2[%c1_345, %c36864_346] : memref<2x37632xf32, #tpu.memory_space<vmem>>, vector<1x768xf32>
    %c0_347 = arith.constant 0 : index
    %c36864_348 = arith.constant 36864 : index
    %493 = vector.load %arg3[%c0_347, %c36864_348] : memref<9x37632xf32, #tpu.memory_space<vmem>>, vector<9x768xf32>
    %494 = vector.broadcast %492 : vector<1x768xf32> to vector<9x768xf32>
    %495 = arith.mulf %494, %493 : vector<9x768xf32>
    %496 = arith.addf %491, %495 : vector<9x768xf32>
    %c1_349 = arith.constant 1 : index
    %c0_350 = arith.constant 0 : index
    %c0_351 = arith.constant 0 : index
    %497 = vector.load %arg5[%c1_349, %c0_350, %c0_351] : memref<2x9x768xf32, #tpu.memory_space<vmem>>, vector<1x9x768xf32>
    %498 = vector.shape_cast %497 : vector<1x9x768xf32> to vector<9x768xf32>
    %499 = arith.addf %498, %496 : vector<9x768xf32>
    %c1_352 = arith.constant 1 : index
    %c0_353 = arith.constant 0 : index
    %c0_354 = arith.constant 0 : index
    %500 = vector.load %arg5[%c1_352, %c0_353, %c0_354] : memref<2x9x768xf32, #tpu.memory_space<vmem>>, vector<1x9x768xf32>
    %501 = vector.shape_cast %500 : vector<1x9x768xf32> to vector<9x768xf32>
    %502 = vector.shape_cast %499 : vector<9x768xf32> to vector<1x9x768xf32>
    tpu.vector_store %arg5[%c1_352, %c0_353, %c0_354], %502 {strides = array<i32>} : memref<2x9x768xf32, #tpu.memory_space<vmem>>, vector<1x9x768xf32>,
    %c1_i32 = arith.constant 1 : i32
    %503 = arith.cmpi eq, %arg1, %c1_i32 : i32
    %504 = arith.extui %503 : i1 to i32
    %c0_i32_355 = arith.constant 0 : i32
    %505 = arith.cmpi ne, %504, %c0_i32_355 : i32
    scf.if %505 {
      %c0_356 = arith.constant 0 : index
      %c0_357 = arith.constant 0 : index
      %c0_358 = arith.constant 0 : index
      %506 = vector.load %arg5[%c0_356, %c0_357, %c0_358] : memref<2x9x768xf32, #tpu.memory_space<vmem>>, vector<2x9x768xf32>
      %cst = arith.constant dense<0.000000e+00> : vector<2x9xf32>
      %507 = vector.multi_reduction <add>, %506, %cst [2] : vector<2x9x768xf32> to vector<2x9xf32>
      %c0_359 = arith.constant 0 : index
      %c0_360 = arith.constant 0 : index
      %c0_361 = arith.constant 0 : index
      %508 = vector.load %arg4[%c0_359, %c0_360, %c0_361] : memref<1x2x9xf32, #tpu.memory_space<vmem>>, vector<1x2x9xf32>
      %509 = vector.shape_cast %508 : vector<1x2x9xf32> to vector<2x9xf32>
      %510 = vector.shape_cast %507 : vector<2x9xf32> to vector<1x2x9xf32>
      tpu.vector_store %arg4[%c0_359, %c0_360, %c0_361], %510 {strides = array<i32>} : memref<1x2x9xf32, #tpu.memory_space<vmem>>, vector<1x2x9xf32>,
    } else {
    }
    return
  }
  func.func @transform_0(%arg0: i32, %arg1: i32) -> (i32, i32) {
    %c2_i32 = arith.constant 2 : i32
    %0 = arith.muli %arg0, %c2_i32 : i32
    %1 = arith.addi %0, %arg1 : i32
    %c0_i32 = arith.constant 0 : i32
    %c0_i32_0 = arith.constant 0 : i32
    return %c0_i32, %1 : i32, i32
  }
  func.func @transform_1(%arg0: i32, %arg1: i32) -> (i32, i32) {
    %c2_i32 = arith.constant 2 : i32
    %0 = arith.muli %arg0, %c2_i32 : i32
    %1 = arith.addi %0, %arg1 : i32
    %c0_i32 = arith.constant 0 : i32
    %c0_i32_0 = arith.constant 0 : i32
    return %c0_i32, %1 : i32, i32
  }
  func.func @transform_2(%arg0: i32, %arg1: i32) -> (i32, i32, i32) {
    %c0_i32 = arith.constant 0 : i32
    %c0_i32_0 = arith.constant 0 : i32
    %c0_i32_1 = arith.constant 0 : i32
    return %arg0, %c0_i32, %c0_i32_0 : i32, i32, i32
  }
}

</mosaic_0001>

<llo_original>
// kernel: single_layer_ff.1
$region0: #{single_layer_ff.1}
  #allocation0 [shape = 'u32[]', space=smem, size = 0x4, offset = 0x4, fixed_abs, tag = 'smem constant byte address 0x4 - core index']
  #allocation1 [shape = 'u32[144,128]{1,0:T(1,128)}', space=vmem, size = 0x12000, scoped, tag = 'internal scratch']
  #allocation2 [shape = 'f32[2,9,768]{2,1,0:T(8,128)}', space=vmem, size = 0x18000, scoped, tag = 'scratch operand']
  %s0 = inlined_call_operand.vmem [shape: f32[2,150528], index: 0, kind: input, shape index: {}]
  %s1 = inlined_call_operand.hbm [shape: f32[9,150528], index: 1, kind: input, shape index: {}]
  %s2 = inlined_call_operand.vmem [shape: f32[2,2,9], index: 2, kind: output, shape index: {}]
  %s3 = sld [smem:[#allocation0]]
  $region53: #{single_layer_ff.1} parent=0
    _
  %s5 = ssub.s32 1, %s3
  %s6 = scalar_select 0, %s5, %s3
  $region1: #{single_layer_ff.1} parent=0
    #allocation3 [shape = 'u8[4816896]{0}', space=vmem, size = 0x498000, scoped, tag = 'input window, operand 1']
    #allocation4 [shape = 's32[2]{0}', space=sflag, size = 0x8, scoped, tag = 'scoped memory for single_layer_ff.1']
    %7 = vsyncpa [#allocation4], 0
    %s8 = scalar_lea.sflag [#allocation4], 1
    %9 = vsyncpa %s8, 0
    loop: start=0, step=1, limit=6
    $region2: #{single_layer_ff.1} parent=1 // loop_pre_header
      _
    $region3: #{single_layer_ff.1} parent=1 // loop_header
      %s11 = sphi 0, %s15
      %p12 = scmp.ge.s32.totalorder %s11, 6
      %s18 = sphi 0, %s30
      %s19 = sphi 0, %s26
      %s20 = sphi 0, %s18
      %s21 = sphi 0, %s19
      %s22 = sphi 0, %s20
      %s23 = sphi 0, %s21
      %s37 = sphi 0, %s39
      %s40 = sphi 0, %s37
      %s41 = sphi 0, %s40
      %s57 = sphi 0, %s41
      %s67 = sphi 0, %s69
      %s70 = sphi 0, %s67
      %s71 = sphi 0, %s70
      %s87 = sphi 0, %s71
      %s93 = sphi 0, %s95
      %s96 = sphi 0, %s93
      %s97 = sphi 0, %s96
      %s113 = sphi 0, %s97
    $region4: #{single_layer_ff.1} parent=1 // loop_header_branch
      %14 = sbr.rel (%p12) target = $region8
    $region5: #{single_layer_ff.1} parent=1 // loop_body
      %s16 = ssub.s32 %s11, 1
      %s17 = ssub.s32 %s11, 2
      %s24 = sadd.s32 1, %s19
      %p25 = scmp.ge.s32.totalorder %s24, 2
      %s26 = scalar_select %p25, 0, %s24
      %s27 = sadd.s32 1, %s18
      %s28 = scalar_select %p25, %s27, %s18
      %p29 = scmp.ge.s32.totalorder %s28, 2
      %s30 = scalar_select %p29, 0, %s28
      %s31 = smul.u32 %s18, 2
      %s32 = sadd.s32 %s31, %s19
      %s33 = smul.u32 %s30, 2
      %s34 = sadd.s32 %s33, %s26
      %s35 = ssub.s32 %s32, %s34
      %p36 = scmp.eq.s32.totalorder %s35, 0
      %s38 = sadd.s32 %s37, 1
      %s39 = scalar_select %p36, %s37, %s38
      %p42 = pneg %p36
      %p43 = scmp.eq.s32.totalorder %s11, 3
      %p44 = por %p42, %p43
      %p45 = scmp.ne.s32.totalorder %s37, %s40
      %p46 = scmp.eq.s32.totalorder %s11, 0
      %p47 = por %p45, %p46
      %p48 = scmp.ne.s32.totalorder %s37, %s40
      %p49 = scmp.eq.s32.totalorder %s16, 3
      %p50 = por %p48, %p49
      %p51 = scmp.ne.s32.totalorder %s40, %s41
      %p52 = scmp.eq.s32.totalorder %s16, 0
      %p53 = por %p51, %p52
      %p54 = scmp.ne.s32.totalorder %s40, %s41
      %p55 = scmp.eq.s32.totalorder %s17, 3
      %p56 = por %p54, %p55
      %p58 = scmp.ne.s32.totalorder %s41, %s57
      %p59 = scmp.eq.s32.totalorder %s17, 0
      %p60 = por %p58, %p59
      %s61 = smul.u32 %s18, 2
      %s62 = sadd.s32 %s61, %s19
      %s63 = smul.u32 %s30, 2
      %s64 = sadd.s32 %s63, %s26
      %s65 = ssub.s32 %s62, %s64
      %p66 = scmp.eq.s32.totalorder %s65, 0
      %s68 = sadd.s32 %s67, 1
      %s69 = scalar_select %p66, %s67, %s68
      %p72 = pneg %p66
      %p73 = scmp.eq.s32.totalorder %s11, 3
      %p74 = por %p72, %p73
      %p75 = scmp.ne.s32.totalorder %s67, %s70
      %p76 = scmp.eq.s32.totalorder %s11, 0
      %p77 = por %p75, %p76
      %p78 = scmp.ne.s32.totalorder %s67, %s70
      %p79 = scmp.eq.s32.totalorder %s16, 3
      %p80 = por %p78, %p79
      %p81 = scmp.ne.s32.totalorder %s70, %s71
      %p82 = scmp.eq.s32.totalorder %s16, 0
      %p83 = por %p81, %p82
      %p84 = scmp.ne.s32.totalorder %s70, %s71
      %p85 = scmp.eq.s32.totalorder %s17, 3
      %p86 = por %p84, %p85
      %p88 = scmp.ne.s32.totalorder %s71, %s87
      %p89 = scmp.eq.s32.totalorder %s17, 0
      %p90 = por %p88, %p89
      %s91 = ssub.s32 %s18, %s30
      %p92 = scmp.eq.s32.totalorder %s91, 0
      %s94 = sadd.s32 %s93, 1
      %s95 = scalar_select %p92, %s93, %s94
      %p98 = pneg %p92
      %p99 = scmp.eq.s32.totalorder %s11, 3
      %p100 = por %p98, %p99
      %p101 = scmp.ne.s32.totalorder %s93, %s96
      %p102 = scmp.eq.s32.totalorder %s11, 0
      %p103 = por %p101, %p102
      %p104 = scmp.ne.s32.totalorder %s93, %s96
      %p105 = scmp.eq.s32.totalorder %s16, 3
      %p106 = por %p104, %p105
      %p107 = scmp.ne.s32.totalorder %s96, %s97
      %p108 = scmp.eq.s32.totalorder %s16, 0
      %p109 = por %p107, %p108
      %p110 = scmp.ne.s32.totalorder %s96, %s97
      %p111 = scmp.eq.s32.totalorder %s17, 3
      %p112 = por %p110, %p111
      %p114 = scmp.ne.s32.totalorder %s97, %s113
      %p115 = scmp.eq.s32.totalorder %s17, 0
      %p116 = por %p114, %p115
      %p117 = scmp.le.s32.totalorder 1, %s11
      %p118 = scmp.lt.s32.totalorder %s11, 5
      %p119 = pnand %p117, %p118
      %p120 = pneg %p119
      // Predicated region
      $region9: #{single_layer_ff.1} parent=5 // pred_check
        _
      $region10: #{single_layer_ff.1} parent=5 // pred_check_branch
        %122 = sbr.rel (%p119) target = $region12
      $region11: #{single_layer_ff.1} parent=5 // pred_region
        %s123 = ssub.s32 %s11, 1
      $region12: #{single_layer_ff.1} parent=5 // pred_fallthru
        _
      %p124 = scmp.lt.s32.totalorder %s11, 4
      // Predicated region
      $region13: #{single_layer_ff.1} parent=5 // pred_check
        %p125 = pneg %p124
      $region14: #{single_layer_ff.1} parent=5 // pred_check_branch
        %127 = sbr.rel (%p125) target = $region16
      $region15: #{single_layer_ff.1} parent=5 // pred_region
        // Predicated region
        $region17: #{single_layer_ff.1} parent=15 // pred_check
          %p128 = pneg %p47
        $region18: #{single_layer_ff.1} parent=15 // pred_check_branch
          %130 = sbr.rel (%p128) target = $region20
        $region19: #{single_layer_ff.1} parent=15 // pred_region
          %s131 = smul.u32 %s18, 2
          %s132 = sadd.s32 %s131, %s19
          %s133 = smul.u32 294, %s132
          %p134 = scmp.lt.s32.totalorder %s133, 1175
          %s135 = scalar_select %p134, %s133, 1175
          %s136 = smul.addr %s135, 2
          %s137 = scalar_lea.vmem %s0, %s136
          %s138 = smul.u32 %s18, 2
          %s139 = sadd.s32 %s138, %s19
          %s140 = smul.u32 294, %s139
        $region20: #{single_layer_ff.1} parent=15 // pred_fallthru
          _
        // Predicated region
        $region21: #{single_layer_ff.1} parent=15 // pred_check
          %p141 = pneg %p77
        $region22: #{single_layer_ff.1} parent=15 // pred_check_branch
          %143 = sbr.rel (%p141) target = $region24
        $region23: #{single_layer_ff.1} parent=15 // pred_region
          %s144 = sand.u32 %s67, 1
          %s145 = scalar_lea.sflag [#allocation4], %s144
          %s146 = sand.u32 %s67, 1
          %s147 = smul.addr %s146, 4704
          %s148 = scalar_lea.vmem [#allocation3], %s147
          %s149 = smul.u32 %s18, 2
          %s150 = sadd.s32 %s149, %s19
          %s151 = smul.u32 294, %s150
          %s153 = ssub.s32 75264, 75264
          %154 = vsyncadd %s145, %s153
          %s155 = smul.addr %s151, 128
          %s156 = scalar_lea.hbm %s1, %s155
          %s157 = sshll.u32 %s148, 4
          %s158 = int_to_ptr.vmem [resolvable:$true] %s157
          %163 = dma.hbm_to_vmem [thread:$0]  %s156, 75264, %s158, %s145, 150528, 37632, 2352
        $region24: #{single_layer_ff.1} parent=15 // pred_fallthru
          _
      $region16: #{single_layer_ff.1} parent=5 // pred_fallthru
        _
      %p164 = scmp.le.s32.totalorder 1, %s11
      %p165 = scmp.lt.s32.totalorder %s11, 5
      %p166 = pnand %p164, %p165
      %p167 = pneg %p166
      // Predicated region
      $region25: #{single_layer_ff.1} parent=5 // pred_check
        _
      $region26: #{single_layer_ff.1} parent=5 // pred_check_branch
        %169 = sbr.rel (%p166) target = $region28
      $region27: #{single_layer_ff.1} parent=5 // pred_region
        %s170 = ssub.s32 %s11, 1
        %s171 = sand.u32 %s70, 1
        %s172 = scalar_lea.sflag [#allocation4], %s171
        %s173 = sand.u32 %s70, 1
        %s174 = smul.addr %s173, 4704
        %s175 = scalar_lea.vmem [#allocation3], %s174
        // Predicated region
        $region29: #{single_layer_ff.1} parent=27 // pred_check
          %p176 = pneg %p83
        $region30: #{single_layer_ff.1} parent=27 // pred_check_branch
          %178 = sbr.rel (%p176) target = $region32
        $region31: #{single_layer_ff.1} parent=27 // pred_region
          %179 = dma.done %s172, 75264
        $region32: #{single_layer_ff.1} parent=27 // pred_fallthru
          _
        %s180 = smul.u32 %s20, 2
        %s181 = sadd.s32 %s180, %s21
        %s182 = smul.u32 294, %s181
        %p183 = scmp.lt.s32.totalorder %s182, 1175
        %s184 = scalar_select %p183, %s182, 1175
        %s185 = smul.addr %s184, 2
        %s186 = scalar_lea.vmem %s0, %s185
        %p187 = pneg %p53
        %p188 = pneg %p50
        %s189 = sand.u32 %s70, 1
        %s190 = scalar_lea.sflag [#allocation4], %s189
        %s191 = sand.u32 %s70, 1
        %s192 = smul.addr %s191, 4704
        %s193 = scalar_lea.vmem [#allocation3], %s192
        %p194 = pneg %p83
        %p195 = pneg %p80
        %p196 = pneg %p109
        %p197 = pneg %p106
        %p198 = scmp.lt.s32.totalorder %s20, 1
        %s199 = scalar_select %p198, %s20, 1
        %s200 = smul.addr %s199, 2
        %s201 = scalar_lea.vmem %s2, %s200
        %s202 = smul.u32 %s20, 2
        %s203 = sadd.s32 %s202, %s21
        %s204 = smul.u32 294, %s203
        %p205 = scmp.lt.s32.totalorder %s204, 1175
        %s206 = scalar_select %p205, %s204, 1175
        %s207 = smul.addr %s206, 2
        %s208 = scalar_lea.vmem %s0, %s207
        %s209 = smul.u32 %s20, 2
        %s210 = sadd.s32 %s209, %s21
        %s211 = smul.u32 294, %s210
        %s212 = smul.u32 %s20, 2
        %s213 = sadd.s32 %s212, %s21
        %s214 = smul.u32 294, %s213
        %p215 = scmp.lt.s32.totalorder %s20, 1
        %s216 = scalar_select %p215, %s20, 1
        %s217 = smul.addr %s216, 2
        %s218 = scalar_lea.vmem %s2, %s217
        %p219 = scmp.eq.s32.totalorder %s21, 0
        // Predicated region
        $region33: #{single_layer_ff.1} parent=27 // pred_check
          %p220 = pneg %p219
        $region34: #{single_layer_ff.1} parent=27 // pred_check_branch
          %222 = sbr.rel (%p220) target = $region36
        $region35: #{single_layer_ff.1} parent=27 // pred_region
          %223 = vst [vmem:[#allocation2] sm:$0xff] 0.0
          %224 = vst [vmem:[#allocation2 + $0x8] sm:$0xff] 0.0
          %225 = vst [vmem:[#allocation2 + $0x10] sm:$0xff] 0.0
          %226 = vst [vmem:[#allocation2 + $0x18] sm:$0xff] 0.0
          %227 = vst [vmem:[#allocation2 + $0x20] sm:$0xff] 0.0
          %228 = vst [vmem:[#allocation2 + $0x28] sm:$0xff] 0.0
          %229 = vst [vmem:[#allocation2 + $0x30] sm:$0x1] 0.0
          %230 = vst [vmem:[#allocation2 + $0x38] sm:$0x1] 0.0
          %231 = vst [vmem:[#allocation2 + $0x40] sm:$0x1] 0.0
          %232 = vst [vmem:[#allocation2 + $0x48] sm:$0x1] 0.0
          %233 = vst [vmem:[#allocation2 + $0x50] sm:$0x1] 0.0
          %234 = vst [vmem:[#allocation2 + $0x58] sm:$0x1] 0.0
          %235 = vst [vmem:[#allocation2 + $0x60] sm:$0xff] 0.0
          %236 = vst [vmem:[#allocation2 + $0x68] sm:$0xff] 0.0
          %237 = vst [vmem:[#allocation2 + $0x70] sm:$0xff] 0.0
          %238 = vst [vmem:[#allocation2 + $0x78] sm:$0xff] 0.0
          %239 = vst [vmem:[#allocation2 + $0x80] sm:$0xff] 0.0
          %240 = vst [vmem:[#allocation2 + $0x88] sm:$0xff] 0.0
          %241 = vst [vmem:[#allocation2 + $0x90] sm:$0x1] 0.0
          %242 = vst [vmem:[#allocation2 + $0x98] sm:$0x1] 0.0
          %243 = vst [vmem:[#allocation2 + $0xa0] sm:$0x1] 0.0
          %244 = vst [vmem:[#allocation2 + $0xa8] sm:$0x1] 0.0
          %245 = vst [vmem:[#allocation2 + $0xb0] sm:$0x1] 0.0
          %246 = vst [vmem:[#allocation2 + $0xb8] sm:$0x1] 0.0
        $region36: #{single_layer_ff.1} parent=27 // pred_fallthru
          _
        %v247 = vld [vmem:[%s208] ss:$2 sm:$0x3f]
        %v248 = vld [vmem:[%s175] sm:$0xff]
        %v249 = vld [vmem:[%s175 + $0x8] sm:$0xff]
        %v250 = vld [vmem:[%s175 + $0x10] sm:$0xff]
        %v251 = vld [vmem:[%s175 + $0x18] sm:$0xff]
        %v252 = vld [vmem:[%s175 + $0x20] sm:$0xff]
        %v253 = vld [vmem:[%s175 + $0x28] sm:$0xff]
        %v254 = vld [vmem:[%s175 + $0x930] sm:$0x1]
        %v255 = vld [vmem:[%s175 + $0x938] sm:$0x1]
        %v256 = vld [vmem:[%s175 + $0x940] sm:$0x1]
        %v257 = vld [vmem:[%s175 + $0x948] sm:$0x1]
        %v258 = vld [vmem:[%s175 + $0x950] sm:$0x1]
        %v259 = vld [vmem:[%s175 + $0x958] sm:$0x1]
        %v261 = vlaneseq
        %v262 = vshrl.u32 %v261, 7
        %v263 = vsub.s32 0, %v262
        %v264 = vrot.slane %v247, %v263
        %v265 = vlaneseq
        %v266 = vshrl.u32 %v265, 7
        %v267 = vsub.s32 1, %v266
        %v268 = vrot.slane %v247, %v267
        %v269 = vlaneseq
        %v270 = vshrl.u32 %v269, 7
        %v271 = vsub.s32 2, %v270
        %v272 = vrot.slane %v247, %v271
        %v273 = vlaneseq
        %v274 = vshrl.u32 %v273, 7
        %v275 = vsub.s32 3, %v274
        %v276 = vrot.slane %v247, %v275
        %v277 = vlaneseq
        %v278 = vshrl.u32 %v277, 7
        %v279 = vsub.s32 4, %v278
        %v280 = vrot.slane %v247, %v279
        %v281 = vlaneseq
        %v282 = vshrl.u32 %v281, 7
        %v283 = vsub.s32 5, %v282
        %v284 = vrot.slane %v247, %v283
        %v291 = vmul.f32 %v264, %v248
        %v292 = vmul.f32 %v268, %v249
        %v293 = vmul.f32 %v272, %v250
        %v294 = vmul.f32 %v276, %v251
        %v295 = vmul.f32 %v280, %v252
        %v296 = vmul.f32 %v284, %v253
        %v297 = vmul.f32 %v264, %v254
        %v298 = vmul.f32 %v268, %v255
        %v299 = vmul.f32 %v272, %v256
        %v300 = vmul.f32 %v276, %v257
        %v301 = vmul.f32 %v280, %v258
        %v302 = vmul.f32 %v284, %v259
        %s303 = scalar_lea.vmem %s208, 12
        %v304 = vld [vmem:[%s303] ss:$2 sm:$0x3f]
        %v305 = vld [vmem:[%s175 + $0x30] sm:$0xff]
        %v306 = vld [vmem:[%s175 + $0x38] sm:$0xff]
        %v307 = vld [vmem:[%s175 + $0x40] sm:$0xff]
        %v308 = vld [vmem:[%s175 + $0x48] sm:$0xff]
        %v309 = vld [vmem:[%s175 + $0x50] sm:$0xff]
        %v310 = vld [vmem:[%s175 + $0x58] sm:$0xff]
        %v311 = vld [vmem:[%s175 + $0x960] sm:$0x1]
        %v312 = vld [vmem:[%s175 + $0x968] sm:$0x1]
        %v313 = vld [vmem:[%s175 + $0x970] sm:$0x1]
        %v314 = vld [vmem:[%s175 + $0x978] sm:$0x1]
        %v315 = vld [vmem:[%s175 + $0x980] sm:$0x1]
        %v316 = vld [vmem:[%s175 + $0x988] sm:$0x1]
        %v318 = vlaneseq
        %v319 = vshrl.u32 %v318, 7
        %v320 = vsub.s32 0, %v319
        %v321 = vrot.slane %v304, %v320
        %v322 = vlaneseq
        %v323 = vshrl.u32 %v322, 7
        %v324 = vsub.s32 1, %v323
        %v325 = vrot.slane %v304, %v324
        %v326 = vlaneseq
        %v327 = vshrl.u32 %v326, 7
        %v328 = vsub.s32 2, %v327
        %v329 = vrot.slane %v304, %v328
        %v330 = vlaneseq
        %v331 = vshrl.u32 %v330, 7
        %v332 = vsub.s32 3, %v331
        %v333 = vrot.slane %v304, %v332
        %v334 = vlaneseq
        %v335 = vshrl.u32 %v334, 7
        %v336 = vsub.s32 4, %v335
        %v337 = vrot.slane %v304, %v336
        %v338 = vlaneseq
        %v339 = vshrl.u32 %v338, 7
        %v340 = vsub.s32 5, %v339
        %v341 = vrot.slane %v304, %v340
        %v348 = vmul.f32 %v321, %v305
        %v349 = vmul.f32 %v325, %v306
        %v350 = vmul.f32 %v329, %v307
        %v351 = vmul.f32 %v333, %v308
        %v352 = vmul.f32 %v337, %v309
        %v353 = vmul.f32 %v341, %v310
        %v354 = vmul.f32 %v321, %v311
        %v355 = vmul.f32 %v325, %v312
        %v356 = vmul.f32 %v329, %v313
        %v357 = vmul.f32 %v333, %v314
        %v358 = vmul.f32 %v337, %v315
        %v359 = vmul.f32 %v341, %v316
        %v360 = vadd.f32 %v291, %v348
        %v361 = vadd.f32 %v292, %v349
        %v362 = vadd.f32 %v293, %v350
        %v363 = vadd.f32 %v294, %v351
        %v364 = vadd.f32 %v295, %v352
        %v365 = vadd.f32 %v296, %v353
        %v366 = vadd.f32 %v297, %v354
        %v367 = vadd.f32 %v298, %v355
        %v368 = vadd.f32 %v299, %v356
        %v369 = vadd.f32 %v300, %v357
        %v370 = vadd.f32 %v301, %v358
        %v371 = vadd.f32 %v302, %v359
        %s372 = scalar_lea.vmem %s208, 24
        %v373 = vld [vmem:[%s372] ss:$2 sm:$0x3f]
        %v374 = vld [vmem:[%s175 + $0x60] sm:$0xff]
        %v375 = vld [vmem:[%s175 + $0x68] sm:$0xff]
        %v376 = vld [vmem:[%s175 + $0x70] sm:$0xff]
        %v377 = vld [vmem:[%s175 + $0x78] sm:$0xff]
        %v378 = vld [vmem:[%s175 + $0x80] sm:$0xff]
        %v379 = vld [vmem:[%s175 + $0x88] sm:$0xff]
        %v380 = vld [vmem:[%s175 + $0x990] sm:$0x1]
        %v381 = vld [vmem:[%s175 + $0x998] sm:$0x1]
        %v382 = vld [vmem:[%s175 + $0x9a0] sm:$0x1]
        %v383 = vld [vmem:[%s175 + $0x9a8] sm:$0x1]
        %v384 = vld [vmem:[%s175 + $0x9b0] sm:$0x1]
        %v385 = vld [vmem:[%s175 + $0x9b8] sm:$0x1]
        %v387 = vlaneseq
        %v388 = vshrl.u32 %v387, 7
        %v389 = vsub.s32 0, %v388
        %v390 = vrot.slane %v373, %v389
        %v391 = vlaneseq
        %v392 = vshrl.u32 %v391, 7
        %v393 = vsub.s32 1, %v392
        %v394 = vrot.slane %v373, %v393
        %v395 = vlaneseq
        %v396 = vshrl.u32 %v395, 7
        %v397 = vsub.s32 2, %v396
        %v398 = vrot.slane %v373, %v397
        %v399 = vlaneseq
        %v400 = vshrl.u32 %v399, 7
        %v401 = vsub.s32 3, %v400
        %v402 = vrot.slane %v373, %v401
        %v403 = vlaneseq
        %v404 = vshrl.u32 %v403, 7
        %v405 = vsub.s32 4, %v404
        %v406 = vrot.slane %v373, %v405
        %v407 = vlaneseq
        %v408 = vshrl.u32 %v407, 7
        %v409 = vsub.s32 5, %v408
        %v410 = vrot.slane %v373, %v409
        %v417 = vmul.f32 %v390, %v374
        %v418 = vmul.f32 %v394, %v375
        %v419 = vmul.f32 %v398, %v376
        %v420 = vmul.f32 %v402, %v377
        %v421 = vmul.f32 %v406, %v378
        %v422 = vmul.f32 %v410, %v379
        %v423 = vmul.f32 %v390, %v380
        %v424 = vmul.f32 %v394, %v381
        %v425 = vmul.f32 %v398, %v382
        %v426 = vmul.f32 %v402, %v383
        %v427 = vmul.f32 %v406, %v384
        %v428 = vmul.f32 %v410, %v385
        %v429 = vadd.f32 %v360, %v417
        %v430 = vadd.f32 %v361, %v418
        %v431 = vadd.f32 %v362, %v419
        %v432 = vadd.f32 %v363, %v420
        %v433 = vadd.f32 %v364, %v421
        %v434 = vadd.f32 %v365, %v422
        %v435 = vadd.f32 %v366, %v423
        %v436 = vadd.f32 %v367, %v424
        %v437 = vadd.f32 %v368, %v425
        %v438 = vadd.f32 %v369, %v426
        %v439 = vadd.f32 %v370, %v427
        %v440 = vadd.f32 %v371, %v428
        %s441 = scalar_lea.vmem %s208, 36
        %v442 = vld [vmem:[%s441] ss:$2 sm:$0x3f]
        %v443 = vld [vmem:[%s175 + $0x90] sm:$0xff]
        %v444 = vld [vmem:[%s175 + $0x98] sm:$0xff]
        %v445 = vld [vmem:[%s175 + $0xa0] sm:$0xff]
        %v446 = vld [vmem:[%s175 + $0xa8] sm:$0xff]
        %v447 = vld [vmem:[%s175 + $0xb0] sm:$0xff]
        %v448 = vld [vmem:[%s175 + $0xb8] sm:$0xff]
        %v449 = vld [vmem:[%s175 + $0x9c0] sm:$0x1]
        %v450 = vld [vmem:[%s175 + $0x9c8] sm:$0x1]
        %v451 = vld [vmem:[%s175 + $0x9d0] sm:$0x1]
        %v452 = vld [vmem:[%s175 + $0x9d8] sm:$0x1]
        %v453 = vld [vmem:[%s175 + $0x9e0] sm:$0x1]
        %v454 = vld [vmem:[%s175 + $0x9e8] sm:$0x1]
        %v456 = vlaneseq
        %v457 = vshrl.u32 %v456, 7
        %v458 = vsub.s32 0, %v457
        %v459 = vrot.slane %v442, %v458
        %v460 = vlaneseq
        %v461 = vshrl.u32 %v460, 7
        %v462 = vsub.s32 1, %v461
        %v463 = vrot.slane %v442, %v462
        %v464 = vlaneseq
        %v465 = vshrl.u32 %v464, 7
        %v466 = vsub.s32 2, %v465
        %v467 = vrot.slane %v442, %v466
        %v468 = vlaneseq
        %v469 = vshrl.u32 %v468, 7
        %v470 = vsub.s32 3, %v469
        %v471 = vrot.slane %v442, %v470
        %v472 = vlaneseq
        %v473 = vshrl.u32 %v472, 7
        %v474 = vsub.s32 4, %v473
        %v475 = vrot.slane %v442, %v474
        %v476 = vlaneseq
        %v477 = vshrl.u32 %v476, 7
        %v478 = vsub.s32 5, %v477
        %v479 = vrot.slane %v442, %v478
        %v486 = vmul.f32 %v459, %v443
        %v487 = vmul.f32 %v463, %v444
        %v488 = vmul.f32 %v467, %v445
        %v489 = vmul.f32 %v471, %v446
        %v490 = vmul.f32 %v475, %v447
        %v491 = vmul.f32 %v479, %v448
        %v492 = vmul.f32 %v459, %v449
        %v493 = vmul.f32 %v463, %v450
        %v494 = vmul.f32 %v467, %v451
        %v495 = vmul.f32 %v471, %v452
        %v496 = vmul.f32 %v475, %v453
        %v497 = vmul.f32 %v479, %v454
        %v498 = vadd.f32 %v429, %v486
        %v499 = vadd.f32 %v430, %v487
        %v500 = vadd.f32 %v431, %v488
        %v501 = vadd.f32 %v432, %v489
        %v502 = vadd.f32 %v433, %v490
        %v503 = vadd.f32 %v434, %v491
        %v504 = vadd.f32 %v435, %v492
        %v505 = vadd.f32 %v436, %v493
        %v506 = vadd.f32 %v437, %v494
        %v507 = vadd.f32 %v438, %v495
        %v508 = vadd.f32 %v439, %v496
        %v509 = vadd.f32 %v440, %v497
        %s510 = scalar_lea.vmem %s208, 48
        %v511 = vld [vmem:[%s510] ss:$2 sm:$0x3f]
        %v512 = vld [vmem:[%s175 + $0xc0] sm:$0xff]
        %v513 = vld [vmem:[%s175 + $0xc8] sm:$0xff]
        %v514 = vld [vmem:[%s175 + $0xd0] sm:$0xff]
        %v515 = vld [vmem:[%s175 + $0xd8] sm:$0xff]
        %v516 = vld [vmem:[%s175 + $0xe0] sm:$0xff]
        %v517 = vld [vmem:[%s175 + $0xe8] sm:$0xff]
        %v518 = vld [vmem:[%s175 + $0x9f0] sm:$0x1]
        %v519 = vld [vmem:[%s175 + $0x9f8] sm:$0x1]
        %v520 = vld [vmem:[%s175 + $0xa00] sm:$0x1]
        %v521 = vld [vmem:[%s175 + $0xa08] sm:$0x1]
        %v522 = vld [vmem:[%s175 + $0xa10] sm:$0x1]
        %v523 = vld [vmem:[%s175 + $0xa18] sm:$0x1]
        %v525 = vlaneseq
        %v526 = vshrl.u32 %v525, 7
        %v527 = vsub.s32 0, %v526
        %v528 = vrot.slane %v511, %v527
        %v529 = vlaneseq
        %v530 = vshrl.u32 %v529, 7
        %v531 = vsub.s32 1, %v530
        %v532 = vrot.slane %v511, %v531
        %v533 = vlaneseq
        %v534 = vshrl.u32 %v533, 7
        %v535 = vsub.s32 2, %v534
        %v536 = vrot.slane %v511, %v535
        %v537 = vlaneseq
        %v538 = vshrl.u32 %v537, 7
        %v539 = vsub.s32 3, %v538
        %v540 = vrot.slane %v511, %v539
        %v541 = vlaneseq
        %v542 = vshrl.u32 %v541, 7
        %v543 = vsub.s32 4, %v542
        %v544 = vrot.slane %v511, %v543
        %v545 = vlaneseq
        %v546 = vshrl.u32 %v545, 7
        %v547 = vsub.s32 5, %v546
        %v548 = vrot.slane %v511, %v547
        %v555 = vmul.f32 %v528, %v512
        %v556 = vmul.f32 %v532, %v513
        %v557 = vmul.f32 %v536, %v514
        %v558 = vmul.f32 %v540, %v515
        %v559 = vmul.f32 %v544, %v516
        %v560 = vmul.f32 %v548, %v517
        %v561 = vmul.f32 %v528, %v518
        %v562 = vmul.f32 %v532, %v519
        %v563 = vmul.f32 %v536, %v520
        %v564 = vmul.f32 %v540, %v521
        %v565 = vmul.f32 %v544, %v522
        %v566 = vmul.f32 %v548, %v523
        %v567 = vadd.f32 %v498, %v555
        %v568 = vadd.f32 %v499, %v556
        %v569 = vadd.f32 %v500, %v557
        %v570 = vadd.f32 %v501, %v558
        %v571 = vadd.f32 %v502, %v559
        %v572 = vadd.f32 %v503, %v560
        %v573 = vadd.f32 %v504, %v561
        %v574 = vadd.f32 %v505, %v562
        %v575 = vadd.f32 %v506, %v563
        %v576 = vadd.f32 %v507, %v564
        %v577 = vadd.f32 %v508, %v565
        %v578 = vadd.f32 %v509, %v566
        %s579 = scalar_lea.vmem %s208, 60
        %v580 = vld [vmem:[%s579] ss:$2 sm:$0x3f]
        %v581 = vld [vmem:[%s175 + $0xf0] sm:$0xff]
        %v582 = vld [vmem:[%s175 + $0xf8] sm:$0xff]
        %v583 = vld [vmem:[%s175 + $0x100] sm:$0xff]
        %v584 = vld [vmem:[%s175 + $0x108] sm:$0xff]
        %v585 = vld [vmem:[%s175 + $0x110] sm:$0xff]
        %v586 = vld [vmem:[%s175 + $0x118] sm:$0xff]
        %v587 = vld [vmem:[%s175 + $0xa20] sm:$0x1]
        %v588 = vld [vmem:[%s175 + $0xa28] sm:$0x1]
        %v589 = vld [vmem:[%s175 + $0xa30] sm:$0x1]
        %v590 = vld [vmem:[%s175 + $0xa38] sm:$0x1]
        %v591 = vld [vmem:[%s175 + $0xa40] sm:$0x1]
        %v592 = vld [vmem:[%s175 + $0xa48] sm:$0x1]
        %v594 = vlaneseq
        %v595 = vshrl.u32 %v594, 7
        %v596 = vsub.s32 0, %v595
        %v597 = vrot.slane %v580, %v596
        %v598 = vlaneseq
        %v599 = vshrl.u32 %v598, 7
        %v600 = vsub.s32 1, %v599
        %v601 = vrot.slane %v580, %v600
        %v602 = vlaneseq
        %v603 = vshrl.u32 %v602, 7
        %v604 = vsub.s32 2, %v603
        %v605 = vrot.slane %v580, %v604
        %v606 = vlaneseq
        %v607 = vshrl.u32 %v606, 7
        %v608 = vsub.s32 3, %v607
        %v609 = vrot.slane %v580, %v608
        %v610 = vlaneseq
        %v611 = vshrl.u32 %v610, 7
        %v612 = vsub.s32 4, %v611
        %v613 = vrot.slane %v580, %v612
        %v614 = vlaneseq
        %v615 = vshrl.u32 %v614, 7
        %v616 = vsub.s32 5, %v615
        %v617 = vrot.slane %v580, %v616
        %v624 = vmul.f32 %v597, %v581
        %v625 = vmul.f32 %v601, %v582
        %v626 = vmul.f32 %v605, %v583
        %v627 = vmul.f32 %v609, %v584
        %v628 = vmul.f32 %v613, %v585
        %v629 = vmul.f32 %v617, %v586
        %v630 = vmul.f32 %v597, %v587
        %v631 = vmul.f32 %v601, %v588
        %v632 = vmul.f32 %v605, %v589
        %v633 = vmul.f32 %v609, %v590
        %v634 = vmul.f32 %v613, %v591
        %v635 = vmul.f32 %v617, %v592
        %v636 = vadd.f32 %v567, %v624
        %v637 = vadd.f32 %v568, %v625
        %v638 = vadd.f32 %v569, %v626
        %v639 = vadd.f32 %v570, %v627
        %v640 = vadd.f32 %v571, %v628
        %v641 = vadd.f32 %v572, %v629
        %v642 = vadd.f32 %v573, %v630
        %v643 = vadd.f32 %v574, %v631
        %v644 = vadd.f32 %v575, %v632
        %v645 = vadd.f32 %v576, %v633
        %v646 = vadd.f32 %v577, %v634
        %v647 = vadd.f32 %v578, %v635
        %s648 = scalar_lea.vmem %s208, 72
        %v649 = vld [vmem:[%s648] ss:$2 sm:$0x3f]
        %v650 = vld [vmem:[%s175 + $0x120] sm:$0xff]
        %v651 = vld [vmem:[%s175 + $0x128] sm:$0xff]
        %v652 = vld [vmem:[%s175 + $0x130] sm:$0xff]
        %v653 = vld [vmem:[%s175 + $0x138] sm:$0xff]
        %v654 = vld [vmem:[%s175 + $0x140] sm:$0xff]
        %v655 = vld [vmem:[%s175 + $0x148] sm:$0xff]
        %v656 = vld [vmem:[%s175 + $0xa50] sm:$0x1]
        %v657 = vld [vmem:[%s175 + $0xa58] sm:$0x1]
        %v658 = vld [vmem:[%s175 + $0xa60] sm:$0x1]
        %v659 = vld [vmem:[%s175 + $0xa68] sm:$0x1]
        %v660 = vld [vmem:[%s175 + $0xa70] sm:$0x1]
        %v661 = vld [vmem:[%s175 + $0xa78] sm:$0x1]
        %v663 = vlaneseq
        %v664 = vshrl.u32 %v663, 7
        %v665 = vsub.s32 0, %v664
        %v666 = vrot.slane %v649, %v665
        %v667 = vlaneseq
        %v668 = vshrl.u32 %v667, 7
        %v669 = vsub.s32 1, %v668
        %v670 = vrot.slane %v649, %v669
        %v671 = vlaneseq
        %v672 = vshrl.u32 %v671, 7
        %v673 = vsub.s32 2, %v672
        %v674 = vrot.slane %v649, %v673
        %v675 = vlaneseq
        %v676 = vshrl.u32 %v675, 7
        %v677 = vsub.s32 3, %v676
        %v678 = vrot.slane %v649, %v677
        %v679 = vlaneseq
        %v680 = vshrl.u32 %v679, 7
        %v681 = vsub.s32 4, %v680
        %v682 = vrot.slane %v649, %v681
        %v683 = vlaneseq
        %v684 = vshrl.u32 %v683, 7
        %v685 = vsub.s32 5, %v684
        %v686 = vrot.slane %v649, %v685
        %v693 = vmul.f32 %v666, %v650
        %v694 = vmul.f32 %v670, %v651
        %v695 = vmul.f32 %v674, %v652
        %v696 = vmul.f32 %v678, %v653
        %v697 = vmul.f32 %v682, %v654
        %v698 = vmul.f32 %v686, %v655
        %v699 = vmul.f32 %v666, %v656
        %v700 = vmul.f32 %v670, %v657
        %v701 = vmul.f32 %v674, %v658
        %v702 = vmul.f32 %v678, %v659
        %v703 = vmul.f32 %v682, %v660
        %v704 = vmul.f32 %v686, %v661
        %v705 = vadd.f32 %v636, %v693
        %v706 = vadd.f32 %v637, %v694
        %v707 = vadd.f32 %v638, %v695
        %v708 = vadd.f32 %v639, %v696
        %v709 = vadd.f32 %v640, %v697
        %v710 = vadd.f32 %v641, %v698
        %v711 = vadd.f32 %v642, %v699
        %v712 = vadd.f32 %v643, %v700
        %v713 = vadd.f32 %v644, %v701
        %v714 = vadd.f32 %v645, %v702
        %v715 = vadd.f32 %v646, %v703
        %v716 = vadd.f32 %v647, %v704
        %s717 = scalar_lea.vmem %s208, 84
        %v718 = vld [vmem:[%s717] ss:$2 sm:$0x3f]
        %v719 = vld [vmem:[%s175 + $0x150] sm:$0xff]
        %v720 = vld [vmem:[%s175 + $0x158] sm:$0xff]
        %v721 = vld [vmem:[%s175 + $0x160] sm:$0xff]
        %v722 = vld [vmem:[%s175 + $0x168] sm:$0xff]
        %v723 = vld [vmem:[%s175 + $0x170] sm:$0xff]
        %v724 = vld [vmem:[%s175 + $0x178] sm:$0xff]
        %v725 = vld [vmem:[%s175 + $0xa80] sm:$0x1]
        %v726 = vld [vmem:[%s175 + $0xa88] sm:$0x1]
        %v727 = vld [vmem:[%s175 + $0xa90] sm:$0x1]
        %v728 = vld [vmem:[%s175 + $0xa98] sm:$0x1]
        %v729 = vld [vmem:[%s175 + $0xaa0] sm:$0x1]
        %v730 = vld [vmem:[%s175 + $0xaa8] sm:$0x1]
        %v732 = vlaneseq
        %v733 = vshrl.u32 %v732, 7
        %v734 = vsub.s32 0, %v733
        %v735 = vrot.slane %v718, %v734
        %v736 = vlaneseq
        %v737 = vshrl.u32 %v736, 7
        %v738 = vsub.s32 1, %v737
        %v739 = vrot.slane %v718, %v738
        %v740 = vlaneseq
        %v741 = vshrl.u32 %v740, 7
        %v742 = vsub.s32 2, %v741
        %v743 = vrot.slane %v718, %v742
        %v744 = vlaneseq
        %v745 = vshrl.u32 %v744, 7
        %v746 = vsub.s32 3, %v745
        %v747 = vrot.slane %v718, %v746
        %v748 = vlaneseq
        %v749 = vshrl.u32 %v748, 7
        %v750 = vsub.s32 4, %v749
        %v751 = vrot.slane %v718, %v750
        %v752 = vlaneseq
        %v753 = vshrl.u32 %v752, 7
        %v754 = vsub.s32 5, %v753
        %v755 = vrot.slane %v718, %v754
        %v762 = vmul.f32 %v735, %v719
        %v763 = vmul.f32 %v739, %v720
        %v764 = vmul.f32 %v743, %v721
        %v765 = vmul.f32 %v747, %v722
        %v766 = vmul.f32 %v751, %v723
        %v767 = vmul.f32 %v755, %v724
        %v768 = vmul.f32 %v735, %v725
        %v769 = vmul.f32 %v739, %v726
        %v770 = vmul.f32 %v743, %v727
        %v771 = vmul.f32 %v747, %v728
        %v772 = vmul.f32 %v751, %v729
        %v773 = vmul.f32 %v755, %v730
        %v774 = vadd.f32 %v705, %v762
        %v775 = vadd.f32 %v706, %v763
        %v776 = vadd.f32 %v707, %v764
        %v777 = vadd.f32 %v708, %v765
        %v778 = vadd.f32 %v709, %v766
        %v779 = vadd.f32 %v710, %v767
        %v780 = vadd.f32 %v711, %v768
        %v781 = vadd.f32 %v712, %v769
        %v782 = vadd.f32 %v713, %v770
        %v783 = vadd.f32 %v714, %v771
        %v784 = vadd.f32 %v715, %v772
        %v785 = vadd.f32 %v716, %v773
        %s786 = scalar_lea.vmem %s208, 96
        %v787 = vld [vmem:[%s786] ss:$2 sm:$0x3f]
        %v788 = vld [vmem:[%s175 + $0x180] sm:$0xff]
        %v789 = vld [vmem:[%s175 + $0x188] sm:$0xff]
        %v790 = vld [vmem:[%s175 + $0x190] sm:$0xff]
        %v791 = vld [vmem:[%s175 + $0x198] sm:$0xff]
        %v792 = vld [vmem:[%s175 + $0x1a0] sm:$0xff]
        %v793 = vld [vmem:[%s175 + $0x1a8] sm:$0xff]
        %v794 = vld [vmem:[%s175 + $0xab0] sm:$0x1]
        %v795 = vld [vmem:[%s175 + $0xab8] sm:$0x1]
        %v796 = vld [vmem:[%s175 + $0xac0] sm:$0x1]
        %v797 = vld [vmem:[%s175 + $0xac8] sm:$0x1]
        %v798 = vld [vmem:[%s175 + $0xad0] sm:$0x1]
        %v799 = vld [vmem:[%s175 + $0xad8] sm:$0x1]
        %v801 = vlaneseq
        %v802 = vshrl.u32 %v801, 7
        %v803 = vsub.s32 0, %v802
        %v804 = vrot.slane %v787, %v803
        %v805 = vlaneseq
        %v806 = vshrl.u32 %v805, 7
        %v807 = vsub.s32 1, %v806
        %v808 = vrot.slane %v787, %v807
        %v809 = vlaneseq
        %v810 = vshrl.u32 %v809, 7
        %v811 = vsub.s32 2, %v810
        %v812 = vrot.slane %v787, %v811
        %v813 = vlaneseq
        %v814 = vshrl.u32 %v813, 7
        %v815 = vsub.s32 3, %v814
        %v816 = vrot.slane %v787, %v815
        %v817 = vlaneseq
        %v818 = vshrl.u32 %v817, 7
        %v819 = vsub.s32 4, %v818
        %v820 = vrot.slane %v787, %v819
        %v821 = vlaneseq
        %v822 = vshrl.u32 %v821, 7
        %v823 = vsub.s32 5, %v822
        %v824 = vrot.slane %v787, %v823
        %v831 = vmul.f32 %v804, %v788
        %v832 = vmul.f32 %v808, %v789
        %v833 = vmul.f32 %v812, %v790
        %v834 = vmul.f32 %v816, %v791
        %v835 = vmul.f32 %v820, %v792
        %v836 = vmul.f32 %v824, %v793
        %v837 = vmul.f32 %v804, %v794
        %v838 = vmul.f32 %v808, %v795
        %v839 = vmul.f32 %v812, %v796
        %v840 = vmul.f32 %v816, %v797
        %v841 = vmul.f32 %v820, %v798
        %v842 = vmul.f32 %v824, %v799
        %v843 = vadd.f32 %v774, %v831
        %v844 = vadd.f32 %v775, %v832
        %v845 = vadd.f32 %v776, %v833
        %v846 = vadd.f32 %v777, %v834
        %v847 = vadd.f32 %v778, %v835
        %v848 = vadd.f32 %v779, %v836
        %v849 = vadd.f32 %v780, %v837
        %v850 = vadd.f32 %v781, %v838
        %v851 = vadd.f32 %v782, %v839
        %v852 = vadd.f32 %v783, %v840
        %v853 = vadd.f32 %v784, %v841
        %v854 = vadd.f32 %v785, %v842
        %s855 = scalar_lea.vmem %s208, 108
        %v856 = vld [vmem:[%s855] ss:$2 sm:$0x3f]
        %v857 = vld [vmem:[%s175 + $0x1b0] sm:$0xff]
        %v858 = vld [vmem:[%s175 + $0x1b8] sm:$0xff]
        %v859 = vld [vmem:[%s175 + $0x1c0] sm:$0xff]
        %v860 = vld [vmem:[%s175 + $0x1c8] sm:$0xff]
        %v861 = vld [vmem:[%s175 + $0x1d0] sm:$0xff]
        %v862 = vld [vmem:[%s175 + $0x1d8] sm:$0xff]
        %v863 = vld [vmem:[%s175 + $0xae0] sm:$0x1]
        %v864 = vld [vmem:[%s175 + $0xae8] sm:$0x1]
        %v865 = vld [vmem:[%s175 + $0xaf0] sm:$0x1]
        %v866 = vld [vmem:[%s175 + $0xaf8] sm:$0x1]
        %v867 = vld [vmem:[%s175 + $0xb00] sm:$0x1]
        %v868 = vld [vmem:[%s175 + $0xb08] sm:$0x1]
        %v870 = vlaneseq
        %v871 = vshrl.u32 %v870, 7
        %v872 = vsub.s32 0, %v871
        %v873 = vrot.slane %v856, %v872
        %v874 = vlaneseq
        %v875 = vshrl.u32 %v874, 7
        %v876 = vsub.s32 1, %v875
        %v877 = vrot.slane %v856, %v876
        %v878 = vlaneseq
        %v879 = vshrl.u32 %v878, 7
        %v880 = vsub.s32 2, %v879
        %v881 = vrot.slane %v856, %v880
        %v882 = vlaneseq
        %v883 = vshrl.u32 %v882, 7
        %v884 = vsub.s32 3, %v883
        %v885 = vrot.slane %v856, %v884
        %v886 = vlaneseq
        %v887 = vshrl.u32 %v886, 7
        %v888 = vsub.s32 4, %v887
        %v889 = vrot.slane %v856, %v888
        %v890 = vlaneseq
        %v891 = vshrl.u32 %v890, 7
        %v892 = vsub.s32 5, %v891
        %v893 = vrot.slane %v856, %v892
        %v900 = vmul.f32 %v873, %v857
        %v901 = vmul.f32 %v877, %v858
        %v902 = vmul.f32 %v881, %v859
        %v903 = vmul.f32 %v885, %v860
        %v904 = vmul.f32 %v889, %v861
        %v905 = vmul.f32 %v893, %v862
        %v906 = vmul.f32 %v873, %v863
        %v907 = vmul.f32 %v877, %v864
        %v908 = vmul.f32 %v881, %v865
        %v909 = vmul.f32 %v885, %v866
        %v910 = vmul.f32 %v889, %v867
        %v911 = vmul.f32 %v893, %v868
        %v912 = vadd.f32 %v843, %v900
        %v913 = vadd.f32 %v844, %v901
        %v914 = vadd.f32 %v845, %v902
        %v915 = vadd.f32 %v846, %v903
        %v916 = vadd.f32 %v847, %v904
        %v917 = vadd.f32 %v848, %v905
        %v918 = vadd.f32 %v849, %v906
        %v919 = vadd.f32 %v850, %v907
        %v920 = vadd.f32 %v851, %v908
        %v921 = vadd.f32 %v852, %v909
        %v922 = vadd.f32 %v853, %v910
        %v923 = vadd.f32 %v854, %v911
        %s924 = scalar_lea.vmem %s208, 120
        %v925 = vld [vmem:[%s924] ss:$2 sm:$0x3f]
        %v926 = vld [vmem:[%s175 + $0x1e0] sm:$0xff]
        %v927 = vld [vmem:[%s175 + $0x1e8] sm:$0xff]
        %v928 = vld [vmem:[%s175 + $0x1f0] sm:$0xff]
        %v929 = vld [vmem:[%s175 + $0x1f8] sm:$0xff]
        %v930 = vld [vmem:[%s175 + $0x200] sm:$0xff]
        %v931 = vld [vmem:[%s175 + $0x208] sm:$0xff]
        %v932 = vld [vmem:[%s175 + $0xb10] sm:$0x1]
        %v933 = vld [vmem:[%s175 + $0xb18] sm:$0x1]
        %v934 = vld [vmem:[%s175 + $0xb20] sm:$0x1]
        %v935 = vld [vmem:[%s175 + $0xb28] sm:$0x1]
        %v936 = vld [vmem:[%s175 + $0xb30] sm:$0x1]
        %v937 = vld [vmem:[%s175 + $0xb38] sm:$0x1]
        %v939 = vlaneseq
        %v940 = vshrl.u32 %v939, 7
        %v941 = vsub.s32 0, %v940
        %v942 = vrot.slane %v925, %v941
        %v943 = vlaneseq
        %v944 = vshrl.u32 %v943, 7
        %v945 = vsub.s32 1, %v944
        %v946 = vrot.slane %v925, %v945
        %v947 = vlaneseq
        %v948 = vshrl.u32 %v947, 7
        %v949 = vsub.s32 2, %v948
        %v950 = vrot.slane %v925, %v949
        %v951 = vlaneseq
        %v952 = vshrl.u32 %v951, 7
        %v953 = vsub.s32 3, %v952
        %v954 = vrot.slane %v925, %v953
        %v955 = vlaneseq
        %v956 = vshrl.u32 %v955, 7
        %v957 = vsub.s32 4, %v956
        %v958 = vrot.slane %v925, %v957
        %v959 = vlaneseq
        %v960 = vshrl.u32 %v959, 7
        %v961 = vsub.s32 5, %v960
        %v962 = vrot.slane %v925, %v961
        %v969 = vmul.f32 %v942, %v926
        %v970 = vmul.f32 %v946, %v927
        %v971 = vmul.f32 %v950, %v928
        %v972 = vmul.f32 %v954, %v929
        %v973 = vmul.f32 %v958, %v930
        %v974 = vmul.f32 %v962, %v931
        %v975 = vmul.f32 %v942, %v932
        %v976 = vmul.f32 %v946, %v933
        %v977 = vmul.f32 %v950, %v934
        %v978 = vmul.f32 %v954, %v935
        %v979 = vmul.f32 %v958, %v936
        %v980 = vmul.f32 %v962, %v937
        %v981 = vadd.f32 %v912, %v969
        %v982 = vadd.f32 %v913, %v970
        %v983 = vadd.f32 %v914, %v971
        %v984 = vadd.f32 %v915, %v972
        %v985 = vadd.f32 %v916, %v973
        %v986 = vadd.f32 %v917, %v974
        %v987 = vadd.f32 %v918, %v975
        %v988 = vadd.f32 %v919, %v976
        %v989 = vadd.f32 %v920, %v977
        %v990 = vadd.f32 %v921, %v978
        %v991 = vadd.f32 %v922, %v979
        %v992 = vadd.f32 %v923, %v980
        %s993 = scalar_lea.vmem %s208, 132
        %v994 = vld [vmem:[%s993] ss:$2 sm:$0x3f]
        %v995 = vld [vmem:[%s175 + $0x210] sm:$0xff]
        %v996 = vld [vmem:[%s175 + $0x218] sm:$0xff]
        %v997 = vld [vmem:[%s175 + $0x220] sm:$0xff]
        %v998 = vld [vmem:[%s175 + $0x228] sm:$0xff]
        %v999 = vld [vmem:[%s175 + $0x230] sm:$0xff]
        %v1000 = vld [vmem:[%s175 + $0x238] sm:$0xff]
        %v1001 = vld [vmem:[%s175 + $0xb40] sm:$0x1]
        %v1002 = vld [vmem:[%s175 + $0xb48] sm:$0x1]
        %v1003 = vld [vmem:[%s175 + $0xb50] sm:$0x1]
        %v1004 = vld [vmem:[%s175 + $0xb58] sm:$0x1]
        %v1005 = vld [vmem:[%s175 + $0xb60] sm:$0x1]
        %v1006 = vld [vmem:[%s175 + $0xb68] sm:$0x1]
        %v1008 = vlaneseq
        %v1009 = vshrl.u32 %v1008, 7
        %v1010 = vsub.s32 0, %v1009
        %v1011 = vrot.slane %v994, %v1010
        %v1012 = vlaneseq
        %v1013 = vshrl.u32 %v1012, 7
        %v1014 = vsub.s32 1, %v1013
        %v1015 = vrot.slane %v994, %v1014
        %v1016 = vlaneseq
        %v1017 = vshrl.u32 %v1016, 7
        %v1018 = vsub.s32 2, %v1017
        %v1019 = vrot.slane %v994, %v1018
        %v1020 = vlaneseq
        %v1021 = vshrl.u32 %v1020, 7
        %v1022 = vsub.s32 3, %v1021
        %v1023 = vrot.slane %v994, %v1022
        %v1024 = vlaneseq
        %v1025 = vshrl.u32 %v1024, 7
        %v1026 = vsub.s32 4, %v1025
        %v1027 = vrot.slane %v994, %v1026
        %v1028 = vlaneseq
        %v1029 = vshrl.u32 %v1028, 7
        %v1030 = vsub.s32 5, %v1029
        %v1031 = vrot.slane %v994, %v1030
        %v1038 = vmul.f32 %v1011, %v995
        %v1039 = vmul.f32 %v1015, %v996
        %v1040 = vmul.f32 %v1019, %v997
        %v1041 = vmul.f32 %v1023, %v998
        %v1042 = vmul.f32 %v1027, %v999
        %v1043 = vmul.f32 %v1031, %v1000
        %v1044 = vmul.f32 %v1011, %v1001
        %v1045 = vmul.f32 %v1015, %v1002
        %v1046 = vmul.f32 %v1019, %v1003
        %v1047 = vmul.f32 %v1023, %v1004
        %v1048 = vmul.f32 %v1027, %v1005
        %v1049 = vmul.f32 %v1031, %v1006
        %v1050 = vadd.f32 %v981, %v1038
        %v1051 = vadd.f32 %v982, %v1039
        %v1052 = vadd.f32 %v983, %v1040
        %v1053 = vadd.f32 %v984, %v1041
        %v1054 = vadd.f32 %v985, %v1042
        %v1055 = vadd.f32 %v986, %v1043
        %v1056 = vadd.f32 %v987, %v1044
        %v1057 = vadd.f32 %v988, %v1045
        %v1058 = vadd.f32 %v989, %v1046
        %v1059 = vadd.f32 %v990, %v1047
        %v1060 = vadd.f32 %v991, %v1048
        %v1061 = vadd.f32 %v992, %v1049
        %s1062 = scalar_lea.vmem %s208, 144
        %v1063 = vld [vmem:[%s1062] ss:$2 sm:$0x3f]
        %v1064 = vld [vmem:[%s175 + $0x240] sm:$0xff]
        %v1065 = vld [vmem:[%s175 + $0x248] sm:$0xff]
        %v1066 = vld [vmem:[%s175 + $0x250] sm:$0xff]
        %v1067 = vld [vmem:[%s175 + $0x258] sm:$0xff]
        %v1068 = vld [vmem:[%s175 + $0x260] sm:$0xff]
        %v1069 = vld [vmem:[%s175 + $0x268] sm:$0xff]
        %v1070 = vld [vmem:[%s175 + $0xb70] sm:$0x1]
        %v1071 = vld [vmem:[%s175 + $0xb78] sm:$0x1]
        %v1072 = vld [vmem:[%s175 + $0xb80] sm:$0x1]
        %v1073 = vld [vmem:[%s175 + $0xb88] sm:$0x1]
        %v1074 = vld [vmem:[%s175 + $0xb90] sm:$0x1]
        %v1075 = vld [vmem:[%s175 + $0xb98] sm:$0x1]
        %v1077 = vlaneseq
        %v1078 = vshrl.u32 %v1077, 7
        %v1079 = vsub.s32 0, %v1078
        %v1080 = vrot.slane %v1063, %v1079
        %v1081 = vlaneseq
        %v1082 = vshrl.u32 %v1081, 7
        %v1083 = vsub.s32 1, %v1082
        %v1084 = vrot.slane %v1063, %v1083
        %v1085 = vlaneseq
        %v1086 = vshrl.u32 %v1085, 7
        %v1087 = vsub.s32 2, %v1086
        %v1088 = vrot.slane %v1063, %v1087
        %v1089 = vlaneseq
        %v1090 = vshrl.u32 %v1089, 7
        %v1091 = vsub.s32 3, %v1090
        %v1092 = vrot.slane %v1063, %v1091
        %v1093 = vlaneseq
        %v1094 = vshrl.u32 %v1093, 7
        %v1095 = vsub.s32 4, %v1094
        %v1096 = vrot.slane %v1063, %v1095
        %v1097 = vlaneseq
        %v1098 = vshrl.u32 %v1097, 7
        %v1099 = vsub.s32 5, %v1098
        %v1100 = vrot.slane %v1063, %v1099
        %v1107 = vmul.f32 %v1080, %v1064
        %v1108 = vmul.f32 %v1084, %v1065
        %v1109 = vmul.f32 %v1088, %v1066
        %v1110 = vmul.f32 %v1092, %v1067
        %v1111 = vmul.f32 %v1096, %v1068
        %v1112 = vmul.f32 %v1100, %v1069
        %v1113 = vmul.f32 %v1080, %v1070
        %v1114 = vmul.f32 %v1084, %v1071
        %v1115 = vmul.f32 %v1088, %v1072
        %v1116 = vmul.f32 %v1092, %v1073
        %v1117 = vmul.f32 %v1096, %v1074
        %v1118 = vmul.f32 %v1100, %v1075
        %v1119 = vadd.f32 %v1050, %v1107
        %v1120 = vadd.f32 %v1051, %v1108
        %v1121 = vadd.f32 %v1052, %v1109
        %v1122 = vadd.f32 %v1053, %v1110
        %v1123 = vadd.f32 %v1054, %v1111
        %v1124 = vadd.f32 %v1055, %v1112
        %v1125 = vadd.f32 %v1056, %v1113
        %v1126 = vadd.f32 %v1057, %v1114
        %v1127 = vadd.f32 %v1058, %v1115
        %v1128 = vadd.f32 %v1059, %v1116
        %v1129 = vadd.f32 %v1060, %v1117
        %v1130 = vadd.f32 %v1061, %v1118
        %s1131 = scalar_lea.vmem %s208, 156
        %v1132 = vld [vmem:[%s1131] ss:$2 sm:$0x3f]
        %v1133 = vld [vmem:[%s175 + $0x270] sm:$0xff]
        %v1134 = vld [vmem:[%s175 + $0x278] sm:$0xff]
        %v1135 = vld [vmem:[%s175 + $0x280] sm:$0xff]
        %v1136 = vld [vmem:[%s175 + $0x288] sm:$0xff]
        %v1137 = vld [vmem:[%s175 + $0x290] sm:$0xff]
        %v1138 = vld [vmem:[%s175 + $0x298] sm:$0xff]
        %v1139 = vld [vmem:[%s175 + $0xba0] sm:$0x1]
        %v1140 = vld [vmem:[%s175 + $0xba8] sm:$0x1]
        %v1141 = vld [vmem:[%s175 + $0xbb0] sm:$0x1]
        %v1142 = vld [vmem:[%s175 + $0xbb8] sm:$0x1]
        %v1143 = vld [vmem:[%s175 + $0xbc0] sm:$0x1]
        %v1144 = vld [vmem:[%s175 + $0xbc8] sm:$0x1]
        %v1146 = vlaneseq
        %v1147 = vshrl.u32 %v1146, 7
        %v1148 = vsub.s32 0, %v1147
        %v1149 = vrot.slane %v1132, %v1148
        %v1150 = vlaneseq
        %v1151 = vshrl.u32 %v1150, 7
        %v1152 = vsub.s32 1, %v1151
        %v1153 = vrot.slane %v1132, %v1152
        %v1154 = vlaneseq
        %v1155 = vshrl.u32 %v1154, 7
        %v1156 = vsub.s32 2, %v1155
        %v1157 = vrot.slane %v1132, %v1156
        %v1158 = vlaneseq
        %v1159 = vshrl.u32 %v1158, 7
        %v1160 = vsub.s32 3, %v1159
        %v1161 = vrot.slane %v1132, %v1160
        %v1162 = vlaneseq
        %v1163 = vshrl.u32 %v1162, 7
        %v1164 = vsub.s32 4, %v1163
        %v1165 = vrot.slane %v1132, %v1164
        %v1166 = vlaneseq
        %v1167 = vshrl.u32 %v1166, 7
        %v1168 = vsub.s32 5, %v1167
        %v1169 = vrot.slane %v1132, %v1168
        %v1176 = vmul.f32 %v1149, %v1133
        %v1177 = vmul.f32 %v1153, %v1134
        %v1178 = vmul.f32 %v1157, %v1135
        %v1179 = vmul.f32 %v1161, %v1136
        %v1180 = vmul.f32 %v1165, %v1137
        %v1181 = vmul.f32 %v1169, %v1138
        %v1182 = vmul.f32 %v1149, %v1139
        %v1183 = vmul.f32 %v1153, %v1140
        %v1184 = vmul.f32 %v1157, %v1141
        %v1185 = vmul.f32 %v1161, %v1142
        %v1186 = vmul.f32 %v1165, %v1143
        %v1187 = vmul.f32 %v1169, %v1144
        %v1188 = vadd.f32 %v1119, %v1176
        %v1189 = vadd.f32 %v1120, %v1177
        %v1190 = vadd.f32 %v1121, %v1178
        %v1191 = vadd.f32 %v1122, %v1179
        %v1192 = vadd.f32 %v1123, %v1180
        %v1193 = vadd.f32 %v1124, %v1181
        %v1194 = vadd.f32 %v1125, %v1182
        %v1195 = vadd.f32 %v1126, %v1183
        %v1196 = vadd.f32 %v1127, %v1184
        %v1197 = vadd.f32 %v1128, %v1185
        %v1198 = vadd.f32 %v1129, %v1186
        %v1199 = vadd.f32 %v1130, %v1187
        %s1200 = scalar_lea.vmem %s208, 168
        %v1201 = vld [vmem:[%s1200] ss:$2 sm:$0x3f]
        %v1202 = vld [vmem:[%s175 + $0x2a0] sm:$0xff]
        %v1203 = vld [vmem:[%s175 + $0x2a8] sm:$0xff]
        %v1204 = vld [vmem:[%s175 + $0x2b0] sm:$0xff]
        %v1205 = vld [vmem:[%s175 + $0x2b8] sm:$0xff]
        %v1206 = vld [vmem:[%s175 + $0x2c0] sm:$0xff]
        %v1207 = vld [vmem:[%s175 + $0x2c8] sm:$0xff]
        %v1208 = vld [vmem:[%s175 + $0xbd0] sm:$0x1]
        %v1209 = vld [vmem:[%s175 + $0xbd8] sm:$0x1]
        %v1210 = vld [vmem:[%s175 + $0xbe0] sm:$0x1]
        %v1211 = vld [vmem:[%s175 + $0xbe8] sm:$0x1]
        %v1212 = vld [vmem:[%s175 + $0xbf0] sm:$0x1]
        %v1213 = vld [vmem:[%s175 + $0xbf8] sm:$0x1]
        %v1215 = vlaneseq
        %v1216 = vshrl.u32 %v1215, 7
        %v1217 = vsub.s32 0, %v1216
        %v1218 = vrot.slane %v1201, %v1217
        %v1219 = vlaneseq
        %v1220 = vshrl.u32 %v1219, 7
        %v1221 = vsub.s32 1, %v1220
        %v1222 = vrot.slane %v1201, %v1221
        %v1223 = vlaneseq
        %v1224 = vshrl.u32 %v1223, 7
        %v1225 = vsub.s32 2, %v1224
        %v1226 = vrot.slane %v1201, %v1225
        %v1227 = vlaneseq
        %v1228 = vshrl.u32 %v1227, 7
        %v1229 = vsub.s32 3, %v1228
        %v1230 = vrot.slane %v1201, %v1229
        %v1231 = vlaneseq
        %v1232 = vshrl.u32 %v1231, 7
        %v1233 = vsub.s32 4, %v1232
        %v1234 = vrot.slane %v1201, %v1233
        %v1235 = vlaneseq
        %v1236 = vshrl.u32 %v1235, 7
        %v1237 = vsub.s32 5, %v1236
        %v1238 = vrot.slane %v1201, %v1237
        %v1245 = vmul.f32 %v1218, %v1202
        %v1246 = vmul.f32 %v1222, %v1203
        %v1247 = vmul.f32 %v1226, %v1204
        %v1248 = vmul.f32 %v1230, %v1205
        %v1249 = vmul.f32 %v1234, %v1206
        %v1250 = vmul.f32 %v1238, %v1207
        %v1251 = vmul.f32 %v1218, %v1208
        %v1252 = vmul.f32 %v1222, %v1209
        %v1253 = vmul.f32 %v1226, %v1210
        %v1254 = vmul.f32 %v1230, %v1211
        %v1255 = vmul.f32 %v1234, %v1212
        %v1256 = vmul.f32 %v1238, %v1213
        %v1257 = vadd.f32 %v1188, %v1245
        %v1258 = vadd.f32 %v1189, %v1246
        %v1259 = vadd.f32 %v1190, %v1247
        %v1260 = vadd.f32 %v1191, %v1248
        %v1261 = vadd.f32 %v1192, %v1249
        %v1262 = vadd.f32 %v1193, %v1250
        %v1263 = vadd.f32 %v1194, %v1251
        %v1264 = vadd.f32 %v1195, %v1252
        %v1265 = vadd.f32 %v1196, %v1253
        %v1266 = vadd.f32 %v1197, %v1254
        %v1267 = vadd.f32 %v1198, %v1255
        %v1268 = vadd.f32 %v1199, %v1256
        %s1269 = scalar_lea.vmem %s208, 180
        %v1270 = vld [vmem:[%s1269] ss:$2 sm:$0x3f]
        %v1271 = vld [vmem:[%s175 + $0x2d0] sm:$0xff]
        %v1272 = vld [vmem:[%s175 + $0x2d8] sm:$0xff]
        %v1273 = vld [vmem:[%s175 + $0x2e0] sm:$0xff]
        %v1274 = vld [vmem:[%s175 + $0x2e8] sm:$0xff]
        %v1275 = vld [vmem:[%s175 + $0x2f0] sm:$0xff]
        %v1276 = vld [vmem:[%s175 + $0x2f8] sm:$0xff]
        %v1277 = vld [vmem:[%s175 + $0xc00] sm:$0x1]
        %v1278 = vld [vmem:[%s175 + $0xc08] sm:$0x1]
        %v1279 = vld [vmem:[%s175 + $0xc10] sm:$0x1]
        %v1280 = vld [vmem:[%s175 + $0xc18] sm:$0x1]
        %v1281 = vld [vmem:[%s175 + $0xc20] sm:$0x1]
        %v1282 = vld [vmem:[%s175 + $0xc28] sm:$0x1]
        %v1284 = vlaneseq
        %v1285 = vshrl.u32 %v1284, 7
        %v1286 = vsub.s32 0, %v1285
        %v1287 = vrot.slane %v1270, %v1286
        %v1288 = vlaneseq
        %v1289 = vshrl.u32 %v1288, 7
        %v1290 = vsub.s32 1, %v1289
        %v1291 = vrot.slane %v1270, %v1290
        %v1292 = vlaneseq
        %v1293 = vshrl.u32 %v1292, 7
        %v1294 = vsub.s32 2, %v1293
        %v1295 = vrot.slane %v1270, %v1294
        %v1296 = vlaneseq
        %v1297 = vshrl.u32 %v1296, 7
        %v1298 = vsub.s32 3, %v1297
        %v1299 = vrot.slane %v1270, %v1298
        %v1300 = vlaneseq
        %v1301 = vshrl.u32 %v1300, 7
        %v1302 = vsub.s32 4, %v1301
        %v1303 = vrot.slane %v1270, %v1302
        %v1304 = vlaneseq
        %v1305 = vshrl.u32 %v1304, 7
        %v1306 = vsub.s32 5, %v1305
        %v1307 = vrot.slane %v1270, %v1306
        %v1314 = vmul.f32 %v1287, %v1271
        %v1315 = vmul.f32 %v1291, %v1272
        %v1316 = vmul.f32 %v1295, %v1273
        %v1317 = vmul.f32 %v1299, %v1274
        %v1318 = vmul.f32 %v1303, %v1275
        %v1319 = vmul.f32 %v1307, %v1276
        %v1320 = vmul.f32 %v1287, %v1277
        %v1321 = vmul.f32 %v1291, %v1278
        %v1322 = vmul.f32 %v1295, %v1279
        %v1323 = vmul.f32 %v1299, %v1280
        %v1324 = vmul.f32 %v1303, %v1281
        %v1325 = vmul.f32 %v1307, %v1282
        %v1326 = vadd.f32 %v1257, %v1314
        %v1327 = vadd.f32 %v1258, %v1315
        %v1328 = vadd.f32 %v1259, %v1316
        %v1329 = vadd.f32 %v1260, %v1317
        %v1330 = vadd.f32 %v1261, %v1318
        %v1331 = vadd.f32 %v1262, %v1319
        %v1332 = vadd.f32 %v1263, %v1320
        %v1333 = vadd.f32 %v1264, %v1321
        %v1334 = vadd.f32 %v1265, %v1322
        %v1335 = vadd.f32 %v1266, %v1323
        %v1336 = vadd.f32 %v1267, %v1324
        %v1337 = vadd.f32 %v1268, %v1325
        %s1338 = scalar_lea.vmem %s208, 192
        %v1339 = vld [vmem:[%s1338] ss:$2 sm:$0x3f]
        %v1340 = vld [vmem:[%s175 + $0x300] sm:$0xff]
        %v1341 = vld [vmem:[%s175 + $0x308] sm:$0xff]
        %v1342 = vld [vmem:[%s175 + $0x310] sm:$0xff]
        %v1343 = vld [vmem:[%s175 + $0x318] sm:$0xff]
        %v1344 = vld [vmem:[%s175 + $0x320] sm:$0xff]
        %v1345 = vld [vmem:[%s175 + $0x328] sm:$0xff]
        %v1346 = vld [vmem:[%s175 + $0xc30] sm:$0x1]
        %v1347 = vld [vmem:[%s175 + $0xc38] sm:$0x1]
        %v1348 = vld [vmem:[%s175 + $0xc40] sm:$0x1]
        %v1349 = vld [vmem:[%s175 + $0xc48] sm:$0x1]
        %v1350 = vld [vmem:[%s175 + $0xc50] sm:$0x1]
        %v1351 = vld [vmem:[%s175 + $0xc58] sm:$0x1]
        %v1353 = vlaneseq
        %v1354 = vshrl.u32 %v1353, 7
        %v1355 = vsub.s32 0, %v1354
        %v1356 = vrot.slane %v1339, %v1355
        %v1357 = vlaneseq
        %v1358 = vshrl.u32 %v1357, 7
        %v1359 = vsub.s32 1, %v1358
        %v1360 = vrot.slane %v1339, %v1359
        %v1361 = vlaneseq
        %v1362 = vshrl.u32 %v1361, 7
        %v1363 = vsub.s32 2, %v1362
        %v1364 = vrot.slane %v1339, %v1363
        %v1365 = vlaneseq
        %v1366 = vshrl.u32 %v1365, 7
        %v1367 = vsub.s32 3, %v1366
        %v1368 = vrot.slane %v1339, %v1367
        %v1369 = vlaneseq
        %v1370 = vshrl.u32 %v1369, 7
        %v1371 = vsub.s32 4, %v1370
        %v1372 = vrot.slane %v1339, %v1371
        %v1373 = vlaneseq
        %v1374 = vshrl.u32 %v1373, 7
        %v1375 = vsub.s32 5, %v1374
        %v1376 = vrot.slane %v1339, %v1375
        %v1383 = vmul.f32 %v1356, %v1340
        %v1384 = vmul.f32 %v1360, %v1341
        %v1385 = vmul.f32 %v1364, %v1342
        %v1386 = vmul.f32 %v1368, %v1343
        %v1387 = vmul.f32 %v1372, %v1344
        %v1388 = vmul.f32 %v1376, %v1345
        %v1389 = vmul.f32 %v1356, %v1346
        %v1390 = vmul.f32 %v1360, %v1347
        %v1391 = vmul.f32 %v1364, %v1348
        %v1392 = vmul.f32 %v1368, %v1349
        %v1393 = vmul.f32 %v1372, %v1350
        %v1394 = vmul.f32 %v1376, %v1351
        %v1395 = vadd.f32 %v1326, %v1383
        %v1396 = vadd.f32 %v1327, %v1384
        %v1397 = vadd.f32 %v1328, %v1385
        %v1398 = vadd.f32 %v1329, %v1386
        %v1399 = vadd.f32 %v1330, %v1387
        %v1400 = vadd.f32 %v1331, %v1388
        %v1401 = vadd.f32 %v1332, %v1389
        %v1402 = vadd.f32 %v1333, %v1390
        %v1403 = vadd.f32 %v1334, %v1391
        %v1404 = vadd.f32 %v1335, %v1392
        %v1405 = vadd.f32 %v1336, %v1393
        %v1406 = vadd.f32 %v1337, %v1394
        %s1407 = scalar_lea.vmem %s208, 204
        %v1408 = vld [vmem:[%s1407] ss:$2 sm:$0x3f]
        %v1409 = vld [vmem:[%s175 + $0x330] sm:$0xff]
        %v1410 = vld [vmem:[%s175 + $0x338] sm:$0xff]
        %v1411 = vld [vmem:[%s175 + $0x340] sm:$0xff]
        %v1412 = vld [vmem:[%s175 + $0x348] sm:$0xff]
        %v1413 = vld [vmem:[%s175 + $0x350] sm:$0xff]
        %v1414 = vld [vmem:[%s175 + $0x358] sm:$0xff]
        %v1415 = vld [vmem:[%s175 + $0xc60] sm:$0x1]
        %v1416 = vld [vmem:[%s175 + $0xc68] sm:$0x1]
        %v1417 = vld [vmem:[%s175 + $0xc70] sm:$0x1]
        %v1418 = vld [vmem:[%s175 + $0xc78] sm:$0x1]
        %v1419 = vld [vmem:[%s175 + $0xc80] sm:$0x1]
        %v1420 = vld [vmem:[%s175 + $0xc88] sm:$0x1]
        %v1422 = vlaneseq
        %v1423 = vshrl.u32 %v1422, 7
        %v1424 = vsub.s32 0, %v1423
        %v1425 = vrot.slane %v1408, %v1424
        %v1426 = vlaneseq
        %v1427 = vshrl.u32 %v1426, 7
        %v1428 = vsub.s32 1, %v1427
        %v1429 = vrot.slane %v1408, %v1428
        %v1430 = vlaneseq
        %v1431 = vshrl.u32 %v1430, 7
        %v1432 = vsub.s32 2, %v1431
        %v1433 = vrot.slane %v1408, %v1432
        %v1434 = vlaneseq
        %v1435 = vshrl.u32 %v1434, 7
        %v1436 = vsub.s32 3, %v1435
        %v1437 = vrot.slane %v1408, %v1436
        %v1438 = vlaneseq
        %v1439 = vshrl.u32 %v1438, 7
        %v1440 = vsub.s32 4, %v1439
        %v1441 = vrot.slane %v1408, %v1440
        %v1442 = vlaneseq
        %v1443 = vshrl.u32 %v1442, 7
        %v1444 = vsub.s32 5, %v1443
        %v1445 = vrot.slane %v1408, %v1444
        %v1452 = vmul.f32 %v1425, %v1409
        %v1453 = vmul.f32 %v1429, %v1410
        %v1454 = vmul.f32 %v1433, %v1411
        %v1455 = vmul.f32 %v1437, %v1412
        %v1456 = vmul.f32 %v1441, %v1413
        %v1457 = vmul.f32 %v1445, %v1414
        %v1458 = vmul.f32 %v1425, %v1415
        %v1459 = vmul.f32 %v1429, %v1416
        %v1460 = vmul.f32 %v1433, %v1417
        %v1461 = vmul.f32 %v1437, %v1418
        %v1462 = vmul.f32 %v1441, %v1419
        %v1463 = vmul.f32 %v1445, %v1420
        %v1464 = vadd.f32 %v1395, %v1452
        %v1465 = vadd.f32 %v1396, %v1453
        %v1466 = vadd.f32 %v1397, %v1454
        %v1467 = vadd.f32 %v1398, %v1455
        %v1468 = vadd.f32 %v1399, %v1456
        %v1469 = vadd.f32 %v1400, %v1457
        %v1470 = vadd.f32 %v1401, %v1458
        %v1471 = vadd.f32 %v1402, %v1459
        %v1472 = vadd.f32 %v1403, %v1460
        %v1473 = vadd.f32 %v1404, %v1461
        %v1474 = vadd.f32 %v1405, %v1462
        %v1475 = vadd.f32 %v1406, %v1463
        %s1476 = scalar_lea.vmem %s208, 216
        %v1477 = vld [vmem:[%s1476] ss:$2 sm:$0x3f]
        %v1478 = vld [vmem:[%s175 + $0x360] sm:$0xff]
        %v1479 = vld [vmem:[%s175 + $0x368] sm:$0xff]
        %v1480 = vld [vmem:[%s175 + $0x370] sm:$0xff]
        %v1481 = vld [vmem:[%s175 + $0x378] sm:$0xff]
        %v1482 = vld [vmem:[%s175 + $0x380] sm:$0xff]
        %v1483 = vld [vmem:[%s175 + $0x388] sm:$0xff]
        %v1484 = vld [vmem:[%s175 + $0xc90] sm:$0x1]
        %v1485 = vld [vmem:[%s175 + $0xc98] sm:$0x1]
        %v1486 = vld [vmem:[%s175 + $0xca0] sm:$0x1]
        %v1487 = vld [vmem:[%s175 + $0xca8] sm:$0x1]
        %v1488 = vld [vmem:[%s175 + $0xcb0] sm:$0x1]
        %v1489 = vld [vmem:[%s175 + $0xcb8] sm:$0x1]
        %v1491 = vlaneseq
        %v1492 = vshrl.u32 %v1491, 7
        %v1493 = vsub.s32 0, %v1492
        %v1494 = vrot.slane %v1477, %v1493
        %v1495 = vlaneseq
        %v1496 = vshrl.u32 %v1495, 7
        %v1497 = vsub.s32 1, %v1496
        %v1498 = vrot.slane %v1477, %v1497
        %v1499 = vlaneseq
        %v1500 = vshrl.u32 %v1499, 7
        %v1501 = vsub.s32 2, %v1500
        %v1502 = vrot.slane %v1477, %v1501
        %v1503 = vlaneseq
        %v1504 = vshrl.u32 %v1503, 7
        %v1505 = vsub.s32 3, %v1504
        %v1506 = vrot.slane %v1477, %v1505
        %v1507 = vlaneseq
        %v1508 = vshrl.u32 %v1507, 7
        %v1509 = vsub.s32 4, %v1508
        %v1510 = vrot.slane %v1477, %v1509
        %v1511 = vlaneseq
        %v1512 = vshrl.u32 %v1511, 7
        %v1513 = vsub.s32 5, %v1512
        %v1514 = vrot.slane %v1477, %v1513
        %v1521 = vmul.f32 %v1494, %v1478
        %v1522 = vmul.f32 %v1498, %v1479
        %v1523 = vmul.f32 %v1502, %v1480
        %v1524 = vmul.f32 %v1506, %v1481
        %v1525 = vmul.f32 %v1510, %v1482
        %v1526 = vmul.f32 %v1514, %v1483
        %v1527 = vmul.f32 %v1494, %v1484
        %v1528 = vmul.f32 %v1498, %v1485
        %v1529 = vmul.f32 %v1502, %v1486
        %v1530 = vmul.f32 %v1506, %v1487
        %v1531 = vmul.f32 %v1510, %v1488
        %v1532 = vmul.f32 %v1514, %v1489
        %v1533 = vadd.f32 %v1464, %v1521
        %v1534 = vadd.f32 %v1465, %v1522
        %v1535 = vadd.f32 %v1466, %v1523
        %v1536 = vadd.f32 %v1467, %v1524
        %v1537 = vadd.f32 %v1468, %v1525
        %v1538 = vadd.f32 %v1469, %v1526
        %v1539 = vadd.f32 %v1470, %v1527
        %v1540 = vadd.f32 %v1471, %v1528
        %v1541 = vadd.f32 %v1472, %v1529
        %v1542 = vadd.f32 %v1473, %v1530
        %v1543 = vadd.f32 %v1474, %v1531
        %v1544 = vadd.f32 %v1475, %v1532
        %s1545 = scalar_lea.vmem %s208, 228
        %v1546 = vld [vmem:[%s1545] ss:$2 sm:$0x3f]
        %v1547 = vld [vmem:[%s175 + $0x390] sm:$0xff]
        %v1548 = vld [vmem:[%s175 + $0x398] sm:$0xff]
        %v1549 = vld [vmem:[%s175 + $0x3a0] sm:$0xff]
        %v1550 = vld [vmem:[%s175 + $0x3a8] sm:$0xff]
        %v1551 = vld [vmem:[%s175 + $0x3b0] sm:$0xff]
        %v1552 = vld [vmem:[%s175 + $0x3b8] sm:$0xff]
        %v1553 = vld [vmem:[%s175 + $0xcc0] sm:$0x1]
        %v1554 = vld [vmem:[%s175 + $0xcc8] sm:$0x1]
        %v1555 = vld [vmem:[%s175 + $0xcd0] sm:$0x1]
        %v1556 = vld [vmem:[%s175 + $0xcd8] sm:$0x1]
        %v1557 = vld [vmem:[%s175 + $0xce0] sm:$0x1]
        %v1558 = vld [vmem:[%s175 + $0xce8] sm:$0x1]
        %v1560 = vlaneseq
        %v1561 = vshrl.u32 %v1560, 7
        %v1562 = vsub.s32 0, %v1561
        %v1563 = vrot.slane %v1546, %v1562
        %v1564 = vlaneseq
        %v1565 = vshrl.u32 %v1564, 7
        %v1566 = vsub.s32 1, %v1565
        %v1567 = vrot.slane %v1546, %v1566
        %v1568 = vlaneseq
        %v1569 = vshrl.u32 %v1568, 7
        %v1570 = vsub.s32 2, %v1569
        %v1571 = vrot.slane %v1546, %v1570
        %v1572 = vlaneseq
        %v1573 = vshrl.u32 %v1572, 7
        %v1574 = vsub.s32 3, %v1573
        %v1575 = vrot.slane %v1546, %v1574
        %v1576 = vlaneseq
        %v1577 = vshrl.u32 %v1576, 7
        %v1578 = vsub.s32 4, %v1577
        %v1579 = vrot.slane %v1546, %v1578
        %v1580 = vlaneseq
        %v1581 = vshrl.u32 %v1580, 7
        %v1582 = vsub.s32 5, %v1581
        %v1583 = vrot.slane %v1546, %v1582
        %v1590 = vmul.f32 %v1563, %v1547
        %v1591 = vmul.f32 %v1567, %v1548
        %v1592 = vmul.f32 %v1571, %v1549
        %v1593 = vmul.f32 %v1575, %v1550
        %v1594 = vmul.f32 %v1579, %v1551
        %v1595 = vmul.f32 %v1583, %v1552
        %v1596 = vmul.f32 %v1563, %v1553
        %v1597 = vmul.f32 %v1567, %v1554
        %v1598 = vmul.f32 %v1571, %v1555
        %v1599 = vmul.f32 %v1575, %v1556
        %v1600 = vmul.f32 %v1579, %v1557
        %v1601 = vmul.f32 %v1583, %v1558
        %v1602 = vadd.f32 %v1533, %v1590
        %v1603 = vadd.f32 %v1534, %v1591
        %v1604 = vadd.f32 %v1535, %v1592
        %v1605 = vadd.f32 %v1536, %v1593
        %v1606 = vadd.f32 %v1537, %v1594
        %v1607 = vadd.f32 %v1538, %v1595
        %v1608 = vadd.f32 %v1539, %v1596
        %v1609 = vadd.f32 %v1540, %v1597
        %v1610 = vadd.f32 %v1541, %v1598
        %v1611 = vadd.f32 %v1542, %v1599
        %v1612 = vadd.f32 %v1543, %v1600
        %v1613 = vadd.f32 %v1544, %v1601
        %s1614 = scalar_lea.vmem %s208, 240
        %v1615 = vld [vmem:[%s1614] ss:$2 sm:$0x3f]
        %v1616 = vld [vmem:[%s175 + $0x3c0] sm:$0xff]
        %v1617 = vld [vmem:[%s175 + $0x3c8] sm:$0xff]
        %v1618 = vld [vmem:[%s175 + $0x3d0] sm:$0xff]
        %v1619 = vld [vmem:[%s175 + $0x3d8] sm:$0xff]
        %v1620 = vld [vmem:[%s175 + $0x3e0] sm:$0xff]
        %v1621 = vld [vmem:[%s175 + $0x3e8] sm:$0xff]
        %v1622 = vld [vmem:[%s175 + $0xcf0] sm:$0x1]
        %v1623 = vld [vmem:[%s175 + $0xcf8] sm:$0x1]
        %v1624 = vld [vmem:[%s175 + $0xd00] sm:$0x1]
        %v1625 = vld [vmem:[%s175 + $0xd08] sm:$0x1]
        %v1626 = vld [vmem:[%s175 + $0xd10] sm:$0x1]
        %v1627 = vld [vmem:[%s175 + $0xd18] sm:$0x1]
        %v1629 = vlaneseq
        %v1630 = vshrl.u32 %v1629, 7
        %v1631 = vsub.s32 0, %v1630
        %v1632 = vrot.slane %v1615, %v1631
        %v1633 = vlaneseq
        %v1634 = vshrl.u32 %v1633, 7
        %v1635 = vsub.s32 1, %v1634
        %v1636 = vrot.slane %v1615, %v1635
        %v1637 = vlaneseq
        %v1638 = vshrl.u32 %v1637, 7
        %v1639 = vsub.s32 2, %v1638
        %v1640 = vrot.slane %v1615, %v1639
        %v1641 = vlaneseq
        %v1642 = vshrl.u32 %v1641, 7
        %v1643 = vsub.s32 3, %v1642
        %v1644 = vrot.slane %v1615, %v1643
        %v1645 = vlaneseq
        %v1646 = vshrl.u32 %v1645, 7
        %v1647 = vsub.s32 4, %v1646
        %v1648 = vrot.slane %v1615, %v1647
        %v1649 = vlaneseq
        %v1650 = vshrl.u32 %v1649, 7
        %v1651 = vsub.s32 5, %v1650
        %v1652 = vrot.slane %v1615, %v1651
        %v1659 = vmul.f32 %v1632, %v1616
        %v1660 = vmul.f32 %v1636, %v1617
        %v1661 = vmul.f32 %v1640, %v1618
        %v1662 = vmul.f32 %v1644, %v1619
        %v1663 = vmul.f32 %v1648, %v1620
        %v1664 = vmul.f32 %v1652, %v1621
        %v1665 = vmul.f32 %v1632, %v1622
        %v1666 = vmul.f32 %v1636, %v1623
        %v1667 = vmul.f32 %v1640, %v1624
        %v1668 = vmul.f32 %v1644, %v1625
        %v1669 = vmul.f32 %v1648, %v1626
        %v1670 = vmul.f32 %v1652, %v1627
        %v1671 = vadd.f32 %v1602, %v1659
        %v1672 = vadd.f32 %v1603, %v1660
        %v1673 = vadd.f32 %v1604, %v1661
        %v1674 = vadd.f32 %v1605, %v1662
        %v1675 = vadd.f32 %v1606, %v1663
        %v1676 = vadd.f32 %v1607, %v1664
        %v1677 = vadd.f32 %v1608, %v1665
        %v1678 = vadd.f32 %v1609, %v1666
        %v1679 = vadd.f32 %v1610, %v1667
        %v1680 = vadd.f32 %v1611, %v1668
        %v1681 = vadd.f32 %v1612, %v1669
        %v1682 = vadd.f32 %v1613, %v1670
        %s1683 = scalar_lea.vmem %s208, 252
        %v1684 = vld [vmem:[%s1683] ss:$2 sm:$0x3f]
        %v1685 = vld [vmem:[%s175 + $0x3f0] sm:$0xff]
        %v1686 = vld [vmem:[%s175 + $0x3f8] sm:$0xff]
        %v1687 = vld [vmem:[%s175 + $0x400] sm:$0xff]
        %v1688 = vld [vmem:[%s175 + $0x408] sm:$0xff]
        %v1689 = vld [vmem:[%s175 + $0x410] sm:$0xff]
        %v1690 = vld [vmem:[%s175 + $0x418] sm:$0xff]
        %v1691 = vld [vmem:[%s175 + $0xd20] sm:$0x1]
        %v1692 = vld [vmem:[%s175 + $0xd28] sm:$0x1]
        %v1693 = vld [vmem:[%s175 + $0xd30] sm:$0x1]
        %v1694 = vld [vmem:[%s175 + $0xd38] sm:$0x1]
        %v1695 = vld [vmem:[%s175 + $0xd40] sm:$0x1]
        %v1696 = vld [vmem:[%s175 + $0xd48] sm:$0x1]
        %v1698 = vlaneseq
        %v1699 = vshrl.u32 %v1698, 7
        %v1700 = vsub.s32 0, %v1699
        %v1701 = vrot.slane %v1684, %v1700
        %v1702 = vlaneseq
        %v1703 = vshrl.u32 %v1702, 7
        %v1704 = vsub.s32 1, %v1703
        %v1705 = vrot.slane %v1684, %v1704
        %v1706 = vlaneseq
        %v1707 = vshrl.u32 %v1706, 7
        %v1708 = vsub.s32 2, %v1707
        %v1709 = vrot.slane %v1684, %v1708
        %v1710 = vlaneseq
        %v1711 = vshrl.u32 %v1710, 7
        %v1712 = vsub.s32 3, %v1711
        %v1713 = vrot.slane %v1684, %v1712
        %v1714 = vlaneseq
        %v1715 = vshrl.u32 %v1714, 7
        %v1716 = vsub.s32 4, %v1715
        %v1717 = vrot.slane %v1684, %v1716
        %v1718 = vlaneseq
        %v1719 = vshrl.u32 %v1718, 7
        %v1720 = vsub.s32 5, %v1719
        %v1721 = vrot.slane %v1684, %v1720
        %v1728 = vmul.f32 %v1701, %v1685
        %v1729 = vmul.f32 %v1705, %v1686
        %v1730 = vmul.f32 %v1709, %v1687
        %v1731 = vmul.f32 %v1713, %v1688
        %v1732 = vmul.f32 %v1717, %v1689
        %v1733 = vmul.f32 %v1721, %v1690
        %v1734 = vmul.f32 %v1701, %v1691
        %v1735 = vmul.f32 %v1705, %v1692
        %v1736 = vmul.f32 %v1709, %v1693
        %v1737 = vmul.f32 %v1713, %v1694
        %v1738 = vmul.f32 %v1717, %v1695
        %v1739 = vmul.f32 %v1721, %v1696
        %v1740 = vadd.f32 %v1671, %v1728
        %v1741 = vadd.f32 %v1672, %v1729
        %v1742 = vadd.f32 %v1673, %v1730
        %v1743 = vadd.f32 %v1674, %v1731
        %v1744 = vadd.f32 %v1675, %v1732
        %v1745 = vadd.f32 %v1676, %v1733
        %v1746 = vadd.f32 %v1677, %v1734
        %v1747 = vadd.f32 %v1678, %v1735
        %v1748 = vadd.f32 %v1679, %v1736
        %v1749 = vadd.f32 %v1680, %v1737
        %v1750 = vadd.f32 %v1681, %v1738
        %v1751 = vadd.f32 %v1682, %v1739
        %s1752 = scalar_lea.vmem %s208, 264
        %v1753 = vld [vmem:[%s1752] ss:$2 sm:$0x3f]
        %v1754 = vld [vmem:[%s175 + $0x420] sm:$0xff]
        %v1755 = vld [vmem:[%s175 + $0x428] sm:$0xff]
        %v1756 = vld [vmem:[%s175 + $0x430] sm:$0xff]
        %v1757 = vld [vmem:[%s175 + $0x438] sm:$0xff]
        %v1758 = vld [vmem:[%s175 + $0x440] sm:$0xff]
        %v1759 = vld [vmem:[%s175 + $0x448] sm:$0xff]
        %v1760 = vld [vmem:[%s175 + $0xd50] sm:$0x1]
        %v1761 = vld [vmem:[%s175 + $0xd58] sm:$0x1]
        %v1762 = vld [vmem:[%s175 + $0xd60] sm:$0x1]
        %v1763 = vld [vmem:[%s175 + $0xd68] sm:$0x1]
        %v1764 = vld [vmem:[%s175 + $0xd70] sm:$0x1]
        %v1765 = vld [vmem:[%s175 + $0xd78] sm:$0x1]
        %v1767 = vlaneseq
        %v1768 = vshrl.u32 %v1767, 7
        %v1769 = vsub.s32 0, %v1768
        %v1770 = vrot.slane %v1753, %v1769
        %v1771 = vlaneseq
        %v1772 = vshrl.u32 %v1771, 7
        %v1773 = vsub.s32 1, %v1772
        %v1774 = vrot.slane %v1753, %v1773
        %v1775 = vlaneseq
        %v1776 = vshrl.u32 %v1775, 7
        %v1777 = vsub.s32 2, %v1776
        %v1778 = vrot.slane %v1753, %v1777
        %v1779 = vlaneseq
        %v1780 = vshrl.u32 %v1779, 7
        %v1781 = vsub.s32 3, %v1780
        %v1782 = vrot.slane %v1753, %v1781
        %v1783 = vlaneseq
        %v1784 = vshrl.u32 %v1783, 7
        %v1785 = vsub.s32 4, %v1784
        %v1786 = vrot.slane %v1753, %v1785
        %v1787 = vlaneseq
        %v1788 = vshrl.u32 %v1787, 7
        %v1789 = vsub.s32 5, %v1788
        %v1790 = vrot.slane %v1753, %v1789
        %v1797 = vmul.f32 %v1770, %v1754
        %v1798 = vmul.f32 %v1774, %v1755
        %v1799 = vmul.f32 %v1778, %v1756
        %v1800 = vmul.f32 %v1782, %v1757
        %v1801 = vmul.f32 %v1786, %v1758
        %v1802 = vmul.f32 %v1790, %v1759
        %v1803 = vmul.f32 %v1770, %v1760
        %v1804 = vmul.f32 %v1774, %v1761
        %v1805 = vmul.f32 %v1778, %v1762
        %v1806 = vmul.f32 %v1782, %v1763
        %v1807 = vmul.f32 %v1786, %v1764
        %v1808 = vmul.f32 %v1790, %v1765
        %v1809 = vadd.f32 %v1740, %v1797
        %v1810 = vadd.f32 %v1741, %v1798
        %v1811 = vadd.f32 %v1742, %v1799
        %v1812 = vadd.f32 %v1743, %v1800
        %v1813 = vadd.f32 %v1744, %v1801
        %v1814 = vadd.f32 %v1745, %v1802
        %v1815 = vadd.f32 %v1746, %v1803
        %v1816 = vadd.f32 %v1747, %v1804
        %v1817 = vadd.f32 %v1748, %v1805
        %v1818 = vadd.f32 %v1749, %v1806
        %v1819 = vadd.f32 %v1750, %v1807
        %v1820 = vadd.f32 %v1751, %v1808
        %s1821 = scalar_lea.vmem %s208, 276
        %v1822 = vld [vmem:[%s1821] ss:$2 sm:$0x3f]
        %v1823 = vld [vmem:[%s175 + $0x450] sm:$0xff]
        %v1824 = vld [vmem:[%s175 + $0x458] sm:$0xff]
        %v1825 = vld [vmem:[%s175 + $0x460] sm:$0xff]
        %v1826 = vld [vmem:[%s175 + $0x468] sm:$0xff]
        %v1827 = vld [vmem:[%s175 + $0x470] sm:$0xff]
        %v1828 = vld [vmem:[%s175 + $0x478] sm:$0xff]
        %v1829 = vld [vmem:[%s175 + $0xd80] sm:$0x1]
        %v1830 = vld [vmem:[%s175 + $0xd88] sm:$0x1]
        %v1831 = vld [vmem:[%s175 + $0xd90] sm:$0x1]
        %v1832 = vld [vmem:[%s175 + $0xd98] sm:$0x1]
        %v1833 = vld [vmem:[%s175 + $0xda0] sm:$0x1]
        %v1834 = vld [vmem:[%s175 + $0xda8] sm:$0x1]
        %v1836 = vlaneseq
        %v1837 = vshrl.u32 %v1836, 7
        %v1838 = vsub.s32 0, %v1837
        %v1839 = vrot.slane %v1822, %v1838
        %v1840 = vlaneseq
        %v1841 = vshrl.u32 %v1840, 7
        %v1842 = vsub.s32 1, %v1841
        %v1843 = vrot.slane %v1822, %v1842
        %v1844 = vlaneseq
        %v1845 = vshrl.u32 %v1844, 7
        %v1846 = vsub.s32 2, %v1845
        %v1847 = vrot.slane %v1822, %v1846
        %v1848 = vlaneseq
        %v1849 = vshrl.u32 %v1848, 7
        %v1850 = vsub.s32 3, %v1849
        %v1851 = vrot.slane %v1822, %v1850
        %v1852 = vlaneseq
        %v1853 = vshrl.u32 %v1852, 7
        %v1854 = vsub.s32 4, %v1853
        %v1855 = vrot.slane %v1822, %v1854
        %v1856 = vlaneseq
        %v1857 = vshrl.u32 %v1856, 7
        %v1858 = vsub.s32 5, %v1857
        %v1859 = vrot.slane %v1822, %v1858
        %v1866 = vmul.f32 %v1839, %v1823
        %v1867 = vmul.f32 %v1843, %v1824
        %v1868 = vmul.f32 %v1847, %v1825
        %v1869 = vmul.f32 %v1851, %v1826
        %v1870 = vmul.f32 %v1855, %v1827
        %v1871 = vmul.f32 %v1859, %v1828
        %v1872 = vmul.f32 %v1839, %v1829
        %v1873 = vmul.f32 %v1843, %v1830
        %v1874 = vmul.f32 %v1847, %v1831
        %v1875 = vmul.f32 %v1851, %v1832
        %v1876 = vmul.f32 %v1855, %v1833
        %v1877 = vmul.f32 %v1859, %v1834
        %v1878 = vadd.f32 %v1809, %v1866
        %v1879 = vadd.f32 %v1810, %v1867
        %v1880 = vadd.f32 %v1811, %v1868
        %v1881 = vadd.f32 %v1812, %v1869
        %v1882 = vadd.f32 %v1813, %v1870
        %v1883 = vadd.f32 %v1814, %v1871
        %v1884 = vadd.f32 %v1815, %v1872
        %v1885 = vadd.f32 %v1816, %v1873
        %v1886 = vadd.f32 %v1817, %v1874
        %v1887 = vadd.f32 %v1818, %v1875
        %v1888 = vadd.f32 %v1819, %v1876
        %v1889 = vadd.f32 %v1820, %v1877
        %s1890 = scalar_lea.vmem %s208, 288
        %v1891 = vld [vmem:[%s1890] ss:$2 sm:$0x3f]
        %v1892 = vld [vmem:[%s175 + $0x480] sm:$0xff]
        %v1893 = vld [vmem:[%s175 + $0x488] sm:$0xff]
        %v1894 = vld [vmem:[%s175 + $0x490] sm:$0xff]
        %v1895 = vld [vmem:[%s175 + $0x498] sm:$0xff]
        %v1896 = vld [vmem:[%s175 + $0x4a0] sm:$0xff]
        %v1897 = vld [vmem:[%s175 + $0x4a8] sm:$0xff]
        %v1898 = vld [vmem:[%s175 + $0xdb0] sm:$0x1]
        %v1899 = vld [vmem:[%s175 + $0xdb8] sm:$0x1]
        %v1900 = vld [vmem:[%s175 + $0xdc0] sm:$0x1]
        %v1901 = vld [vmem:[%s175 + $0xdc8] sm:$0x1]
        %v1902 = vld [vmem:[%s175 + $0xdd0] sm:$0x1]
        %v1903 = vld [vmem:[%s175 + $0xdd8] sm:$0x1]
        %v1905 = vlaneseq
        %v1906 = vshrl.u32 %v1905, 7
        %v1907 = vsub.s32 0, %v1906
        %v1908 = vrot.slane %v1891, %v1907
        %v1909 = vlaneseq
        %v1910 = vshrl.u32 %v1909, 7
        %v1911 = vsub.s32 1, %v1910
        %v1912 = vrot.slane %v1891, %v1911
        %v1913 = vlaneseq
        %v1914 = vshrl.u32 %v1913, 7
        %v1915 = vsub.s32 2, %v1914
        %v1916 = vrot.slane %v1891, %v1915
        %v1917 = vlaneseq
        %v1918 = vshrl.u32 %v1917, 7
        %v1919 = vsub.s32 3, %v1918
        %v1920 = vrot.slane %v1891, %v1919
        %v1921 = vlaneseq
        %v1922 = vshrl.u32 %v1921, 7
        %v1923 = vsub.s32 4, %v1922
        %v1924 = vrot.slane %v1891, %v1923
        %v1925 = vlaneseq
        %v1926 = vshrl.u32 %v1925, 7
        %v1927 = vsub.s32 5, %v1926
        %v1928 = vrot.slane %v1891, %v1927
        %v1935 = vmul.f32 %v1908, %v1892
        %v1936 = vmul.f32 %v1912, %v1893
        %v1937 = vmul.f32 %v1916, %v1894
        %v1938 = vmul.f32 %v1920, %v1895
        %v1939 = vmul.f32 %v1924, %v1896
        %v1940 = vmul.f32 %v1928, %v1897
        %v1941 = vmul.f32 %v1908, %v1898
        %v1942 = vmul.f32 %v1912, %v1899
        %v1943 = vmul.f32 %v1916, %v1900
        %v1944 = vmul.f32 %v1920, %v1901
        %v1945 = vmul.f32 %v1924, %v1902
        %v1946 = vmul.f32 %v1928, %v1903
        %v1947 = vadd.f32 %v1878, %v1935
        %v1948 = vadd.f32 %v1879, %v1936
        %v1949 = vadd.f32 %v1880, %v1937
        %v1950 = vadd.f32 %v1881, %v1938
        %v1951 = vadd.f32 %v1882, %v1939
        %v1952 = vadd.f32 %v1883, %v1940
        %v1953 = vadd.f32 %v1884, %v1941
        %v1954 = vadd.f32 %v1885, %v1942
        %v1955 = vadd.f32 %v1886, %v1943
        %v1956 = vadd.f32 %v1887, %v1944
        %v1957 = vadd.f32 %v1888, %v1945
        %v1958 = vadd.f32 %v1889, %v1946
        %s1959 = scalar_lea.vmem %s208, 300
        %v1960 = vld [vmem:[%s1959] ss:$2 sm:$0x3f]
        %v1961 = vld [vmem:[%s175 + $0x4b0] sm:$0xff]
        %v1962 = vld [vmem:[%s175 + $0x4b8] sm:$0xff]
        %v1963 = vld [vmem:[%s175 + $0x4c0] sm:$0xff]
        %v1964 = vld [vmem:[%s175 + $0x4c8] sm:$0xff]
        %v1965 = vld [vmem:[%s175 + $0x4d0] sm:$0xff]
        %v1966 = vld [vmem:[%s175 + $0x4d8] sm:$0xff]
        %v1967 = vld [vmem:[%s175 + $0xde0] sm:$0x1]
        %v1968 = vld [vmem:[%s175 + $0xde8] sm:$0x1]
        %v1969 = vld [vmem:[%s175 + $0xdf0] sm:$0x1]
        %v1970 = vld [vmem:[%s175 + $0xdf8] sm:$0x1]
        %v1971 = vld [vmem:[%s175 + $0xe00] sm:$0x1]
        %v1972 = vld [vmem:[%s175 + $0xe08] sm:$0x1]
        %v1974 = vlaneseq
        %v1975 = vshrl.u32 %v1974, 7
        %v1976 = vsub.s32 0, %v1975
        %v1977 = vrot.slane %v1960, %v1976
        %v1978 = vlaneseq
        %v1979 = vshrl.u32 %v1978, 7
        %v1980 = vsub.s32 1, %v1979
        %v1981 = vrot.slane %v1960, %v1980
        %v1982 = vlaneseq
        %v1983 = vshrl.u32 %v1982, 7
        %v1984 = vsub.s32 2, %v1983
        %v1985 = vrot.slane %v1960, %v1984
        %v1986 = vlaneseq
        %v1987 = vshrl.u32 %v1986, 7
        %v1988 = vsub.s32 3, %v1987
        %v1989 = vrot.slane %v1960, %v1988
        %v1990 = vlaneseq
        %v1991 = vshrl.u32 %v1990, 7
        %v1992 = vsub.s32 4, %v1991
        %v1993 = vrot.slane %v1960, %v1992
        %v1994 = vlaneseq
        %v1995 = vshrl.u32 %v1994, 7
        %v1996 = vsub.s32 5, %v1995
        %v1997 = vrot.slane %v1960, %v1996
        %v2004 = vmul.f32 %v1977, %v1961
        %v2005 = vmul.f32 %v1981, %v1962
        %v2006 = vmul.f32 %v1985, %v1963
        %v2007 = vmul.f32 %v1989, %v1964
        %v2008 = vmul.f32 %v1993, %v1965
        %v2009 = vmul.f32 %v1997, %v1966
        %v2010 = vmul.f32 %v1977, %v1967
        %v2011 = vmul.f32 %v1981, %v1968
        %v2012 = vmul.f32 %v1985, %v1969
        %v2013 = vmul.f32 %v1989, %v1970
        %v2014 = vmul.f32 %v1993, %v1971
        %v2015 = vmul.f32 %v1997, %v1972
        %v2016 = vadd.f32 %v1947, %v2004
        %v2017 = vadd.f32 %v1948, %v2005
        %v2018 = vadd.f32 %v1949, %v2006
        %v2019 = vadd.f32 %v1950, %v2007
        %v2020 = vadd.f32 %v1951, %v2008
        %v2021 = vadd.f32 %v1952, %v2009
        %v2022 = vadd.f32 %v1953, %v2010
        %v2023 = vadd.f32 %v1954, %v2011
        %v2024 = vadd.f32 %v1955, %v2012
        %v2025 = vadd.f32 %v1956, %v2013
        %v2026 = vadd.f32 %v1957, %v2014
        %v2027 = vadd.f32 %v1958, %v2015
        %s2028 = scalar_lea.vmem %s208, 312
        %v2029 = vld [vmem:[%s2028] ss:$2 sm:$0x3f]
        %v2030 = vld [vmem:[%s175 + $0x4e0] sm:$0xff]
        %v2031 = vld [vmem:[%s175 + $0x4e8] sm:$0xff]
        %v2032 = vld [vmem:[%s175 + $0x4f0] sm:$0xff]
        %v2033 = vld [vmem:[%s175 + $0x4f8] sm:$0xff]
        %v2034 = vld [vmem:[%s175 + $0x500] sm:$0xff]
        %v2035 = vld [vmem:[%s175 + $0x508] sm:$0xff]
        %v2036 = vld [vmem:[%s175 + $0xe10] sm:$0x1]
        %v2037 = vld [vmem:[%s175 + $0xe18] sm:$0x1]
        %v2038 = vld [vmem:[%s175 + $0xe20] sm:$0x1]
        %v2039 = vld [vmem:[%s175 + $0xe28] sm:$0x1]
        %v2040 = vld [vmem:[%s175 + $0xe30] sm:$0x1]
        %v2041 = vld [vmem:[%s175 + $0xe38] sm:$0x1]
        %v2043 = vlaneseq
        %v2044 = vshrl.u32 %v2043, 7
        %v2045 = vsub.s32 0, %v2044
        %v2046 = vrot.slane %v2029, %v2045
        %v2047 = vlaneseq
        %v2048 = vshrl.u32 %v2047, 7
        %v2049 = vsub.s32 1, %v2048
        %v2050 = vrot.slane %v2029, %v2049
        %v2051 = vlaneseq
        %v2052 = vshrl.u32 %v2051, 7
        %v2053 = vsub.s32 2, %v2052
        %v2054 = vrot.slane %v2029, %v2053
        %v2055 = vlaneseq
        %v2056 = vshrl.u32 %v2055, 7
        %v2057 = vsub.s32 3, %v2056
        %v2058 = vrot.slane %v2029, %v2057
        %v2059 = vlaneseq
        %v2060 = vshrl.u32 %v2059, 7
        %v2061 = vsub.s32 4, %v2060
        %v2062 = vrot.slane %v2029, %v2061
        %v2063 = vlaneseq
        %v2064 = vshrl.u32 %v2063, 7
        %v2065 = vsub.s32 5, %v2064
        %v2066 = vrot.slane %v2029, %v2065
        %v2073 = vmul.f32 %v2046, %v2030
        %v2074 = vmul.f32 %v2050, %v2031
        %v2075 = vmul.f32 %v2054, %v2032
        %v2076 = vmul.f32 %v2058, %v2033
        %v2077 = vmul.f32 %v2062, %v2034
        %v2078 = vmul.f32 %v2066, %v2035
        %v2079 = vmul.f32 %v2046, %v2036
        %v2080 = vmul.f32 %v2050, %v2037
        %v2081 = vmul.f32 %v2054, %v2038
        %v2082 = vmul.f32 %v2058, %v2039
        %v2083 = vmul.f32 %v2062, %v2040
        %v2084 = vmul.f32 %v2066, %v2041
        %v2085 = vadd.f32 %v2016, %v2073
        %v2086 = vadd.f32 %v2017, %v2074
        %v2087 = vadd.f32 %v2018, %v2075
        %v2088 = vadd.f32 %v2019, %v2076
        %v2089 = vadd.f32 %v2020, %v2077
        %v2090 = vadd.f32 %v2021, %v2078
        %v2091 = vadd.f32 %v2022, %v2079
        %v2092 = vadd.f32 %v2023, %v2080
        %v2093 = vadd.f32 %v2024, %v2081
        %v2094 = vadd.f32 %v2025, %v2082
        %v2095 = vadd.f32 %v2026, %v2083
        %v2096 = vadd.f32 %v2027, %v2084
        %s2097 = scalar_lea.vmem %s208, 324
        %v2098 = vld [vmem:[%s2097] ss:$2 sm:$0x3f]
        %v2099 = vld [vmem:[%s175 + $0x510] sm:$0xff]
        %v2100 = vld [vmem:[%s175 + $0x518] sm:$0xff]
        %v2101 = vld [vmem:[%s175 + $0x520] sm:$0xff]
        %v2102 = vld [vmem:[%s175 + $0x528] sm:$0xff]
        %v2103 = vld [vmem:[%s175 + $0x530] sm:$0xff]
        %v2104 = vld [vmem:[%s175 + $0x538] sm:$0xff]
        %v2105 = vld [vmem:[%s175 + $0xe40] sm:$0x1]
        %v2106 = vld [vmem:[%s175 + $0xe48] sm:$0x1]
        %v2107 = vld [vmem:[%s175 + $0xe50] sm:$0x1]
        %v2108 = vld [vmem:[%s175 + $0xe58] sm:$0x1]
        %v2109 = vld [vmem:[%s175 + $0xe60] sm:$0x1]
        %v2110 = vld [vmem:[%s175 + $0xe68] sm:$0x1]
        %v2112 = vlaneseq
        %v2113 = vshrl.u32 %v2112, 7
        %v2114 = vsub.s32 0, %v2113
        %v2115 = vrot.slane %v2098, %v2114
        %v2116 = vlaneseq
        %v2117 = vshrl.u32 %v2116, 7
        %v2118 = vsub.s32 1, %v2117
        %v2119 = vrot.slane %v2098, %v2118
        %v2120 = vlaneseq
        %v2121 = vshrl.u32 %v2120, 7
        %v2122 = vsub.s32 2, %v2121
        %v2123 = vrot.slane %v2098, %v2122
        %v2124 = vlaneseq
        %v2125 = vshrl.u32 %v2124, 7
        %v2126 = vsub.s32 3, %v2125
        %v2127 = vrot.slane %v2098, %v2126
        %v2128 = vlaneseq
        %v2129 = vshrl.u32 %v2128, 7
        %v2130 = vsub.s32 4, %v2129
        %v2131 = vrot.slane %v2098, %v2130
        %v2132 = vlaneseq
        %v2133 = vshrl.u32 %v2132, 7
        %v2134 = vsub.s32 5, %v2133
        %v2135 = vrot.slane %v2098, %v2134
        %v2142 = vmul.f32 %v2115, %v2099
        %v2143 = vmul.f32 %v2119, %v2100
        %v2144 = vmul.f32 %v2123, %v2101
        %v2145 = vmul.f32 %v2127, %v2102
        %v2146 = vmul.f32 %v2131, %v2103
        %v2147 = vmul.f32 %v2135, %v2104
        %v2148 = vmul.f32 %v2115, %v2105
        %v2149 = vmul.f32 %v2119, %v2106
        %v2150 = vmul.f32 %v2123, %v2107
        %v2151 = vmul.f32 %v2127, %v2108
        %v2152 = vmul.f32 %v2131, %v2109
        %v2153 = vmul.f32 %v2135, %v2110
        %v2154 = vadd.f32 %v2085, %v2142
        %v2155 = vadd.f32 %v2086, %v2143
        %v2156 = vadd.f32 %v2087, %v2144
        %v2157 = vadd.f32 %v2088, %v2145
        %v2158 = vadd.f32 %v2089, %v2146
        %v2159 = vadd.f32 %v2090, %v2147
        %v2160 = vadd.f32 %v2091, %v2148
        %v2161 = vadd.f32 %v2092, %v2149
        %v2162 = vadd.f32 %v2093, %v2150
        %v2163 = vadd.f32 %v2094, %v2151
        %v2164 = vadd.f32 %v2095, %v2152
        %v2165 = vadd.f32 %v2096, %v2153
        %s2166 = scalar_lea.vmem %s208, 336
        %v2167 = vld [vmem:[%s2166] ss:$2 sm:$0x3f]
        %v2168 = vld [vmem:[%s175 + $0x540] sm:$0xff]
        %v2169 = vld [vmem:[%s175 + $0x548] sm:$0xff]
        %v2170 = vld [vmem:[%s175 + $0x550] sm:$0xff]
        %v2171 = vld [vmem:[%s175 + $0x558] sm:$0xff]
        %v2172 = vld [vmem:[%s175 + $0x560] sm:$0xff]
        %v2173 = vld [vmem:[%s175 + $0x568] sm:$0xff]
        %v2174 = vld [vmem:[%s175 + $0xe70] sm:$0x1]
        %v2175 = vld [vmem:[%s175 + $0xe78] sm:$0x1]
        %v2176 = vld [vmem:[%s175 + $0xe80] sm:$0x1]
        %v2177 = vld [vmem:[%s175 + $0xe88] sm:$0x1]
        %v2178 = vld [vmem:[%s175 + $0xe90] sm:$0x1]
        %v2179 = vld [vmem:[%s175 + $0xe98] sm:$0x1]
        %v2181 = vlaneseq
        %v2182 = vshrl.u32 %v2181, 7
        %v2183 = vsub.s32 0, %v2182
        %v2184 = vrot.slane %v2167, %v2183
        %v2185 = vlaneseq
        %v2186 = vshrl.u32 %v2185, 7
        %v2187 = vsub.s32 1, %v2186
        %v2188 = vrot.slane %v2167, %v2187
        %v2189 = vlaneseq
        %v2190 = vshrl.u32 %v2189, 7
        %v2191 = vsub.s32 2, %v2190
        %v2192 = vrot.slane %v2167, %v2191
        %v2193 = vlaneseq
        %v2194 = vshrl.u32 %v2193, 7
        %v2195 = vsub.s32 3, %v2194
        %v2196 = vrot.slane %v2167, %v2195
        %v2197 = vlaneseq
        %v2198 = vshrl.u32 %v2197, 7
        %v2199 = vsub.s32 4, %v2198
        %v2200 = vrot.slane %v2167, %v2199
        %v2201 = vlaneseq
        %v2202 = vshrl.u32 %v2201, 7
        %v2203 = vsub.s32 5, %v2202
        %v2204 = vrot.slane %v2167, %v2203
        %v2211 = vmul.f32 %v2184, %v2168
        %v2212 = vmul.f32 %v2188, %v2169
        %v2213 = vmul.f32 %v2192, %v2170
        %v2214 = vmul.f32 %v2196, %v2171
        %v2215 = vmul.f32 %v2200, %v2172
        %v2216 = vmul.f32 %v2204, %v2173
        %v2217 = vmul.f32 %v2184, %v2174
        %v2218 = vmul.f32 %v2188, %v2175
        %v2219 = vmul.f32 %v2192, %v2176
        %v2220 = vmul.f32 %v2196, %v2177
        %v2221 = vmul.f32 %v2200, %v2178
        %v2222 = vmul.f32 %v2204, %v2179
        %v2223 = vadd.f32 %v2154, %v2211
        %v2224 = vadd.f32 %v2155, %v2212
        %v2225 = vadd.f32 %v2156, %v2213
        %v2226 = vadd.f32 %v2157, %v2214
        %v2227 = vadd.f32 %v2158, %v2215
        %v2228 = vadd.f32 %v2159, %v2216
        %v2229 = vadd.f32 %v2160, %v2217
        %v2230 = vadd.f32 %v2161, %v2218
        %v2231 = vadd.f32 %v2162, %v2219
        %v2232 = vadd.f32 %v2163, %v2220
        %v2233 = vadd.f32 %v2164, %v2221
        %v2234 = vadd.f32 %v2165, %v2222
        %s2235 = scalar_lea.vmem %s208, 348
        %v2236 = vld [vmem:[%s2235] ss:$2 sm:$0x3f]
        %v2237 = vld [vmem:[%s175 + $0x570] sm:$0xff]
        %v2238 = vld [vmem:[%s175 + $0x578] sm:$0xff]
        %v2239 = vld [vmem:[%s175 + $0x580] sm:$0xff]
        %v2240 = vld [vmem:[%s175 + $0x588] sm:$0xff]
        %v2241 = vld [vmem:[%s175 + $0x590] sm:$0xff]
        %v2242 = vld [vmem:[%s175 + $0x598] sm:$0xff]
        %v2243 = vld [vmem:[%s175 + $0xea0] sm:$0x1]
        %v2244 = vld [vmem:[%s175 + $0xea8] sm:$0x1]
        %v2245 = vld [vmem:[%s175 + $0xeb0] sm:$0x1]
        %v2246 = vld [vmem:[%s175 + $0xeb8] sm:$0x1]
        %v2247 = vld [vmem:[%s175 + $0xec0] sm:$0x1]
        %v2248 = vld [vmem:[%s175 + $0xec8] sm:$0x1]
        %v2250 = vlaneseq
        %v2251 = vshrl.u32 %v2250, 7
        %v2252 = vsub.s32 0, %v2251
        %v2253 = vrot.slane %v2236, %v2252
        %v2254 = vlaneseq
        %v2255 = vshrl.u32 %v2254, 7
        %v2256 = vsub.s32 1, %v2255
        %v2257 = vrot.slane %v2236, %v2256
        %v2258 = vlaneseq
        %v2259 = vshrl.u32 %v2258, 7
        %v2260 = vsub.s32 2, %v2259
        %v2261 = vrot.slane %v2236, %v2260
        %v2262 = vlaneseq
        %v2263 = vshrl.u32 %v2262, 7
        %v2264 = vsub.s32 3, %v2263
        %v2265 = vrot.slane %v2236, %v2264
        %v2266 = vlaneseq
        %v2267 = vshrl.u32 %v2266, 7
        %v2268 = vsub.s32 4, %v2267
        %v2269 = vrot.slane %v2236, %v2268
        %v2270 = vlaneseq
        %v2271 = vshrl.u32 %v2270, 7
        %v2272 = vsub.s32 5, %v2271
        %v2273 = vrot.slane %v2236, %v2272
        %v2280 = vmul.f32 %v2253, %v2237
        %v2281 = vmul.f32 %v2257, %v2238
        %v2282 = vmul.f32 %v2261, %v2239
        %v2283 = vmul.f32 %v2265, %v2240
        %v2284 = vmul.f32 %v2269, %v2241
        %v2285 = vmul.f32 %v2273, %v2242
        %v2286 = vmul.f32 %v2253, %v2243
        %v2287 = vmul.f32 %v2257, %v2244
        %v2288 = vmul.f32 %v2261, %v2245
        %v2289 = vmul.f32 %v2265, %v2246
        %v2290 = vmul.f32 %v2269, %v2247
        %v2291 = vmul.f32 %v2273, %v2248
        %v2292 = vadd.f32 %v2223, %v2280
        %v2293 = vadd.f32 %v2224, %v2281
        %v2294 = vadd.f32 %v2225, %v2282
        %v2295 = vadd.f32 %v2226, %v2283
        %v2296 = vadd.f32 %v2227, %v2284
        %v2297 = vadd.f32 %v2228, %v2285
        %v2298 = vadd.f32 %v2229, %v2286
        %v2299 = vadd.f32 %v2230, %v2287
        %v2300 = vadd.f32 %v2231, %v2288
        %v2301 = vadd.f32 %v2232, %v2289
        %v2302 = vadd.f32 %v2233, %v2290
        %v2303 = vadd.f32 %v2234, %v2291
        %s2304 = scalar_lea.vmem %s208, 360
        %v2305 = vld [vmem:[%s2304] ss:$2 sm:$0x3f]
        %v2306 = vld [vmem:[%s175 + $0x5a0] sm:$0xff]
        %v2307 = vld [vmem:[%s175 + $0x5a8] sm:$0xff]
        %v2308 = vld [vmem:[%s175 + $0x5b0] sm:$0xff]
        %v2309 = vld [vmem:[%s175 + $0x5b8] sm:$0xff]
        %v2310 = vld [vmem:[%s175 + $0x5c0] sm:$0xff]
        %v2311 = vld [vmem:[%s175 + $0x5c8] sm:$0xff]
        %v2312 = vld [vmem:[%s175 + $0xed0] sm:$0x1]
        %v2313 = vld [vmem:[%s175 + $0xed8] sm:$0x1]
        %v2314 = vld [vmem:[%s175 + $0xee0] sm:$0x1]
        %v2315 = vld [vmem:[%s175 + $0xee8] sm:$0x1]
        %v2316 = vld [vmem:[%s175 + $0xef0] sm:$0x1]
        %v2317 = vld [vmem:[%s175 + $0xef8] sm:$0x1]
        %v2319 = vlaneseq
        %v2320 = vshrl.u32 %v2319, 7
        %v2321 = vsub.s32 0, %v2320
        %v2322 = vrot.slane %v2305, %v2321
        %v2323 = vlaneseq
        %v2324 = vshrl.u32 %v2323, 7
        %v2325 = vsub.s32 1, %v2324
        %v2326 = vrot.slane %v2305, %v2325
        %v2327 = vlaneseq
        %v2328 = vshrl.u32 %v2327, 7
        %v2329 = vsub.s32 2, %v2328
        %v2330 = vrot.slane %v2305, %v2329
        %v2331 = vlaneseq
        %v2332 = vshrl.u32 %v2331, 7
        %v2333 = vsub.s32 3, %v2332
        %v2334 = vrot.slane %v2305, %v2333
        %v2335 = vlaneseq
        %v2336 = vshrl.u32 %v2335, 7
        %v2337 = vsub.s32 4, %v2336
        %v2338 = vrot.slane %v2305, %v2337
        %v2339 = vlaneseq
        %v2340 = vshrl.u32 %v2339, 7
        %v2341 = vsub.s32 5, %v2340
        %v2342 = vrot.slane %v2305, %v2341
        %v2349 = vmul.f32 %v2322, %v2306
        %v2350 = vmul.f32 %v2326, %v2307
        %v2351 = vmul.f32 %v2330, %v2308
        %v2352 = vmul.f32 %v2334, %v2309
        %v2353 = vmul.f32 %v2338, %v2310
        %v2354 = vmul.f32 %v2342, %v2311
        %v2355 = vmul.f32 %v2322, %v2312
        %v2356 = vmul.f32 %v2326, %v2313
        %v2357 = vmul.f32 %v2330, %v2314
        %v2358 = vmul.f32 %v2334, %v2315
        %v2359 = vmul.f32 %v2338, %v2316
        %v2360 = vmul.f32 %v2342, %v2317
        %v2361 = vadd.f32 %v2292, %v2349
        %v2362 = vadd.f32 %v2293, %v2350
        %v2363 = vadd.f32 %v2294, %v2351
        %v2364 = vadd.f32 %v2295, %v2352
        %v2365 = vadd.f32 %v2296, %v2353
        %v2366 = vadd.f32 %v2297, %v2354
        %v2367 = vadd.f32 %v2298, %v2355
        %v2368 = vadd.f32 %v2299, %v2356
        %v2369 = vadd.f32 %v2300, %v2357
        %v2370 = vadd.f32 %v2301, %v2358
        %v2371 = vadd.f32 %v2302, %v2359
        %v2372 = vadd.f32 %v2303, %v2360
        %s2373 = scalar_lea.vmem %s208, 372
        %v2374 = vld [vmem:[%s2373] ss:$2 sm:$0x3f]
        %v2375 = vld [vmem:[%s175 + $0x5d0] sm:$0xff]
        %v2376 = vld [vmem:[%s175 + $0x5d8] sm:$0xff]
        %v2377 = vld [vmem:[%s175 + $0x5e0] sm:$0xff]
        %v2378 = vld [vmem:[%s175 + $0x5e8] sm:$0xff]
        %v2379 = vld [vmem:[%s175 + $0x5f0] sm:$0xff]
        %v2380 = vld [vmem:[%s175 + $0x5f8] sm:$0xff]
        %v2381 = vld [vmem:[%s175 + $0xf00] sm:$0x1]
        %v2382 = vld [vmem:[%s175 + $0xf08] sm:$0x1]
        %v2383 = vld [vmem:[%s175 + $0xf10] sm:$0x1]
        %v2384 = vld [vmem:[%s175 + $0xf18] sm:$0x1]
        %v2385 = vld [vmem:[%s175 + $0xf20] sm:$0x1]
        %v2386 = vld [vmem:[%s175 + $0xf28] sm:$0x1]
        %v2388 = vlaneseq
        %v2389 = vshrl.u32 %v2388, 7
        %v2390 = vsub.s32 0, %v2389
        %v2391 = vrot.slane %v2374, %v2390
        %v2392 = vlaneseq
        %v2393 = vshrl.u32 %v2392, 7
        %v2394 = vsub.s32 1, %v2393
        %v2395 = vrot.slane %v2374, %v2394
        %v2396 = vlaneseq
        %v2397 = vshrl.u32 %v2396, 7
        %v2398 = vsub.s32 2, %v2397
        %v2399 = vrot.slane %v2374, %v2398
        %v2400 = vlaneseq
        %v2401 = vshrl.u32 %v2400, 7
        %v2402 = vsub.s32 3, %v2401
        %v2403 = vrot.slane %v2374, %v2402
        %v2404 = vlaneseq
        %v2405 = vshrl.u32 %v2404, 7
        %v2406 = vsub.s32 4, %v2405
        %v2407 = vrot.slane %v2374, %v2406
        %v2408 = vlaneseq
        %v2409 = vshrl.u32 %v2408, 7
        %v2410 = vsub.s32 5, %v2409
        %v2411 = vrot.slane %v2374, %v2410
        %v2418 = vmul.f32 %v2391, %v2375
        %v2419 = vmul.f32 %v2395, %v2376
        %v2420 = vmul.f32 %v2399, %v2377
        %v2421 = vmul.f32 %v2403, %v2378
        %v2422 = vmul.f32 %v2407, %v2379
        %v2423 = vmul.f32 %v2411, %v2380
        %v2424 = vmul.f32 %v2391, %v2381
        %v2425 = vmul.f32 %v2395, %v2382
        %v2426 = vmul.f32 %v2399, %v2383
        %v2427 = vmul.f32 %v2403, %v2384
        %v2428 = vmul.f32 %v2407, %v2385
        %v2429 = vmul.f32 %v2411, %v2386
        %v2430 = vadd.f32 %v2361, %v2418
        %v2431 = vadd.f32 %v2362, %v2419
        %v2432 = vadd.f32 %v2363, %v2420
        %v2433 = vadd.f32 %v2364, %v2421
        %v2434 = vadd.f32 %v2365, %v2422
        %v2435 = vadd.f32 %v2366, %v2423
        %v2436 = vadd.f32 %v2367, %v2424
        %v2437 = vadd.f32 %v2368, %v2425
        %v2438 = vadd.f32 %v2369, %v2426
        %v2439 = vadd.f32 %v2370, %v2427
        %v2440 = vadd.f32 %v2371, %v2428
        %v2441 = vadd.f32 %v2372, %v2429
        %s2442 = scalar_lea.vmem %s208, 384
        %v2443 = vld [vmem:[%s2442] ss:$2 sm:$0x3f]
        %v2444 = vld [vmem:[%s175 + $0x600] sm:$0xff]
        %v2445 = vld [vmem:[%s175 + $0x608] sm:$0xff]
        %v2446 = vld [vmem:[%s175 + $0x610] sm:$0xff]
        %v2447 = vld [vmem:[%s175 + $0x618] sm:$0xff]
        %v2448 = vld [vmem:[%s175 + $0x620] sm:$0xff]
        %v2449 = vld [vmem:[%s175 + $0x628] sm:$0xff]
        %v2450 = vld [vmem:[%s175 + $0xf30] sm:$0x1]
        %v2451 = vld [vmem:[%s175 + $0xf38] sm:$0x1]
        %v2452 = vld [vmem:[%s175 + $0xf40] sm:$0x1]
        %v2453 = vld [vmem:[%s175 + $0xf48] sm:$0x1]
        %v2454 = vld [vmem:[%s175 + $0xf50] sm:$0x1]
        %v2455 = vld [vmem:[%s175 + $0xf58] sm:$0x1]
        %v2457 = vlaneseq
        %v2458 = vshrl.u32 %v2457, 7
        %v2459 = vsub.s32 0, %v2458
        %v2460 = vrot.slane %v2443, %v2459
        %v2461 = vlaneseq
        %v2462 = vshrl.u32 %v2461, 7
        %v2463 = vsub.s32 1, %v2462
        %v2464 = vrot.slane %v2443, %v2463
        %v2465 = vlaneseq
        %v2466 = vshrl.u32 %v2465, 7
        %v2467 = vsub.s32 2, %v2466
        %v2468 = vrot.slane %v2443, %v2467
        %v2469 = vlaneseq
        %v2470 = vshrl.u32 %v2469, 7
        %v2471 = vsub.s32 3, %v2470
        %v2472 = vrot.slane %v2443, %v2471
        %v2473 = vlaneseq
        %v2474 = vshrl.u32 %v2473, 7
        %v2475 = vsub.s32 4, %v2474
        %v2476 = vrot.slane %v2443, %v2475
        %v2477 = vlaneseq
        %v2478 = vshrl.u32 %v2477, 7
        %v2479 = vsub.s32 5, %v2478
        %v2480 = vrot.slane %v2443, %v2479
        %v2487 = vmul.f32 %v2460, %v2444
        %v2488 = vmul.f32 %v2464, %v2445
        %v2489 = vmul.f32 %v2468, %v2446
        %v2490 = vmul.f32 %v2472, %v2447
        %v2491 = vmul.f32 %v2476, %v2448
        %v2492 = vmul.f32 %v2480, %v2449
        %v2493 = vmul.f32 %v2460, %v2450
        %v2494 = vmul.f32 %v2464, %v2451
        %v2495 = vmul.f32 %v2468, %v2452
        %v2496 = vmul.f32 %v2472, %v2453
        %v2497 = vmul.f32 %v2476, %v2454
        %v2498 = vmul.f32 %v2480, %v2455
        %v2499 = vadd.f32 %v2430, %v2487
        %v2500 = vadd.f32 %v2431, %v2488
        %v2501 = vadd.f32 %v2432, %v2489
        %v2502 = vadd.f32 %v2433, %v2490
        %v2503 = vadd.f32 %v2434, %v2491
        %v2504 = vadd.f32 %v2435, %v2492
        %v2505 = vadd.f32 %v2436, %v2493
        %v2506 = vadd.f32 %v2437, %v2494
        %v2507 = vadd.f32 %v2438, %v2495
        %v2508 = vadd.f32 %v2439, %v2496
        %v2509 = vadd.f32 %v2440, %v2497
        %v2510 = vadd.f32 %v2441, %v2498
        %s2511 = scalar_lea.vmem %s208, 396
        %v2512 = vld [vmem:[%s2511] ss:$2 sm:$0x3f]
        %v2513 = vld [vmem:[%s175 + $0x630] sm:$0xff]
        %v2514 = vld [vmem:[%s175 + $0x638] sm:$0xff]
        %v2515 = vld [vmem:[%s175 + $0x640] sm:$0xff]
        %v2516 = vld [vmem:[%s175 + $0x648] sm:$0xff]
        %v2517 = vld [vmem:[%s175 + $0x650] sm:$0xff]
        %v2518 = vld [vmem:[%s175 + $0x658] sm:$0xff]
        %v2519 = vld [vmem:[%s175 + $0xf60] sm:$0x1]
        %v2520 = vld [vmem:[%s175 + $0xf68] sm:$0x1]
        %v2521 = vld [vmem:[%s175 + $0xf70] sm:$0x1]
        %v2522 = vld [vmem:[%s175 + $0xf78] sm:$0x1]
        %v2523 = vld [vmem:[%s175 + $0xf80] sm:$0x1]
        %v2524 = vld [vmem:[%s175 + $0xf88] sm:$0x1]
        %v2526 = vlaneseq
        %v2527 = vshrl.u32 %v2526, 7
        %v2528 = vsub.s32 0, %v2527
        %v2529 = vrot.slane %v2512, %v2528
        %v2530 = vlaneseq
        %v2531 = vshrl.u32 %v2530, 7
        %v2532 = vsub.s32 1, %v2531
        %v2533 = vrot.slane %v2512, %v2532
        %v2534 = vlaneseq
        %v2535 = vshrl.u32 %v2534, 7
        %v2536 = vsub.s32 2, %v2535
        %v2537 = vrot.slane %v2512, %v2536
        %v2538 = vlaneseq
        %v2539 = vshrl.u32 %v2538, 7
        %v2540 = vsub.s32 3, %v2539
        %v2541 = vrot.slane %v2512, %v2540
        %v2542 = vlaneseq
        %v2543 = vshrl.u32 %v2542, 7
        %v2544 = vsub.s32 4, %v2543
        %v2545 = vrot.slane %v2512, %v2544
        %v2546 = vlaneseq
        %v2547 = vshrl.u32 %v2546, 7
        %v2548 = vsub.s32 5, %v2547
        %v2549 = vrot.slane %v2512, %v2548
        %v2556 = vmul.f32 %v2529, %v2513
        %v2557 = vmul.f32 %v2533, %v2514
        %v2558 = vmul.f32 %v2537, %v2515
        %v2559 = vmul.f32 %v2541, %v2516
        %v2560 = vmul.f32 %v2545, %v2517
        %v2561 = vmul.f32 %v2549, %v2518
        %v2562 = vmul.f32 %v2529, %v2519
        %v2563 = vmul.f32 %v2533, %v2520
        %v2564 = vmul.f32 %v2537, %v2521
        %v2565 = vmul.f32 %v2541, %v2522
        %v2566 = vmul.f32 %v2545, %v2523
        %v2567 = vmul.f32 %v2549, %v2524
        %v2568 = vadd.f32 %v2499, %v2556
        %v2569 = vadd.f32 %v2500, %v2557
        %v2570 = vadd.f32 %v2501, %v2558
        %v2571 = vadd.f32 %v2502, %v2559
        %v2572 = vadd.f32 %v2503, %v2560
        %v2573 = vadd.f32 %v2504, %v2561
        %v2574 = vadd.f32 %v2505, %v2562
        %v2575 = vadd.f32 %v2506, %v2563
        %v2576 = vadd.f32 %v2507, %v2564
        %v2577 = vadd.f32 %v2508, %v2565
        %v2578 = vadd.f32 %v2509, %v2566
        %v2579 = vadd.f32 %v2510, %v2567
        %s2580 = scalar_lea.vmem %s208, 408
        %v2581 = vld [vmem:[%s2580] ss:$2 sm:$0x3f]
        %v2582 = vld [vmem:[%s175 + $0x660] sm:$0xff]
        %v2583 = vld [vmem:[%s175 + $0x668] sm:$0xff]
        %v2584 = vld [vmem:[%s175 + $0x670] sm:$0xff]
        %v2585 = vld [vmem:[%s175 + $0x678] sm:$0xff]
        %v2586 = vld [vmem:[%s175 + $0x680] sm:$0xff]
        %v2587 = vld [vmem:[%s175 + $0x688] sm:$0xff]
        %v2588 = vld [vmem:[%s175 + $0xf90] sm:$0x1]
        %v2589 = vld [vmem:[%s175 + $0xf98] sm:$0x1]
        %v2590 = vld [vmem:[%s175 + $0xfa0] sm:$0x1]
        %v2591 = vld [vmem:[%s175 + $0xfa8] sm:$0x1]
        %v2592 = vld [vmem:[%s175 + $0xfb0] sm:$0x1]
        %v2593 = vld [vmem:[%s175 + $0xfb8] sm:$0x1]
        %v2595 = vlaneseq
        %v2596 = vshrl.u32 %v2595, 7
        %v2597 = vsub.s32 0, %v2596
        %v2598 = vrot.slane %v2581, %v2597
        %v2599 = vlaneseq
        %v2600 = vshrl.u32 %v2599, 7
        %v2601 = vsub.s32 1, %v2600
        %v2602 = vrot.slane %v2581, %v2601
        %v2603 = vlaneseq
        %v2604 = vshrl.u32 %v2603, 7
        %v2605 = vsub.s32 2, %v2604
        %v2606 = vrot.slane %v2581, %v2605
        %v2607 = vlaneseq
        %v2608 = vshrl.u32 %v2607, 7
        %v2609 = vsub.s32 3, %v2608
        %v2610 = vrot.slane %v2581, %v2609
        %v2611 = vlaneseq
        %v2612 = vshrl.u32 %v2611, 7
        %v2613 = vsub.s32 4, %v2612
        %v2614 = vrot.slane %v2581, %v2613
        %v2615 = vlaneseq
        %v2616 = vshrl.u32 %v2615, 7
        %v2617 = vsub.s32 5, %v2616
        %v2618 = vrot.slane %v2581, %v2617
        %v2625 = vmul.f32 %v2598, %v2582
        %v2626 = vmul.f32 %v2602, %v2583
        %v2627 = vmul.f32 %v2606, %v2584
        %v2628 = vmul.f32 %v2610, %v2585
        %v2629 = vmul.f32 %v2614, %v2586
        %v2630 = vmul.f32 %v2618, %v2587
        %v2631 = vmul.f32 %v2598, %v2588
        %v2632 = vmul.f32 %v2602, %v2589
        %v2633 = vmul.f32 %v2606, %v2590
        %v2634 = vmul.f32 %v2610, %v2591
        %v2635 = vmul.f32 %v2614, %v2592
        %v2636 = vmul.f32 %v2618, %v2593
        %v2637 = vadd.f32 %v2568, %v2625
        %v2638 = vadd.f32 %v2569, %v2626
        %v2639 = vadd.f32 %v2570, %v2627
        %v2640 = vadd.f32 %v2571, %v2628
        %v2641 = vadd.f32 %v2572, %v2629
        %v2642 = vadd.f32 %v2573, %v2630
        %v2643 = vadd.f32 %v2574, %v2631
        %v2644 = vadd.f32 %v2575, %v2632
        %v2645 = vadd.f32 %v2576, %v2633
        %v2646 = vadd.f32 %v2577, %v2634
        %v2647 = vadd.f32 %v2578, %v2635
        %v2648 = vadd.f32 %v2579, %v2636
        %s2649 = scalar_lea.vmem %s208, 420
        %v2650 = vld [vmem:[%s2649] ss:$2 sm:$0x3f]
        %v2651 = vld [vmem:[%s175 + $0x690] sm:$0xff]
        %v2652 = vld [vmem:[%s175 + $0x698] sm:$0xff]
        %v2653 = vld [vmem:[%s175 + $0x6a0] sm:$0xff]
        %v2654 = vld [vmem:[%s175 + $0x6a8] sm:$0xff]
        %v2655 = vld [vmem:[%s175 + $0x6b0] sm:$0xff]
        %v2656 = vld [vmem:[%s175 + $0x6b8] sm:$0xff]
        %v2657 = vld [vmem:[%s175 + $0xfc0] sm:$0x1]
        %v2658 = vld [vmem:[%s175 + $0xfc8] sm:$0x1]
        %v2659 = vld [vmem:[%s175 + $0xfd0] sm:$0x1]
        %v2660 = vld [vmem:[%s175 + $0xfd8] sm:$0x1]
        %v2661 = vld [vmem:[%s175 + $0xfe0] sm:$0x1]
        %v2662 = vld [vmem:[%s175 + $0xfe8] sm:$0x1]
        %v2664 = vlaneseq
        %v2665 = vshrl.u32 %v2664, 7
        %v2666 = vsub.s32 0, %v2665
        %v2667 = vrot.slane %v2650, %v2666
        %v2668 = vlaneseq
        %v2669 = vshrl.u32 %v2668, 7
        %v2670 = vsub.s32 1, %v2669
        %v2671 = vrot.slane %v2650, %v2670
        %v2672 = vlaneseq
        %v2673 = vshrl.u32 %v2672, 7
        %v2674 = vsub.s32 2, %v2673
        %v2675 = vrot.slane %v2650, %v2674
        %v2676 = vlaneseq
        %v2677 = vshrl.u32 %v2676, 7
        %v2678 = vsub.s32 3, %v2677
        %v2679 = vrot.slane %v2650, %v2678
        %v2680 = vlaneseq
        %v2681 = vshrl.u32 %v2680, 7
        %v2682 = vsub.s32 4, %v2681
        %v2683 = vrot.slane %v2650, %v2682
        %v2684 = vlaneseq
        %v2685 = vshrl.u32 %v2684, 7
        %v2686 = vsub.s32 5, %v2685
        %v2687 = vrot.slane %v2650, %v2686
        %v2694 = vmul.f32 %v2667, %v2651
        %v2695 = vmul.f32 %v2671, %v2652
        %v2696 = vmul.f32 %v2675, %v2653
        %v2697 = vmul.f32 %v2679, %v2654
        %v2698 = vmul.f32 %v2683, %v2655
        %v2699 = vmul.f32 %v2687, %v2656
        %v2700 = vmul.f32 %v2667, %v2657
        %v2701 = vmul.f32 %v2671, %v2658
        %v2702 = vmul.f32 %v2675, %v2659
        %v2703 = vmul.f32 %v2679, %v2660
        %v2704 = vmul.f32 %v2683, %v2661
        %v2705 = vmul.f32 %v2687, %v2662
        %v2706 = vadd.f32 %v2637, %v2694
        %v2707 = vadd.f32 %v2638, %v2695
        %v2708 = vadd.f32 %v2639, %v2696
        %v2709 = vadd.f32 %v2640, %v2697
        %v2710 = vadd.f32 %v2641, %v2698
        %v2711 = vadd.f32 %v2642, %v2699
        %v2712 = vadd.f32 %v2643, %v2700
        %v2713 = vadd.f32 %v2644, %v2701
        %v2714 = vadd.f32 %v2645, %v2702
        %v2715 = vadd.f32 %v2646, %v2703
        %v2716 = vadd.f32 %v2647, %v2704
        %v2717 = vadd.f32 %v2648, %v2705
        %s2718 = scalar_lea.vmem %s208, 432
        %v2719 = vld [vmem:[%s2718] ss:$2 sm:$0x3f]
        %v2720 = vld [vmem:[%s175 + $0x6c0] sm:$0xff]
        %v2721 = vld [vmem:[%s175 + $0x6c8] sm:$0xff]
        %v2722 = vld [vmem:[%s175 + $0x6d0] sm:$0xff]
        %v2723 = vld [vmem:[%s175 + $0x6d8] sm:$0xff]
        %v2724 = vld [vmem:[%s175 + $0x6e0] sm:$0xff]
        %v2725 = vld [vmem:[%s175 + $0x6e8] sm:$0xff]
        %v2726 = vld [vmem:[%s175 + $0xff0] sm:$0x1]
        %v2727 = vld [vmem:[%s175 + $0xff8] sm:$0x1]
        %v2728 = vld [vmem:[%s175 + $0x1000] sm:$0x1]
        %v2729 = vld [vmem:[%s175 + $0x1008] sm:$0x1]
        %v2730 = vld [vmem:[%s175 + $0x1010] sm:$0x1]
        %v2731 = vld [vmem:[%s175 + $0x1018] sm:$0x1]
        %v2733 = vlaneseq
        %v2734 = vshrl.u32 %v2733, 7
        %v2735 = vsub.s32 0, %v2734
        %v2736 = vrot.slane %v2719, %v2735
        %v2737 = vlaneseq
        %v2738 = vshrl.u32 %v2737, 7
        %v2739 = vsub.s32 1, %v2738
        %v2740 = vrot.slane %v2719, %v2739
        %v2741 = vlaneseq
        %v2742 = vshrl.u32 %v2741, 7
        %v2743 = vsub.s32 2, %v2742
        %v2744 = vrot.slane %v2719, %v2743
        %v2745 = vlaneseq
        %v2746 = vshrl.u32 %v2745, 7
        %v2747 = vsub.s32 3, %v2746
        %v2748 = vrot.slane %v2719, %v2747
        %v2749 = vlaneseq
        %v2750 = vshrl.u32 %v2749, 7
        %v2751 = vsub.s32 4, %v2750
        %v2752 = vrot.slane %v2719, %v2751
        %v2753 = vlaneseq
        %v2754 = vshrl.u32 %v2753, 7
        %v2755 = vsub.s32 5, %v2754
        %v2756 = vrot.slane %v2719, %v2755
        %v2763 = vmul.f32 %v2736, %v2720
        %v2764 = vmul.f32 %v2740, %v2721
        %v2765 = vmul.f32 %v2744, %v2722
        %v2766 = vmul.f32 %v2748, %v2723
        %v2767 = vmul.f32 %v2752, %v2724
        %v2768 = vmul.f32 %v2756, %v2725
        %v2769 = vmul.f32 %v2736, %v2726
        %v2770 = vmul.f32 %v2740, %v2727
        %v2771 = vmul.f32 %v2744, %v2728
        %v2772 = vmul.f32 %v2748, %v2729
        %v2773 = vmul.f32 %v2752, %v2730
        %v2774 = vmul.f32 %v2756, %v2731
        %v2775 = vadd.f32 %v2706, %v2763
        %v2776 = vadd.f32 %v2707, %v2764
        %v2777 = vadd.f32 %v2708, %v2765
        %v2778 = vadd.f32 %v2709, %v2766
        %v2779 = vadd.f32 %v2710, %v2767
        %v2780 = vadd.f32 %v2711, %v2768
        %v2781 = vadd.f32 %v2712, %v2769
        %v2782 = vadd.f32 %v2713, %v2770
        %v2783 = vadd.f32 %v2714, %v2771
        %v2784 = vadd.f32 %v2715, %v2772
        %v2785 = vadd.f32 %v2716, %v2773
        %v2786 = vadd.f32 %v2717, %v2774
        %s2787 = scalar_lea.vmem %s208, 444
        %v2788 = vld [vmem:[%s2787] ss:$2 sm:$0x3f]
        %v2789 = vld [vmem:[%s175 + $0x6f0] sm:$0xff]
        %v2790 = vld [vmem:[%s175 + $0x6f8] sm:$0xff]
        %v2791 = vld [vmem:[%s175 + $0x700] sm:$0xff]
        %v2792 = vld [vmem:[%s175 + $0x708] sm:$0xff]
        %v2793 = vld [vmem:[%s175 + $0x710] sm:$0xff]
        %v2794 = vld [vmem:[%s175 + $0x718] sm:$0xff]
        %v2795 = vld [vmem:[%s175 + $0x1020] sm:$0x1]
        %v2796 = vld [vmem:[%s175 + $0x1028] sm:$0x1]
        %v2797 = vld [vmem:[%s175 + $0x1030] sm:$0x1]
        %v2798 = vld [vmem:[%s175 + $0x1038] sm:$0x1]
        %v2799 = vld [vmem:[%s175 + $0x1040] sm:$0x1]
        %v2800 = vld [vmem:[%s175 + $0x1048] sm:$0x1]
        %v2802 = vlaneseq
        %v2803 = vshrl.u32 %v2802, 7
        %v2804 = vsub.s32 0, %v2803
        %v2805 = vrot.slane %v2788, %v2804
        %v2806 = vlaneseq
        %v2807 = vshrl.u32 %v2806, 7
        %v2808 = vsub.s32 1, %v2807
        %v2809 = vrot.slane %v2788, %v2808
        %v2810 = vlaneseq
        %v2811 = vshrl.u32 %v2810, 7
        %v2812 = vsub.s32 2, %v2811
        %v2813 = vrot.slane %v2788, %v2812
        %v2814 = vlaneseq
        %v2815 = vshrl.u32 %v2814, 7
        %v2816 = vsub.s32 3, %v2815
        %v2817 = vrot.slane %v2788, %v2816
        %v2818 = vlaneseq
        %v2819 = vshrl.u32 %v2818, 7
        %v2820 = vsub.s32 4, %v2819
        %v2821 = vrot.slane %v2788, %v2820
        %v2822 = vlaneseq
        %v2823 = vshrl.u32 %v2822, 7
        %v2824 = vsub.s32 5, %v2823
        %v2825 = vrot.slane %v2788, %v2824
        %v2832 = vmul.f32 %v2805, %v2789
        %v2833 = vmul.f32 %v2809, %v2790
        %v2834 = vmul.f32 %v2813, %v2791
        %v2835 = vmul.f32 %v2817, %v2792
        %v2836 = vmul.f32 %v2821, %v2793
        %v2837 = vmul.f32 %v2825, %v2794
        %v2838 = vmul.f32 %v2805, %v2795
        %v2839 = vmul.f32 %v2809, %v2796
        %v2840 = vmul.f32 %v2813, %v2797
        %v2841 = vmul.f32 %v2817, %v2798
        %v2842 = vmul.f32 %v2821, %v2799
        %v2843 = vmul.f32 %v2825, %v2800
        %v2844 = vadd.f32 %v2775, %v2832
        %v2845 = vadd.f32 %v2776, %v2833
        %v2846 = vadd.f32 %v2777, %v2834
        %v2847 = vadd.f32 %v2778, %v2835
        %v2848 = vadd.f32 %v2779, %v2836
        %v2849 = vadd.f32 %v2780, %v2837
        %v2850 = vadd.f32 %v2781, %v2838
        %v2851 = vadd.f32 %v2782, %v2839
        %v2852 = vadd.f32 %v2783, %v2840
        %v2853 = vadd.f32 %v2784, %v2841
        %v2854 = vadd.f32 %v2785, %v2842
        %v2855 = vadd.f32 %v2786, %v2843
        %s2856 = scalar_lea.vmem %s208, 456
        %v2857 = vld [vmem:[%s2856] ss:$2 sm:$0x3f]
        %v2858 = vld [vmem:[%s175 + $0x720] sm:$0xff]
        %v2859 = vld [vmem:[%s175 + $0x728] sm:$0xff]
        %v2860 = vld [vmem:[%s175 + $0x730] sm:$0xff]
        %v2861 = vld [vmem:[%s175 + $0x738] sm:$0xff]
        %v2862 = vld [vmem:[%s175 + $0x740] sm:$0xff]
        %v2863 = vld [vmem:[%s175 + $0x748] sm:$0xff]
        %v2864 = vld [vmem:[%s175 + $0x1050] sm:$0x1]
        %v2865 = vld [vmem:[%s175 + $0x1058] sm:$0x1]
        %v2866 = vld [vmem:[%s175 + $0x1060] sm:$0x1]
        %v2867 = vld [vmem:[%s175 + $0x1068] sm:$0x1]
        %v2868 = vld [vmem:[%s175 + $0x1070] sm:$0x1]
        %v2869 = vld [vmem:[%s175 + $0x1078] sm:$0x1]
        %v2871 = vlaneseq
        %v2872 = vshrl.u32 %v2871, 7
        %v2873 = vsub.s32 0, %v2872
        %v2874 = vrot.slane %v2857, %v2873
        %v2875 = vlaneseq
        %v2876 = vshrl.u32 %v2875, 7
        %v2877 = vsub.s32 1, %v2876
        %v2878 = vrot.slane %v2857, %v2877
        %v2879 = vlaneseq
        %v2880 = vshrl.u32 %v2879, 7
        %v2881 = vsub.s32 2, %v2880
        %v2882 = vrot.slane %v2857, %v2881
        %v2883 = vlaneseq
        %v2884 = vshrl.u32 %v2883, 7
        %v2885 = vsub.s32 3, %v2884
        %v2886 = vrot.slane %v2857, %v2885
        %v2887 = vlaneseq
        %v2888 = vshrl.u32 %v2887, 7
        %v2889 = vsub.s32 4, %v2888
        %v2890 = vrot.slane %v2857, %v2889
        %v2891 = vlaneseq
        %v2892 = vshrl.u32 %v2891, 7
        %v2893 = vsub.s32 5, %v2892
        %v2894 = vrot.slane %v2857, %v2893
        %v2901 = vmul.f32 %v2874, %v2858
        %v2902 = vmul.f32 %v2878, %v2859
        %v2903 = vmul.f32 %v2882, %v2860
        %v2904 = vmul.f32 %v2886, %v2861
        %v2905 = vmul.f32 %v2890, %v2862
        %v2906 = vmul.f32 %v2894, %v2863
        %v2907 = vmul.f32 %v2874, %v2864
        %v2908 = vmul.f32 %v2878, %v2865
        %v2909 = vmul.f32 %v2882, %v2866
        %v2910 = vmul.f32 %v2886, %v2867
        %v2911 = vmul.f32 %v2890, %v2868
        %v2912 = vmul.f32 %v2894, %v2869
        %v2913 = vadd.f32 %v2844, %v2901
        %v2914 = vadd.f32 %v2845, %v2902
        %v2915 = vadd.f32 %v2846, %v2903
        %v2916 = vadd.f32 %v2847, %v2904
        %v2917 = vadd.f32 %v2848, %v2905
        %v2918 = vadd.f32 %v2849, %v2906
        %v2919 = vadd.f32 %v2850, %v2907
        %v2920 = vadd.f32 %v2851, %v2908
        %v2921 = vadd.f32 %v2852, %v2909
        %v2922 = vadd.f32 %v2853, %v2910
        %v2923 = vadd.f32 %v2854, %v2911
        %v2924 = vadd.f32 %v2855, %v2912
        %s2925 = scalar_lea.vmem %s208, 468
        %v2926 = vld [vmem:[%s2925] ss:$2 sm:$0x3f]
        %v2927 = vld [vmem:[%s175 + $0x750] sm:$0xff]
        %v2928 = vld [vmem:[%s175 + $0x758] sm:$0xff]
        %v2929 = vld [vmem:[%s175 + $0x760] sm:$0xff]
        %v2930 = vld [vmem:[%s175 + $0x768] sm:$0xff]
        %v2931 = vld [vmem:[%s175 + $0x770] sm:$0xff]
        %v2932 = vld [vmem:[%s175 + $0x778] sm:$0xff]
        %v2933 = vld [vmem:[%s175 + $0x1080] sm:$0x1]
        %v2934 = vld [vmem:[%s175 + $0x1088] sm:$0x1]
        %v2935 = vld [vmem:[%s175 + $0x1090] sm:$0x1]
        %v2936 = vld [vmem:[%s175 + $0x1098] sm:$0x1]
        %v2937 = vld [vmem:[%s175 + $0x10a0] sm:$0x1]
        %v2938 = vld [vmem:[%s175 + $0x10a8] sm:$0x1]
        %v2940 = vlaneseq
        %v2941 = vshrl.u32 %v2940, 7
        %v2942 = vsub.s32 0, %v2941
        %v2943 = vrot.slane %v2926, %v2942
        %v2944 = vlaneseq
        %v2945 = vshrl.u32 %v2944, 7
        %v2946 = vsub.s32 1, %v2945
        %v2947 = vrot.slane %v2926, %v2946
        %v2948 = vlaneseq
        %v2949 = vshrl.u32 %v2948, 7
        %v2950 = vsub.s32 2, %v2949
        %v2951 = vrot.slane %v2926, %v2950
        %v2952 = vlaneseq
        %v2953 = vshrl.u32 %v2952, 7
        %v2954 = vsub.s32 3, %v2953
        %v2955 = vrot.slane %v2926, %v2954
        %v2956 = vlaneseq
        %v2957 = vshrl.u32 %v2956, 7
        %v2958 = vsub.s32 4, %v2957
        %v2959 = vrot.slane %v2926, %v2958
        %v2960 = vlaneseq
        %v2961 = vshrl.u32 %v2960, 7
        %v2962 = vsub.s32 5, %v2961
        %v2963 = vrot.slane %v2926, %v2962
        %v2970 = vmul.f32 %v2943, %v2927
        %v2971 = vmul.f32 %v2947, %v2928
        %v2972 = vmul.f32 %v2951, %v2929
        %v2973 = vmul.f32 %v2955, %v2930
        %v2974 = vmul.f32 %v2959, %v2931
        %v2975 = vmul.f32 %v2963, %v2932
        %v2976 = vmul.f32 %v2943, %v2933
        %v2977 = vmul.f32 %v2947, %v2934
        %v2978 = vmul.f32 %v2951, %v2935
        %v2979 = vmul.f32 %v2955, %v2936
        %v2980 = vmul.f32 %v2959, %v2937
        %v2981 = vmul.f32 %v2963, %v2938
        %v2982 = vadd.f32 %v2913, %v2970
        %v2983 = vadd.f32 %v2914, %v2971
        %v2984 = vadd.f32 %v2915, %v2972
        %v2985 = vadd.f32 %v2916, %v2973
        %v2986 = vadd.f32 %v2917, %v2974
        %v2987 = vadd.f32 %v2918, %v2975
        %v2988 = vadd.f32 %v2919, %v2976
        %v2989 = vadd.f32 %v2920, %v2977
        %v2990 = vadd.f32 %v2921, %v2978
        %v2991 = vadd.f32 %v2922, %v2979
        %v2992 = vadd.f32 %v2923, %v2980
        %v2993 = vadd.f32 %v2924, %v2981
        %s2994 = scalar_lea.vmem %s208, 480
        %v2995 = vld [vmem:[%s2994] ss:$2 sm:$0x3f]
        %v2996 = vld [vmem:[%s175 + $0x780] sm:$0xff]
        %v2997 = vld [vmem:[%s175 + $0x788] sm:$0xff]
        %v2998 = vld [vmem:[%s175 + $0x790] sm:$0xff]
        %v2999 = vld [vmem:[%s175 + $0x798] sm:$0xff]
        %v3000 = vld [vmem:[%s175 + $0x7a0] sm:$0xff]
        %v3001 = vld [vmem:[%s175 + $0x7a8] sm:$0xff]
        %v3002 = vld [vmem:[%s175 + $0x10b0] sm:$0x1]
        %v3003 = vld [vmem:[%s175 + $0x10b8] sm:$0x1]
        %v3004 = vld [vmem:[%s175 + $0x10c0] sm:$0x1]
        %v3005 = vld [vmem:[%s175 + $0x10c8] sm:$0x1]
        %v3006 = vld [vmem:[%s175 + $0x10d0] sm:$0x1]
        %v3007 = vld [vmem:[%s175 + $0x10d8] sm:$0x1]
        %v3009 = vlaneseq
        %v3010 = vshrl.u32 %v3009, 7
        %v3011 = vsub.s32 0, %v3010
        %v3012 = vrot.slane %v2995, %v3011
        %v3013 = vlaneseq
        %v3014 = vshrl.u32 %v3013, 7
        %v3015 = vsub.s32 1, %v3014
        %v3016 = vrot.slane %v2995, %v3015
        %v3017 = vlaneseq
        %v3018 = vshrl.u32 %v3017, 7
        %v3019 = vsub.s32 2, %v3018
        %v3020 = vrot.slane %v2995, %v3019
        %v3021 = vlaneseq
        %v3022 = vshrl.u32 %v3021, 7
        %v3023 = vsub.s32 3, %v3022
        %v3024 = vrot.slane %v2995, %v3023
        %v3025 = vlaneseq
        %v3026 = vshrl.u32 %v3025, 7
        %v3027 = vsub.s32 4, %v3026
        %v3028 = vrot.slane %v2995, %v3027
        %v3029 = vlaneseq
        %v3030 = vshrl.u32 %v3029, 7
        %v3031 = vsub.s32 5, %v3030
        %v3032 = vrot.slane %v2995, %v3031
        %v3039 = vmul.f32 %v3012, %v2996
        %v3040 = vmul.f32 %v3016, %v2997
        %v3041 = vmul.f32 %v3020, %v2998
        %v3042 = vmul.f32 %v3024, %v2999
        %v3043 = vmul.f32 %v3028, %v3000
        %v3044 = vmul.f32 %v3032, %v3001
        %v3045 = vmul.f32 %v3012, %v3002
        %v3046 = vmul.f32 %v3016, %v3003
        %v3047 = vmul.f32 %v3020, %v3004
        %v3048 = vmul.f32 %v3024, %v3005
        %v3049 = vmul.f32 %v3028, %v3006
        %v3050 = vmul.f32 %v3032, %v3007
        %v3051 = vadd.f32 %v2982, %v3039
        %v3052 = vadd.f32 %v2983, %v3040
        %v3053 = vadd.f32 %v2984, %v3041
        %v3054 = vadd.f32 %v2985, %v3042
        %v3055 = vadd.f32 %v2986, %v3043
        %v3056 = vadd.f32 %v2987, %v3044
        %v3057 = vadd.f32 %v2988, %v3045
        %v3058 = vadd.f32 %v2989, %v3046
        %v3059 = vadd.f32 %v2990, %v3047
        %v3060 = vadd.f32 %v2991, %v3048
        %v3061 = vadd.f32 %v2992, %v3049
        %v3062 = vadd.f32 %v2993, %v3050
        %s3063 = scalar_lea.vmem %s208, 492
        %v3064 = vld [vmem:[%s3063] ss:$2 sm:$0x3f]
        %v3065 = vld [vmem:[%s175 + $0x7b0] sm:$0xff]
        %v3066 = vld [vmem:[%s175 + $0x7b8] sm:$0xff]
        %v3067 = vld [vmem:[%s175 + $0x7c0] sm:$0xff]
        %v3068 = vld [vmem:[%s175 + $0x7c8] sm:$0xff]
        %v3069 = vld [vmem:[%s175 + $0x7d0] sm:$0xff]
        %v3070 = vld [vmem:[%s175 + $0x7d8] sm:$0xff]
        %v3071 = vld [vmem:[%s175 + $0x10e0] sm:$0x1]
        %v3072 = vld [vmem:[%s175 + $0x10e8] sm:$0x1]
        %v3073 = vld [vmem:[%s175 + $0x10f0] sm:$0x1]
        %v3074 = vld [vmem:[%s175 + $0x10f8] sm:$0x1]
        %v3075 = vld [vmem:[%s175 + $0x1100] sm:$0x1]
        %v3076 = vld [vmem:[%s175 + $0x1108] sm:$0x1]
        %v3078 = vlaneseq
        %v3079 = vshrl.u32 %v3078, 7
        %v3080 = vsub.s32 0, %v3079
        %v3081 = vrot.slane %v3064, %v3080
        %v3082 = vlaneseq
        %v3083 = vshrl.u32 %v3082, 7
        %v3084 = vsub.s32 1, %v3083
        %v3085 = vrot.slane %v3064, %v3084
        %v3086 = vlaneseq
        %v3087 = vshrl.u32 %v3086, 7
        %v3088 = vsub.s32 2, %v3087
        %v3089 = vrot.slane %v3064, %v3088
        %v3090 = vlaneseq
        %v3091 = vshrl.u32 %v3090, 7
        %v3092 = vsub.s32 3, %v3091
        %v3093 = vrot.slane %v3064, %v3092
        %v3094 = vlaneseq
        %v3095 = vshrl.u32 %v3094, 7
        %v3096 = vsub.s32 4, %v3095
        %v3097 = vrot.slane %v3064, %v3096
        %v3098 = vlaneseq
        %v3099 = vshrl.u32 %v3098, 7
        %v3100 = vsub.s32 5, %v3099
        %v3101 = vrot.slane %v3064, %v3100
        %v3108 = vmul.f32 %v3081, %v3065
        %v3109 = vmul.f32 %v3085, %v3066
        %v3110 = vmul.f32 %v3089, %v3067
        %v3111 = vmul.f32 %v3093, %v3068
        %v3112 = vmul.f32 %v3097, %v3069
        %v3113 = vmul.f32 %v3101, %v3070
        %v3114 = vmul.f32 %v3081, %v3071
        %v3115 = vmul.f32 %v3085, %v3072
        %v3116 = vmul.f32 %v3089, %v3073
        %v3117 = vmul.f32 %v3093, %v3074
        %v3118 = vmul.f32 %v3097, %v3075
        %v3119 = vmul.f32 %v3101, %v3076
        %v3120 = vadd.f32 %v3051, %v3108
        %v3121 = vadd.f32 %v3052, %v3109
        %v3122 = vadd.f32 %v3053, %v3110
        %v3123 = vadd.f32 %v3054, %v3111
        %v3124 = vadd.f32 %v3055, %v3112
        %v3125 = vadd.f32 %v3056, %v3113
        %v3126 = vadd.f32 %v3057, %v3114
        %v3127 = vadd.f32 %v3058, %v3115
        %v3128 = vadd.f32 %v3059, %v3116
        %v3129 = vadd.f32 %v3060, %v3117
        %v3130 = vadd.f32 %v3061, %v3118
        %v3131 = vadd.f32 %v3062, %v3119
        %s3132 = scalar_lea.vmem %s208, 504
        %v3133 = vld [vmem:[%s3132] ss:$2 sm:$0x3f]
        %v3134 = vld [vmem:[%s175 + $0x7e0] sm:$0xff]
        %v3135 = vld [vmem:[%s175 + $0x7e8] sm:$0xff]
        %v3136 = vld [vmem:[%s175 + $0x7f0] sm:$0xff]
        %v3137 = vld [vmem:[%s175 + $0x7f8] sm:$0xff]
        %v3138 = vld [vmem:[%s175 + $0x800] sm:$0xff]
        %v3139 = vld [vmem:[%s175 + $0x808] sm:$0xff]
        %v3140 = vld [vmem:[%s175 + $0x1110] sm:$0x1]
        %v3141 = vld [vmem:[%s175 + $0x1118] sm:$0x1]
        %v3142 = vld [vmem:[%s175 + $0x1120] sm:$0x1]
        %v3143 = vld [vmem:[%s175 + $0x1128] sm:$0x1]
        %v3144 = vld [vmem:[%s175 + $0x1130] sm:$0x1]
        %v3145 = vld [vmem:[%s175 + $0x1138] sm:$0x1]
        %v3147 = vlaneseq
        %v3148 = vshrl.u32 %v3147, 7
        %v3149 = vsub.s32 0, %v3148
        %v3150 = vrot.slane %v3133, %v3149
        %v3151 = vlaneseq
        %v3152 = vshrl.u32 %v3151, 7
        %v3153 = vsub.s32 1, %v3152
        %v3154 = vrot.slane %v3133, %v3153
        %v3155 = vlaneseq
        %v3156 = vshrl.u32 %v3155, 7
        %v3157 = vsub.s32 2, %v3156
        %v3158 = vrot.slane %v3133, %v3157
        %v3159 = vlaneseq
        %v3160 = vshrl.u32 %v3159, 7
        %v3161 = vsub.s32 3, %v3160
        %v3162 = vrot.slane %v3133, %v3161
        %v3163 = vlaneseq
        %v3164 = vshrl.u32 %v3163, 7
        %v3165 = vsub.s32 4, %v3164
        %v3166 = vrot.slane %v3133, %v3165
        %v3167 = vlaneseq
        %v3168 = vshrl.u32 %v3167, 7
        %v3169 = vsub.s32 5, %v3168
        %v3170 = vrot.slane %v3133, %v3169
        %v3177 = vmul.f32 %v3150, %v3134
        %v3178 = vmul.f32 %v3154, %v3135
        %v3179 = vmul.f32 %v3158, %v3136
        %v3180 = vmul.f32 %v3162, %v3137
        %v3181 = vmul.f32 %v3166, %v3138
        %v3182 = vmul.f32 %v3170, %v3139
        %v3183 = vmul.f32 %v3150, %v3140
        %v3184 = vmul.f32 %v3154, %v3141
        %v3185 = vmul.f32 %v3158, %v3142
        %v3186 = vmul.f32 %v3162, %v3143
        %v3187 = vmul.f32 %v3166, %v3144
        %v3188 = vmul.f32 %v3170, %v3145
        %v3189 = vadd.f32 %v3120, %v3177
        %v3190 = vadd.f32 %v3121, %v3178
        %v3191 = vadd.f32 %v3122, %v3179
        %v3192 = vadd.f32 %v3123, %v3180
        %v3193 = vadd.f32 %v3124, %v3181
        %v3194 = vadd.f32 %v3125, %v3182
        %v3195 = vadd.f32 %v3126, %v3183
        %v3196 = vadd.f32 %v3127, %v3184
        %v3197 = vadd.f32 %v3128, %v3185
        %v3198 = vadd.f32 %v3129, %v3186
        %v3199 = vadd.f32 %v3130, %v3187
        %v3200 = vadd.f32 %v3131, %v3188
        %s3201 = scalar_lea.vmem %s208, 516
        %v3202 = vld [vmem:[%s3201] ss:$2 sm:$0x3f]
        %v3203 = vld [vmem:[%s175 + $0x810] sm:$0xff]
        %v3204 = vld [vmem:[%s175 + $0x818] sm:$0xff]
        %v3205 = vld [vmem:[%s175 + $0x820] sm:$0xff]
        %v3206 = vld [vmem:[%s175 + $0x828] sm:$0xff]
        %v3207 = vld [vmem:[%s175 + $0x830] sm:$0xff]
        %v3208 = vld [vmem:[%s175 + $0x838] sm:$0xff]
        %v3209 = vld [vmem:[%s175 + $0x1140] sm:$0x1]
        %v3210 = vld [vmem:[%s175 + $0x1148] sm:$0x1]
        %v3211 = vld [vmem:[%s175 + $0x1150] sm:$0x1]
        %v3212 = vld [vmem:[%s175 + $0x1158] sm:$0x1]
        %v3213 = vld [vmem:[%s175 + $0x1160] sm:$0x1]
        %v3214 = vld [vmem:[%s175 + $0x1168] sm:$0x1]
        %v3216 = vlaneseq
        %v3217 = vshrl.u32 %v3216, 7
        %v3218 = vsub.s32 0, %v3217
        %v3219 = vrot.slane %v3202, %v3218
        %v3220 = vlaneseq
        %v3221 = vshrl.u32 %v3220, 7
        %v3222 = vsub.s32 1, %v3221
        %v3223 = vrot.slane %v3202, %v3222
        %v3224 = vlaneseq
        %v3225 = vshrl.u32 %v3224, 7
        %v3226 = vsub.s32 2, %v3225
        %v3227 = vrot.slane %v3202, %v3226
        %v3228 = vlaneseq
        %v3229 = vshrl.u32 %v3228, 7
        %v3230 = vsub.s32 3, %v3229
        %v3231 = vrot.slane %v3202, %v3230
        %v3232 = vlaneseq
        %v3233 = vshrl.u32 %v3232, 7
        %v3234 = vsub.s32 4, %v3233
        %v3235 = vrot.slane %v3202, %v3234
        %v3236 = vlaneseq
        %v3237 = vshrl.u32 %v3236, 7
        %v3238 = vsub.s32 5, %v3237
        %v3239 = vrot.slane %v3202, %v3238
        %v3246 = vmul.f32 %v3219, %v3203
        %v3247 = vmul.f32 %v3223, %v3204
        %v3248 = vmul.f32 %v3227, %v3205
        %v3249 = vmul.f32 %v3231, %v3206
        %v3250 = vmul.f32 %v3235, %v3207
        %v3251 = vmul.f32 %v3239, %v3208
        %v3252 = vmul.f32 %v3219, %v3209
        %v3253 = vmul.f32 %v3223, %v3210
        %v3254 = vmul.f32 %v3227, %v3211
        %v3255 = vmul.f32 %v3231, %v3212
        %v3256 = vmul.f32 %v3235, %v3213
        %v3257 = vmul.f32 %v3239, %v3214
        %v3258 = vadd.f32 %v3189, %v3246
        %v3259 = vadd.f32 %v3190, %v3247
        %v3260 = vadd.f32 %v3191, %v3248
        %v3261 = vadd.f32 %v3192, %v3249
        %v3262 = vadd.f32 %v3193, %v3250
        %v3263 = vadd.f32 %v3194, %v3251
        %v3264 = vadd.f32 %v3195, %v3252
        %v3265 = vadd.f32 %v3196, %v3253
        %v3266 = vadd.f32 %v3197, %v3254
        %v3267 = vadd.f32 %v3198, %v3255
        %v3268 = vadd.f32 %v3199, %v3256
        %v3269 = vadd.f32 %v3200, %v3257
        %s3270 = scalar_lea.vmem %s208, 528
        %v3271 = vld [vmem:[%s3270] ss:$2 sm:$0x3f]
        %v3272 = vld [vmem:[%s175 + $0x840] sm:$0xff]
        %v3273 = vld [vmem:[%s175 + $0x848] sm:$0xff]
        %v3274 = vld [vmem:[%s175 + $0x850] sm:$0xff]
        %v3275 = vld [vmem:[%s175 + $0x858] sm:$0xff]
        %v3276 = vld [vmem:[%s175 + $0x860] sm:$0xff]
        %v3277 = vld [vmem:[%s175 + $0x868] sm:$0xff]
        %v3278 = vld [vmem:[%s175 + $0x1170] sm:$0x1]
        %v3279 = vld [vmem:[%s175 + $0x1178] sm:$0x1]
        %v3280 = vld [vmem:[%s175 + $0x1180] sm:$0x1]
        %v3281 = vld [vmem:[%s175 + $0x1188] sm:$0x1]
        %v3282 = vld [vmem:[%s175 + $0x1190] sm:$0x1]
        %v3283 = vld [vmem:[%s175 + $0x1198] sm:$0x1]
        %v3285 = vlaneseq
        %v3286 = vshrl.u32 %v3285, 7
        %v3287 = vsub.s32 0, %v3286
        %v3288 = vrot.slane %v3271, %v3287
        %v3289 = vlaneseq
        %v3290 = vshrl.u32 %v3289, 7
        %v3291 = vsub.s32 1, %v3290
        %v3292 = vrot.slane %v3271, %v3291
        %v3293 = vlaneseq
        %v3294 = vshrl.u32 %v3293, 7
        %v3295 = vsub.s32 2, %v3294
        %v3296 = vrot.slane %v3271, %v3295
        %v3297 = vlaneseq
        %v3298 = vshrl.u32 %v3297, 7
        %v3299 = vsub.s32 3, %v3298
        %v3300 = vrot.slane %v3271, %v3299
        %v3301 = vlaneseq
        %v3302 = vshrl.u32 %v3301, 7
        %v3303 = vsub.s32 4, %v3302
        %v3304 = vrot.slane %v3271, %v3303
        %v3305 = vlaneseq
        %v3306 = vshrl.u32 %v3305, 7
        %v3307 = vsub.s32 5, %v3306
        %v3308 = vrot.slane %v3271, %v3307
        %v3315 = vmul.f32 %v3288, %v3272
        %v3316 = vmul.f32 %v3292, %v3273
        %v3317 = vmul.f32 %v3296, %v3274
        %v3318 = vmul.f32 %v3300, %v3275
        %v3319 = vmul.f32 %v3304, %v3276
        %v3320 = vmul.f32 %v3308, %v3277
        %v3321 = vmul.f32 %v3288, %v3278
        %v3322 = vmul.f32 %v3292, %v3279
        %v3323 = vmul.f32 %v3296, %v3280
        %v3324 = vmul.f32 %v3300, %v3281
        %v3325 = vmul.f32 %v3304, %v3282
        %v3326 = vmul.f32 %v3308, %v3283
        %v3327 = vadd.f32 %v3258, %v3315
        %v3328 = vadd.f32 %v3259, %v3316
        %v3329 = vadd.f32 %v3260, %v3317
        %v3330 = vadd.f32 %v3261, %v3318
        %v3331 = vadd.f32 %v3262, %v3319
        %v3332 = vadd.f32 %v3263, %v3320
        %v3333 = vadd.f32 %v3264, %v3321
        %v3334 = vadd.f32 %v3265, %v3322
        %v3335 = vadd.f32 %v3266, %v3323
        %v3336 = vadd.f32 %v3267, %v3324
        %v3337 = vadd.f32 %v3268, %v3325
        %v3338 = vadd.f32 %v3269, %v3326
        %s3339 = scalar_lea.vmem %s208, 540
        %v3340 = vld [vmem:[%s3339] ss:$2 sm:$0x3f]
        %v3341 = vld [vmem:[%s175 + $0x870] sm:$0xff]
        %v3342 = vld [vmem:[%s175 + $0x878] sm:$0xff]
        %v3343 = vld [vmem:[%s175 + $0x880] sm:$0xff]
        %v3344 = vld [vmem:[%s175 + $0x888] sm:$0xff]
        %v3345 = vld [vmem:[%s175 + $0x890] sm:$0xff]
        %v3346 = vld [vmem:[%s175 + $0x898] sm:$0xff]
        %v3347 = vld [vmem:[%s175 + $0x11a0] sm:$0x1]
        %v3348 = vld [vmem:[%s175 + $0x11a8] sm:$0x1]
        %v3349 = vld [vmem:[%s175 + $0x11b0] sm:$0x1]
        %v3350 = vld [vmem:[%s175 + $0x11b8] sm:$0x1]
        %v3351 = vld [vmem:[%s175 + $0x11c0] sm:$0x1]
        %v3352 = vld [vmem:[%s175 + $0x11c8] sm:$0x1]
        %v3354 = vlaneseq
        %v3355 = vshrl.u32 %v3354, 7
        %v3356 = vsub.s32 0, %v3355
        %v3357 = vrot.slane %v3340, %v3356
        %v3358 = vlaneseq
        %v3359 = vshrl.u32 %v3358, 7
        %v3360 = vsub.s32 1, %v3359
        %v3361 = vrot.slane %v3340, %v3360
        %v3362 = vlaneseq
        %v3363 = vshrl.u32 %v3362, 7
        %v3364 = vsub.s32 2, %v3363
        %v3365 = vrot.slane %v3340, %v3364
        %v3366 = vlaneseq
        %v3367 = vshrl.u32 %v3366, 7
        %v3368 = vsub.s32 3, %v3367
        %v3369 = vrot.slane %v3340, %v3368
        %v3370 = vlaneseq
        %v3371 = vshrl.u32 %v3370, 7
        %v3372 = vsub.s32 4, %v3371
        %v3373 = vrot.slane %v3340, %v3372
        %v3374 = vlaneseq
        %v3375 = vshrl.u32 %v3374, 7
        %v3376 = vsub.s32 5, %v3375
        %v3377 = vrot.slane %v3340, %v3376
        %v3384 = vmul.f32 %v3357, %v3341
        %v3385 = vmul.f32 %v3361, %v3342
        %v3386 = vmul.f32 %v3365, %v3343
        %v3387 = vmul.f32 %v3369, %v3344
        %v3388 = vmul.f32 %v3373, %v3345
        %v3389 = vmul.f32 %v3377, %v3346
        %v3390 = vmul.f32 %v3357, %v3347
        %v3391 = vmul.f32 %v3361, %v3348
        %v3392 = vmul.f32 %v3365, %v3349
        %v3393 = vmul.f32 %v3369, %v3350
        %v3394 = vmul.f32 %v3373, %v3351
        %v3395 = vmul.f32 %v3377, %v3352
        %v3396 = vadd.f32 %v3327, %v3384
        %v3397 = vadd.f32 %v3328, %v3385
        %v3398 = vadd.f32 %v3329, %v3386
        %v3399 = vadd.f32 %v3330, %v3387
        %v3400 = vadd.f32 %v3331, %v3388
        %v3401 = vadd.f32 %v3332, %v3389
        %v3402 = vadd.f32 %v3333, %v3390
        %v3403 = vadd.f32 %v3334, %v3391
        %v3404 = vadd.f32 %v3335, %v3392
        %v3405 = vadd.f32 %v3336, %v3393
        %v3406 = vadd.f32 %v3337, %v3394
        %v3407 = vadd.f32 %v3338, %v3395
        %s3408 = scalar_lea.vmem %s208, 552
        %v3409 = vld [vmem:[%s3408] ss:$2 sm:$0x3f]
        %v3410 = vld [vmem:[%s175 + $0x8a0] sm:$0xff]
        %v3411 = vld [vmem:[%s175 + $0x8a8] sm:$0xff]
        %v3412 = vld [vmem:[%s175 + $0x8b0] sm:$0xff]
        %v3413 = vld [vmem:[%s175 + $0x8b8] sm:$0xff]
        %v3414 = vld [vmem:[%s175 + $0x8c0] sm:$0xff]
        %v3415 = vld [vmem:[%s175 + $0x8c8] sm:$0xff]
        %v3416 = vld [vmem:[%s175 + $0x11d0] sm:$0x1]
        %v3417 = vld [vmem:[%s175 + $0x11d8] sm:$0x1]
        %v3418 = vld [vmem:[%s175 + $0x11e0] sm:$0x1]
        %v3419 = vld [vmem:[%s175 + $0x11e8] sm:$0x1]
        %v3420 = vld [vmem:[%s175 + $0x11f0] sm:$0x1]
        %v3421 = vld [vmem:[%s175 + $0x11f8] sm:$0x1]
        %v3423 = vlaneseq
        %v3424 = vshrl.u32 %v3423, 7
        %v3425 = vsub.s32 0, %v3424
        %v3426 = vrot.slane %v3409, %v3425
        %v3427 = vlaneseq
        %v3428 = vshrl.u32 %v3427, 7
        %v3429 = vsub.s32 1, %v3428
        %v3430 = vrot.slane %v3409, %v3429
        %v3431 = vlaneseq
        %v3432 = vshrl.u32 %v3431, 7
        %v3433 = vsub.s32 2, %v3432
        %v3434 = vrot.slane %v3409, %v3433
        %v3435 = vlaneseq
        %v3436 = vshrl.u32 %v3435, 7
        %v3437 = vsub.s32 3, %v3436
        %v3438 = vrot.slane %v3409, %v3437
        %v3439 = vlaneseq
        %v3440 = vshrl.u32 %v3439, 7
        %v3441 = vsub.s32 4, %v3440
        %v3442 = vrot.slane %v3409, %v3441
        %v3443 = vlaneseq
        %v3444 = vshrl.u32 %v3443, 7
        %v3445 = vsub.s32 5, %v3444
        %v3446 = vrot.slane %v3409, %v3445
        %v3453 = vmul.f32 %v3426, %v3410
        %v3454 = vmul.f32 %v3430, %v3411
        %v3455 = vmul.f32 %v3434, %v3412
        %v3456 = vmul.f32 %v3438, %v3413
        %v3457 = vmul.f32 %v3442, %v3414
        %v3458 = vmul.f32 %v3446, %v3415
        %v3459 = vmul.f32 %v3426, %v3416
        %v3460 = vmul.f32 %v3430, %v3417
        %v3461 = vmul.f32 %v3434, %v3418
        %v3462 = vmul.f32 %v3438, %v3419
        %v3463 = vmul.f32 %v3442, %v3420
        %v3464 = vmul.f32 %v3446, %v3421
        %v3465 = vadd.f32 %v3396, %v3453
        %v3466 = vadd.f32 %v3397, %v3454
        %v3467 = vadd.f32 %v3398, %v3455
        %v3468 = vadd.f32 %v3399, %v3456
        %v3469 = vadd.f32 %v3400, %v3457
        %v3470 = vadd.f32 %v3401, %v3458
        %v3471 = vadd.f32 %v3402, %v3459
        %v3472 = vadd.f32 %v3403, %v3460
        %v3473 = vadd.f32 %v3404, %v3461
        %v3474 = vadd.f32 %v3405, %v3462
        %v3475 = vadd.f32 %v3406, %v3463
        %v3476 = vadd.f32 %v3407, %v3464
        %s3477 = scalar_lea.vmem %s208, 564
        %v3478 = vld [vmem:[%s3477] ss:$2 sm:$0x3f]
        %v3479 = vld [vmem:[%s175 + $0x8d0] sm:$0xff]
        %v3480 = vld [vmem:[%s175 + $0x8d8] sm:$0xff]
        %v3481 = vld [vmem:[%s175 + $0x8e0] sm:$0xff]
        %v3482 = vld [vmem:[%s175 + $0x8e8] sm:$0xff]
        %v3483 = vld [vmem:[%s175 + $0x8f0] sm:$0xff]
        %v3484 = vld [vmem:[%s175 + $0x8f8] sm:$0xff]
        %v3485 = vld [vmem:[%s175 + $0x1200] sm:$0x1]
        %v3486 = vld [vmem:[%s175 + $0x1208] sm:$0x1]
        %v3487 = vld [vmem:[%s175 + $0x1210] sm:$0x1]
        %v3488 = vld [vmem:[%s175 + $0x1218] sm:$0x1]
        %v3489 = vld [vmem:[%s175 + $0x1220] sm:$0x1]
        %v3490 = vld [vmem:[%s175 + $0x1228] sm:$0x1]
        %v3492 = vlaneseq
        %v3493 = vshrl.u32 %v3492, 7
        %v3494 = vsub.s32 0, %v3493
        %v3495 = vrot.slane %v3478, %v3494
        %v3496 = vlaneseq
        %v3497 = vshrl.u32 %v3496, 7
        %v3498 = vsub.s32 1, %v3497
        %v3499 = vrot.slane %v3478, %v3498
        %v3500 = vlaneseq
        %v3501 = vshrl.u32 %v3500, 7
        %v3502 = vsub.s32 2, %v3501
        %v3503 = vrot.slane %v3478, %v3502
        %v3504 = vlaneseq
        %v3505 = vshrl.u32 %v3504, 7
        %v3506 = vsub.s32 3, %v3505
        %v3507 = vrot.slane %v3478, %v3506
        %v3508 = vlaneseq
        %v3509 = vshrl.u32 %v3508, 7
        %v3510 = vsub.s32 4, %v3509
        %v3511 = vrot.slane %v3478, %v3510
        %v3512 = vlaneseq
        %v3513 = vshrl.u32 %v3512, 7
        %v3514 = vsub.s32 5, %v3513
        %v3515 = vrot.slane %v3478, %v3514
        %v3522 = vmul.f32 %v3495, %v3479
        %v3523 = vmul.f32 %v3499, %v3480
        %v3524 = vmul.f32 %v3503, %v3481
        %v3525 = vmul.f32 %v3507, %v3482
        %v3526 = vmul.f32 %v3511, %v3483
        %v3527 = vmul.f32 %v3515, %v3484
        %v3528 = vmul.f32 %v3495, %v3485
        %v3529 = vmul.f32 %v3499, %v3486
        %v3530 = vmul.f32 %v3503, %v3487
        %v3531 = vmul.f32 %v3507, %v3488
        %v3532 = vmul.f32 %v3511, %v3489
        %v3533 = vmul.f32 %v3515, %v3490
        %v3534 = vadd.f32 %v3465, %v3522
        %v3535 = vadd.f32 %v3466, %v3523
        %v3536 = vadd.f32 %v3467, %v3524
        %v3537 = vadd.f32 %v3468, %v3525
        %v3538 = vadd.f32 %v3469, %v3526
        %v3539 = vadd.f32 %v3470, %v3527
        %v3540 = vadd.f32 %v3471, %v3528
        %v3541 = vadd.f32 %v3472, %v3529
        %v3542 = vadd.f32 %v3473, %v3530
        %v3543 = vadd.f32 %v3474, %v3531
        %v3544 = vadd.f32 %v3475, %v3532
        %v3545 = vadd.f32 %v3476, %v3533
        %s3546 = scalar_lea.vmem %s208, 576
        %v3547 = vld [vmem:[%s3546] ss:$2 sm:$0x3f]
        %v3548 = vld [vmem:[%s175 + $0x900] sm:$0xff]
        %v3549 = vld [vmem:[%s175 + $0x908] sm:$0xff]
        %v3550 = vld [vmem:[%s175 + $0x910] sm:$0xff]
        %v3551 = vld [vmem:[%s175 + $0x918] sm:$0xff]
        %v3552 = vld [vmem:[%s175 + $0x920] sm:$0xff]
        %v3553 = vld [vmem:[%s175 + $0x928] sm:$0xff]
        %v3554 = vld [vmem:[%s175 + $0x1230] sm:$0x1]
        %v3555 = vld [vmem:[%s175 + $0x1238] sm:$0x1]
        %v3556 = vld [vmem:[%s175 + $0x1240] sm:$0x1]
        %v3557 = vld [vmem:[%s175 + $0x1248] sm:$0x1]
        %v3558 = vld [vmem:[%s175 + $0x1250] sm:$0x1]
        %v3559 = vld [vmem:[%s175 + $0x1258] sm:$0x1]
        %v3561 = vlaneseq
        %v3562 = vshrl.u32 %v3561, 7
        %v3563 = vsub.s32 0, %v3562
        %v3564 = vrot.slane %v3547, %v3563
        %v3565 = vlaneseq
        %v3566 = vshrl.u32 %v3565, 7
        %v3567 = vsub.s32 1, %v3566
        %v3568 = vrot.slane %v3547, %v3567
        %v3569 = vlaneseq
        %v3570 = vshrl.u32 %v3569, 7
        %v3571 = vsub.s32 2, %v3570
        %v3572 = vrot.slane %v3547, %v3571
        %v3573 = vlaneseq
        %v3574 = vshrl.u32 %v3573, 7
        %v3575 = vsub.s32 3, %v3574
        %v3576 = vrot.slane %v3547, %v3575
        %v3577 = vlaneseq
        %v3578 = vshrl.u32 %v3577, 7
        %v3579 = vsub.s32 4, %v3578
        %v3580 = vrot.slane %v3547, %v3579
        %v3581 = vlaneseq
        %v3582 = vshrl.u32 %v3581, 7
        %v3583 = vsub.s32 5, %v3582
        %v3584 = vrot.slane %v3547, %v3583
        %v3591 = vmul.f32 %v3564, %v3548
        %v3592 = vmul.f32 %v3568, %v3549
        %v3593 = vmul.f32 %v3572, %v3550
        %v3594 = vmul.f32 %v3576, %v3551
        %v3595 = vmul.f32 %v3580, %v3552
        %v3596 = vmul.f32 %v3584, %v3553
        %v3597 = vmul.f32 %v3564, %v3554
        %v3598 = vmul.f32 %v3568, %v3555
        %v3599 = vmul.f32 %v3572, %v3556
        %v3600 = vmul.f32 %v3576, %v3557
        %v3601 = vmul.f32 %v3580, %v3558
        %v3602 = vmul.f32 %v3584, %v3559
        %v3603 = vadd.f32 %v3534, %v3591
        %v3604 = vadd.f32 %v3535, %v3592
        %v3605 = vadd.f32 %v3536, %v3593
        %v3606 = vadd.f32 %v3537, %v3594
        %v3607 = vadd.f32 %v3538, %v3595
        %v3608 = vadd.f32 %v3539, %v3596
        %v3609 = vadd.f32 %v3540, %v3597
        %v3610 = vadd.f32 %v3541, %v3598
        %v3611 = vadd.f32 %v3542, %v3599
        %v3612 = vadd.f32 %v3543, %v3600
        %v3613 = vadd.f32 %v3544, %v3601
        %v3614 = vadd.f32 %v3545, %v3602
        %v3615 = vld [vmem:[#allocation2] sm:$0xff]
        %v3616 = vld [vmem:[#allocation2 + $0x8] sm:$0xff]
        %v3617 = vld [vmem:[#allocation2 + $0x10] sm:$0xff]
        %v3618 = vld [vmem:[#allocation2 + $0x18] sm:$0xff]
        %v3619 = vld [vmem:[#allocation2 + $0x20] sm:$0xff]
        %v3620 = vld [vmem:[#allocation2 + $0x28] sm:$0xff]
        %v3621 = vld [vmem:[#allocation2 + $0x30] sm:$0x1]
        %v3622 = vld [vmem:[#allocation2 + $0x38] sm:$0x1]
        %v3623 = vld [vmem:[#allocation2 + $0x40] sm:$0x1]
        %v3624 = vld [vmem:[#allocation2 + $0x48] sm:$0x1]
        %v3625 = vld [vmem:[#allocation2 + $0x50] sm:$0x1]
        %v3626 = vld [vmem:[#allocation2 + $0x58] sm:$0x1]
        %v3627 = vadd.f32 %v3615, %v3603
        %v3628 = vadd.f32 %v3616, %v3604
        %v3629 = vadd.f32 %v3617, %v3605
        %v3630 = vadd.f32 %v3618, %v3606
        %v3631 = vadd.f32 %v3619, %v3607
        %v3632 = vadd.f32 %v3620, %v3608
        %v3633 = vadd.f32 %v3621, %v3609
        %v3634 = vadd.f32 %v3622, %v3610
        %v3635 = vadd.f32 %v3623, %v3611
        %v3636 = vadd.f32 %v3624, %v3612
        %v3637 = vadd.f32 %v3625, %v3613
        %v3638 = vadd.f32 %v3626, %v3614
        %3639 = vst [vmem:[#allocation2] sm:$0xff] %v3627
        %3640 = vst [vmem:[#allocation2 + $0x8] sm:$0xff] %v3628
        %3641 = vst [vmem:[#allocation2 + $0x10] sm:$0xff] %v3629
        %3642 = vst [vmem:[#allocation2 + $0x18] sm:$0xff] %v3630
        %3643 = vst [vmem:[#allocation2 + $0x20] sm:$0xff] %v3631
        %3644 = vst [vmem:[#allocation2 + $0x28] sm:$0xff] %v3632
        %3645 = vst [vmem:[#allocation2 + $0x30] sm:$0x1] %v3633
        %3646 = vst [vmem:[#allocation2 + $0x38] sm:$0x1] %v3634
        %3647 = vst [vmem:[#allocation2 + $0x40] sm:$0x1] %v3635
        %3648 = vst [vmem:[#allocation2 + $0x48] sm:$0x1] %v3636
        %3649 = vst [vmem:[#allocation2 + $0x50] sm:$0x1] %v3637
        %3650 = vst [vmem:[#allocation2 + $0x58] sm:$0x1] %v3638
        %s3651 = scalar_lea.vmem %s208, 1
        %v3652 = vld [vmem:[%s3651] ss:$2 sm:$0x3f]
        %v3653 = vld [vmem:[%s175] sm:$0xff]
        %v3654 = vld [vmem:[%s175 + $0x8] sm:$0xff]
        %v3655 = vld [vmem:[%s175 + $0x10] sm:$0xff]
        %v3656 = vld [vmem:[%s175 + $0x18] sm:$0xff]
        %v3657 = vld [vmem:[%s175 + $0x20] sm:$0xff]
        %v3658 = vld [vmem:[%s175 + $0x28] sm:$0xff]
        %v3659 = vld [vmem:[%s175 + $0x930] sm:$0x1]
        %v3660 = vld [vmem:[%s175 + $0x938] sm:$0x1]
        %v3661 = vld [vmem:[%s175 + $0x940] sm:$0x1]
        %v3662 = vld [vmem:[%s175 + $0x948] sm:$0x1]
        %v3663 = vld [vmem:[%s175 + $0x950] sm:$0x1]
        %v3664 = vld [vmem:[%s175 + $0x958] sm:$0x1]
        %v3666 = vlaneseq
        %v3667 = vshrl.u32 %v3666, 7
        %v3668 = vsub.s32 0, %v3667
        %v3669 = vrot.slane %v3652, %v3668
        %v3670 = vlaneseq
        %v3671 = vshrl.u32 %v3670, 7
        %v3672 = vsub.s32 1, %v3671
        %v3673 = vrot.slane %v3652, %v3672
        %v3674 = vlaneseq
        %v3675 = vshrl.u32 %v3674, 7
        %v3676 = vsub.s32 2, %v3675
        %v3677 = vrot.slane %v3652, %v3676
        %v3678 = vlaneseq
        %v3679 = vshrl.u32 %v3678, 7
        %v3680 = vsub.s32 3, %v3679
        %v3681 = vrot.slane %v3652, %v3680
        %v3682 = vlaneseq
        %v3683 = vshrl.u32 %v3682, 7
        %v3684 = vsub.s32 4, %v3683
        %v3685 = vrot.slane %v3652, %v3684
        %v3686 = vlaneseq
        %v3687 = vshrl.u32 %v3686, 7
        %v3688 = vsub.s32 5, %v3687
        %v3689 = vrot.slane %v3652, %v3688
        %v3696 = vmul.f32 %v3669, %v3653
        %v3697 = vmul.f32 %v3673, %v3654
        %v3698 = vmul.f32 %v3677, %v3655
        %v3699 = vmul.f32 %v3681, %v3656
        %v3700 = vmul.f32 %v3685, %v3657
        %v3701 = vmul.f32 %v3689, %v3658
        %v3702 = vmul.f32 %v3669, %v3659
        %v3703 = vmul.f32 %v3673, %v3660
        %v3704 = vmul.f32 %v3677, %v3661
        %v3705 = vmul.f32 %v3681, %v3662
        %v3706 = vmul.f32 %v3685, %v3663
        %v3707 = vmul.f32 %v3689, %v3664
        %s3708 = scalar_lea.vmem %s208, 13
        %v3709 = vld [vmem:[%s3708] ss:$2 sm:$0x3f]
        %v3710 = vld [vmem:[%s175 + $0x30] sm:$0xff]
        %v3711 = vld [vmem:[%s175 + $0x38] sm:$0xff]
        %v3712 = vld [vmem:[%s175 + $0x40] sm:$0xff]
        %v3713 = vld [vmem:[%s175 + $0x48] sm:$0xff]
        %v3714 = vld [vmem:[%s175 + $0x50] sm:$0xff]
        %v3715 = vld [vmem:[%s175 + $0x58] sm:$0xff]
        %v3716 = vld [vmem:[%s175 + $0x960] sm:$0x1]
        %v3717 = vld [vmem:[%s175 + $0x968] sm:$0x1]
        %v3718 = vld [vmem:[%s175 + $0x970] sm:$0x1]
        %v3719 = vld [vmem:[%s175 + $0x978] sm:$0x1]
        %v3720 = vld [vmem:[%s175 + $0x980] sm:$0x1]
        %v3721 = vld [vmem:[%s175 + $0x988] sm:$0x1]
        %v3723 = vlaneseq
        %v3724 = vshrl.u32 %v3723, 7
        %v3725 = vsub.s32 0, %v3724
        %v3726 = vrot.slane %v3709, %v3725
        %v3727 = vlaneseq
        %v3728 = vshrl.u32 %v3727, 7
        %v3729 = vsub.s32 1, %v3728
        %v3730 = vrot.slane %v3709, %v3729
        %v3731 = vlaneseq
        %v3732 = vshrl.u32 %v3731, 7
        %v3733 = vsub.s32 2, %v3732
        %v3734 = vrot.slane %v3709, %v3733
        %v3735 = vlaneseq
        %v3736 = vshrl.u32 %v3735, 7
        %v3737 = vsub.s32 3, %v3736
        %v3738 = vrot.slane %v3709, %v3737
        %v3739 = vlaneseq
        %v3740 = vshrl.u32 %v3739, 7
        %v3741 = vsub.s32 4, %v3740
        %v3742 = vrot.slane %v3709, %v3741
        %v3743 = vlaneseq
        %v3744 = vshrl.u32 %v3743, 7
        %v3745 = vsub.s32 5, %v3744
        %v3746 = vrot.slane %v3709, %v3745
        %v3753 = vmul.f32 %v3726, %v3710
        %v3754 = vmul.f32 %v3730, %v3711
        %v3755 = vmul.f32 %v3734, %v3712
        %v3756 = vmul.f32 %v3738, %v3713
        %v3757 = vmul.f32 %v3742, %v3714
        %v3758 = vmul.f32 %v3746, %v3715
        %v3759 = vmul.f32 %v3726, %v3716
        %v3760 = vmul.f32 %v3730, %v3717
        %v3761 = vmul.f32 %v3734, %v3718
        %v3762 = vmul.f32 %v3738, %v3719
        %v3763 = vmul.f32 %v3742, %v3720
        %v3764 = vmul.f32 %v3746, %v3721
        %v3765 = vadd.f32 %v3696, %v3753
        %v3766 = vadd.f32 %v3697, %v3754
        %v3767 = vadd.f32 %v3698, %v3755
        %v3768 = vadd.f32 %v3699, %v3756
        %v3769 = vadd.f32 %v3700, %v3757
        %v3770 = vadd.f32 %v3701, %v3758
        %v3771 = vadd.f32 %v3702, %v3759
        %v3772 = vadd.f32 %v3703, %v3760
        %v3773 = vadd.f32 %v3704, %v3761
        %v3774 = vadd.f32 %v3705, %v3762
        %v3775 = vadd.f32 %v3706, %v3763
        %v3776 = vadd.f32 %v3707, %v3764
        %s3777 = scalar_lea.vmem %s208, 25
        %v3778 = vld [vmem:[%s3777] ss:$2 sm:$0x3f]
        %v3779 = vld [vmem:[%s175 + $0x60] sm:$0xff]
        %v3780 = vld [vmem:[%s175 + $0x68] sm:$0xff]
        %v3781 = vld [vmem:[%s175 + $0x70] sm:$0xff]
        %v3782 = vld [vmem:[%s175 + $0x78] sm:$0xff]
        %v3783 = vld [vmem:[%s175 + $0x80] sm:$0xff]
        %v3784 = vld [vmem:[%s175 + $0x88] sm:$0xff]
        %v3785 = vld [vmem:[%s175 + $0x990] sm:$0x1]
        %v3786 = vld [vmem:[%s175 + $0x998] sm:$0x1]
        %v3787 = vld [vmem:[%s175 + $0x9a0] sm:$0x1]
        %v3788 = vld [vmem:[%s175 + $0x9a8] sm:$0x1]
        %v3789 = vld [vmem:[%s175 + $0x9b0] sm:$0x1]
        %v3790 = vld [vmem:[%s175 + $0x9b8] sm:$0x1]
        %v3792 = vlaneseq
        %v3793 = vshrl.u32 %v3792, 7
        %v3794 = vsub.s32 0, %v3793
        %v3795 = vrot.slane %v3778, %v3794
        %v3796 = vlaneseq
        %v3797 = vshrl.u32 %v3796, 7
        %v3798 = vsub.s32 1, %v3797
        %v3799 = vrot.slane %v3778, %v3798
        %v3800 = vlaneseq
        %v3801 = vshrl.u32 %v3800, 7
        %v3802 = vsub.s32 2, %v3801
        %v3803 = vrot.slane %v3778, %v3802
        %v3804 = vlaneseq
        %v3805 = vshrl.u32 %v3804, 7
        %v3806 = vsub.s32 3, %v3805
        %v3807 = vrot.slane %v3778, %v3806
        %v3808 = vlaneseq
        %v3809 = vshrl.u32 %v3808, 7
        %v3810 = vsub.s32 4, %v3809
        %v3811 = vrot.slane %v3778, %v3810
        %v3812 = vlaneseq
        %v3813 = vshrl.u32 %v3812, 7
        %v3814 = vsub.s32 5, %v3813
        %v3815 = vrot.slane %v3778, %v3814
        %v3822 = vmul.f32 %v3795, %v3779
        %v3823 = vmul.f32 %v3799, %v3780
        %v3824 = vmul.f32 %v3803, %v3781
        %v3825 = vmul.f32 %v3807, %v3782
        %v3826 = vmul.f32 %v3811, %v3783
        %v3827 = vmul.f32 %v3815, %v3784
        %v3828 = vmul.f32 %v3795, %v3785
        %v3829 = vmul.f32 %v3799, %v3786
        %v3830 = vmul.f32 %v3803, %v3787
        %v3831 = vmul.f32 %v3807, %v3788
        %v3832 = vmul.f32 %v3811, %v3789
        %v3833 = vmul.f32 %v3815, %v3790
        %v3834 = vadd.f32 %v3765, %v3822
        %v3835 = vadd.f32 %v3766, %v3823
        %v3836 = vadd.f32 %v3767, %v3824
        %v3837 = vadd.f32 %v3768, %v3825
        %v3838 = vadd.f32 %v3769, %v3826
        %v3839 = vadd.f32 %v3770, %v3827
        %v3840 = vadd.f32 %v3771, %v3828
        %v3841 = vadd.f32 %v3772, %v3829
        %v3842 = vadd.f32 %v3773, %v3830
        %v3843 = vadd.f32 %v3774, %v3831
        %v3844 = vadd.f32 %v3775, %v3832
        %v3845 = vadd.f32 %v3776, %v3833
        %s3846 = scalar_lea.vmem %s208, 37
        %v3847 = vld [vmem:[%s3846] ss:$2 sm:$0x3f]
        %v3848 = vld [vmem:[%s175 + $0x90] sm:$0xff]
        %v3849 = vld [vmem:[%s175 + $0x98] sm:$0xff]
        %v3850 = vld [vmem:[%s175 + $0xa0] sm:$0xff]
        %v3851 = vld [vmem:[%s175 + $0xa8] sm:$0xff]
        %v3852 = vld [vmem:[%s175 + $0xb0] sm:$0xff]
        %v3853 = vld [vmem:[%s175 + $0xb8] sm:$0xff]
        %v3854 = vld [vmem:[%s175 + $0x9c0] sm:$0x1]
        %v3855 = vld [vmem:[%s175 + $0x9c8] sm:$0x1]
        %v3856 = vld [vmem:[%s175 + $0x9d0] sm:$0x1]
        %v3857 = vld [vmem:[%s175 + $0x9d8] sm:$0x1]
        %v3858 = vld [vmem:[%s175 + $0x9e0] sm:$0x1]
        %v3859 = vld [vmem:[%s175 + $0x9e8] sm:$0x1]
        %v3861 = vlaneseq
        %v3862 = vshrl.u32 %v3861, 7
        %v3863 = vsub.s32 0, %v3862
        %v3864 = vrot.slane %v3847, %v3863
        %v3865 = vlaneseq
        %v3866 = vshrl.u32 %v3865, 7
        %v3867 = vsub.s32 1, %v3866
        %v3868 = vrot.slane %v3847, %v3867
        %v3869 = vlaneseq
        %v3870 = vshrl.u32 %v3869, 7
        %v3871 = vsub.s32 2, %v3870
        %v3872 = vrot.slane %v3847, %v3871
        %v3873 = vlaneseq
        %v3874 = vshrl.u32 %v3873, 7
        %v3875 = vsub.s32 3, %v3874
        %v3876 = vrot.slane %v3847, %v3875
        %v3877 = vlaneseq
        %v3878 = vshrl.u32 %v3877, 7
        %v3879 = vsub.s32 4, %v3878
        %v3880 = vrot.slane %v3847, %v3879
        %v3881 = vlaneseq
        %v3882 = vshrl.u32 %v3881, 7
        %v3883 = vsub.s32 5, %v3882
        %v3884 = vrot.slane %v3847, %v3883
        %v3891 = vmul.f32 %v3864, %v3848
        %v3892 = vmul.f32 %v3868, %v3849
        %v3893 = vmul.f32 %v3872, %v3850
        %v3894 = vmul.f32 %v3876, %v3851
        %v3895 = vmul.f32 %v3880, %v3852
        %v3896 = vmul.f32 %v3884, %v3853
        %v3897 = vmul.f32 %v3864, %v3854
        %v3898 = vmul.f32 %v3868, %v3855
        %v3899 = vmul.f32 %v3872, %v3856
        %v3900 = vmul.f32 %v3876, %v3857
        %v3901 = vmul.f32 %v3880, %v3858
        %v3902 = vmul.f32 %v3884, %v3859
        %v3903 = vadd.f32 %v3834, %v3891
        %v3904 = vadd.f32 %v3835, %v3892
        %v3905 = vadd.f32 %v3836, %v3893
        %v3906 = vadd.f32 %v3837, %v3894
        %v3907 = vadd.f32 %v3838, %v3895
        %v3908 = vadd.f32 %v3839, %v3896
        %v3909 = vadd.f32 %v3840, %v3897
        %v3910 = vadd.f32 %v3841, %v3898
        %v3911 = vadd.f32 %v3842, %v3899
        %v3912 = vadd.f32 %v3843, %v3900
        %v3913 = vadd.f32 %v3844, %v3901
        %v3914 = vadd.f32 %v3845, %v3902
        %s3915 = scalar_lea.vmem %s208, 49
        %v3916 = vld [vmem:[%s3915] ss:$2 sm:$0x3f]
        %v3917 = vld [vmem:[%s175 + $0xc0] sm:$0xff]
        %v3918 = vld [vmem:[%s175 + $0xc8] sm:$0xff]
        %v3919 = vld [vmem:[%s175 + $0xd0] sm:$0xff]
        %v3920 = vld [vmem:[%s175 + $0xd8] sm:$0xff]
        %v3921 = vld [vmem:[%s175 + $0xe0] sm:$0xff]
        %v3922 = vld [vmem:[%s175 + $0xe8] sm:$0xff]
        %v3923 = vld [vmem:[%s175 + $0x9f0] sm:$0x1]
        %v3924 = vld [vmem:[%s175 + $0x9f8] sm:$0x1]
        %v3925 = vld [vmem:[%s175 + $0xa00] sm:$0x1]
        %v3926 = vld [vmem:[%s175 + $0xa08] sm:$0x1]
        %v3927 = vld [vmem:[%s175 + $0xa10] sm:$0x1]
        %v3928 = vld [vmem:[%s175 + $0xa18] sm:$0x1]
        %v3930 = vlaneseq
        %v3931 = vshrl.u32 %v3930, 7
        %v3932 = vsub.s32 0, %v3931
        %v3933 = vrot.slane %v3916, %v3932
        %v3934 = vlaneseq
        %v3935 = vshrl.u32 %v3934, 7
        %v3936 = vsub.s32 1, %v3935
        %v3937 = vrot.slane %v3916, %v3936
        %v3938 = vlaneseq
        %v3939 = vshrl.u32 %v3938, 7
        %v3940 = vsub.s32 2, %v3939
        %v3941 = vrot.slane %v3916, %v3940
        %v3942 = vlaneseq
        %v3943 = vshrl.u32 %v3942, 7
        %v3944 = vsub.s32 3, %v3943
        %v3945 = vrot.slane %v3916, %v3944
        %v3946 = vlaneseq
        %v3947 = vshrl.u32 %v3946, 7
        %v3948 = vsub.s32 4, %v3947
        %v3949 = vrot.slane %v3916, %v3948
        %v3950 = vlaneseq
        %v3951 = vshrl.u32 %v3950, 7
        %v3952 = vsub.s32 5, %v3951
        %v3953 = vrot.slane %v3916, %v3952
        %v3960 = vmul.f32 %v3933, %v3917
        %v3961 = vmul.f32 %v3937, %v3918
        %v3962 = vmul.f32 %v3941, %v3919
        %v3963 = vmul.f32 %v3945, %v3920
        %v3964 = vmul.f32 %v3949, %v3921
        %v3965 = vmul.f32 %v3953, %v3922
        %v3966 = vmul.f32 %v3933, %v3923
        %v3967 = vmul.f32 %v3937, %v3924
        %v3968 = vmul.f32 %v3941, %v3925
        %v3969 = vmul.f32 %v3945, %v3926
        %v3970 = vmul.f32 %v3949, %v3927
        %v3971 = vmul.f32 %v3953, %v3928
        %v3972 = vadd.f32 %v3903, %v3960
        %v3973 = vadd.f32 %v3904, %v3961
        %v3974 = vadd.f32 %v3905, %v3962
        %v3975 = vadd.f32 %v3906, %v3963
        %v3976 = vadd.f32 %v3907, %v3964
        %v3977 = vadd.f32 %v3908, %v3965
        %v3978 = vadd.f32 %v3909, %v3966
        %v3979 = vadd.f32 %v3910, %v3967
        %v3980 = vadd.f32 %v3911, %v3968
        %v3981 = vadd.f32 %v3912, %v3969
        %v3982 = vadd.f32 %v3913, %v3970
        %v3983 = vadd.f32 %v3914, %v3971
        %s3984 = scalar_lea.vmem %s208, 61
        %v3985 = vld [vmem:[%s3984] ss:$2 sm:$0x3f]
        %v3986 = vld [vmem:[%s175 + $0xf0] sm:$0xff]
        %v3987 = vld [vmem:[%s175 + $0xf8] sm:$0xff]
        %v3988 = vld [vmem:[%s175 + $0x100] sm:$0xff]
        %v3989 = vld [vmem:[%s175 + $0x108] sm:$0xff]
        %v3990 = vld [vmem:[%s175 + $0x110] sm:$0xff]
        %v3991 = vld [vmem:[%s175 + $0x118] sm:$0xff]
        %v3992 = vld [vmem:[%s175 + $0xa20] sm:$0x1]
        %v3993 = vld [vmem:[%s175 + $0xa28] sm:$0x1]
        %v3994 = vld [vmem:[%s175 + $0xa30] sm:$0x1]
        %v3995 = vld [vmem:[%s175 + $0xa38] sm:$0x1]
        %v3996 = vld [vmem:[%s175 + $0xa40] sm:$0x1]
        %v3997 = vld [vmem:[%s175 + $0xa48] sm:$0x1]
        %v3999 = vlaneseq
        %v4000 = vshrl.u32 %v3999, 7
        %v4001 = vsub.s32 0, %v4000
        %v4002 = vrot.slane %v3985, %v4001
        %v4003 = vlaneseq
        %v4004 = vshrl.u32 %v4003, 7
        %v4005 = vsub.s32 1, %v4004
        %v4006 = vrot.slane %v3985, %v4005
        %v4007 = vlaneseq
        %v4008 = vshrl.u32 %v4007, 7
        %v4009 = vsub.s32 2, %v4008
        %v4010 = vrot.slane %v3985, %v4009
        %v4011 = vlaneseq
        %v4012 = vshrl.u32 %v4011, 7
        %v4013 = vsub.s32 3, %v4012
        %v4014 = vrot.slane %v3985, %v4013
        %v4015 = vlaneseq
        %v4016 = vshrl.u32 %v4015, 7
        %v4017 = vsub.s32 4, %v4016
        %v4018 = vrot.slane %v3985, %v4017
        %v4019 = vlaneseq
        %v4020 = vshrl.u32 %v4019, 7
        %v4021 = vsub.s32 5, %v4020
        %v4022 = vrot.slane %v3985, %v4021
        %v4029 = vmul.f32 %v4002, %v3986
        %v4030 = vmul.f32 %v4006, %v3987
        %v4031 = vmul.f32 %v4010, %v3988
        %v4032 = vmul.f32 %v4014, %v3989
        %v4033 = vmul.f32 %v4018, %v3990
        %v4034 = vmul.f32 %v4022, %v3991
        %v4035 = vmul.f32 %v4002, %v3992
        %v4036 = vmul.f32 %v4006, %v3993
        %v4037 = vmul.f32 %v4010, %v3994
        %v4038 = vmul.f32 %v4014, %v3995
        %v4039 = vmul.f32 %v4018, %v3996
        %v4040 = vmul.f32 %v4022, %v3997
        %v4041 = vadd.f32 %v3972, %v4029
        %v4042 = vadd.f32 %v3973, %v4030
        %v4043 = vadd.f32 %v3974, %v4031
        %v4044 = vadd.f32 %v3975, %v4032
        %v4045 = vadd.f32 %v3976, %v4033
        %v4046 = vadd.f32 %v3977, %v4034
        %v4047 = vadd.f32 %v3978, %v4035
        %v4048 = vadd.f32 %v3979, %v4036
        %v4049 = vadd.f32 %v3980, %v4037
        %v4050 = vadd.f32 %v3981, %v4038
        %v4051 = vadd.f32 %v3982, %v4039
        %v4052 = vadd.f32 %v3983, %v4040
        %s4053 = scalar_lea.vmem %s208, 73
        %v4054 = vld [vmem:[%s4053] ss:$2 sm:$0x3f]
        %v4055 = vld [vmem:[%s175 + $0x120] sm:$0xff]
        %v4056 = vld [vmem:[%s175 + $0x128] sm:$0xff]
        %v4057 = vld [vmem:[%s175 + $0x130] sm:$0xff]
        %v4058 = vld [vmem:[%s175 + $0x138] sm:$0xff]
        %v4059 = vld [vmem:[%s175 + $0x140] sm:$0xff]
        %v4060 = vld [vmem:[%s175 + $0x148] sm:$0xff]
        %v4061 = vld [vmem:[%s175 + $0xa50] sm:$0x1]
        %v4062 = vld [vmem:[%s175 + $0xa58] sm:$0x1]
        %v4063 = vld [vmem:[%s175 + $0xa60] sm:$0x1]
        %v4064 = vld [vmem:[%s175 + $0xa68] sm:$0x1]
        %v4065 = vld [vmem:[%s175 + $0xa70] sm:$0x1]
        %v4066 = vld [vmem:[%s175 + $0xa78] sm:$0x1]
        %v4068 = vlaneseq
        %v4069 = vshrl.u32 %v4068, 7
        %v4070 = vsub.s32 0, %v4069
        %v4071 = vrot.slane %v4054, %v4070
        %v4072 = vlaneseq
        %v4073 = vshrl.u32 %v4072, 7
        %v4074 = vsub.s32 1, %v4073
        %v4075 = vrot.slane %v4054, %v4074
        %v4076 = vlaneseq
        %v4077 = vshrl.u32 %v4076, 7
        %v4078 = vsub.s32 2, %v4077
        %v4079 = vrot.slane %v4054, %v4078
        %v4080 = vlaneseq
        %v4081 = vshrl.u32 %v4080, 7
        %v4082 = vsub.s32 3, %v4081
        %v4083 = vrot.slane %v4054, %v4082
        %v4084 = vlaneseq
        %v4085 = vshrl.u32 %v4084, 7
        %v4086 = vsub.s32 4, %v4085
        %v4087 = vrot.slane %v4054, %v4086
        %v4088 = vlaneseq
        %v4089 = vshrl.u32 %v4088, 7
        %v4090 = vsub.s32 5, %v4089
        %v4091 = vrot.slane %v4054, %v4090
        %v4098 = vmul.f32 %v4071, %v4055
        %v4099 = vmul.f32 %v4075, %v4056
        %v4100 = vmul.f32 %v4079, %v4057
        %v4101 = vmul.f32 %v4083, %v4058
        %v4102 = vmul.f32 %v4087, %v4059
        %v4103 = vmul.f32 %v4091, %v4060
        %v4104 = vmul.f32 %v4071, %v4061
        %v4105 = vmul.f32 %v4075, %v4062
        %v4106 = vmul.f32 %v4079, %v4063
        %v4107 = vmul.f32 %v4083, %v4064
        %v4108 = vmul.f32 %v4087, %v4065
        %v4109 = vmul.f32 %v4091, %v4066
        %v4110 = vadd.f32 %v4041, %v4098
        %v4111 = vadd.f32 %v4042, %v4099
        %v4112 = vadd.f32 %v4043, %v4100
        %v4113 = vadd.f32 %v4044, %v4101
        %v4114 = vadd.f32 %v4045, %v4102
        %v4115 = vadd.f32 %v4046, %v4103
        %v4116 = vadd.f32 %v4047, %v4104
        %v4117 = vadd.f32 %v4048, %v4105
        %v4118 = vadd.f32 %v4049, %v4106
        %v4119 = vadd.f32 %v4050, %v4107
        %v4120 = vadd.f32 %v4051, %v4108
        %v4121 = vadd.f32 %v4052, %v4109
        %s4122 = scalar_lea.vmem %s208, 85
        %v4123 = vld [vmem:[%s4122] ss:$2 sm:$0x3f]
        %v4124 = vld [vmem:[%s175 + $0x150] sm:$0xff]
        %v4125 = vld [vmem:[%s175 + $0x158] sm:$0xff]
        %v4126 = vld [vmem:[%s175 + $0x160] sm:$0xff]
        %v4127 = vld [vmem:[%s175 + $0x168] sm:$0xff]
        %v4128 = vld [vmem:[%s175 + $0x170] sm:$0xff]
        %v4129 = vld [vmem:[%s175 + $0x178] sm:$0xff]
        %v4130 = vld [vmem:[%s175 + $0xa80] sm:$0x1]
        %v4131 = vld [vmem:[%s175 + $0xa88] sm:$0x1]
        %v4132 = vld [vmem:[%s175 + $0xa90] sm:$0x1]
        %v4133 = vld [vmem:[%s175 + $0xa98] sm:$0x1]
        %v4134 = vld [vmem:[%s175 + $0xaa0] sm:$0x1]
        %v4135 = vld [vmem:[%s175 + $0xaa8] sm:$0x1]
        %v4137 = vlaneseq
        %v4138 = vshrl.u32 %v4137, 7
        %v4139 = vsub.s32 0, %v4138
        %v4140 = vrot.slane %v4123, %v4139
        %v4141 = vlaneseq
        %v4142 = vshrl.u32 %v4141, 7
        %v4143 = vsub.s32 1, %v4142
        %v4144 = vrot.slane %v4123, %v4143
        %v4145 = vlaneseq
        %v4146 = vshrl.u32 %v4145, 7
        %v4147 = vsub.s32 2, %v4146
        %v4148 = vrot.slane %v4123, %v4147
        %v4149 = vlaneseq
        %v4150 = vshrl.u32 %v4149, 7
        %v4151 = vsub.s32 3, %v4150
        %v4152 = vrot.slane %v4123, %v4151
        %v4153 = vlaneseq
        %v4154 = vshrl.u32 %v4153, 7
        %v4155 = vsub.s32 4, %v4154
        %v4156 = vrot.slane %v4123, %v4155
        %v4157 = vlaneseq
        %v4158 = vshrl.u32 %v4157, 7
        %v4159 = vsub.s32 5, %v4158
        %v4160 = vrot.slane %v4123, %v4159
        %v4167 = vmul.f32 %v4140, %v4124
        %v4168 = vmul.f32 %v4144, %v4125
        %v4169 = vmul.f32 %v4148, %v4126
        %v4170 = vmul.f32 %v4152, %v4127
        %v4171 = vmul.f32 %v4156, %v4128
        %v4172 = vmul.f32 %v4160, %v4129
        %v4173 = vmul.f32 %v4140, %v4130
        %v4174 = vmul.f32 %v4144, %v4131
        %v4175 = vmul.f32 %v4148, %v4132
        %v4176 = vmul.f32 %v4152, %v4133
        %v4177 = vmul.f32 %v4156, %v4134
        %v4178 = vmul.f32 %v4160, %v4135
        %v4179 = vadd.f32 %v4110, %v4167
        %v4180 = vadd.f32 %v4111, %v4168
        %v4181 = vadd.f32 %v4112, %v4169
        %v4182 = vadd.f32 %v4113, %v4170
        %v4183 = vadd.f32 %v4114, %v4171
        %v4184 = vadd.f32 %v4115, %v4172
        %v4185 = vadd.f32 %v4116, %v4173
        %v4186 = vadd.f32 %v4117, %v4174
        %v4187 = vadd.f32 %v4118, %v4175
        %v4188 = vadd.f32 %v4119, %v4176
        %v4189 = vadd.f32 %v4120, %v4177
        %v4190 = vadd.f32 %v4121, %v4178
        %s4191 = scalar_lea.vmem %s208, 97
        %v4192 = vld [vmem:[%s4191] ss:$2 sm:$0x3f]
        %v4193 = vld [vmem:[%s175 + $0x180] sm:$0xff]
        %v4194 = vld [vmem:[%s175 + $0x188] sm:$0xff]
        %v4195 = vld [vmem:[%s175 + $0x190] sm:$0xff]
        %v4196 = vld [vmem:[%s175 + $0x198] sm:$0xff]
        %v4197 = vld [vmem:[%s175 + $0x1a0] sm:$0xff]
        %v4198 = vld [vmem:[%s175 + $0x1a8] sm:$0xff]
        %v4199 = vld [vmem:[%s175 + $0xab0] sm:$0x1]
        %v4200 = vld [vmem:[%s175 + $0xab8] sm:$0x1]
        %v4201 = vld [vmem:[%s175 + $0xac0] sm:$0x1]
        %v4202 = vld [vmem:[%s175 + $0xac8] sm:$0x1]
        %v4203 = vld [vmem:[%s175 + $0xad0] sm:$0x1]
        %v4204 = vld [vmem:[%s175 + $0xad8] sm:$0x1]
        %v4206 = vlaneseq
        %v4207 = vshrl.u32 %v4206, 7
        %v4208 = vsub.s32 0, %v4207
        %v4209 = vrot.slane %v4192, %v4208
        %v4210 = vlaneseq
        %v4211 = vshrl.u32 %v4210, 7
        %v4212 = vsub.s32 1, %v4211
        %v4213 = vrot.slane %v4192, %v4212
        %v4214 = vlaneseq
        %v4215 = vshrl.u32 %v4214, 7
        %v4216 = vsub.s32 2, %v4215
        %v4217 = vrot.slane %v4192, %v4216
        %v4218 = vlaneseq
        %v4219 = vshrl.u32 %v4218, 7
        %v4220 = vsub.s32 3, %v4219
        %v4221 = vrot.slane %v4192, %v4220
        %v4222 = vlaneseq
        %v4223 = vshrl.u32 %v4222, 7
        %v4224 = vsub.s32 4, %v4223
        %v4225 = vrot.slane %v4192, %v4224
        %v4226 = vlaneseq
        %v4227 = vshrl.u32 %v4226, 7
        %v4228 = vsub.s32 5, %v4227
        %v4229 = vrot.slane %v4192, %v4228
        %v4236 = vmul.f32 %v4209, %v4193
        %v4237 = vmul.f32 %v4213, %v4194
        %v4238 = vmul.f32 %v4217, %v4195
        %v4239 = vmul.f32 %v4221, %v4196
        %v4240 = vmul.f32 %v4225, %v4197
        %v4241 = vmul.f32 %v4229, %v4198
        %v4242 = vmul.f32 %v4209, %v4199
        %v4243 = vmul.f32 %v4213, %v4200
        %v4244 = vmul.f32 %v4217, %v4201
        %v4245 = vmul.f32 %v4221, %v4202
        %v4246 = vmul.f32 %v4225, %v4203
        %v4247 = vmul.f32 %v4229, %v4204
        %v4248 = vadd.f32 %v4179, %v4236
        %v4249 = vadd.f32 %v4180, %v4237
        %v4250 = vadd.f32 %v4181, %v4238
        %v4251 = vadd.f32 %v4182, %v4239
        %v4252 = vadd.f32 %v4183, %v4240
        %v4253 = vadd.f32 %v4184, %v4241
        %v4254 = vadd.f32 %v4185, %v4242
        %v4255 = vadd.f32 %v4186, %v4243
        %v4256 = vadd.f32 %v4187, %v4244
        %v4257 = vadd.f32 %v4188, %v4245
        %v4258 = vadd.f32 %v4189, %v4246
        %v4259 = vadd.f32 %v4190, %v4247
        %s4260 = scalar_lea.vmem %s208, 109
        %v4261 = vld [vmem:[%s4260] ss:$2 sm:$0x3f]
        %v4262 = vld [vmem:[%s175 + $0x1b0] sm:$0xff]
        %v4263 = vld [vmem:[%s175 + $0x1b8] sm:$0xff]
        %v4264 = vld [vmem:[%s175 + $0x1c0] sm:$0xff]
        %v4265 = vld [vmem:[%s175 + $0x1c8] sm:$0xff]
        %v4266 = vld [vmem:[%s175 + $0x1d0] sm:$0xff]
        %v4267 = vld [vmem:[%s175 + $0x1d8] sm:$0xff]
        %v4268 = vld [vmem:[%s175 + $0xae0] sm:$0x1]
        %v4269 = vld [vmem:[%s175 + $0xae8] sm:$0x1]
        %v4270 = vld [vmem:[%s175 + $0xaf0] sm:$0x1]
        %v4271 = vld [vmem:[%s175 + $0xaf8] sm:$0x1]
        %v4272 = vld [vmem:[%s175 + $0xb00] sm:$0x1]
        %v4273 = vld [vmem:[%s175 + $0xb08] sm:$0x1]
        %v4275 = vlaneseq
        %v4276 = vshrl.u32 %v4275, 7
        %v4277 = vsub.s32 0, %v4276
        %v4278 = vrot.slane %v4261, %v4277
        %v4279 = vlaneseq
        %v4280 = vshrl.u32 %v4279, 7
        %v4281 = vsub.s32 1, %v4280
        %v4282 = vrot.slane %v4261, %v4281
        %v4283 = vlaneseq
        %v4284 = vshrl.u32 %v4283, 7
        %v4285 = vsub.s32 2, %v4284
        %v4286 = vrot.slane %v4261, %v4285
        %v4287 = vlaneseq
        %v4288 = vshrl.u32 %v4287, 7
        %v4289 = vsub.s32 3, %v4288
        %v4290 = vrot.slane %v4261, %v4289
        %v4291 = vlaneseq
        %v4292 = vshrl.u32 %v4291, 7
        %v4293 = vsub.s32 4, %v4292
        %v4294 = vrot.slane %v4261, %v4293
        %v4295 = vlaneseq
        %v4296 = vshrl.u32 %v4295, 7
        %v4297 = vsub.s32 5, %v4296
        %v4298 = vrot.slane %v4261, %v4297
        %v4305 = vmul.f32 %v4278, %v4262
        %v4306 = vmul.f32 %v4282, %v4263
        %v4307 = vmul.f32 %v4286, %v4264
        %v4308 = vmul.f32 %v4290, %v4265
        %v4309 = vmul.f32 %v4294, %v4266
        %v4310 = vmul.f32 %v4298, %v4267
        %v4311 = vmul.f32 %v4278, %v4268
        %v4312 = vmul.f32 %v4282, %v4269
        %v4313 = vmul.f32 %v4286, %v4270
        %v4314 = vmul.f32 %v4290, %v4271
        %v4315 = vmul.f32 %v4294, %v4272
        %v4316 = vmul.f32 %v4298, %v4273
        %v4317 = vadd.f32 %v4248, %v4305
        %v4318 = vadd.f32 %v4249, %v4306
        %v4319 = vadd.f32 %v4250, %v4307
        %v4320 = vadd.f32 %v4251, %v4308
        %v4321 = vadd.f32 %v4252, %v4309
        %v4322 = vadd.f32 %v4253, %v4310
        %v4323 = vadd.f32 %v4254, %v4311
        %v4324 = vadd.f32 %v4255, %v4312
        %v4325 = vadd.f32 %v4256, %v4313
        %v4326 = vadd.f32 %v4257, %v4314
        %v4327 = vadd.f32 %v4258, %v4315
        %v4328 = vadd.f32 %v4259, %v4316
        %s4329 = scalar_lea.vmem %s208, 121
        %v4330 = vld [vmem:[%s4329] ss:$2 sm:$0x3f]
        %v4331 = vld [vmem:[%s175 + $0x1e0] sm:$0xff]
        %v4332 = vld [vmem:[%s175 + $0x1e8] sm:$0xff]
        %v4333 = vld [vmem:[%s175 + $0x1f0] sm:$0xff]
        %v4334 = vld [vmem:[%s175 + $0x1f8] sm:$0xff]
        %v4335 = vld [vmem:[%s175 + $0x200] sm:$0xff]
        %v4336 = vld [vmem:[%s175 + $0x208] sm:$0xff]
        %v4337 = vld [vmem:[%s175 + $0xb10] sm:$0x1]
        %v4338 = vld [vmem:[%s175 + $0xb18] sm:$0x1]
        %v4339 = vld [vmem:[%s175 + $0xb20] sm:$0x1]
        %v4340 = vld [vmem:[%s175 + $0xb28] sm:$0x1]
        %v4341 = vld [vmem:[%s175 + $0xb30] sm:$0x1]
        %v4342 = vld [vmem:[%s175 + $0xb38] sm:$0x1]
        %v4344 = vlaneseq
        %v4345 = vshrl.u32 %v4344, 7
        %v4346 = vsub.s32 0, %v4345
        %v4347 = vrot.slane %v4330, %v4346
        %v4348 = vlaneseq
        %v4349 = vshrl.u32 %v4348, 7
        %v4350 = vsub.s32 1, %v4349
        %v4351 = vrot.slane %v4330, %v4350
        %v4352 = vlaneseq
        %v4353 = vshrl.u32 %v4352, 7
        %v4354 = vsub.s32 2, %v4353
        %v4355 = vrot.slane %v4330, %v4354
        %v4356 = vlaneseq
        %v4357 = vshrl.u32 %v4356, 7
        %v4358 = vsub.s32 3, %v4357
        %v4359 = vrot.slane %v4330, %v4358
        %v4360 = vlaneseq
        %v4361 = vshrl.u32 %v4360, 7
        %v4362 = vsub.s32 4, %v4361
        %v4363 = vrot.slane %v4330, %v4362
        %v4364 = vlaneseq
        %v4365 = vshrl.u32 %v4364, 7
        %v4366 = vsub.s32 5, %v4365
        %v4367 = vrot.slane %v4330, %v4366
        %v4374 = vmul.f32 %v4347, %v4331
        %v4375 = vmul.f32 %v4351, %v4332
        %v4376 = vmul.f32 %v4355, %v4333
        %v4377 = vmul.f32 %v4359, %v4334
        %v4378 = vmul.f32 %v4363, %v4335
        %v4379 = vmul.f32 %v4367, %v4336
        %v4380 = vmul.f32 %v4347, %v4337
        %v4381 = vmul.f32 %v4351, %v4338
        %v4382 = vmul.f32 %v4355, %v4339
        %v4383 = vmul.f32 %v4359, %v4340
        %v4384 = vmul.f32 %v4363, %v4341
        %v4385 = vmul.f32 %v4367, %v4342
        %v4386 = vadd.f32 %v4317, %v4374
        %v4387 = vadd.f32 %v4318, %v4375
        %v4388 = vadd.f32 %v4319, %v4376
        %v4389 = vadd.f32 %v4320, %v4377
        %v4390 = vadd.f32 %v4321, %v4378
        %v4391 = vadd.f32 %v4322, %v4379
        %v4392 = vadd.f32 %v4323, %v4380
        %v4393 = vadd.f32 %v4324, %v4381
        %v4394 = vadd.f32 %v4325, %v4382
        %v4395 = vadd.f32 %v4326, %v4383
        %v4396 = vadd.f32 %v4327, %v4384
        %v4397 = vadd.f32 %v4328, %v4385
        %s4398 = scalar_lea.vmem %s208, 133
        %v4399 = vld [vmem:[%s4398] ss:$2 sm:$0x3f]
        %v4400 = vld [vmem:[%s175 + $0x210] sm:$0xff]
        %v4401 = vld [vmem:[%s175 + $0x218] sm:$0xff]
        %v4402 = vld [vmem:[%s175 + $0x220] sm:$0xff]
        %v4403 = vld [vmem:[%s175 + $0x228] sm:$0xff]
        %v4404 = vld [vmem:[%s175 + $0x230] sm:$0xff]
        %v4405 = vld [vmem:[%s175 + $0x238] sm:$0xff]
        %v4406 = vld [vmem:[%s175 + $0xb40] sm:$0x1]
        %v4407 = vld [vmem:[%s175 + $0xb48] sm:$0x1]
        %v4408 = vld [vmem:[%s175 + $0xb50] sm:$0x1]
        %v4409 = vld [vmem:[%s175 + $0xb58] sm:$0x1]
        %v4410 = vld [vmem:[%s175 + $0xb60] sm:$0x1]
        %v4411 = vld [vmem:[%s175 + $0xb68] sm:$0x1]
        %v4413 = vlaneseq
        %v4414 = vshrl.u32 %v4413, 7
        %v4415 = vsub.s32 0, %v4414
        %v4416 = vrot.slane %v4399, %v4415
        %v4417 = vlaneseq
        %v4418 = vshrl.u32 %v4417, 7
        %v4419 = vsub.s32 1, %v4418
        %v4420 = vrot.slane %v4399, %v4419
        %v4421 = vlaneseq
        %v4422 = vshrl.u32 %v4421, 7
        %v4423 = vsub.s32 2, %v4422
        %v4424 = vrot.slane %v4399, %v4423
        %v4425 = vlaneseq
        %v4426 = vshrl.u32 %v4425, 7
        %v4427 = vsub.s32 3, %v4426
        %v4428 = vrot.slane %v4399, %v4427
        %v4429 = vlaneseq
        %v4430 = vshrl.u32 %v4429, 7
        %v4431 = vsub.s32 4, %v4430
        %v4432 = vrot.slane %v4399, %v4431
        %v4433 = vlaneseq
        %v4434 = vshrl.u32 %v4433, 7
        %v4435 = vsub.s32 5, %v4434
        %v4436 = vrot.slane %v4399, %v4435
        %v4443 = vmul.f32 %v4416, %v4400
        %v4444 = vmul.f32 %v4420, %v4401
        %v4445 = vmul.f32 %v4424, %v4402
        %v4446 = vmul.f32 %v4428, %v4403
        %v4447 = vmul.f32 %v4432, %v4404
        %v4448 = vmul.f32 %v4436, %v4405
        %v4449 = vmul.f32 %v4416, %v4406
        %v4450 = vmul.f32 %v4420, %v4407
        %v4451 = vmul.f32 %v4424, %v4408
        %v4452 = vmul.f32 %v4428, %v4409
        %v4453 = vmul.f32 %v4432, %v4410
        %v4454 = vmul.f32 %v4436, %v4411
        %v4455 = vadd.f32 %v4386, %v4443
        %v4456 = vadd.f32 %v4387, %v4444
        %v4457 = vadd.f32 %v4388, %v4445
        %v4458 = vadd.f32 %v4389, %v4446
        %v4459 = vadd.f32 %v4390, %v4447
        %v4460 = vadd.f32 %v4391, %v4448
        %v4461 = vadd.f32 %v4392, %v4449
        %v4462 = vadd.f32 %v4393, %v4450
        %v4463 = vadd.f32 %v4394, %v4451
        %v4464 = vadd.f32 %v4395, %v4452
        %v4465 = vadd.f32 %v4396, %v4453
        %v4466 = vadd.f32 %v4397, %v4454
        %s4467 = scalar_lea.vmem %s208, 145
        %v4468 = vld [vmem:[%s4467] ss:$2 sm:$0x3f]
        %v4469 = vld [vmem:[%s175 + $0x240] sm:$0xff]
        %v4470 = vld [vmem:[%s175 + $0x248] sm:$0xff]
        %v4471 = vld [vmem:[%s175 + $0x250] sm:$0xff]
        %v4472 = vld [vmem:[%s175 + $0x258] sm:$0xff]
        %v4473 = vld [vmem:[%s175 + $0x260] sm:$0xff]
        %v4474 = vld [vmem:[%s175 + $0x268] sm:$0xff]
        %v4475 = vld [vmem:[%s175 + $0xb70] sm:$0x1]
        %v4476 = vld [vmem:[%s175 + $0xb78] sm:$0x1]
        %v4477 = vld [vmem:[%s175 + $0xb80] sm:$0x1]
        %v4478 = vld [vmem:[%s175 + $0xb88] sm:$0x1]
        %v4479 = vld [vmem:[%s175 + $0xb90] sm:$0x1]
        %v4480 = vld [vmem:[%s175 + $0xb98] sm:$0x1]
        %v4482 = vlaneseq
        %v4483 = vshrl.u32 %v4482, 7
        %v4484 = vsub.s32 0, %v4483
        %v4485 = vrot.slane %v4468, %v4484
        %v4486 = vlaneseq
        %v4487 = vshrl.u32 %v4486, 7
        %v4488 = vsub.s32 1, %v4487
        %v4489 = vrot.slane %v4468, %v4488
        %v4490 = vlaneseq
        %v4491 = vshrl.u32 %v4490, 7
        %v4492 = vsub.s32 2, %v4491
        %v4493 = vrot.slane %v4468, %v4492
        %v4494 = vlaneseq
        %v4495 = vshrl.u32 %v4494, 7
        %v4496 = vsub.s32 3, %v4495
        %v4497 = vrot.slane %v4468, %v4496
        %v4498 = vlaneseq
        %v4499 = vshrl.u32 %v4498, 7
        %v4500 = vsub.s32 4, %v4499
        %v4501 = vrot.slane %v4468, %v4500
        %v4502 = vlaneseq
        %v4503 = vshrl.u32 %v4502, 7
        %v4504 = vsub.s32 5, %v4503
        %v4505 = vrot.slane %v4468, %v4504
        %v4512 = vmul.f32 %v4485, %v4469
        %v4513 = vmul.f32 %v4489, %v4470
        %v4514 = vmul.f32 %v4493, %v4471
        %v4515 = vmul.f32 %v4497, %v4472
        %v4516 = vmul.f32 %v4501, %v4473
        %v4517 = vmul.f32 %v4505, %v4474
        %v4518 = vmul.f32 %v4485, %v4475
        %v4519 = vmul.f32 %v4489, %v4476
        %v4520 = vmul.f32 %v4493, %v4477
        %v4521 = vmul.f32 %v4497, %v4478
        %v4522 = vmul.f32 %v4501, %v4479
        %v4523 = vmul.f32 %v4505, %v4480
        %v4524 = vadd.f32 %v4455, %v4512
        %v4525 = vadd.f32 %v4456, %v4513
        %v4526 = vadd.f32 %v4457, %v4514
        %v4527 = vadd.f32 %v4458, %v4515
        %v4528 = vadd.f32 %v4459, %v4516
        %v4529 = vadd.f32 %v4460, %v4517
        %v4530 = vadd.f32 %v4461, %v4518
        %v4531 = vadd.f32 %v4462, %v4519
        %v4532 = vadd.f32 %v4463, %v4520
        %v4533 = vadd.f32 %v4464, %v4521
        %v4534 = vadd.f32 %v4465, %v4522
        %v4535 = vadd.f32 %v4466, %v4523
        %s4536 = scalar_lea.vmem %s208, 157
        %v4537 = vld [vmem:[%s4536] ss:$2 sm:$0x3f]
        %v4538 = vld [vmem:[%s175 + $0x270] sm:$0xff]
        %v4539 = vld [vmem:[%s175 + $0x278] sm:$0xff]
        %v4540 = vld [vmem:[%s175 + $0x280] sm:$0xff]
        %v4541 = vld [vmem:[%s175 + $0x288] sm:$0xff]
        %v4542 = vld [vmem:[%s175 + $0x290] sm:$0xff]
        %v4543 = vld [vmem:[%s175 + $0x298] sm:$0xff]
        %v4544 = vld [vmem:[%s175 + $0xba0] sm:$0x1]
        %v4545 = vld [vmem:[%s175 + $0xba8] sm:$0x1]
        %v4546 = vld [vmem:[%s175 + $0xbb0] sm:$0x1]
        %v4547 = vld [vmem:[%s175 + $0xbb8] sm:$0x1]
        %v4548 = vld [vmem:[%s175 + $0xbc0] sm:$0x1]
        %v4549 = vld [vmem:[%s175 + $0xbc8] sm:$0x1]
        %v4551 = vlaneseq
        %v4552 = vshrl.u32 %v4551, 7
        %v4553 = vsub.s32 0, %v4552
        %v4554 = vrot.slane %v4537, %v4553
        %v4555 = vlaneseq
        %v4556 = vshrl.u32 %v4555, 7
        %v4557 = vsub.s32 1, %v4556
        %v4558 = vrot.slane %v4537, %v4557
        %v4559 = vlaneseq
        %v4560 = vshrl.u32 %v4559, 7
        %v4561 = vsub.s32 2, %v4560
        %v4562 = vrot.slane %v4537, %v4561
        %v4563 = vlaneseq
        %v4564 = vshrl.u32 %v4563, 7
        %v4565 = vsub.s32 3, %v4564
        %v4566 = vrot.slane %v4537, %v4565
        %v4567 = vlaneseq
        %v4568 = vshrl.u32 %v4567, 7
        %v4569 = vsub.s32 4, %v4568
        %v4570 = vrot.slane %v4537, %v4569
        %v4571 = vlaneseq
        %v4572 = vshrl.u32 %v4571, 7
        %v4573 = vsub.s32 5, %v4572
        %v4574 = vrot.slane %v4537, %v4573
        %v4581 = vmul.f32 %v4554, %v4538
        %v4582 = vmul.f32 %v4558, %v4539
        %v4583 = vmul.f32 %v4562, %v4540
        %v4584 = vmul.f32 %v4566, %v4541
        %v4585 = vmul.f32 %v4570, %v4542
        %v4586 = vmul.f32 %v4574, %v4543
        %v4587 = vmul.f32 %v4554, %v4544
        %v4588 = vmul.f32 %v4558, %v4545
        %v4589 = vmul.f32 %v4562, %v4546
        %v4590 = vmul.f32 %v4566, %v4547
        %v4591 = vmul.f32 %v4570, %v4548
        %v4592 = vmul.f32 %v4574, %v4549
        %v4593 = vadd.f32 %v4524, %v4581
        %v4594 = vadd.f32 %v4525, %v4582
        %v4595 = vadd.f32 %v4526, %v4583
        %v4596 = vadd.f32 %v4527, %v4584
        %v4597 = vadd.f32 %v4528, %v4585
        %v4598 = vadd.f32 %v4529, %v4586
        %v4599 = vadd.f32 %v4530, %v4587
        %v4600 = vadd.f32 %v4531, %v4588
        %v4601 = vadd.f32 %v4532, %v4589
        %v4602 = vadd.f32 %v4533, %v4590
        %v4603 = vadd.f32 %v4534, %v4591
        %v4604 = vadd.f32 %v4535, %v4592
        %s4605 = scalar_lea.vmem %s208, 169
        %v4606 = vld [vmem:[%s4605] ss:$2 sm:$0x3f]
        %v4607 = vld [vmem:[%s175 + $0x2a0] sm:$0xff]
        %v4608 = vld [vmem:[%s175 + $0x2a8] sm:$0xff]
        %v4609 = vld [vmem:[%s175 + $0x2b0] sm:$0xff]
        %v4610 = vld [vmem:[%s175 + $0x2b8] sm:$0xff]
        %v4611 = vld [vmem:[%s175 + $0x2c0] sm:$0xff]
        %v4612 = vld [vmem:[%s175 + $0x2c8] sm:$0xff]
        %v4613 = vld [vmem:[%s175 + $0xbd0] sm:$0x1]
        %v4614 = vld [vmem:[%s175 + $0xbd8] sm:$0x1]
        %v4615 = vld [vmem:[%s175 + $0xbe0] sm:$0x1]
        %v4616 = vld [vmem:[%s175 + $0xbe8] sm:$0x1]
        %v4617 = vld [vmem:[%s175 + $0xbf0] sm:$0x1]
        %v4618 = vld [vmem:[%s175 + $0xbf8] sm:$0x1]
        %v4620 = vlaneseq
        %v4621 = vshrl.u32 %v4620, 7
        %v4622 = vsub.s32 0, %v4621
        %v4623 = vrot.slane %v4606, %v4622
        %v4624 = vlaneseq
        %v4625 = vshrl.u32 %v4624, 7
        %v4626 = vsub.s32 1, %v4625
        %v4627 = vrot.slane %v4606, %v4626
        %v4628 = vlaneseq
        %v4629 = vshrl.u32 %v4628, 7
        %v4630 = vsub.s32 2, %v4629
        %v4631 = vrot.slane %v4606, %v4630
        %v4632 = vlaneseq
        %v4633 = vshrl.u32 %v4632, 7
        %v4634 = vsub.s32 3, %v4633
        %v4635 = vrot.slane %v4606, %v4634
        %v4636 = vlaneseq
        %v4637 = vshrl.u32 %v4636, 7
        %v4638 = vsub.s32 4, %v4637
        %v4639 = vrot.slane %v4606, %v4638
        %v4640 = vlaneseq
        %v4641 = vshrl.u32 %v4640, 7
        %v4642 = vsub.s32 5, %v4641
        %v4643 = vrot.slane %v4606, %v4642
        %v4650 = vmul.f32 %v4623, %v4607
        %v4651 = vmul.f32 %v4627, %v4608
        %v4652 = vmul.f32 %v4631, %v4609
        %v4653 = vmul.f32 %v4635, %v4610
        %v4654 = vmul.f32 %v4639, %v4611
        %v4655 = vmul.f32 %v4643, %v4612
        %v4656 = vmul.f32 %v4623, %v4613
        %v4657 = vmul.f32 %v4627, %v4614
        %v4658 = vmul.f32 %v4631, %v4615
        %v4659 = vmul.f32 %v4635, %v4616
        %v4660 = vmul.f32 %v4639, %v4617
        %v4661 = vmul.f32 %v4643, %v4618
        %v4662 = vadd.f32 %v4593, %v4650
        %v4663 = vadd.f32 %v4594, %v4651
        %v4664 = vadd.f32 %v4595, %v4652
        %v4665 = vadd.f32 %v4596, %v4653
        %v4666 = vadd.f32 %v4597, %v4654
        %v4667 = vadd.f32 %v4598, %v4655
        %v4668 = vadd.f32 %v4599, %v4656
        %v4669 = vadd.f32 %v4600, %v4657
        %v4670 = vadd.f32 %v4601, %v4658
        %v4671 = vadd.f32 %v4602, %v4659
        %v4672 = vadd.f32 %v4603, %v4660
        %v4673 = vadd.f32 %v4604, %v4661
        %s4674 = scalar_lea.vmem %s208, 181
        %v4675 = vld [vmem:[%s4674] ss:$2 sm:$0x3f]
        %v4676 = vld [vmem:[%s175 + $0x2d0] sm:$0xff]
        %v4677 = vld [vmem:[%s175 + $0x2d8] sm:$0xff]
        %v4678 = vld [vmem:[%s175 + $0x2e0] sm:$0xff]
        %v4679 = vld [vmem:[%s175 + $0x2e8] sm:$0xff]
        %v4680 = vld [vmem:[%s175 + $0x2f0] sm:$0xff]
        %v4681 = vld [vmem:[%s175 + $0x2f8] sm:$0xff]
        %v4682 = vld [vmem:[%s175 + $0xc00] sm:$0x1]
        %v4683 = vld [vmem:[%s175 + $0xc08] sm:$0x1]
        %v4684 = vld [vmem:[%s175 + $0xc10] sm:$0x1]
        %v4685 = vld [vmem:[%s175 + $0xc18] sm:$0x1]
        %v4686 = vld [vmem:[%s175 + $0xc20] sm:$0x1]
        %v4687 = vld [vmem:[%s175 + $0xc28] sm:$0x1]
        %v4689 = vlaneseq
        %v4690 = vshrl.u32 %v4689, 7
        %v4691 = vsub.s32 0, %v4690
        %v4692 = vrot.slane %v4675, %v4691
        %v4693 = vlaneseq
        %v4694 = vshrl.u32 %v4693, 7
        %v4695 = vsub.s32 1, %v4694
        %v4696 = vrot.slane %v4675, %v4695
        %v4697 = vlaneseq
        %v4698 = vshrl.u32 %v4697, 7
        %v4699 = vsub.s32 2, %v4698
        %v4700 = vrot.slane %v4675, %v4699
        %v4701 = vlaneseq
        %v4702 = vshrl.u32 %v4701, 7
        %v4703 = vsub.s32 3, %v4702
        %v4704 = vrot.slane %v4675, %v4703
        %v4705 = vlaneseq
        %v4706 = vshrl.u32 %v4705, 7
        %v4707 = vsub.s32 4, %v4706
        %v4708 = vrot.slane %v4675, %v4707
        %v4709 = vlaneseq
        %v4710 = vshrl.u32 %v4709, 7
        %v4711 = vsub.s32 5, %v4710
        %v4712 = vrot.slane %v4675, %v4711
        %v4719 = vmul.f32 %v4692, %v4676
        %v4720 = vmul.f32 %v4696, %v4677
        %v4721 = vmul.f32 %v4700, %v4678
        %v4722 = vmul.f32 %v4704, %v4679
        %v4723 = vmul.f32 %v4708, %v4680
        %v4724 = vmul.f32 %v4712, %v4681
        %v4725 = vmul.f32 %v4692, %v4682
        %v4726 = vmul.f32 %v4696, %v4683
        %v4727 = vmul.f32 %v4700, %v4684
        %v4728 = vmul.f32 %v4704, %v4685
        %v4729 = vmul.f32 %v4708, %v4686
        %v4730 = vmul.f32 %v4712, %v4687
        %v4731 = vadd.f32 %v4662, %v4719
        %v4732 = vadd.f32 %v4663, %v4720
        %v4733 = vadd.f32 %v4664, %v4721
        %v4734 = vadd.f32 %v4665, %v4722
        %v4735 = vadd.f32 %v4666, %v4723
        %v4736 = vadd.f32 %v4667, %v4724
        %v4737 = vadd.f32 %v4668, %v4725
        %v4738 = vadd.f32 %v4669, %v4726
        %v4739 = vadd.f32 %v4670, %v4727
        %v4740 = vadd.f32 %v4671, %v4728
        %v4741 = vadd.f32 %v4672, %v4729
        %v4742 = vadd.f32 %v4673, %v4730
        %s4743 = scalar_lea.vmem %s208, 193
        %v4744 = vld [vmem:[%s4743] ss:$2 sm:$0x3f]
        %v4745 = vld [vmem:[%s175 + $0x300] sm:$0xff]
        %v4746 = vld [vmem:[%s175 + $0x308] sm:$0xff]
        %v4747 = vld [vmem:[%s175 + $0x310] sm:$0xff]
        %v4748 = vld [vmem:[%s175 + $0x318] sm:$0xff]
        %v4749 = vld [vmem:[%s175 + $0x320] sm:$0xff]
        %v4750 = vld [vmem:[%s175 + $0x328] sm:$0xff]
        %v4751 = vld [vmem:[%s175 + $0xc30] sm:$0x1]
        %v4752 = vld [vmem:[%s175 + $0xc38] sm:$0x1]
        %v4753 = vld [vmem:[%s175 + $0xc40] sm:$0x1]
        %v4754 = vld [vmem:[%s175 + $0xc48] sm:$0x1]
        %v4755 = vld [vmem:[%s175 + $0xc50] sm:$0x1]
        %v4756 = vld [vmem:[%s175 + $0xc58] sm:$0x1]
        %v4758 = vlaneseq
        %v4759 = vshrl.u32 %v4758, 7
        %v4760 = vsub.s32 0, %v4759
        %v4761 = vrot.slane %v4744, %v4760
        %v4762 = vlaneseq
        %v4763 = vshrl.u32 %v4762, 7
        %v4764 = vsub.s32 1, %v4763
        %v4765 = vrot.slane %v4744, %v4764
        %v4766 = vlaneseq
        %v4767 = vshrl.u32 %v4766, 7
        %v4768 = vsub.s32 2, %v4767
        %v4769 = vrot.slane %v4744, %v4768
        %v4770 = vlaneseq
        %v4771 = vshrl.u32 %v4770, 7
        %v4772 = vsub.s32 3, %v4771
        %v4773 = vrot.slane %v4744, %v4772
        %v4774 = vlaneseq
        %v4775 = vshrl.u32 %v4774, 7
        %v4776 = vsub.s32 4, %v4775
        %v4777 = vrot.slane %v4744, %v4776
        %v4778 = vlaneseq
        %v4779 = vshrl.u32 %v4778, 7
        %v4780 = vsub.s32 5, %v4779
        %v4781 = vrot.slane %v4744, %v4780
        %v4788 = vmul.f32 %v4761, %v4745
        %v4789 = vmul.f32 %v4765, %v4746
        %v4790 = vmul.f32 %v4769, %v4747
        %v4791 = vmul.f32 %v4773, %v4748
        %v4792 = vmul.f32 %v4777, %v4749
        %v4793 = vmul.f32 %v4781, %v4750
        %v4794 = vmul.f32 %v4761, %v4751
        %v4795 = vmul.f32 %v4765, %v4752
        %v4796 = vmul.f32 %v4769, %v4753
        %v4797 = vmul.f32 %v4773, %v4754
        %v4798 = vmul.f32 %v4777, %v4755
        %v4799 = vmul.f32 %v4781, %v4756
        %v4800 = vadd.f32 %v4731, %v4788
        %v4801 = vadd.f32 %v4732, %v4789
        %v4802 = vadd.f32 %v4733, %v4790
        %v4803 = vadd.f32 %v4734, %v4791
        %v4804 = vadd.f32 %v4735, %v4792
        %v4805 = vadd.f32 %v4736, %v4793
        %v4806 = vadd.f32 %v4737, %v4794
        %v4807 = vadd.f32 %v4738, %v4795
        %v4808 = vadd.f32 %v4739, %v4796
        %v4809 = vadd.f32 %v4740, %v4797
        %v4810 = vadd.f32 %v4741, %v4798
        %v4811 = vadd.f32 %v4742, %v4799
        %s4812 = scalar_lea.vmem %s208, 205
        %v4813 = vld [vmem:[%s4812] ss:$2 sm:$0x3f]
        %v4814 = vld [vmem:[%s175 + $0x330] sm:$0xff]
        %v4815 = vld [vmem:[%s175 + $0x338] sm:$0xff]
        %v4816 = vld [vmem:[%s175 + $0x340] sm:$0xff]
        %v4817 = vld [vmem:[%s175 + $0x348] sm:$0xff]
        %v4818 = vld [vmem:[%s175 + $0x350] sm:$0xff]
        %v4819 = vld [vmem:[%s175 + $0x358] sm:$0xff]
        %v4820 = vld [vmem:[%s175 + $0xc60] sm:$0x1]
        %v4821 = vld [vmem:[%s175 + $0xc68] sm:$0x1]
        %v4822 = vld [vmem:[%s175 + $0xc70] sm:$0x1]
        %v4823 = vld [vmem:[%s175 + $0xc78] sm:$0x1]
        %v4824 = vld [vmem:[%s175 + $0xc80] sm:$0x1]
        %v4825 = vld [vmem:[%s175 + $0xc88] sm:$0x1]
        %v4827 = vlaneseq
        %v4828 = vshrl.u32 %v4827, 7
        %v4829 = vsub.s32 0, %v4828
        %v4830 = vrot.slane %v4813, %v4829
        %v4831 = vlaneseq
        %v4832 = vshrl.u32 %v4831, 7
        %v4833 = vsub.s32 1, %v4832
        %v4834 = vrot.slane %v4813, %v4833
        %v4835 = vlaneseq
        %v4836 = vshrl.u32 %v4835, 7
        %v4837 = vsub.s32 2, %v4836
        %v4838 = vrot.slane %v4813, %v4837
        %v4839 = vlaneseq
        %v4840 = vshrl.u32 %v4839, 7
        %v4841 = vsub.s32 3, %v4840
        %v4842 = vrot.slane %v4813, %v4841
        %v4843 = vlaneseq
        %v4844 = vshrl.u32 %v4843, 7
        %v4845 = vsub.s32 4, %v4844
        %v4846 = vrot.slane %v4813, %v4845
        %v4847 = vlaneseq
        %v4848 = vshrl.u32 %v4847, 7
        %v4849 = vsub.s32 5, %v4848
        %v4850 = vrot.slane %v4813, %v4849
        %v4857 = vmul.f32 %v4830, %v4814
        %v4858 = vmul.f32 %v4834, %v4815
        %v4859 = vmul.f32 %v4838, %v4816
        %v4860 = vmul.f32 %v4842, %v4817
        %v4861 = vmul.f32 %v4846, %v4818
        %v4862 = vmul.f32 %v4850, %v4819
        %v4863 = vmul.f32 %v4830, %v4820
        %v4864 = vmul.f32 %v4834, %v4821
        %v4865 = vmul.f32 %v4838, %v4822
        %v4866 = vmul.f32 %v4842, %v4823
        %v4867 = vmul.f32 %v4846, %v4824
        %v4868 = vmul.f32 %v4850, %v4825
        %v4869 = vadd.f32 %v4800, %v4857
        %v4870 = vadd.f32 %v4801, %v4858
        %v4871 = vadd.f32 %v4802, %v4859
        %v4872 = vadd.f32 %v4803, %v4860
        %v4873 = vadd.f32 %v4804, %v4861
        %v4874 = vadd.f32 %v4805, %v4862
        %v4875 = vadd.f32 %v4806, %v4863
        %v4876 = vadd.f32 %v4807, %v4864
        %v4877 = vadd.f32 %v4808, %v4865
        %v4878 = vadd.f32 %v4809, %v4866
        %v4879 = vadd.f32 %v4810, %v4867
        %v4880 = vadd.f32 %v4811, %v4868
        %s4881 = scalar_lea.vmem %s208, 217
        %v4882 = vld [vmem:[%s4881] ss:$2 sm:$0x3f]
        %v4883 = vld [vmem:[%s175 + $0x360] sm:$0xff]
        %v4884 = vld [vmem:[%s175 + $0x368] sm:$0xff]
        %v4885 = vld [vmem:[%s175 + $0x370] sm:$0xff]
        %v4886 = vld [vmem:[%s175 + $0x378] sm:$0xff]
        %v4887 = vld [vmem:[%s175 + $0x380] sm:$0xff]
        %v4888 = vld [vmem:[%s175 + $0x388] sm:$0xff]
        %v4889 = vld [vmem:[%s175 + $0xc90] sm:$0x1]
        %v4890 = vld [vmem:[%s175 + $0xc98] sm:$0x1]
        %v4891 = vld [vmem:[%s175 + $0xca0] sm:$0x1]
        %v4892 = vld [vmem:[%s175 + $0xca8] sm:$0x1]
        %v4893 = vld [vmem:[%s175 + $0xcb0] sm:$0x1]
        %v4894 = vld [vmem:[%s175 + $0xcb8] sm:$0x1]
        %v4896 = vlaneseq
        %v4897 = vshrl.u32 %v4896, 7
        %v4898 = vsub.s32 0, %v4897
        %v4899 = vrot.slane %v4882, %v4898
        %v4900 = vlaneseq
        %v4901 = vshrl.u32 %v4900, 7
        %v4902 = vsub.s32 1, %v4901
        %v4903 = vrot.slane %v4882, %v4902
        %v4904 = vlaneseq
        %v4905 = vshrl.u32 %v4904, 7
        %v4906 = vsub.s32 2, %v4905
        %v4907 = vrot.slane %v4882, %v4906
        %v4908 = vlaneseq
        %v4909 = vshrl.u32 %v4908, 7
        %v4910 = vsub.s32 3, %v4909
        %v4911 = vrot.slane %v4882, %v4910
        %v4912 = vlaneseq
        %v4913 = vshrl.u32 %v4912, 7
        %v4914 = vsub.s32 4, %v4913
        %v4915 = vrot.slane %v4882, %v4914
        %v4916 = vlaneseq
        %v4917 = vshrl.u32 %v4916, 7
        %v4918 = vsub.s32 5, %v4917
        %v4919 = vrot.slane %v4882, %v4918
        %v4926 = vmul.f32 %v4899, %v4883
        %v4927 = vmul.f32 %v4903, %v4884
        %v4928 = vmul.f32 %v4907, %v4885
        %v4929 = vmul.f32 %v4911, %v4886
        %v4930 = vmul.f32 %v4915, %v4887
        %v4931 = vmul.f32 %v4919, %v4888
        %v4932 = vmul.f32 %v4899, %v4889
        %v4933 = vmul.f32 %v4903, %v4890
        %v4934 = vmul.f32 %v4907, %v4891
        %v4935 = vmul.f32 %v4911, %v4892
        %v4936 = vmul.f32 %v4915, %v4893
        %v4937 = vmul.f32 %v4919, %v4894
        %v4938 = vadd.f32 %v4869, %v4926
        %v4939 = vadd.f32 %v4870, %v4927
        %v4940 = vadd.f32 %v4871, %v4928
        %v4941 = vadd.f32 %v4872, %v4929
        %v4942 = vadd.f32 %v4873, %v4930
        %v4943 = vadd.f32 %v4874, %v4931
        %v4944 = vadd.f32 %v4875, %v4932
        %v4945 = vadd.f32 %v4876, %v4933
        %v4946 = vadd.f32 %v4877, %v4934
        %v4947 = vadd.f32 %v4878, %v4935
        %v4948 = vadd.f32 %v4879, %v4936
        %v4949 = vadd.f32 %v4880, %v4937
        %s4950 = scalar_lea.vmem %s208, 229
        %v4951 = vld [vmem:[%s4950] ss:$2 sm:$0x3f]
        %v4952 = vld [vmem:[%s175 + $0x390] sm:$0xff]
        %v4953 = vld [vmem:[%s175 + $0x398] sm:$0xff]
        %v4954 = vld [vmem:[%s175 + $0x3a0] sm:$0xff]
        %v4955 = vld [vmem:[%s175 + $0x3a8] sm:$0xff]
        %v4956 = vld [vmem:[%s175 + $0x3b0] sm:$0xff]
        %v4957 = vld [vmem:[%s175 + $0x3b8] sm:$0xff]
        %v4958 = vld [vmem:[%s175 + $0xcc0] sm:$0x1]
        %v4959 = vld [vmem:[%s175 + $0xcc8] sm:$0x1]
        %v4960 = vld [vmem:[%s175 + $0xcd0] sm:$0x1]
        %v4961 = vld [vmem:[%s175 + $0xcd8] sm:$0x1]
        %v4962 = vld [vmem:[%s175 + $0xce0] sm:$0x1]
        %v4963 = vld [vmem:[%s175 + $0xce8] sm:$0x1]
        %v4965 = vlaneseq
        %v4966 = vshrl.u32 %v4965, 7
        %v4967 = vsub.s32 0, %v4966
        %v4968 = vrot.slane %v4951, %v4967
        %v4969 = vlaneseq
        %v4970 = vshrl.u32 %v4969, 7
        %v4971 = vsub.s32 1, %v4970
        %v4972 = vrot.slane %v4951, %v4971
        %v4973 = vlaneseq
        %v4974 = vshrl.u32 %v4973, 7
        %v4975 = vsub.s32 2, %v4974
        %v4976 = vrot.slane %v4951, %v4975
        %v4977 = vlaneseq
        %v4978 = vshrl.u32 %v4977, 7
        %v4979 = vsub.s32 3, %v4978
        %v4980 = vrot.slane %v4951, %v4979
        %v4981 = vlaneseq
        %v4982 = vshrl.u32 %v4981, 7
        %v4983 = vsub.s32 4, %v4982
        %v4984 = vrot.slane %v4951, %v4983
        %v4985 = vlaneseq
        %v4986 = vshrl.u32 %v4985, 7
        %v4987 = vsub.s32 5, %v4986
        %v4988 = vrot.slane %v4951, %v4987
        %v4995 = vmul.f32 %v4968, %v4952
        %v4996 = vmul.f32 %v4972, %v4953
        %v4997 = vmul.f32 %v4976, %v4954
        %v4998 = vmul.f32 %v4980, %v4955
        %v4999 = vmul.f32 %v4984, %v4956
        %v5000 = vmul.f32 %v4988, %v4957
        %v5001 = vmul.f32 %v4968, %v4958
        %v5002 = vmul.f32 %v4972, %v4959
        %v5003 = vmul.f32 %v4976, %v4960
        %v5004 = vmul.f32 %v4980, %v4961
        %v5005 = vmul.f32 %v4984, %v4962
        %v5006 = vmul.f32 %v4988, %v4963
        %v5007 = vadd.f32 %v4938, %v4995
        %v5008 = vadd.f32 %v4939, %v4996
        %v5009 = vadd.f32 %v4940, %v4997
        %v5010 = vadd.f32 %v4941, %v4998
        %v5011 = vadd.f32 %v4942, %v4999
        %v5012 = vadd.f32 %v4943, %v5000
        %v5013 = vadd.f32 %v4944, %v5001
        %v5014 = vadd.f32 %v4945, %v5002
        %v5015 = vadd.f32 %v4946, %v5003
        %v5016 = vadd.f32 %v4947, %v5004
        %v5017 = vadd.f32 %v4948, %v5005
        %v5018 = vadd.f32 %v4949, %v5006
        %s5019 = scalar_lea.vmem %s208, 241
        %v5020 = vld [vmem:[%s5019] ss:$2 sm:$0x3f]
        %v5021 = vld [vmem:[%s175 + $0x3c0] sm:$0xff]
        %v5022 = vld [vmem:[%s175 + $0x3c8] sm:$0xff]
        %v5023 = vld [vmem:[%s175 + $0x3d0] sm:$0xff]
        %v5024 = vld [vmem:[%s175 + $0x3d8] sm:$0xff]
        %v5025 = vld [vmem:[%s175 + $0x3e0] sm:$0xff]
        %v5026 = vld [vmem:[%s175 + $0x3e8] sm:$0xff]
        %v5027 = vld [vmem:[%s175 + $0xcf0] sm:$0x1]
        %v5028 = vld [vmem:[%s175 + $0xcf8] sm:$0x1]
        %v5029 = vld [vmem:[%s175 + $0xd00] sm:$0x1]
        %v5030 = vld [vmem:[%s175 + $0xd08] sm:$0x1]
        %v5031 = vld [vmem:[%s175 + $0xd10] sm:$0x1]
        %v5032 = vld [vmem:[%s175 + $0xd18] sm:$0x1]
        %v5034 = vlaneseq
        %v5035 = vshrl.u32 %v5034, 7
        %v5036 = vsub.s32 0, %v5035
        %v5037 = vrot.slane %v5020, %v5036
        %v5038 = vlaneseq
        %v5039 = vshrl.u32 %v5038, 7
        %v5040 = vsub.s32 1, %v5039
        %v5041 = vrot.slane %v5020, %v5040
        %v5042 = vlaneseq
        %v5043 = vshrl.u32 %v5042, 7
        %v5044 = vsub.s32 2, %v5043
        %v5045 = vrot.slane %v5020, %v5044
        %v5046 = vlaneseq
        %v5047 = vshrl.u32 %v5046, 7
        %v5048 = vsub.s32 3, %v5047
        %v5049 = vrot.slane %v5020, %v5048
        %v5050 = vlaneseq
        %v5051 = vshrl.u32 %v5050, 7
        %v5052 = vsub.s32 4, %v5051
        %v5053 = vrot.slane %v5020, %v5052
        %v5054 = vlaneseq
        %v5055 = vshrl.u32 %v5054, 7
        %v5056 = vsub.s32 5, %v5055
        %v5057 = vrot.slane %v5020, %v5056
        %v5064 = vmul.f32 %v5037, %v5021
        %v5065 = vmul.f32 %v5041, %v5022
        %v5066 = vmul.f32 %v5045, %v5023
        %v5067 = vmul.f32 %v5049, %v5024
        %v5068 = vmul.f32 %v5053, %v5025
        %v5069 = vmul.f32 %v5057, %v5026
        %v5070 = vmul.f32 %v5037, %v5027
        %v5071 = vmul.f32 %v5041, %v5028
        %v5072 = vmul.f32 %v5045, %v5029
        %v5073 = vmul.f32 %v5049, %v5030
        %v5074 = vmul.f32 %v5053, %v5031
        %v5075 = vmul.f32 %v5057, %v5032
        %v5076 = vadd.f32 %v5007, %v5064
        %v5077 = vadd.f32 %v5008, %v5065
        %v5078 = vadd.f32 %v5009, %v5066
        %v5079 = vadd.f32 %v5010, %v5067
        %v5080 = vadd.f32 %v5011, %v5068
        %v5081 = vadd.f32 %v5012, %v5069
        %v5082 = vadd.f32 %v5013, %v5070
        %v5083 = vadd.f32 %v5014, %v5071
        %v5084 = vadd.f32 %v5015, %v5072
        %v5085 = vadd.f32 %v5016, %v5073
        %v5086 = vadd.f32 %v5017, %v5074
        %v5087 = vadd.f32 %v5018, %v5075
        %s5088 = scalar_lea.vmem %s208, 253
        %v5089 = vld [vmem:[%s5088] ss:$2 sm:$0x3f]
        %v5090 = vld [vmem:[%s175 + $0x3f0] sm:$0xff]
        %v5091 = vld [vmem:[%s175 + $0x3f8] sm:$0xff]
        %v5092 = vld [vmem:[%s175 + $0x400] sm:$0xff]
        %v5093 = vld [vmem:[%s175 + $0x408] sm:$0xff]
        %v5094 = vld [vmem:[%s175 + $0x410] sm:$0xff]
        %v5095 = vld [vmem:[%s175 + $0x418] sm:$0xff]
        %v5096 = vld [vmem:[%s175 + $0xd20] sm:$0x1]
        %v5097 = vld [vmem:[%s175 + $0xd28] sm:$0x1]
        %v5098 = vld [vmem:[%s175 + $0xd30] sm:$0x1]
        %v5099 = vld [vmem:[%s175 + $0xd38] sm:$0x1]
        %v5100 = vld [vmem:[%s175 + $0xd40] sm:$0x1]
        %v5101 = vld [vmem:[%s175 + $0xd48] sm:$0x1]
        %v5103 = vlaneseq
        %v5104 = vshrl.u32 %v5103, 7
        %v5105 = vsub.s32 0, %v5104
        %v5106 = vrot.slane %v5089, %v5105
        %v5107 = vlaneseq
        %v5108 = vshrl.u32 %v5107, 7
        %v5109 = vsub.s32 1, %v5108
        %v5110 = vrot.slane %v5089, %v5109
        %v5111 = vlaneseq
        %v5112 = vshrl.u32 %v5111, 7
        %v5113 = vsub.s32 2, %v5112
        %v5114 = vrot.slane %v5089, %v5113
        %v5115 = vlaneseq
        %v5116 = vshrl.u32 %v5115, 7
        %v5117 = vsub.s32 3, %v5116
        %v5118 = vrot.slane %v5089, %v5117
        %v5119 = vlaneseq
        %v5120 = vshrl.u32 %v5119, 7
        %v5121 = vsub.s32 4, %v5120
        %v5122 = vrot.slane %v5089, %v5121
        %v5123 = vlaneseq
        %v5124 = vshrl.u32 %v5123, 7
        %v5125 = vsub.s32 5, %v5124
        %v5126 = vrot.slane %v5089, %v5125
        %v5133 = vmul.f32 %v5106, %v5090
        %v5134 = vmul.f32 %v5110, %v5091
        %v5135 = vmul.f32 %v5114, %v5092
        %v5136 = vmul.f32 %v5118, %v5093
        %v5137 = vmul.f32 %v5122, %v5094
        %v5138 = vmul.f32 %v5126, %v5095
        %v5139 = vmul.f32 %v5106, %v5096
        %v5140 = vmul.f32 %v5110, %v5097
        %v5141 = vmul.f32 %v5114, %v5098
        %v5142 = vmul.f32 %v5118, %v5099
        %v5143 = vmul.f32 %v5122, %v5100
        %v5144 = vmul.f32 %v5126, %v5101
        %v5145 = vadd.f32 %v5076, %v5133
        %v5146 = vadd.f32 %v5077, %v5134
        %v5147 = vadd.f32 %v5078, %v5135
        %v5148 = vadd.f32 %v5079, %v5136
        %v5149 = vadd.f32 %v5080, %v5137
        %v5150 = vadd.f32 %v5081, %v5138
        %v5151 = vadd.f32 %v5082, %v5139
        %v5152 = vadd.f32 %v5083, %v5140
        %v5153 = vadd.f32 %v5084, %v5141
        %v5154 = vadd.f32 %v5085, %v5142
        %v5155 = vadd.f32 %v5086, %v5143
        %v5156 = vadd.f32 %v5087, %v5144
        %s5157 = scalar_lea.vmem %s208, 265
        %v5158 = vld [vmem:[%s5157] ss:$2 sm:$0x3f]
        %v5159 = vld [vmem:[%s175 + $0x420] sm:$0xff]
        %v5160 = vld [vmem:[%s175 + $0x428] sm:$0xff]
        %v5161 = vld [vmem:[%s175 + $0x430] sm:$0xff]
        %v5162 = vld [vmem:[%s175 + $0x438] sm:$0xff]
        %v5163 = vld [vmem:[%s175 + $0x440] sm:$0xff]
        %v5164 = vld [vmem:[%s175 + $0x448] sm:$0xff]
        %v5165 = vld [vmem:[%s175 + $0xd50] sm:$0x1]
        %v5166 = vld [vmem:[%s175 + $0xd58] sm:$0x1]
        %v5167 = vld [vmem:[%s175 + $0xd60] sm:$0x1]
        %v5168 = vld [vmem:[%s175 + $0xd68] sm:$0x1]
        %v5169 = vld [vmem:[%s175 + $0xd70] sm:$0x1]
        %v5170 = vld [vmem:[%s175 + $0xd78] sm:$0x1]
        %v5172 = vlaneseq
        %v5173 = vshrl.u32 %v5172, 7
        %v5174 = vsub.s32 0, %v5173
        %v5175 = vrot.slane %v5158, %v5174
        %v5176 = vlaneseq
        %v5177 = vshrl.u32 %v5176, 7
        %v5178 = vsub.s32 1, %v5177
        %v5179 = vrot.slane %v5158, %v5178
        %v5180 = vlaneseq
        %v5181 = vshrl.u32 %v5180, 7
        %v5182 = vsub.s32 2, %v5181
        %v5183 = vrot.slane %v5158, %v5182
        %v5184 = vlaneseq
        %v5185 = vshrl.u32 %v5184, 7
        %v5186 = vsub.s32 3, %v5185
        %v5187 = vrot.slane %v5158, %v5186
        %v5188 = vlaneseq
        %v5189 = vshrl.u32 %v5188, 7
        %v5190 = vsub.s32 4, %v5189
        %v5191 = vrot.slane %v5158, %v5190
        %v5192 = vlaneseq
        %v5193 = vshrl.u32 %v5192, 7
        %v5194 = vsub.s32 5, %v5193
        %v5195 = vrot.slane %v5158, %v5194
        %v5202 = vmul.f32 %v5175, %v5159
        %v5203 = vmul.f32 %v5179, %v5160
        %v5204 = vmul.f32 %v5183, %v5161
        %v5205 = vmul.f32 %v5187, %v5162
        %v5206 = vmul.f32 %v5191, %v5163
        %v5207 = vmul.f32 %v5195, %v5164
        %v5208 = vmul.f32 %v5175, %v5165
        %v5209 = vmul.f32 %v5179, %v5166
        %v5210 = vmul.f32 %v5183, %v5167
        %v5211 = vmul.f32 %v5187, %v5168
        %v5212 = vmul.f32 %v5191, %v5169
        %v5213 = vmul.f32 %v5195, %v5170
        %v5214 = vadd.f32 %v5145, %v5202
        %v5215 = vadd.f32 %v5146, %v5203
        %v5216 = vadd.f32 %v5147, %v5204
        %v5217 = vadd.f32 %v5148, %v5205
        %v5218 = vadd.f32 %v5149, %v5206
        %v5219 = vadd.f32 %v5150, %v5207
        %v5220 = vadd.f32 %v5151, %v5208
        %v5221 = vadd.f32 %v5152, %v5209
        %v5222 = vadd.f32 %v5153, %v5210
        %v5223 = vadd.f32 %v5154, %v5211
        %v5224 = vadd.f32 %v5155, %v5212
        %v5225 = vadd.f32 %v5156, %v5213
        %s5226 = scalar_lea.vmem %s208, 277
        %v5227 = vld [vmem:[%s5226] ss:$2 sm:$0x3f]
        %v5228 = vld [vmem:[%s175 + $0x450] sm:$0xff]
        %v5229 = vld [vmem:[%s175 + $0x458] sm:$0xff]
        %v5230 = vld [vmem:[%s175 + $0x460] sm:$0xff]
        %v5231 = vld [vmem:[%s175 + $0x468] sm:$0xff]
        %v5232 = vld [vmem:[%s175 + $0x470] sm:$0xff]
        %v5233 = vld [vmem:[%s175 + $0x478] sm:$0xff]
        %v5234 = vld [vmem:[%s175 + $0xd80] sm:$0x1]
        %v5235 = vld [vmem:[%s175 + $0xd88] sm:$0x1]
        %v5236 = vld [vmem:[%s175 + $0xd90] sm:$0x1]
        %v5237 = vld [vmem:[%s175 + $0xd98] sm:$0x1]
        %v5238 = vld [vmem:[%s175 + $0xda0] sm:$0x1]
        %v5239 = vld [vmem:[%s175 + $0xda8] sm:$0x1]
        %v5241 = vlaneseq
        %v5242 = vshrl.u32 %v5241, 7
        %v5243 = vsub.s32 0, %v5242
        %v5244 = vrot.slane %v5227, %v5243
        %v5245 = vlaneseq
        %v5246 = vshrl.u32 %v5245, 7
        %v5247 = vsub.s32 1, %v5246
        %v5248 = vrot.slane %v5227, %v5247
        %v5249 = vlaneseq
        %v5250 = vshrl.u32 %v5249, 7
        %v5251 = vsub.s32 2, %v5250
        %v5252 = vrot.slane %v5227, %v5251
        %v5253 = vlaneseq
        %v5254 = vshrl.u32 %v5253, 7
        %v5255 = vsub.s32 3, %v5254
        %v5256 = vrot.slane %v5227, %v5255
        %v5257 = vlaneseq
        %v5258 = vshrl.u32 %v5257, 7
        %v5259 = vsub.s32 4, %v5258
        %v5260 = vrot.slane %v5227, %v5259
        %v5261 = vlaneseq
        %v5262 = vshrl.u32 %v5261, 7
        %v5263 = vsub.s32 5, %v5262
        %v5264 = vrot.slane %v5227, %v5263
        %v5271 = vmul.f32 %v5244, %v5228
        %v5272 = vmul.f32 %v5248, %v5229
        %v5273 = vmul.f32 %v5252, %v5230
        %v5274 = vmul.f32 %v5256, %v5231
        %v5275 = vmul.f32 %v5260, %v5232
        %v5276 = vmul.f32 %v5264, %v5233
        %v5277 = vmul.f32 %v5244, %v5234
        %v5278 = vmul.f32 %v5248, %v5235
        %v5279 = vmul.f32 %v5252, %v5236
        %v5280 = vmul.f32 %v5256, %v5237
        %v5281 = vmul.f32 %v5260, %v5238
        %v5282 = vmul.f32 %v5264, %v5239
        %v5283 = vadd.f32 %v5214, %v5271
        %v5284 = vadd.f32 %v5215, %v5272
        %v5285 = vadd.f32 %v5216, %v5273
        %v5286 = vadd.f32 %v5217, %v5274
        %v5287 = vadd.f32 %v5218, %v5275
        %v5288 = vadd.f32 %v5219, %v5276
        %v5289 = vadd.f32 %v5220, %v5277
        %v5290 = vadd.f32 %v5221, %v5278
        %v5291 = vadd.f32 %v5222, %v5279
        %v5292 = vadd.f32 %v5223, %v5280
        %v5293 = vadd.f32 %v5224, %v5281
        %v5294 = vadd.f32 %v5225, %v5282
        %s5295 = scalar_lea.vmem %s208, 289
        %v5296 = vld [vmem:[%s5295] ss:$2 sm:$0x3f]
        %v5297 = vld [vmem:[%s175 + $0x480] sm:$0xff]
        %v5298 = vld [vmem:[%s175 + $0x488] sm:$0xff]
        %v5299 = vld [vmem:[%s175 + $0x490] sm:$0xff]
        %v5300 = vld [vmem:[%s175 + $0x498] sm:$0xff]
        %v5301 = vld [vmem:[%s175 + $0x4a0] sm:$0xff]
        %v5302 = vld [vmem:[%s175 + $0x4a8] sm:$0xff]
        %v5303 = vld [vmem:[%s175 + $0xdb0] sm:$0x1]
        %v5304 = vld [vmem:[%s175 + $0xdb8] sm:$0x1]
        %v5305 = vld [vmem:[%s175 + $0xdc0] sm:$0x1]
        %v5306 = vld [vmem:[%s175 + $0xdc8] sm:$0x1]
        %v5307 = vld [vmem:[%s175 + $0xdd0] sm:$0x1]
        %v5308 = vld [vmem:[%s175 + $0xdd8] sm:$0x1]
        %v5310 = vlaneseq
        %v5311 = vshrl.u32 %v5310, 7
        %v5312 = vsub.s32 0, %v5311
        %v5313 = vrot.slane %v5296, %v5312
        %v5314 = vlaneseq
        %v5315 = vshrl.u32 %v5314, 7
        %v5316 = vsub.s32 1, %v5315
        %v5317 = vrot.slane %v5296, %v5316
        %v5318 = vlaneseq
        %v5319 = vshrl.u32 %v5318, 7
        %v5320 = vsub.s32 2, %v5319
        %v5321 = vrot.slane %v5296, %v5320
        %v5322 = vlaneseq
        %v5323 = vshrl.u32 %v5322, 7
        %v5324 = vsub.s32 3, %v5323
        %v5325 = vrot.slane %v5296, %v5324
        %v5326 = vlaneseq
        %v5327 = vshrl.u32 %v5326, 7
        %v5328 = vsub.s32 4, %v5327
        %v5329 = vrot.slane %v5296, %v5328
        %v5330 = vlaneseq
        %v5331 = vshrl.u32 %v5330, 7
        %v5332 = vsub.s32 5, %v5331
        %v5333 = vrot.slane %v5296, %v5332
        %v5340 = vmul.f32 %v5313, %v5297
        %v5341 = vmul.f32 %v5317, %v5298
        %v5342 = vmul.f32 %v5321, %v5299
        %v5343 = vmul.f32 %v5325, %v5300
        %v5344 = vmul.f32 %v5329, %v5301
        %v5345 = vmul.f32 %v5333, %v5302
        %v5346 = vmul.f32 %v5313, %v5303
        %v5347 = vmul.f32 %v5317, %v5304
        %v5348 = vmul.f32 %v5321, %v5305
        %v5349 = vmul.f32 %v5325, %v5306
        %v5350 = vmul.f32 %v5329, %v5307
        %v5351 = vmul.f32 %v5333, %v5308
        %v5352 = vadd.f32 %v5283, %v5340
        %v5353 = vadd.f32 %v5284, %v5341
        %v5354 = vadd.f32 %v5285, %v5342
        %v5355 = vadd.f32 %v5286, %v5343
        %v5356 = vadd.f32 %v5287, %v5344
        %v5357 = vadd.f32 %v5288, %v5345
        %v5358 = vadd.f32 %v5289, %v5346
        %v5359 = vadd.f32 %v5290, %v5347
        %v5360 = vadd.f32 %v5291, %v5348
        %v5361 = vadd.f32 %v5292, %v5349
        %v5362 = vadd.f32 %v5293, %v5350
        %v5363 = vadd.f32 %v5294, %v5351
        %s5364 = scalar_lea.vmem %s208, 301
        %v5365 = vld [vmem:[%s5364] ss:$2 sm:$0x3f]
        %v5366 = vld [vmem:[%s175 + $0x4b0] sm:$0xff]
        %v5367 = vld [vmem:[%s175 + $0x4b8] sm:$0xff]
        %v5368 = vld [vmem:[%s175 + $0x4c0] sm:$0xff]
        %v5369 = vld [vmem:[%s175 + $0x4c8] sm:$0xff]
        %v5370 = vld [vmem:[%s175 + $0x4d0] sm:$0xff]
        %v5371 = vld [vmem:[%s175 + $0x4d8] sm:$0xff]
        %v5372 = vld [vmem:[%s175 + $0xde0] sm:$0x1]
        %v5373 = vld [vmem:[%s175 + $0xde8] sm:$0x1]
        %v5374 = vld [vmem:[%s175 + $0xdf0] sm:$0x1]
        %v5375 = vld [vmem:[%s175 + $0xdf8] sm:$0x1]
        %v5376 = vld [vmem:[%s175 + $0xe00] sm:$0x1]
        %v5377 = vld [vmem:[%s175 + $0xe08] sm:$0x1]
        %v5379 = vlaneseq
        %v5380 = vshrl.u32 %v5379, 7
        %v5381 = vsub.s32 0, %v5380
        %v5382 = vrot.slane %v5365, %v5381
        %v5383 = vlaneseq
        %v5384 = vshrl.u32 %v5383, 7
        %v5385 = vsub.s32 1, %v5384
        %v5386 = vrot.slane %v5365, %v5385
        %v5387 = vlaneseq
        %v5388 = vshrl.u32 %v5387, 7
        %v5389 = vsub.s32 2, %v5388
        %v5390 = vrot.slane %v5365, %v5389
        %v5391 = vlaneseq
        %v5392 = vshrl.u32 %v5391, 7
        %v5393 = vsub.s32 3, %v5392
        %v5394 = vrot.slane %v5365, %v5393
        %v5395 = vlaneseq
        %v5396 = vshrl.u32 %v5395, 7
        %v5397 = vsub.s32 4, %v5396
        %v5398 = vrot.slane %v5365, %v5397
        %v5399 = vlaneseq
        %v5400 = vshrl.u32 %v5399, 7
        %v5401 = vsub.s32 5, %v5400
        %v5402 = vrot.slane %v5365, %v5401
        %v5409 = vmul.f32 %v5382, %v5366
        %v5410 = vmul.f32 %v5386, %v5367
        %v5411 = vmul.f32 %v5390, %v5368
        %v5412 = vmul.f32 %v5394, %v5369
        %v5413 = vmul.f32 %v5398, %v5370
        %v5414 = vmul.f32 %v5402, %v5371
        %v5415 = vmul.f32 %v5382, %v5372
        %v5416 = vmul.f32 %v5386, %v5373
        %v5417 = vmul.f32 %v5390, %v5374
        %v5418 = vmul.f32 %v5394, %v5375
        %v5419 = vmul.f32 %v5398, %v5376
        %v5420 = vmul.f32 %v5402, %v5377
        %v5421 = vadd.f32 %v5352, %v5409
        %v5422 = vadd.f32 %v5353, %v5410
        %v5423 = vadd.f32 %v5354, %v5411
        %v5424 = vadd.f32 %v5355, %v5412
        %v5425 = vadd.f32 %v5356, %v5413
        %v5426 = vadd.f32 %v5357, %v5414
        %v5427 = vadd.f32 %v5358, %v5415
        %v5428 = vadd.f32 %v5359, %v5416
        %v5429 = vadd.f32 %v5360, %v5417
        %v5430 = vadd.f32 %v5361, %v5418
        %v5431 = vadd.f32 %v5362, %v5419
        %v5432 = vadd.f32 %v5363, %v5420
        %s5433 = scalar_lea.vmem %s208, 313
        %v5434 = vld [vmem:[%s5433] ss:$2 sm:$0x3f]
        %v5435 = vld [vmem:[%s175 + $0x4e0] sm:$0xff]
        %v5436 = vld [vmem:[%s175 + $0x4e8] sm:$0xff]
        %v5437 = vld [vmem:[%s175 + $0x4f0] sm:$0xff]
        %v5438 = vld [vmem:[%s175 + $0x4f8] sm:$0xff]
        %v5439 = vld [vmem:[%s175 + $0x500] sm:$0xff]
        %v5440 = vld [vmem:[%s175 + $0x508] sm:$0xff]
        %v5441 = vld [vmem:[%s175 + $0xe10] sm:$0x1]
        %v5442 = vld [vmem:[%s175 + $0xe18] sm:$0x1]
        %v5443 = vld [vmem:[%s175 + $0xe20] sm:$0x1]
        %v5444 = vld [vmem:[%s175 + $0xe28] sm:$0x1]
        %v5445 = vld [vmem:[%s175 + $0xe30] sm:$0x1]
        %v5446 = vld [vmem:[%s175 + $0xe38] sm:$0x1]
        %v5448 = vlaneseq
        %v5449 = vshrl.u32 %v5448, 7
        %v5450 = vsub.s32 0, %v5449
        %v5451 = vrot.slane %v5434, %v5450
        %v5452 = vlaneseq
        %v5453 = vshrl.u32 %v5452, 7
        %v5454 = vsub.s32 1, %v5453
        %v5455 = vrot.slane %v5434, %v5454
        %v5456 = vlaneseq
        %v5457 = vshrl.u32 %v5456, 7
        %v5458 = vsub.s32 2, %v5457
        %v5459 = vrot.slane %v5434, %v5458
        %v5460 = vlaneseq
        %v5461 = vshrl.u32 %v5460, 7
        %v5462 = vsub.s32 3, %v5461
        %v5463 = vrot.slane %v5434, %v5462
        %v5464 = vlaneseq
        %v5465 = vshrl.u32 %v5464, 7
        %v5466 = vsub.s32 4, %v5465
        %v5467 = vrot.slane %v5434, %v5466
        %v5468 = vlaneseq
        %v5469 = vshrl.u32 %v5468, 7
        %v5470 = vsub.s32 5, %v5469
        %v5471 = vrot.slane %v5434, %v5470
        %v5478 = vmul.f32 %v5451, %v5435
        %v5479 = vmul.f32 %v5455, %v5436
        %v5480 = vmul.f32 %v5459, %v5437
        %v5481 = vmul.f32 %v5463, %v5438
        %v5482 = vmul.f32 %v5467, %v5439
        %v5483 = vmul.f32 %v5471, %v5440
        %v5484 = vmul.f32 %v5451, %v5441
        %v5485 = vmul.f32 %v5455, %v5442
        %v5486 = vmul.f32 %v5459, %v5443
        %v5487 = vmul.f32 %v5463, %v5444
        %v5488 = vmul.f32 %v5467, %v5445
        %v5489 = vmul.f32 %v5471, %v5446
        %v5490 = vadd.f32 %v5421, %v5478
        %v5491 = vadd.f32 %v5422, %v5479
        %v5492 = vadd.f32 %v5423, %v5480
        %v5493 = vadd.f32 %v5424, %v5481
        %v5494 = vadd.f32 %v5425, %v5482
        %v5495 = vadd.f32 %v5426, %v5483
        %v5496 = vadd.f32 %v5427, %v5484
        %v5497 = vadd.f32 %v5428, %v5485
        %v5498 = vadd.f32 %v5429, %v5486
        %v5499 = vadd.f32 %v5430, %v5487
        %v5500 = vadd.f32 %v5431, %v5488
        %v5501 = vadd.f32 %v5432, %v5489
        %s5502 = scalar_lea.vmem %s208, 325
        %v5503 = vld [vmem:[%s5502] ss:$2 sm:$0x3f]
        %v5504 = vld [vmem:[%s175 + $0x510] sm:$0xff]
        %v5505 = vld [vmem:[%s175 + $0x518] sm:$0xff]
        %v5506 = vld [vmem:[%s175 + $0x520] sm:$0xff]
        %v5507 = vld [vmem:[%s175 + $0x528] sm:$0xff]
        %v5508 = vld [vmem:[%s175 + $0x530] sm:$0xff]
        %v5509 = vld [vmem:[%s175 + $0x538] sm:$0xff]
        %v5510 = vld [vmem:[%s175 + $0xe40] sm:$0x1]
        %v5511 = vld [vmem:[%s175 + $0xe48] sm:$0x1]
        %v5512 = vld [vmem:[%s175 + $0xe50] sm:$0x1]
        %v5513 = vld [vmem:[%s175 + $0xe58] sm:$0x1]
        %v5514 = vld [vmem:[%s175 + $0xe60] sm:$0x1]
        %v5515 = vld [vmem:[%s175 + $0xe68] sm:$0x1]
        %v5517 = vlaneseq
        %v5518 = vshrl.u32 %v5517, 7
        %v5519 = vsub.s32 0, %v5518
        %v5520 = vrot.slane %v5503, %v5519
        %v5521 = vlaneseq
        %v5522 = vshrl.u32 %v5521, 7
        %v5523 = vsub.s32 1, %v5522
        %v5524 = vrot.slane %v5503, %v5523
        %v5525 = vlaneseq
        %v5526 = vshrl.u32 %v5525, 7
        %v5527 = vsub.s32 2, %v5526
        %v5528 = vrot.slane %v5503, %v5527
        %v5529 = vlaneseq
        %v5530 = vshrl.u32 %v5529, 7
        %v5531 = vsub.s32 3, %v5530
        %v5532 = vrot.slane %v5503, %v5531
        %v5533 = vlaneseq
        %v5534 = vshrl.u32 %v5533, 7
        %v5535 = vsub.s32 4, %v5534
        %v5536 = vrot.slane %v5503, %v5535
        %v5537 = vlaneseq
        %v5538 = vshrl.u32 %v5537, 7
        %v5539 = vsub.s32 5, %v5538
        %v5540 = vrot.slane %v5503, %v5539
        %v5547 = vmul.f32 %v5520, %v5504
        %v5548 = vmul.f32 %v5524, %v5505
        %v5549 = vmul.f32 %v5528, %v5506
        %v5550 = vmul.f32 %v5532, %v5507
        %v5551 = vmul.f32 %v5536, %v5508
        %v5552 = vmul.f32 %v5540, %v5509
        %v5553 = vmul.f32 %v5520, %v5510
        %v5554 = vmul.f32 %v5524, %v5511
        %v5555 = vmul.f32 %v5528, %v5512
        %v5556 = vmul.f32 %v5532, %v5513
        %v5557 = vmul.f32 %v5536, %v5514
        %v5558 = vmul.f32 %v5540, %v5515
        %v5559 = vadd.f32 %v5490, %v5547
        %v5560 = vadd.f32 %v5491, %v5548
        %v5561 = vadd.f32 %v5492, %v5549
        %v5562 = vadd.f32 %v5493, %v5550
        %v5563 = vadd.f32 %v5494, %v5551
        %v5564 = vadd.f32 %v5495, %v5552
        %v5565 = vadd.f32 %v5496, %v5553
        %v5566 = vadd.f32 %v5497, %v5554
        %v5567 = vadd.f32 %v5498, %v5555
        %v5568 = vadd.f32 %v5499, %v5556
        %v5569 = vadd.f32 %v5500, %v5557
        %v5570 = vadd.f32 %v5501, %v5558
        %s5571 = scalar_lea.vmem %s208, 337
        %v5572 = vld [vmem:[%s5571] ss:$2 sm:$0x3f]
        %v5573 = vld [vmem:[%s175 + $0x540] sm:$0xff]
        %v5574 = vld [vmem:[%s175 + $0x548] sm:$0xff]
        %v5575 = vld [vmem:[%s175 + $0x550] sm:$0xff]
        %v5576 = vld [vmem:[%s175 + $0x558] sm:$0xff]
        %v5577 = vld [vmem:[%s175 + $0x560] sm:$0xff]
        %v5578 = vld [vmem:[%s175 + $0x568] sm:$0xff]
        %v5579 = vld [vmem:[%s175 + $0xe70] sm:$0x1]
        %v5580 = vld [vmem:[%s175 + $0xe78] sm:$0x1]
        %v5581 = vld [vmem:[%s175 + $0xe80] sm:$0x1]
        %v5582 = vld [vmem:[%s175 + $0xe88] sm:$0x1]
        %v5583 = vld [vmem:[%s175 + $0xe90] sm:$0x1]
        %v5584 = vld [vmem:[%s175 + $0xe98] sm:$0x1]
        %v5586 = vlaneseq
        %v5587 = vshrl.u32 %v5586, 7
        %v5588 = vsub.s32 0, %v5587
        %v5589 = vrot.slane %v5572, %v5588
        %v5590 = vlaneseq
        %v5591 = vshrl.u32 %v5590, 7
        %v5592 = vsub.s32 1, %v5591
        %v5593 = vrot.slane %v5572, %v5592
        %v5594 = vlaneseq
        %v5595 = vshrl.u32 %v5594, 7
        %v5596 = vsub.s32 2, %v5595
        %v5597 = vrot.slane %v5572, %v5596
        %v5598 = vlaneseq
        %v5599 = vshrl.u32 %v5598, 7
        %v5600 = vsub.s32 3, %v5599
        %v5601 = vrot.slane %v5572, %v5600
        %v5602 = vlaneseq
        %v5603 = vshrl.u32 %v5602, 7
        %v5604 = vsub.s32 4, %v5603
        %v5605 = vrot.slane %v5572, %v5604
        %v5606 = vlaneseq
        %v5607 = vshrl.u32 %v5606, 7
        %v5608 = vsub.s32 5, %v5607
        %v5609 = vrot.slane %v5572, %v5608
        %v5616 = vmul.f32 %v5589, %v5573
        %v5617 = vmul.f32 %v5593, %v5574
        %v5618 = vmul.f32 %v5597, %v5575
        %v5619 = vmul.f32 %v5601, %v5576
        %v5620 = vmul.f32 %v5605, %v5577
        %v5621 = vmul.f32 %v5609, %v5578
        %v5622 = vmul.f32 %v5589, %v5579
        %v5623 = vmul.f32 %v5593, %v5580
        %v5624 = vmul.f32 %v5597, %v5581
        %v5625 = vmul.f32 %v5601, %v5582
        %v5626 = vmul.f32 %v5605, %v5583
        %v5627 = vmul.f32 %v5609, %v5584
        %v5628 = vadd.f32 %v5559, %v5616
        %v5629 = vadd.f32 %v5560, %v5617
        %v5630 = vadd.f32 %v5561, %v5618
        %v5631 = vadd.f32 %v5562, %v5619
        %v5632 = vadd.f32 %v5563, %v5620
        %v5633 = vadd.f32 %v5564, %v5621
        %v5634 = vadd.f32 %v5565, %v5622
        %v5635 = vadd.f32 %v5566, %v5623
        %v5636 = vadd.f32 %v5567, %v5624
        %v5637 = vadd.f32 %v5568, %v5625
        %v5638 = vadd.f32 %v5569, %v5626
        %v5639 = vadd.f32 %v5570, %v5627
        %s5640 = scalar_lea.vmem %s208, 349
        %v5641 = vld [vmem:[%s5640] ss:$2 sm:$0x3f]
        %v5642 = vld [vmem:[%s175 + $0x570] sm:$0xff]
        %v5643 = vld [vmem:[%s175 + $0x578] sm:$0xff]
        %v5644 = vld [vmem:[%s175 + $0x580] sm:$0xff]
        %v5645 = vld [vmem:[%s175 + $0x588] sm:$0xff]
        %v5646 = vld [vmem:[%s175 + $0x590] sm:$0xff]
        %v5647 = vld [vmem:[%s175 + $0x598] sm:$0xff]
        %v5648 = vld [vmem:[%s175 + $0xea0] sm:$0x1]
        %v5649 = vld [vmem:[%s175 + $0xea8] sm:$0x1]
        %v5650 = vld [vmem:[%s175 + $0xeb0] sm:$0x1]
        %v5651 = vld [vmem:[%s175 + $0xeb8] sm:$0x1]
        %v5652 = vld [vmem:[%s175 + $0xec0] sm:$0x1]
        %v5653 = vld [vmem:[%s175 + $0xec8] sm:$0x1]
        %v5655 = vlaneseq
        %v5656 = vshrl.u32 %v5655, 7
        %v5657 = vsub.s32 0, %v5656
        %v5658 = vrot.slane %v5641, %v5657
        %v5659 = vlaneseq
        %v5660 = vshrl.u32 %v5659, 7
        %v5661 = vsub.s32 1, %v5660
        %v5662 = vrot.slane %v5641, %v5661
        %v5663 = vlaneseq
        %v5664 = vshrl.u32 %v5663, 7
        %v5665 = vsub.s32 2, %v5664
        %v5666 = vrot.slane %v5641, %v5665
        %v5667 = vlaneseq
        %v5668 = vshrl.u32 %v5667, 7
        %v5669 = vsub.s32 3, %v5668
        %v5670 = vrot.slane %v5641, %v5669
        %v5671 = vlaneseq
        %v5672 = vshrl.u32 %v5671, 7
        %v5673 = vsub.s32 4, %v5672
        %v5674 = vrot.slane %v5641, %v5673
        %v5675 = vlaneseq
        %v5676 = vshrl.u32 %v5675, 7
        %v5677 = vsub.s32 5, %v5676
        %v5678 = vrot.slane %v5641, %v5677
        %v5685 = vmul.f32 %v5658, %v5642
        %v5686 = vmul.f32 %v5662, %v5643
        %v5687 = vmul.f32 %v5666, %v5644
        %v5688 = vmul.f32 %v5670, %v5645
        %v5689 = vmul.f32 %v5674, %v5646
        %v5690 = vmul.f32 %v5678, %v5647
        %v5691 = vmul.f32 %v5658, %v5648
        %v5692 = vmul.f32 %v5662, %v5649
        %v5693 = vmul.f32 %v5666, %v5650
        %v5694 = vmul.f32 %v5670, %v5651
        %v5695 = vmul.f32 %v5674, %v5652
        %v5696 = vmul.f32 %v5678, %v5653
        %v5697 = vadd.f32 %v5628, %v5685
        %v5698 = vadd.f32 %v5629, %v5686
        %v5699 = vadd.f32 %v5630, %v5687
        %v5700 = vadd.f32 %v5631, %v5688
        %v5701 = vadd.f32 %v5632, %v5689
        %v5702 = vadd.f32 %v5633, %v5690
        %v5703 = vadd.f32 %v5634, %v5691
        %v5704 = vadd.f32 %v5635, %v5692
        %v5705 = vadd.f32 %v5636, %v5693
        %v5706 = vadd.f32 %v5637, %v5694
        %v5707 = vadd.f32 %v5638, %v5695
        %v5708 = vadd.f32 %v5639, %v5696
        %s5709 = scalar_lea.vmem %s208, 361
        %v5710 = vld [vmem:[%s5709] ss:$2 sm:$0x3f]
        %v5711 = vld [vmem:[%s175 + $0x5a0] sm:$0xff]
        %v5712 = vld [vmem:[%s175 + $0x5a8] sm:$0xff]
        %v5713 = vld [vmem:[%s175 + $0x5b0] sm:$0xff]
        %v5714 = vld [vmem:[%s175 + $0x5b8] sm:$0xff]
        %v5715 = vld [vmem:[%s175 + $0x5c0] sm:$0xff]
        %v5716 = vld [vmem:[%s175 + $0x5c8] sm:$0xff]
        %v5717 = vld [vmem:[%s175 + $0xed0] sm:$0x1]
        %v5718 = vld [vmem:[%s175 + $0xed8] sm:$0x1]
        %v5719 = vld [vmem:[%s175 + $0xee0] sm:$0x1]
        %v5720 = vld [vmem:[%s175 + $0xee8] sm:$0x1]
        %v5721 = vld [vmem:[%s175 + $0xef0] sm:$0x1]
        %v5722 = vld [vmem:[%s175 + $0xef8] sm:$0x1]
        %v5724 = vlaneseq
        %v5725 = vshrl.u32 %v5724, 7
        %v5726 = vsub.s32 0, %v5725
        %v5727 = vrot.slane %v5710, %v5726
        %v5728 = vlaneseq
        %v5729 = vshrl.u32 %v5728, 7
        %v5730 = vsub.s32 1, %v5729
        %v5731 = vrot.slane %v5710, %v5730
        %v5732 = vlaneseq
        %v5733 = vshrl.u32 %v5732, 7
        %v5734 = vsub.s32 2, %v5733
        %v5735 = vrot.slane %v5710, %v5734
        %v5736 = vlaneseq
        %v5737 = vshrl.u32 %v5736, 7
        %v5738 = vsub.s32 3, %v5737
        %v5739 = vrot.slane %v5710, %v5738
        %v5740 = vlaneseq
        %v5741 = vshrl.u32 %v5740, 7
        %v5742 = vsub.s32 4, %v5741
        %v5743 = vrot.slane %v5710, %v5742
        %v5744 = vlaneseq
        %v5745 = vshrl.u32 %v5744, 7
        %v5746 = vsub.s32 5, %v5745
        %v5747 = vrot.slane %v5710, %v5746
        %v5754 = vmul.f32 %v5727, %v5711
        %v5755 = vmul.f32 %v5731, %v5712
        %v5756 = vmul.f32 %v5735, %v5713
        %v5757 = vmul.f32 %v5739, %v5714
        %v5758 = vmul.f32 %v5743, %v5715
        %v5759 = vmul.f32 %v5747, %v5716
        %v5760 = vmul.f32 %v5727, %v5717
        %v5761 = vmul.f32 %v5731, %v5718
        %v5762 = vmul.f32 %v5735, %v5719
        %v5763 = vmul.f32 %v5739, %v5720
        %v5764 = vmul.f32 %v5743, %v5721
        %v5765 = vmul.f32 %v5747, %v5722
        %v5766 = vadd.f32 %v5697, %v5754
        %v5767 = vadd.f32 %v5698, %v5755
        %v5768 = vadd.f32 %v5699, %v5756
        %v5769 = vadd.f32 %v5700, %v5757
        %v5770 = vadd.f32 %v5701, %v5758
        %v5771 = vadd.f32 %v5702, %v5759
        %v5772 = vadd.f32 %v5703, %v5760
        %v5773 = vadd.f32 %v5704, %v5761
        %v5774 = vadd.f32 %v5705, %v5762
        %v5775 = vadd.f32 %v5706, %v5763
        %v5776 = vadd.f32 %v5707, %v5764
        %v5777 = vadd.f32 %v5708, %v5765
        %s5778 = scalar_lea.vmem %s208, 373
        %v5779 = vld [vmem:[%s5778] ss:$2 sm:$0x3f]
        %v5780 = vld [vmem:[%s175 + $0x5d0] sm:$0xff]
        %v5781 = vld [vmem:[%s175 + $0x5d8] sm:$0xff]
        %v5782 = vld [vmem:[%s175 + $0x5e0] sm:$0xff]
        %v5783 = vld [vmem:[%s175 + $0x5e8] sm:$0xff]
        %v5784 = vld [vmem:[%s175 + $0x5f0] sm:$0xff]
        %v5785 = vld [vmem:[%s175 + $0x5f8] sm:$0xff]
        %v5786 = vld [vmem:[%s175 + $0xf00] sm:$0x1]
        %v5787 = vld [vmem:[%s175 + $0xf08] sm:$0x1]
        %v5788 = vld [vmem:[%s175 + $0xf10] sm:$0x1]
        %v5789 = vld [vmem:[%s175 + $0xf18] sm:$0x1]
        %v5790 = vld [vmem:[%s175 + $0xf20] sm:$0x1]
        %v5791 = vld [vmem:[%s175 + $0xf28] sm:$0x1]
        %v5793 = vlaneseq
        %v5794 = vshrl.u32 %v5793, 7
        %v5795 = vsub.s32 0, %v5794
        %v5796 = vrot.slane %v5779, %v5795
        %v5797 = vlaneseq
        %v5798 = vshrl.u32 %v5797, 7
        %v5799 = vsub.s32 1, %v5798
        %v5800 = vrot.slane %v5779, %v5799
        %v5801 = vlaneseq
        %v5802 = vshrl.u32 %v5801, 7
        %v5803 = vsub.s32 2, %v5802
        %v5804 = vrot.slane %v5779, %v5803
        %v5805 = vlaneseq
        %v5806 = vshrl.u32 %v5805, 7
        %v5807 = vsub.s32 3, %v5806
        %v5808 = vrot.slane %v5779, %v5807
        %v5809 = vlaneseq
        %v5810 = vshrl.u32 %v5809, 7
        %v5811 = vsub.s32 4, %v5810
        %v5812 = vrot.slane %v5779, %v5811
        %v5813 = vlaneseq
        %v5814 = vshrl.u32 %v5813, 7
        %v5815 = vsub.s32 5, %v5814
        %v5816 = vrot.slane %v5779, %v5815
        %v5823 = vmul.f32 %v5796, %v5780
        %v5824 = vmul.f32 %v5800, %v5781
        %v5825 = vmul.f32 %v5804, %v5782
        %v5826 = vmul.f32 %v5808, %v5783
        %v5827 = vmul.f32 %v5812, %v5784
        %v5828 = vmul.f32 %v5816, %v5785
        %v5829 = vmul.f32 %v5796, %v5786
        %v5830 = vmul.f32 %v5800, %v5787
        %v5831 = vmul.f32 %v5804, %v5788
        %v5832 = vmul.f32 %v5808, %v5789
        %v5833 = vmul.f32 %v5812, %v5790
        %v5834 = vmul.f32 %v5816, %v5791
        %v5835 = vadd.f32 %v5766, %v5823
        %v5836 = vadd.f32 %v5767, %v5824
        %v5837 = vadd.f32 %v5768, %v5825
        %v5838 = vadd.f32 %v5769, %v5826
        %v5839 = vadd.f32 %v5770, %v5827
        %v5840 = vadd.f32 %v5771, %v5828
        %v5841 = vadd.f32 %v5772, %v5829
        %v5842 = vadd.f32 %v5773, %v5830
        %v5843 = vadd.f32 %v5774, %v5831
        %v5844 = vadd.f32 %v5775, %v5832
        %v5845 = vadd.f32 %v5776, %v5833
        %v5846 = vadd.f32 %v5777, %v5834
        %s5847 = scalar_lea.vmem %s208, 385
        %v5848 = vld [vmem:[%s5847] ss:$2 sm:$0x3f]
        %v5849 = vld [vmem:[%s175 + $0x600] sm:$0xff]
        %v5850 = vld [vmem:[%s175 + $0x608] sm:$0xff]
        %v5851 = vld [vmem:[%s175 + $0x610] sm:$0xff]
        %v5852 = vld [vmem:[%s175 + $0x618] sm:$0xff]
        %v5853 = vld [vmem:[%s175 + $0x620] sm:$0xff]
        %v5854 = vld [vmem:[%s175 + $0x628] sm:$0xff]
        %v5855 = vld [vmem:[%s175 + $0xf30] sm:$0x1]
        %v5856 = vld [vmem:[%s175 + $0xf38] sm:$0x1]
        %v5857 = vld [vmem:[%s175 + $0xf40] sm:$0x1]
        %v5858 = vld [vmem:[%s175 + $0xf48] sm:$0x1]
        %v5859 = vld [vmem:[%s175 + $0xf50] sm:$0x1]
        %v5860 = vld [vmem:[%s175 + $0xf58] sm:$0x1]
        %v5862 = vlaneseq
        %v5863 = vshrl.u32 %v5862, 7
        %v5864 = vsub.s32 0, %v5863
        %v5865 = vrot.slane %v5848, %v5864
        %v5866 = vlaneseq
        %v5867 = vshrl.u32 %v5866, 7
        %v5868 = vsub.s32 1, %v5867
        %v5869 = vrot.slane %v5848, %v5868
        %v5870 = vlaneseq
        %v5871 = vshrl.u32 %v5870, 7
        %v5872 = vsub.s32 2, %v5871
        %v5873 = vrot.slane %v5848, %v5872
        %v5874 = vlaneseq
        %v5875 = vshrl.u32 %v5874, 7
        %v5876 = vsub.s32 3, %v5875
        %v5877 = vrot.slane %v5848, %v5876
        %v5878 = vlaneseq
        %v5879 = vshrl.u32 %v5878, 7
        %v5880 = vsub.s32 4, %v5879
        %v5881 = vrot.slane %v5848, %v5880
        %v5882 = vlaneseq
        %v5883 = vshrl.u32 %v5882, 7
        %v5884 = vsub.s32 5, %v5883
        %v5885 = vrot.slane %v5848, %v5884
        %v5892 = vmul.f32 %v5865, %v5849
        %v5893 = vmul.f32 %v5869, %v5850
        %v5894 = vmul.f32 %v5873, %v5851
        %v5895 = vmul.f32 %v5877, %v5852
        %v5896 = vmul.f32 %v5881, %v5853
        %v5897 = vmul.f32 %v5885, %v5854
        %v5898 = vmul.f32 %v5865, %v5855
        %v5899 = vmul.f32 %v5869, %v5856
        %v5900 = vmul.f32 %v5873, %v5857
        %v5901 = vmul.f32 %v5877, %v5858
        %v5902 = vmul.f32 %v5881, %v5859
        %v5903 = vmul.f32 %v5885, %v5860
        %v5904 = vadd.f32 %v5835, %v5892
        %v5905 = vadd.f32 %v5836, %v5893
        %v5906 = vadd.f32 %v5837, %v5894
        %v5907 = vadd.f32 %v5838, %v5895
        %v5908 = vadd.f32 %v5839, %v5896
        %v5909 = vadd.f32 %v5840, %v5897
        %v5910 = vadd.f32 %v5841, %v5898
        %v5911 = vadd.f32 %v5842, %v5899
        %v5912 = vadd.f32 %v5843, %v5900
        %v5913 = vadd.f32 %v5844, %v5901
        %v5914 = vadd.f32 %v5845, %v5902
        %v5915 = vadd.f32 %v5846, %v5903
        %s5916 = scalar_lea.vmem %s208, 397
        %v5917 = vld [vmem:[%s5916] ss:$2 sm:$0x3f]
        %v5918 = vld [vmem:[%s175 + $0x630] sm:$0xff]
        %v5919 = vld [vmem:[%s175 + $0x638] sm:$0xff]
        %v5920 = vld [vmem:[%s175 + $0x640] sm:$0xff]
        %v5921 = vld [vmem:[%s175 + $0x648] sm:$0xff]
        %v5922 = vld [vmem:[%s175 + $0x650] sm:$0xff]
        %v5923 = vld [vmem:[%s175 + $0x658] sm:$0xff]
        %v5924 = vld [vmem:[%s175 + $0xf60] sm:$0x1]
        %v5925 = vld [vmem:[%s175 + $0xf68] sm:$0x1]
        %v5926 = vld [vmem:[%s175 + $0xf70] sm:$0x1]
        %v5927 = vld [vmem:[%s175 + $0xf78] sm:$0x1]
        %v5928 = vld [vmem:[%s175 + $0xf80] sm:$0x1]
        %v5929 = vld [vmem:[%s175 + $0xf88] sm:$0x1]
        %v5931 = vlaneseq
        %v5932 = vshrl.u32 %v5931, 7
        %v5933 = vsub.s32 0, %v5932
        %v5934 = vrot.slane %v5917, %v5933
        %v5935 = vlaneseq
        %v5936 = vshrl.u32 %v5935, 7
        %v5937 = vsub.s32 1, %v5936
        %v5938 = vrot.slane %v5917, %v5937
        %v5939 = vlaneseq
        %v5940 = vshrl.u32 %v5939, 7
        %v5941 = vsub.s32 2, %v5940
        %v5942 = vrot.slane %v5917, %v5941
        %v5943 = vlaneseq
        %v5944 = vshrl.u32 %v5943, 7
        %v5945 = vsub.s32 3, %v5944
        %v5946 = vrot.slane %v5917, %v5945
        %v5947 = vlaneseq
        %v5948 = vshrl.u32 %v5947, 7
        %v5949 = vsub.s32 4, %v5948
        %v5950 = vrot.slane %v5917, %v5949
        %v5951 = vlaneseq
        %v5952 = vshrl.u32 %v5951, 7
        %v5953 = vsub.s32 5, %v5952
        %v5954 = vrot.slane %v5917, %v5953
        %v5961 = vmul.f32 %v5934, %v5918
        %v5962 = vmul.f32 %v5938, %v5919
        %v5963 = vmul.f32 %v5942, %v5920
        %v5964 = vmul.f32 %v5946, %v5921
        %v5965 = vmul.f32 %v5950, %v5922
        %v5966 = vmul.f32 %v5954, %v5923
        %v5967 = vmul.f32 %v5934, %v5924
        %v5968 = vmul.f32 %v5938, %v5925
        %v5969 = vmul.f32 %v5942, %v5926
        %v5970 = vmul.f32 %v5946, %v5927
        %v5971 = vmul.f32 %v5950, %v5928
        %v5972 = vmul.f32 %v5954, %v5929
        %v5973 = vadd.f32 %v5904, %v5961
        %v5974 = vadd.f32 %v5905, %v5962
        %v5975 = vadd.f32 %v5906, %v5963
        %v5976 = vadd.f32 %v5907, %v5964
        %v5977 = vadd.f32 %v5908, %v5965
        %v5978 = vadd.f32 %v5909, %v5966
        %v5979 = vadd.f32 %v5910, %v5967
        %v5980 = vadd.f32 %v5911, %v5968
        %v5981 = vadd.f32 %v5912, %v5969
        %v5982 = vadd.f32 %v5913, %v5970
        %v5983 = vadd.f32 %v5914, %v5971
        %v5984 = vadd.f32 %v5915, %v5972
        %s5985 = scalar_lea.vmem %s208, 409
        %v5986 = vld [vmem:[%s5985] ss:$2 sm:$0x3f]
        %v5987 = vld [vmem:[%s175 + $0x660] sm:$0xff]
        %v5988 = vld [vmem:[%s175 + $0x668] sm:$0xff]
        %v5989 = vld [vmem:[%s175 + $0x670] sm:$0xff]
        %v5990 = vld [vmem:[%s175 + $0x678] sm:$0xff]
        %v5991 = vld [vmem:[%s175 + $0x680] sm:$0xff]
        %v5992 = vld [vmem:[%s175 + $0x688] sm:$0xff]
        %v5993 = vld [vmem:[%s175 + $0xf90] sm:$0x1]
        %v5994 = vld [vmem:[%s175 + $0xf98] sm:$0x1]
        %v5995 = vld [vmem:[%s175 + $0xfa0] sm:$0x1]
        %v5996 = vld [vmem:[%s175 + $0xfa8] sm:$0x1]
        %v5997 = vld [vmem:[%s175 + $0xfb0] sm:$0x1]
        %v5998 = vld [vmem:[%s175 + $0xfb8] sm:$0x1]
        %v6000 = vlaneseq
        %v6001 = vshrl.u32 %v6000, 7
        %v6002 = vsub.s32 0, %v6001
        %v6003 = vrot.slane %v5986, %v6002
        %v6004 = vlaneseq
        %v6005 = vshrl.u32 %v6004, 7
        %v6006 = vsub.s32 1, %v6005
        %v6007 = vrot.slane %v5986, %v6006
        %v6008 = vlaneseq
        %v6009 = vshrl.u32 %v6008, 7
        %v6010 = vsub.s32 2, %v6009
        %v6011 = vrot.slane %v5986, %v6010
        %v6012 = vlaneseq
        %v6013 = vshrl.u32 %v6012, 7
        %v6014 = vsub.s32 3, %v6013
        %v6015 = vrot.slane %v5986, %v6014
        %v6016 = vlaneseq
        %v6017 = vshrl.u32 %v6016, 7
        %v6018 = vsub.s32 4, %v6017
        %v6019 = vrot.slane %v5986, %v6018
        %v6020 = vlaneseq
        %v6021 = vshrl.u32 %v6020, 7
        %v6022 = vsub.s32 5, %v6021
        %v6023 = vrot.slane %v5986, %v6022
        %v6030 = vmul.f32 %v6003, %v5987
        %v6031 = vmul.f32 %v6007, %v5988
        %v6032 = vmul.f32 %v6011, %v5989
        %v6033 = vmul.f32 %v6015, %v5990
        %v6034 = vmul.f32 %v6019, %v5991
        %v6035 = vmul.f32 %v6023, %v5992
        %v6036 = vmul.f32 %v6003, %v5993
        %v6037 = vmul.f32 %v6007, %v5994
        %v6038 = vmul.f32 %v6011, %v5995
        %v6039 = vmul.f32 %v6015, %v5996
        %v6040 = vmul.f32 %v6019, %v5997
        %v6041 = vmul.f32 %v6023, %v5998
        %v6042 = vadd.f32 %v5973, %v6030
        %v6043 = vadd.f32 %v5974, %v6031
        %v6044 = vadd.f32 %v5975, %v6032
        %v6045 = vadd.f32 %v5976, %v6033
        %v6046 = vadd.f32 %v5977, %v6034
        %v6047 = vadd.f32 %v5978, %v6035
        %v6048 = vadd.f32 %v5979, %v6036
        %v6049 = vadd.f32 %v5980, %v6037
        %v6050 = vadd.f32 %v5981, %v6038
        %v6051 = vadd.f32 %v5982, %v6039
        %v6052 = vadd.f32 %v5983, %v6040
        %v6053 = vadd.f32 %v5984, %v6041
        %s6054 = scalar_lea.vmem %s208, 421
        %v6055 = vld [vmem:[%s6054] ss:$2 sm:$0x3f]
        %v6056 = vld [vmem:[%s175 + $0x690] sm:$0xff]
        %v6057 = vld [vmem:[%s175 + $0x698] sm:$0xff]
        %v6058 = vld [vmem:[%s175 + $0x6a0] sm:$0xff]
        %v6059 = vld [vmem:[%s175 + $0x6a8] sm:$0xff]
        %v6060 = vld [vmem:[%s175 + $0x6b0] sm:$0xff]
        %v6061 = vld [vmem:[%s175 + $0x6b8] sm:$0xff]
        %v6062 = vld [vmem:[%s175 + $0xfc0] sm:$0x1]
        %v6063 = vld [vmem:[%s175 + $0xfc8] sm:$0x1]
        %v6064 = vld [vmem:[%s175 + $0xfd0] sm:$0x1]
        %v6065 = vld [vmem:[%s175 + $0xfd8] sm:$0x1]
        %v6066 = vld [vmem:[%s175 + $0xfe0] sm:$0x1]
        %v6067 = vld [vmem:[%s175 + $0xfe8] sm:$0x1]
        %v6069 = vlaneseq
        %v6070 = vshrl.u32 %v6069, 7
        %v6071 = vsub.s32 0, %v6070
        %v6072 = vrot.slane %v6055, %v6071
        %v6073 = vlaneseq
        %v6074 = vshrl.u32 %v6073, 7
        %v6075 = vsub.s32 1, %v6074
        %v6076 = vrot.slane %v6055, %v6075
        %v6077 = vlaneseq
        %v6078 = vshrl.u32 %v6077, 7
        %v6079 = vsub.s32 2, %v6078
        %v6080 = vrot.slane %v6055, %v6079
        %v6081 = vlaneseq
        %v6082 = vshrl.u32 %v6081, 7
        %v6083 = vsub.s32 3, %v6082
        %v6084 = vrot.slane %v6055, %v6083
        %v6085 = vlaneseq
        %v6086 = vshrl.u32 %v6085, 7
        %v6087 = vsub.s32 4, %v6086
        %v6088 = vrot.slane %v6055, %v6087
        %v6089 = vlaneseq
        %v6090 = vshrl.u32 %v6089, 7
        %v6091 = vsub.s32 5, %v6090
        %v6092 = vrot.slane %v6055, %v6091
        %v6099 = vmul.f32 %v6072, %v6056
        %v6100 = vmul.f32 %v6076, %v6057
        %v6101 = vmul.f32 %v6080, %v6058
        %v6102 = vmul.f32 %v6084, %v6059
        %v6103 = vmul.f32 %v6088, %v6060
        %v6104 = vmul.f32 %v6092, %v6061
        %v6105 = vmul.f32 %v6072, %v6062
        %v6106 = vmul.f32 %v6076, %v6063
        %v6107 = vmul.f32 %v6080, %v6064
        %v6108 = vmul.f32 %v6084, %v6065
        %v6109 = vmul.f32 %v6088, %v6066
        %v6110 = vmul.f32 %v6092, %v6067
        %v6111 = vadd.f32 %v6042, %v6099
        %v6112 = vadd.f32 %v6043, %v6100
        %v6113 = vadd.f32 %v6044, %v6101
        %v6114 = vadd.f32 %v6045, %v6102
        %v6115 = vadd.f32 %v6046, %v6103
        %v6116 = vadd.f32 %v6047, %v6104
        %v6117 = vadd.f32 %v6048, %v6105
        %v6118 = vadd.f32 %v6049, %v6106
        %v6119 = vadd.f32 %v6050, %v6107
        %v6120 = vadd.f32 %v6051, %v6108
        %v6121 = vadd.f32 %v6052, %v6109
        %v6122 = vadd.f32 %v6053, %v6110
        %s6123 = scalar_lea.vmem %s208, 433
        %v6124 = vld [vmem:[%s6123] ss:$2 sm:$0x3f]
        %v6125 = vld [vmem:[%s175 + $0x6c0] sm:$0xff]
        %v6126 = vld [vmem:[%s175 + $0x6c8] sm:$0xff]
        %v6127 = vld [vmem:[%s175 + $0x6d0] sm:$0xff]
        %v6128 = vld [vmem:[%s175 + $0x6d8] sm:$0xff]
        %v6129 = vld [vmem:[%s175 + $0x6e0] sm:$0xff]
        %v6130 = vld [vmem:[%s175 + $0x6e8] sm:$0xff]
        %v6131 = vld [vmem:[%s175 + $0xff0] sm:$0x1]
        %v6132 = vld [vmem:[%s175 + $0xff8] sm:$0x1]
        %v6133 = vld [vmem:[%s175 + $0x1000] sm:$0x1]
        %v6134 = vld [vmem:[%s175 + $0x1008] sm:$0x1]
        %v6135 = vld [vmem:[%s175 + $0x1010] sm:$0x1]
        %v6136 = vld [vmem:[%s175 + $0x1018] sm:$0x1]
        %v6138 = vlaneseq
        %v6139 = vshrl.u32 %v6138, 7
        %v6140 = vsub.s32 0, %v6139
        %v6141 = vrot.slane %v6124, %v6140
        %v6142 = vlaneseq
        %v6143 = vshrl.u32 %v6142, 7
        %v6144 = vsub.s32 1, %v6143
        %v6145 = vrot.slane %v6124, %v6144
        %v6146 = vlaneseq
        %v6147 = vshrl.u32 %v6146, 7
        %v6148 = vsub.s32 2, %v6147
        %v6149 = vrot.slane %v6124, %v6148
        %v6150 = vlaneseq
        %v6151 = vshrl.u32 %v6150, 7
        %v6152 = vsub.s32 3, %v6151
        %v6153 = vrot.slane %v6124, %v6152
        %v6154 = vlaneseq
        %v6155 = vshrl.u32 %v6154, 7
        %v6156 = vsub.s32 4, %v6155
        %v6157 = vrot.slane %v6124, %v6156
        %v6158 = vlaneseq
        %v6159 = vshrl.u32 %v6158, 7
        %v6160 = vsub.s32 5, %v6159
        %v6161 = vrot.slane %v6124, %v6160
        %v6168 = vmul.f32 %v6141, %v6125
        %v6169 = vmul.f32 %v6145, %v6126
        %v6170 = vmul.f32 %v6149, %v6127
        %v6171 = vmul.f32 %v6153, %v6128
        %v6172 = vmul.f32 %v6157, %v6129
        %v6173 = vmul.f32 %v6161, %v6130
        %v6174 = vmul.f32 %v6141, %v6131
        %v6175 = vmul.f32 %v6145, %v6132
        %v6176 = vmul.f32 %v6149, %v6133
        %v6177 = vmul.f32 %v6153, %v6134
        %v6178 = vmul.f32 %v6157, %v6135
        %v6179 = vmul.f32 %v6161, %v6136
        %v6180 = vadd.f32 %v6111, %v6168
        %v6181 = vadd.f32 %v6112, %v6169
        %v6182 = vadd.f32 %v6113, %v6170
        %v6183 = vadd.f32 %v6114, %v6171
        %v6184 = vadd.f32 %v6115, %v6172
        %v6185 = vadd.f32 %v6116, %v6173
        %v6186 = vadd.f32 %v6117, %v6174
        %v6187 = vadd.f32 %v6118, %v6175
        %v6188 = vadd.f32 %v6119, %v6176
        %v6189 = vadd.f32 %v6120, %v6177
        %v6190 = vadd.f32 %v6121, %v6178
        %v6191 = vadd.f32 %v6122, %v6179
        %s6192 = scalar_lea.vmem %s208, 445
        %v6193 = vld [vmem:[%s6192] ss:$2 sm:$0x3f]
        %v6194 = vld [vmem:[%s175 + $0x6f0] sm:$0xff]
        %v6195 = vld [vmem:[%s175 + $0x6f8] sm:$0xff]
        %v6196 = vld [vmem:[%s175 + $0x700] sm:$0xff]
        %v6197 = vld [vmem:[%s175 + $0x708] sm:$0xff]
        %v6198 = vld [vmem:[%s175 + $0x710] sm:$0xff]
        %v6199 = vld [vmem:[%s175 + $0x718] sm:$0xff]
        %v6200 = vld [vmem:[%s175 + $0x1020] sm:$0x1]
        %v6201 = vld [vmem:[%s175 + $0x1028] sm:$0x1]
        %v6202 = vld [vmem:[%s175 + $0x1030] sm:$0x1]
        %v6203 = vld [vmem:[%s175 + $0x1038] sm:$0x1]
        %v6204 = vld [vmem:[%s175 + $0x1040] sm:$0x1]
        %v6205 = vld [vmem:[%s175 + $0x1048] sm:$0x1]
        %v6207 = vlaneseq
        %v6208 = vshrl.u32 %v6207, 7
        %v6209 = vsub.s32 0, %v6208
        %v6210 = vrot.slane %v6193, %v6209
        %v6211 = vlaneseq
        %v6212 = vshrl.u32 %v6211, 7
        %v6213 = vsub.s32 1, %v6212
        %v6214 = vrot.slane %v6193, %v6213
        %v6215 = vlaneseq
        %v6216 = vshrl.u32 %v6215, 7
        %v6217 = vsub.s32 2, %v6216
        %v6218 = vrot.slane %v6193, %v6217
        %v6219 = vlaneseq
        %v6220 = vshrl.u32 %v6219, 7
        %v6221 = vsub.s32 3, %v6220
        %v6222 = vrot.slane %v6193, %v6221
        %v6223 = vlaneseq
        %v6224 = vshrl.u32 %v6223, 7
        %v6225 = vsub.s32 4, %v6224
        %v6226 = vrot.slane %v6193, %v6225
        %v6227 = vlaneseq
        %v6228 = vshrl.u32 %v6227, 7
        %v6229 = vsub.s32 5, %v6228
        %v6230 = vrot.slane %v6193, %v6229
        %v6237 = vmul.f32 %v6210, %v6194
        %v6238 = vmul.f32 %v6214, %v6195
        %v6239 = vmul.f32 %v6218, %v6196
        %v6240 = vmul.f32 %v6222, %v6197
        %v6241 = vmul.f32 %v6226, %v6198
        %v6242 = vmul.f32 %v6230, %v6199
        %v6243 = vmul.f32 %v6210, %v6200
        %v6244 = vmul.f32 %v6214, %v6201
        %v6245 = vmul.f32 %v6218, %v6202
        %v6246 = vmul.f32 %v6222, %v6203
        %v6247 = vmul.f32 %v6226, %v6204
        %v6248 = vmul.f32 %v6230, %v6205
        %v6249 = vadd.f32 %v6180, %v6237
        %v6250 = vadd.f32 %v6181, %v6238
        %v6251 = vadd.f32 %v6182, %v6239
        %v6252 = vadd.f32 %v6183, %v6240
        %v6253 = vadd.f32 %v6184, %v6241
        %v6254 = vadd.f32 %v6185, %v6242
        %v6255 = vadd.f32 %v6186, %v6243
        %v6256 = vadd.f32 %v6187, %v6244
        %v6257 = vadd.f32 %v6188, %v6245
        %v6258 = vadd.f32 %v6189, %v6246
        %v6259 = vadd.f32 %v6190, %v6247
        %v6260 = vadd.f32 %v6191, %v6248
        %s6261 = scalar_lea.vmem %s208, 457
        %v6262 = vld [vmem:[%s6261] ss:$2 sm:$0x3f]
        %v6263 = vld [vmem:[%s175 + $0x720] sm:$0xff]
        %v6264 = vld [vmem:[%s175 + $0x728] sm:$0xff]
        %v6265 = vld [vmem:[%s175 + $0x730] sm:$0xff]
        %v6266 = vld [vmem:[%s175 + $0x738] sm:$0xff]
        %v6267 = vld [vmem:[%s175 + $0x740] sm:$0xff]
        %v6268 = vld [vmem:[%s175 + $0x748] sm:$0xff]
        %v6269 = vld [vmem:[%s175 + $0x1050] sm:$0x1]
        %v6270 = vld [vmem:[%s175 + $0x1058] sm:$0x1]
        %v6271 = vld [vmem:[%s175 + $0x1060] sm:$0x1]
        %v6272 = vld [vmem:[%s175 + $0x1068] sm:$0x1]
        %v6273 = vld [vmem:[%s175 + $0x1070] sm:$0x1]
        %v6274 = vld [vmem:[%s175 + $0x1078] sm:$0x1]
        %v6276 = vlaneseq
        %v6277 = vshrl.u32 %v6276, 7
        %v6278 = vsub.s32 0, %v6277
        %v6279 = vrot.slane %v6262, %v6278
        %v6280 = vlaneseq
        %v6281 = vshrl.u32 %v6280, 7
        %v6282 = vsub.s32 1, %v6281
        %v6283 = vrot.slane %v6262, %v6282
        %v6284 = vlaneseq
        %v6285 = vshrl.u32 %v6284, 7
        %v6286 = vsub.s32 2, %v6285
        %v6287 = vrot.slane %v6262, %v6286
        %v6288 = vlaneseq
        %v6289 = vshrl.u32 %v6288, 7
        %v6290 = vsub.s32 3, %v6289
        %v6291 = vrot.slane %v6262, %v6290
        %v6292 = vlaneseq
        %v6293 = vshrl.u32 %v6292, 7
        %v6294 = vsub.s32 4, %v6293
        %v6295 = vrot.slane %v6262, %v6294
        %v6296 = vlaneseq
        %v6297 = vshrl.u32 %v6296, 7
        %v6298 = vsub.s32 5, %v6297
        %v6299 = vrot.slane %v6262, %v6298
        %v6306 = vmul.f32 %v6279, %v6263
        %v6307 = vmul.f32 %v6283, %v6264
        %v6308 = vmul.f32 %v6287, %v6265
        %v6309 = vmul.f32 %v6291, %v6266
        %v6310 = vmul.f32 %v6295, %v6267
        %v6311 = vmul.f32 %v6299, %v6268
        %v6312 = vmul.f32 %v6279, %v6269
        %v6313 = vmul.f32 %v6283, %v6270
        %v6314 = vmul.f32 %v6287, %v6271
        %v6315 = vmul.f32 %v6291, %v6272
        %v6316 = vmul.f32 %v6295, %v6273
        %v6317 = vmul.f32 %v6299, %v6274
        %v6318 = vadd.f32 %v6249, %v6306
        %v6319 = vadd.f32 %v6250, %v6307
        %v6320 = vadd.f32 %v6251, %v6308
        %v6321 = vadd.f32 %v6252, %v6309
        %v6322 = vadd.f32 %v6253, %v6310
        %v6323 = vadd.f32 %v6254, %v6311
        %v6324 = vadd.f32 %v6255, %v6312
        %v6325 = vadd.f32 %v6256, %v6313
        %v6326 = vadd.f32 %v6257, %v6314
        %v6327 = vadd.f32 %v6258, %v6315
        %v6328 = vadd.f32 %v6259, %v6316
        %v6329 = vadd.f32 %v6260, %v6317
        %s6330 = scalar_lea.vmem %s208, 469
        %v6331 = vld [vmem:[%s6330] ss:$2 sm:$0x3f]
        %v6332 = vld [vmem:[%s175 + $0x750] sm:$0xff]
        %v6333 = vld [vmem:[%s175 + $0x758] sm:$0xff]
        %v6334 = vld [vmem:[%s175 + $0x760] sm:$0xff]
        %v6335 = vld [vmem:[%s175 + $0x768] sm:$0xff]
        %v6336 = vld [vmem:[%s175 + $0x770] sm:$0xff]
        %v6337 = vld [vmem:[%s175 + $0x778] sm:$0xff]
        %v6338 = vld [vmem:[%s175 + $0x1080] sm:$0x1]
        %v6339 = vld [vmem:[%s175 + $0x1088] sm:$0x1]
        %v6340 = vld [vmem:[%s175 + $0x1090] sm:$0x1]
        %v6341 = vld [vmem:[%s175 + $0x1098] sm:$0x1]
        %v6342 = vld [vmem:[%s175 + $0x10a0] sm:$0x1]
        %v6343 = vld [vmem:[%s175 + $0x10a8] sm:$0x1]
        %v6345 = vlaneseq
        %v6346 = vshrl.u32 %v6345, 7
        %v6347 = vsub.s32 0, %v6346
        %v6348 = vrot.slane %v6331, %v6347
        %v6349 = vlaneseq
        %v6350 = vshrl.u32 %v6349, 7
        %v6351 = vsub.s32 1, %v6350
        %v6352 = vrot.slane %v6331, %v6351
        %v6353 = vlaneseq
        %v6354 = vshrl.u32 %v6353, 7
        %v6355 = vsub.s32 2, %v6354
        %v6356 = vrot.slane %v6331, %v6355
        %v6357 = vlaneseq
        %v6358 = vshrl.u32 %v6357, 7
        %v6359 = vsub.s32 3, %v6358
        %v6360 = vrot.slane %v6331, %v6359
        %v6361 = vlaneseq
        %v6362 = vshrl.u32 %v6361, 7
        %v6363 = vsub.s32 4, %v6362
        %v6364 = vrot.slane %v6331, %v6363
        %v6365 = vlaneseq
        %v6366 = vshrl.u32 %v6365, 7
        %v6367 = vsub.s32 5, %v6366
        %v6368 = vrot.slane %v6331, %v6367
        %v6375 = vmul.f32 %v6348, %v6332
        %v6376 = vmul.f32 %v6352, %v6333
        %v6377 = vmul.f32 %v6356, %v6334
        %v6378 = vmul.f32 %v6360, %v6335
        %v6379 = vmul.f32 %v6364, %v6336
        %v6380 = vmul.f32 %v6368, %v6337
        %v6381 = vmul.f32 %v6348, %v6338
        %v6382 = vmul.f32 %v6352, %v6339
        %v6383 = vmul.f32 %v6356, %v6340
        %v6384 = vmul.f32 %v6360, %v6341
        %v6385 = vmul.f32 %v6364, %v6342
        %v6386 = vmul.f32 %v6368, %v6343
        %v6387 = vadd.f32 %v6318, %v6375
        %v6388 = vadd.f32 %v6319, %v6376
        %v6389 = vadd.f32 %v6320, %v6377
        %v6390 = vadd.f32 %v6321, %v6378
        %v6391 = vadd.f32 %v6322, %v6379
        %v6392 = vadd.f32 %v6323, %v6380
        %v6393 = vadd.f32 %v6324, %v6381
        %v6394 = vadd.f32 %v6325, %v6382
        %v6395 = vadd.f32 %v6326, %v6383
        %v6396 = vadd.f32 %v6327, %v6384
        %v6397 = vadd.f32 %v6328, %v6385
        %v6398 = vadd.f32 %v6329, %v6386
        %s6399 = scalar_lea.vmem %s208, 481
        %v6400 = vld [vmem:[%s6399] ss:$2 sm:$0x3f]
        %v6401 = vld [vmem:[%s175 + $0x780] sm:$0xff]
        %v6402 = vld [vmem:[%s175 + $0x788] sm:$0xff]
        %v6403 = vld [vmem:[%s175 + $0x790] sm:$0xff]
        %v6404 = vld [vmem:[%s175 + $0x798] sm:$0xff]
        %v6405 = vld [vmem:[%s175 + $0x7a0] sm:$0xff]
        %v6406 = vld [vmem:[%s175 + $0x7a8] sm:$0xff]
        %v6407 = vld [vmem:[%s175 + $0x10b0] sm:$0x1]
        %v6408 = vld [vmem:[%s175 + $0x10b8] sm:$0x1]
        %v6409 = vld [vmem:[%s175 + $0x10c0] sm:$0x1]
        %v6410 = vld [vmem:[%s175 + $0x10c8] sm:$0x1]
        %v6411 = vld [vmem:[%s175 + $0x10d0] sm:$0x1]
        %v6412 = vld [vmem:[%s175 + $0x10d8] sm:$0x1]
        %v6414 = vlaneseq
        %v6415 = vshrl.u32 %v6414, 7
        %v6416 = vsub.s32 0, %v6415
        %v6417 = vrot.slane %v6400, %v6416
        %v6418 = vlaneseq
        %v6419 = vshrl.u32 %v6418, 7
        %v6420 = vsub.s32 1, %v6419
        %v6421 = vrot.slane %v6400, %v6420
        %v6422 = vlaneseq
        %v6423 = vshrl.u32 %v6422, 7
        %v6424 = vsub.s32 2, %v6423
        %v6425 = vrot.slane %v6400, %v6424
        %v6426 = vlaneseq
        %v6427 = vshrl.u32 %v6426, 7
        %v6428 = vsub.s32 3, %v6427
        %v6429 = vrot.slane %v6400, %v6428
        %v6430 = vlaneseq
        %v6431 = vshrl.u32 %v6430, 7
        %v6432 = vsub.s32 4, %v6431
        %v6433 = vrot.slane %v6400, %v6432
        %v6434 = vlaneseq
        %v6435 = vshrl.u32 %v6434, 7
        %v6436 = vsub.s32 5, %v6435
        %v6437 = vrot.slane %v6400, %v6436
        %v6444 = vmul.f32 %v6417, %v6401
        %v6445 = vmul.f32 %v6421, %v6402
        %v6446 = vmul.f32 %v6425, %v6403
        %v6447 = vmul.f32 %v6429, %v6404
        %v6448 = vmul.f32 %v6433, %v6405
        %v6449 = vmul.f32 %v6437, %v6406
        %v6450 = vmul.f32 %v6417, %v6407
        %v6451 = vmul.f32 %v6421, %v6408
        %v6452 = vmul.f32 %v6425, %v6409
        %v6453 = vmul.f32 %v6429, %v6410
        %v6454 = vmul.f32 %v6433, %v6411
        %v6455 = vmul.f32 %v6437, %v6412
        %v6456 = vadd.f32 %v6387, %v6444
        %v6457 = vadd.f32 %v6388, %v6445
        %v6458 = vadd.f32 %v6389, %v6446
        %v6459 = vadd.f32 %v6390, %v6447
        %v6460 = vadd.f32 %v6391, %v6448
        %v6461 = vadd.f32 %v6392, %v6449
        %v6462 = vadd.f32 %v6393, %v6450
        %v6463 = vadd.f32 %v6394, %v6451
        %v6464 = vadd.f32 %v6395, %v6452
        %v6465 = vadd.f32 %v6396, %v6453
        %v6466 = vadd.f32 %v6397, %v6454
        %v6467 = vadd.f32 %v6398, %v6455
        %s6468 = scalar_lea.vmem %s208, 493
        %v6469 = vld [vmem:[%s6468] ss:$2 sm:$0x3f]
        %v6470 = vld [vmem:[%s175 + $0x7b0] sm:$0xff]
        %v6471 = vld [vmem:[%s175 + $0x7b8] sm:$0xff]
        %v6472 = vld [vmem:[%s175 + $0x7c0] sm:$0xff]
        %v6473 = vld [vmem:[%s175 + $0x7c8] sm:$0xff]
        %v6474 = vld [vmem:[%s175 + $0x7d0] sm:$0xff]
        %v6475 = vld [vmem:[%s175 + $0x7d8] sm:$0xff]
        %v6476 = vld [vmem:[%s175 + $0x10e0] sm:$0x1]
        %v6477 = vld [vmem:[%s175 + $0x10e8] sm:$0x1]
        %v6478 = vld [vmem:[%s175 + $0x10f0] sm:$0x1]
        %v6479 = vld [vmem:[%s175 + $0x10f8] sm:$0x1]
        %v6480 = vld [vmem:[%s175 + $0x1100] sm:$0x1]
        %v6481 = vld [vmem:[%s175 + $0x1108] sm:$0x1]
        %v6483 = vlaneseq
        %v6484 = vshrl.u32 %v6483, 7
        %v6485 = vsub.s32 0, %v6484
        %v6486 = vrot.slane %v6469, %v6485
        %v6487 = vlaneseq
        %v6488 = vshrl.u32 %v6487, 7
        %v6489 = vsub.s32 1, %v6488
        %v6490 = vrot.slane %v6469, %v6489
        %v6491 = vlaneseq
        %v6492 = vshrl.u32 %v6491, 7
        %v6493 = vsub.s32 2, %v6492
        %v6494 = vrot.slane %v6469, %v6493
        %v6495 = vlaneseq
        %v6496 = vshrl.u32 %v6495, 7
        %v6497 = vsub.s32 3, %v6496
        %v6498 = vrot.slane %v6469, %v6497
        %v6499 = vlaneseq
        %v6500 = vshrl.u32 %v6499, 7
        %v6501 = vsub.s32 4, %v6500
        %v6502 = vrot.slane %v6469, %v6501
        %v6503 = vlaneseq
        %v6504 = vshrl.u32 %v6503, 7
        %v6505 = vsub.s32 5, %v6504
        %v6506 = vrot.slane %v6469, %v6505
        %v6513 = vmul.f32 %v6486, %v6470
        %v6514 = vmul.f32 %v6490, %v6471
        %v6515 = vmul.f32 %v6494, %v6472
        %v6516 = vmul.f32 %v6498, %v6473
        %v6517 = vmul.f32 %v6502, %v6474
        %v6518 = vmul.f32 %v6506, %v6475
        %v6519 = vmul.f32 %v6486, %v6476
        %v6520 = vmul.f32 %v6490, %v6477
        %v6521 = vmul.f32 %v6494, %v6478
        %v6522 = vmul.f32 %v6498, %v6479
        %v6523 = vmul.f32 %v6502, %v6480
        %v6524 = vmul.f32 %v6506, %v6481
        %v6525 = vadd.f32 %v6456, %v6513
        %v6526 = vadd.f32 %v6457, %v6514
        %v6527 = vadd.f32 %v6458, %v6515
        %v6528 = vadd.f32 %v6459, %v6516
        %v6529 = vadd.f32 %v6460, %v6517
        %v6530 = vadd.f32 %v6461, %v6518
        %v6531 = vadd.f32 %v6462, %v6519
        %v6532 = vadd.f32 %v6463, %v6520
        %v6533 = vadd.f32 %v6464, %v6521
        %v6534 = vadd.f32 %v6465, %v6522
        %v6535 = vadd.f32 %v6466, %v6523
        %v6536 = vadd.f32 %v6467, %v6524
        %s6537 = scalar_lea.vmem %s208, 505
        %v6538 = vld [vmem:[%s6537] ss:$2 sm:$0x3f]
        %v6539 = vld [vmem:[%s175 + $0x7e0] sm:$0xff]
        %v6540 = vld [vmem:[%s175 + $0x7e8] sm:$0xff]
        %v6541 = vld [vmem:[%s175 + $0x7f0] sm:$0xff]
        %v6542 = vld [vmem:[%s175 + $0x7f8] sm:$0xff]
        %v6543 = vld [vmem:[%s175 + $0x800] sm:$0xff]
        %v6544 = vld [vmem:[%s175 + $0x808] sm:$0xff]
        %v6545 = vld [vmem:[%s175 + $0x1110] sm:$0x1]
        %v6546 = vld [vmem:[%s175 + $0x1118] sm:$0x1]
        %v6547 = vld [vmem:[%s175 + $0x1120] sm:$0x1]
        %v6548 = vld [vmem:[%s175 + $0x1128] sm:$0x1]
        %v6549 = vld [vmem:[%s175 + $0x1130] sm:$0x1]
        %v6550 = vld [vmem:[%s175 + $0x1138] sm:$0x1]
        %v6552 = vlaneseq
        %v6553 = vshrl.u32 %v6552, 7
        %v6554 = vsub.s32 0, %v6553
        %v6555 = vrot.slane %v6538, %v6554
        %v6556 = vlaneseq
        %v6557 = vshrl.u32 %v6556, 7
        %v6558 = vsub.s32 1, %v6557
        %v6559 = vrot.slane %v6538, %v6558
        %v6560 = vlaneseq
        %v6561 = vshrl.u32 %v6560, 7
        %v6562 = vsub.s32 2, %v6561
        %v6563 = vrot.slane %v6538, %v6562
        %v6564 = vlaneseq
        %v6565 = vshrl.u32 %v6564, 7
        %v6566 = vsub.s32 3, %v6565
        %v6567 = vrot.slane %v6538, %v6566
        %v6568 = vlaneseq
        %v6569 = vshrl.u32 %v6568, 7
        %v6570 = vsub.s32 4, %v6569
        %v6571 = vrot.slane %v6538, %v6570
        %v6572 = vlaneseq
        %v6573 = vshrl.u32 %v6572, 7
        %v6574 = vsub.s32 5, %v6573
        %v6575 = vrot.slane %v6538, %v6574
        %v6582 = vmul.f32 %v6555, %v6539
        %v6583 = vmul.f32 %v6559, %v6540
        %v6584 = vmul.f32 %v6563, %v6541
        %v6585 = vmul.f32 %v6567, %v6542
        %v6586 = vmul.f32 %v6571, %v6543
        %v6587 = vmul.f32 %v6575, %v6544
        %v6588 = vmul.f32 %v6555, %v6545
        %v6589 = vmul.f32 %v6559, %v6546
        %v6590 = vmul.f32 %v6563, %v6547
        %v6591 = vmul.f32 %v6567, %v6548
        %v6592 = vmul.f32 %v6571, %v6549
        %v6593 = vmul.f32 %v6575, %v6550
        %v6594 = vadd.f32 %v6525, %v6582
        %v6595 = vadd.f32 %v6526, %v6583
        %v6596 = vadd.f32 %v6527, %v6584
        %v6597 = vadd.f32 %v6528, %v6585
        %v6598 = vadd.f32 %v6529, %v6586
        %v6599 = vadd.f32 %v6530, %v6587
        %v6600 = vadd.f32 %v6531, %v6588
        %v6601 = vadd.f32 %v6532, %v6589
        %v6602 = vadd.f32 %v6533, %v6590
        %v6603 = vadd.f32 %v6534, %v6591
        %v6604 = vadd.f32 %v6535, %v6592
        %v6605 = vadd.f32 %v6536, %v6593
        %s6606 = scalar_lea.vmem %s208, 517
        %v6607 = vld [vmem:[%s6606] ss:$2 sm:$0x3f]
        %v6608 = vld [vmem:[%s175 + $0x810] sm:$0xff]
        %v6609 = vld [vmem:[%s175 + $0x818] sm:$0xff]
        %v6610 = vld [vmem:[%s175 + $0x820] sm:$0xff]
        %v6611 = vld [vmem:[%s175 + $0x828] sm:$0xff]
        %v6612 = vld [vmem:[%s175 + $0x830] sm:$0xff]
        %v6613 = vld [vmem:[%s175 + $0x838] sm:$0xff]
        %v6614 = vld [vmem:[%s175 + $0x1140] sm:$0x1]
        %v6615 = vld [vmem:[%s175 + $0x1148] sm:$0x1]
        %v6616 = vld [vmem:[%s175 + $0x1150] sm:$0x1]
        %v6617 = vld [vmem:[%s175 + $0x1158] sm:$0x1]
        %v6618 = vld [vmem:[%s175 + $0x1160] sm:$0x1]
        %v6619 = vld [vmem:[%s175 + $0x1168] sm:$0x1]
        %v6621 = vlaneseq
        %v6622 = vshrl.u32 %v6621, 7
        %v6623 = vsub.s32 0, %v6622
        %v6624 = vrot.slane %v6607, %v6623
        %v6625 = vlaneseq
        %v6626 = vshrl.u32 %v6625, 7
        %v6627 = vsub.s32 1, %v6626
        %v6628 = vrot.slane %v6607, %v6627
        %v6629 = vlaneseq
        %v6630 = vshrl.u32 %v6629, 7
        %v6631 = vsub.s32 2, %v6630
        %v6632 = vrot.slane %v6607, %v6631
        %v6633 = vlaneseq
        %v6634 = vshrl.u32 %v6633, 7
        %v6635 = vsub.s32 3, %v6634
        %v6636 = vrot.slane %v6607, %v6635
        %v6637 = vlaneseq
        %v6638 = vshrl.u32 %v6637, 7
        %v6639 = vsub.s32 4, %v6638
        %v6640 = vrot.slane %v6607, %v6639
        %v6641 = vlaneseq
        %v6642 = vshrl.u32 %v6641, 7
        %v6643 = vsub.s32 5, %v6642
        %v6644 = vrot.slane %v6607, %v6643
        %v6651 = vmul.f32 %v6624, %v6608
        %v6652 = vmul.f32 %v6628, %v6609
        %v6653 = vmul.f32 %v6632, %v6610
        %v6654 = vmul.f32 %v6636, %v6611
        %v6655 = vmul.f32 %v6640, %v6612
        %v6656 = vmul.f32 %v6644, %v6613
        %v6657 = vmul.f32 %v6624, %v6614
        %v6658 = vmul.f32 %v6628, %v6615
        %v6659 = vmul.f32 %v6632, %v6616
        %v6660 = vmul.f32 %v6636, %v6617
        %v6661 = vmul.f32 %v6640, %v6618
        %v6662 = vmul.f32 %v6644, %v6619
        %v6663 = vadd.f32 %v6594, %v6651
        %v6664 = vadd.f32 %v6595, %v6652
        %v6665 = vadd.f32 %v6596, %v6653
        %v6666 = vadd.f32 %v6597, %v6654
        %v6667 = vadd.f32 %v6598, %v6655
        %v6668 = vadd.f32 %v6599, %v6656
        %v6669 = vadd.f32 %v6600, %v6657
        %v6670 = vadd.f32 %v6601, %v6658
        %v6671 = vadd.f32 %v6602, %v6659
        %v6672 = vadd.f32 %v6603, %v6660
        %v6673 = vadd.f32 %v6604, %v6661
        %v6674 = vadd.f32 %v6605, %v6662
        %s6675 = scalar_lea.vmem %s208, 529
        %v6676 = vld [vmem:[%s6675] ss:$2 sm:$0x3f]
        %v6677 = vld [vmem:[%s175 + $0x840] sm:$0xff]
        %v6678 = vld [vmem:[%s175 + $0x848] sm:$0xff]
        %v6679 = vld [vmem:[%s175 + $0x850] sm:$0xff]
        %v6680 = vld [vmem:[%s175 + $0x858] sm:$0xff]
        %v6681 = vld [vmem:[%s175 + $0x860] sm:$0xff]
        %v6682 = vld [vmem:[%s175 + $0x868] sm:$0xff]
        %v6683 = vld [vmem:[%s175 + $0x1170] sm:$0x1]
        %v6684 = vld [vmem:[%s175 + $0x1178] sm:$0x1]
        %v6685 = vld [vmem:[%s175 + $0x1180] sm:$0x1]
        %v6686 = vld [vmem:[%s175 + $0x1188] sm:$0x1]
        %v6687 = vld [vmem:[%s175 + $0x1190] sm:$0x1]
        %v6688 = vld [vmem:[%s175 + $0x1198] sm:$0x1]
        %v6690 = vlaneseq
        %v6691 = vshrl.u32 %v6690, 7
        %v6692 = vsub.s32 0, %v6691
        %v6693 = vrot.slane %v6676, %v6692
        %v6694 = vlaneseq
        %v6695 = vshrl.u32 %v6694, 7
        %v6696 = vsub.s32 1, %v6695
        %v6697 = vrot.slane %v6676, %v6696
        %v6698 = vlaneseq
        %v6699 = vshrl.u32 %v6698, 7
        %v6700 = vsub.s32 2, %v6699
        %v6701 = vrot.slane %v6676, %v6700
        %v6702 = vlaneseq
        %v6703 = vshrl.u32 %v6702, 7
        %v6704 = vsub.s32 3, %v6703
        %v6705 = vrot.slane %v6676, %v6704
        %v6706 = vlaneseq
        %v6707 = vshrl.u32 %v6706, 7
        %v6708 = vsub.s32 4, %v6707
        %v6709 = vrot.slane %v6676, %v6708
        %v6710 = vlaneseq
        %v6711 = vshrl.u32 %v6710, 7
        %v6712 = vsub.s32 5, %v6711
        %v6713 = vrot.slane %v6676, %v6712
        %v6720 = vmul.f32 %v6693, %v6677
        %v6721 = vmul.f32 %v6697, %v6678
        %v6722 = vmul.f32 %v6701, %v6679
        %v6723 = vmul.f32 %v6705, %v6680
        %v6724 = vmul.f32 %v6709, %v6681
        %v6725 = vmul.f32 %v6713, %v6682
        %v6726 = vmul.f32 %v6693, %v6683
        %v6727 = vmul.f32 %v6697, %v6684
        %v6728 = vmul.f32 %v6701, %v6685
        %v6729 = vmul.f32 %v6705, %v6686
        %v6730 = vmul.f32 %v6709, %v6687
        %v6731 = vmul.f32 %v6713, %v6688
        %v6732 = vadd.f32 %v6663, %v6720
        %v6733 = vadd.f32 %v6664, %v6721
        %v6734 = vadd.f32 %v6665, %v6722
        %v6735 = vadd.f32 %v6666, %v6723
        %v6736 = vadd.f32 %v6667, %v6724
        %v6737 = vadd.f32 %v6668, %v6725
        %v6738 = vadd.f32 %v6669, %v6726
        %v6739 = vadd.f32 %v6670, %v6727
        %v6740 = vadd.f32 %v6671, %v6728
        %v6741 = vadd.f32 %v6672, %v6729
        %v6742 = vadd.f32 %v6673, %v6730
        %v6743 = vadd.f32 %v6674, %v6731
        %s6744 = scalar_lea.vmem %s208, 541
        %v6745 = vld [vmem:[%s6744] ss:$2 sm:$0x3f]
        %v6746 = vld [vmem:[%s175 + $0x870] sm:$0xff]
        %v6747 = vld [vmem:[%s175 + $0x878] sm:$0xff]
        %v6748 = vld [vmem:[%s175 + $0x880] sm:$0xff]
        %v6749 = vld [vmem:[%s175 + $0x888] sm:$0xff]
        %v6750 = vld [vmem:[%s175 + $0x890] sm:$0xff]
        %v6751 = vld [vmem:[%s175 + $0x898] sm:$0xff]
        %v6752 = vld [vmem:[%s175 + $0x11a0] sm:$0x1]
        %v6753 = vld [vmem:[%s175 + $0x11a8] sm:$0x1]
        %v6754 = vld [vmem:[%s175 + $0x11b0] sm:$0x1]
        %v6755 = vld [vmem:[%s175 + $0x11b8] sm:$0x1]
        %v6756 = vld [vmem:[%s175 + $0x11c0] sm:$0x1]
        %v6757 = vld [vmem:[%s175 + $0x11c8] sm:$0x1]
        %v6759 = vlaneseq
        %v6760 = vshrl.u32 %v6759, 7
        %v6761 = vsub.s32 0, %v6760
        %v6762 = vrot.slane %v6745, %v6761
        %v6763 = vlaneseq
        %v6764 = vshrl.u32 %v6763, 7
        %v6765 = vsub.s32 1, %v6764
        %v6766 = vrot.slane %v6745, %v6765
        %v6767 = vlaneseq
        %v6768 = vshrl.u32 %v6767, 7
        %v6769 = vsub.s32 2, %v6768
        %v6770 = vrot.slane %v6745, %v6769
        %v6771 = vlaneseq
        %v6772 = vshrl.u32 %v6771, 7
        %v6773 = vsub.s32 3, %v6772
        %v6774 = vrot.slane %v6745, %v6773
        %v6775 = vlaneseq
        %v6776 = vshrl.u32 %v6775, 7
        %v6777 = vsub.s32 4, %v6776
        %v6778 = vrot.slane %v6745, %v6777
        %v6779 = vlaneseq
        %v6780 = vshrl.u32 %v6779, 7
        %v6781 = vsub.s32 5, %v6780
        %v6782 = vrot.slane %v6745, %v6781
        %v6789 = vmul.f32 %v6762, %v6746
        %v6790 = vmul.f32 %v6766, %v6747
        %v6791 = vmul.f32 %v6770, %v6748
        %v6792 = vmul.f32 %v6774, %v6749
        %v6793 = vmul.f32 %v6778, %v6750
        %v6794 = vmul.f32 %v6782, %v6751
        %v6795 = vmul.f32 %v6762, %v6752
        %v6796 = vmul.f32 %v6766, %v6753
        %v6797 = vmul.f32 %v6770, %v6754
        %v6798 = vmul.f32 %v6774, %v6755
        %v6799 = vmul.f32 %v6778, %v6756
        %v6800 = vmul.f32 %v6782, %v6757
        %v6801 = vadd.f32 %v6732, %v6789
        %v6802 = vadd.f32 %v6733, %v6790
        %v6803 = vadd.f32 %v6734, %v6791
        %v6804 = vadd.f32 %v6735, %v6792
        %v6805 = vadd.f32 %v6736, %v6793
        %v6806 = vadd.f32 %v6737, %v6794
        %v6807 = vadd.f32 %v6738, %v6795
        %v6808 = vadd.f32 %v6739, %v6796
        %v6809 = vadd.f32 %v6740, %v6797
        %v6810 = vadd.f32 %v6741, %v6798
        %v6811 = vadd.f32 %v6742, %v6799
        %v6812 = vadd.f32 %v6743, %v6800
        %s6813 = scalar_lea.vmem %s208, 553
        %v6814 = vld [vmem:[%s6813] ss:$2 sm:$0x3f]
        %v6815 = vld [vmem:[%s175 + $0x8a0] sm:$0xff]
        %v6816 = vld [vmem:[%s175 + $0x8a8] sm:$0xff]
        %v6817 = vld [vmem:[%s175 + $0x8b0] sm:$0xff]
        %v6818 = vld [vmem:[%s175 + $0x8b8] sm:$0xff]
        %v6819 = vld [vmem:[%s175 + $0x8c0] sm:$0xff]
        %v6820 = vld [vmem:[%s175 + $0x8c8] sm:$0xff]
        %v6821 = vld [vmem:[%s175 + $0x11d0] sm:$0x1]
        %v6822 = vld [vmem:[%s175 + $0x11d8] sm:$0x1]
        %v6823 = vld [vmem:[%s175 + $0x11e0] sm:$0x1]
        %v6824 = vld [vmem:[%s175 + $0x11e8] sm:$0x1]
        %v6825 = vld [vmem:[%s175 + $0x11f0] sm:$0x1]
        %v6826 = vld [vmem:[%s175 + $0x11f8] sm:$0x1]
        %v6828 = vlaneseq
        %v6829 = vshrl.u32 %v6828, 7
        %v6830 = vsub.s32 0, %v6829
        %v6831 = vrot.slane %v6814, %v6830
        %v6832 = vlaneseq
        %v6833 = vshrl.u32 %v6832, 7
        %v6834 = vsub.s32 1, %v6833
        %v6835 = vrot.slane %v6814, %v6834
        %v6836 = vlaneseq
        %v6837 = vshrl.u32 %v6836, 7
        %v6838 = vsub.s32 2, %v6837
        %v6839 = vrot.slane %v6814, %v6838
        %v6840 = vlaneseq
        %v6841 = vshrl.u32 %v6840, 7
        %v6842 = vsub.s32 3, %v6841
        %v6843 = vrot.slane %v6814, %v6842
        %v6844 = vlaneseq
        %v6845 = vshrl.u32 %v6844, 7
        %v6846 = vsub.s32 4, %v6845
        %v6847 = vrot.slane %v6814, %v6846
        %v6848 = vlaneseq
        %v6849 = vshrl.u32 %v6848, 7
        %v6850 = vsub.s32 5, %v6849
        %v6851 = vrot.slane %v6814, %v6850
        %v6858 = vmul.f32 %v6831, %v6815
        %v6859 = vmul.f32 %v6835, %v6816
        %v6860 = vmul.f32 %v6839, %v6817
        %v6861 = vmul.f32 %v6843, %v6818
        %v6862 = vmul.f32 %v6847, %v6819
        %v6863 = vmul.f32 %v6851, %v6820
        %v6864 = vmul.f32 %v6831, %v6821
        %v6865 = vmul.f32 %v6835, %v6822
        %v6866 = vmul.f32 %v6839, %v6823
        %v6867 = vmul.f32 %v6843, %v6824
        %v6868 = vmul.f32 %v6847, %v6825
        %v6869 = vmul.f32 %v6851, %v6826
        %v6870 = vadd.f32 %v6801, %v6858
        %v6871 = vadd.f32 %v6802, %v6859
        %v6872 = vadd.f32 %v6803, %v6860
        %v6873 = vadd.f32 %v6804, %v6861
        %v6874 = vadd.f32 %v6805, %v6862
        %v6875 = vadd.f32 %v6806, %v6863
        %v6876 = vadd.f32 %v6807, %v6864
        %v6877 = vadd.f32 %v6808, %v6865
        %v6878 = vadd.f32 %v6809, %v6866
        %v6879 = vadd.f32 %v6810, %v6867
        %v6880 = vadd.f32 %v6811, %v6868
        %v6881 = vadd.f32 %v6812, %v6869
        %s6882 = scalar_lea.vmem %s208, 565
        %v6883 = vld [vmem:[%s6882] ss:$2 sm:$0x3f]
        %v6884 = vld [vmem:[%s175 + $0x8d0] sm:$0xff]
        %v6885 = vld [vmem:[%s175 + $0x8d8] sm:$0xff]
        %v6886 = vld [vmem:[%s175 + $0x8e0] sm:$0xff]
        %v6887 = vld [vmem:[%s175 + $0x8e8] sm:$0xff]
        %v6888 = vld [vmem:[%s175 + $0x8f0] sm:$0xff]
        %v6889 = vld [vmem:[%s175 + $0x8f8] sm:$0xff]
        %v6890 = vld [vmem:[%s175 + $0x1200] sm:$0x1]
        %v6891 = vld [vmem:[%s175 + $0x1208] sm:$0x1]
        %v6892 = vld [vmem:[%s175 + $0x1210] sm:$0x1]
        %v6893 = vld [vmem:[%s175 + $0x1218] sm:$0x1]
        %v6894 = vld [vmem:[%s175 + $0x1220] sm:$0x1]
        %v6895 = vld [vmem:[%s175 + $0x1228] sm:$0x1]
        %v6897 = vlaneseq
        %v6898 = vshrl.u32 %v6897, 7
        %v6899 = vsub.s32 0, %v6898
        %v6900 = vrot.slane %v6883, %v6899
        %v6901 = vlaneseq
        %v6902 = vshrl.u32 %v6901, 7
        %v6903 = vsub.s32 1, %v6902
        %v6904 = vrot.slane %v6883, %v6903
        %v6905 = vlaneseq
        %v6906 = vshrl.u32 %v6905, 7
        %v6907 = vsub.s32 2, %v6906
        %v6908 = vrot.slane %v6883, %v6907
        %v6909 = vlaneseq
        %v6910 = vshrl.u32 %v6909, 7
        %v6911 = vsub.s32 3, %v6910
        %v6912 = vrot.slane %v6883, %v6911
        %v6913 = vlaneseq
        %v6914 = vshrl.u32 %v6913, 7
        %v6915 = vsub.s32 4, %v6914
        %v6916 = vrot.slane %v6883, %v6915
        %v6917 = vlaneseq
        %v6918 = vshrl.u32 %v6917, 7
        %v6919 = vsub.s32 5, %v6918
        %v6920 = vrot.slane %v6883, %v6919
        %v6927 = vmul.f32 %v6900, %v6884
        %v6928 = vmul.f32 %v6904, %v6885
        %v6929 = vmul.f32 %v6908, %v6886
        %v6930 = vmul.f32 %v6912, %v6887
        %v6931 = vmul.f32 %v6916, %v6888
        %v6932 = vmul.f32 %v6920, %v6889
        %v6933 = vmul.f32 %v6900, %v6890
        %v6934 = vmul.f32 %v6904, %v6891
        %v6935 = vmul.f32 %v6908, %v6892
        %v6936 = vmul.f32 %v6912, %v6893
        %v6937 = vmul.f32 %v6916, %v6894
        %v6938 = vmul.f32 %v6920, %v6895
        %v6939 = vadd.f32 %v6870, %v6927
        %v6940 = vadd.f32 %v6871, %v6928
        %v6941 = vadd.f32 %v6872, %v6929
        %v6942 = vadd.f32 %v6873, %v6930
        %v6943 = vadd.f32 %v6874, %v6931
        %v6944 = vadd.f32 %v6875, %v6932
        %v6945 = vadd.f32 %v6876, %v6933
        %v6946 = vadd.f32 %v6877, %v6934
        %v6947 = vadd.f32 %v6878, %v6935
        %v6948 = vadd.f32 %v6879, %v6936
        %v6949 = vadd.f32 %v6880, %v6937
        %v6950 = vadd.f32 %v6881, %v6938
        %s6951 = scalar_lea.vmem %s208, 577
        %v6952 = vld [vmem:[%s6951] ss:$2 sm:$0x3f]
        %v6953 = vld [vmem:[%s175 + $0x900] sm:$0xff]
        %v6954 = vld [vmem:[%s175 + $0x908] sm:$0xff]
        %v6955 = vld [vmem:[%s175 + $0x910] sm:$0xff]
        %v6956 = vld [vmem:[%s175 + $0x918] sm:$0xff]
        %v6957 = vld [vmem:[%s175 + $0x920] sm:$0xff]
        %v6958 = vld [vmem:[%s175 + $0x928] sm:$0xff]
        %v6959 = vld [vmem:[%s175 + $0x1230] sm:$0x1]
        %v6960 = vld [vmem:[%s175 + $0x1238] sm:$0x1]
        %v6961 = vld [vmem:[%s175 + $0x1240] sm:$0x1]
        %v6962 = vld [vmem:[%s175 + $0x1248] sm:$0x1]
        %v6963 = vld [vmem:[%s175 + $0x1250] sm:$0x1]
        %v6964 = vld [vmem:[%s175 + $0x1258] sm:$0x1]
        %v6966 = vlaneseq
        %v6967 = vshrl.u32 %v6966, 7
        %v6968 = vsub.s32 0, %v6967
        %v6969 = vrot.slane %v6952, %v6968
        %v6970 = vlaneseq
        %v6971 = vshrl.u32 %v6970, 7
        %v6972 = vsub.s32 1, %v6971
        %v6973 = vrot.slane %v6952, %v6972
        %v6974 = vlaneseq
        %v6975 = vshrl.u32 %v6974, 7
        %v6976 = vsub.s32 2, %v6975
        %v6977 = vrot.slane %v6952, %v6976
        %v6978 = vlaneseq
        %v6979 = vshrl.u32 %v6978, 7
        %v6980 = vsub.s32 3, %v6979
        %v6981 = vrot.slane %v6952, %v6980
        %v6982 = vlaneseq
        %v6983 = vshrl.u32 %v6982, 7
        %v6984 = vsub.s32 4, %v6983
        %v6985 = vrot.slane %v6952, %v6984
        %v6986 = vlaneseq
        %v6987 = vshrl.u32 %v6986, 7
        %v6988 = vsub.s32 5, %v6987
        %v6989 = vrot.slane %v6952, %v6988
        %v6996 = vmul.f32 %v6969, %v6953
        %v6997 = vmul.f32 %v6973, %v6954
        %v6998 = vmul.f32 %v6977, %v6955
        %v6999 = vmul.f32 %v6981, %v6956
        %v7000 = vmul.f32 %v6985, %v6957
        %v7001 = vmul.f32 %v6989, %v6958
        %v7002 = vmul.f32 %v6969, %v6959
        %v7003 = vmul.f32 %v6973, %v6960
        %v7004 = vmul.f32 %v6977, %v6961
        %v7005 = vmul.f32 %v6981, %v6962
        %v7006 = vmul.f32 %v6985, %v6963
        %v7007 = vmul.f32 %v6989, %v6964
        %v7008 = vadd.f32 %v6939, %v6996
        %v7009 = vadd.f32 %v6940, %v6997
        %v7010 = vadd.f32 %v6941, %v6998
        %v7011 = vadd.f32 %v6942, %v6999
        %v7012 = vadd.f32 %v6943, %v7000
        %v7013 = vadd.f32 %v6944, %v7001
        %v7014 = vadd.f32 %v6945, %v7002
        %v7015 = vadd.f32 %v6946, %v7003
        %v7016 = vadd.f32 %v6947, %v7004
        %v7017 = vadd.f32 %v6948, %v7005
        %v7018 = vadd.f32 %v6949, %v7006
        %v7019 = vadd.f32 %v6950, %v7007
        %s7020 = scalar_lea.vmem [#allocation2], 96
        %v7021 = vld [vmem:[%s7020] sm:$0xff]
        %v7022 = vld [vmem:[%s7020 + $0x8] sm:$0xff]
        %v7023 = vld [vmem:[%s7020 + $0x10] sm:$0xff]
        %v7024 = vld [vmem:[%s7020 + $0x18] sm:$0xff]
        %v7025 = vld [vmem:[%s7020 + $0x20] sm:$0xff]
        %v7026 = vld [vmem:[%s7020 + $0x28] sm:$0xff]
        %v7027 = vld [vmem:[%s7020 + $0x30] sm:$0x1]
        %v7028 = vld [vmem:[%s7020 + $0x38] sm:$0x1]
        %v7029 = vld [vmem:[%s7020 + $0x40] sm:$0x1]
        %v7030 = vld [vmem:[%s7020 + $0x48] sm:$0x1]
        %v7031 = vld [vmem:[%s7020 + $0x50] sm:$0x1]
        %v7032 = vld [vmem:[%s7020 + $0x58] sm:$0x1]
        %v7033 = vadd.f32 %v7021, %v7008
        %v7034 = vadd.f32 %v7022, %v7009
        %v7035 = vadd.f32 %v7023, %v7010
        %v7036 = vadd.f32 %v7024, %v7011
        %v7037 = vadd.f32 %v7025, %v7012
        %v7038 = vadd.f32 %v7026, %v7013
        %v7039 = vadd.f32 %v7027, %v7014
        %v7040 = vadd.f32 %v7028, %v7015
        %v7041 = vadd.f32 %v7029, %v7016
        %v7042 = vadd.f32 %v7030, %v7017
        %v7043 = vadd.f32 %v7031, %v7018
        %v7044 = vadd.f32 %v7032, %v7019
        %7045 = vst [vmem:[%s7020] sm:$0xff] %v7033
        %7046 = vst [vmem:[%s7020 + $0x8] sm:$0xff] %v7034
        %7047 = vst [vmem:[%s7020 + $0x10] sm:$0xff] %v7035
        %7048 = vst [vmem:[%s7020 + $0x18] sm:$0xff] %v7036
        %7049 = vst [vmem:[%s7020 + $0x20] sm:$0xff] %v7037
        %7050 = vst [vmem:[%s7020 + $0x28] sm:$0xff] %v7038
        %7051 = vst [vmem:[%s7020 + $0x30] sm:$0x1] %v7039
        %7052 = vst [vmem:[%s7020 + $0x38] sm:$0x1] %v7040
        %7053 = vst [vmem:[%s7020 + $0x40] sm:$0x1] %v7041
        %7054 = vst [vmem:[%s7020 + $0x48] sm:$0x1] %v7042
        %7055 = vst [vmem:[%s7020 + $0x50] sm:$0x1] %v7043
        %7056 = vst [vmem:[%s7020 + $0x58] sm:$0x1] %v7044
        %p7057 = scmp.eq.s32.totalorder %s21, 1
        // Predicated region
        $region37: #{single_layer_ff.1} parent=27 // pred_check
          %p7058 = pneg %p7057
        $region38: #{single_layer_ff.1} parent=27 // pred_check_branch
          %7060 = sbr.rel (%p7058) target = $region40
        $region39: #{single_layer_ff.1} parent=27 // pred_region
          %v7061 = vld [vmem:[#allocation2] sm:$0xff]
          %v7062 = vld [vmem:[#allocation2 + $0x8] sm:$0xff]
          %v7063 = vld [vmem:[#allocation2 + $0x10] sm:$0xff]
          %v7064 = vld [vmem:[#allocation2 + $0x18] sm:$0xff]
          %v7065 = vld [vmem:[#allocation2 + $0x20] sm:$0xff]
          %v7066 = vld [vmem:[#allocation2 + $0x28] sm:$0xff]
          %v7067 = vld [vmem:[#allocation2 + $0x30] sm:$0x1]
          %v7068 = vld [vmem:[#allocation2 + $0x38] sm:$0x1]
          %v7069 = vld [vmem:[#allocation2 + $0x40] sm:$0x1]
          %v7070 = vld [vmem:[#allocation2 + $0x48] sm:$0x1]
          %v7071 = vld [vmem:[#allocation2 + $0x50] sm:$0x1]
          %v7072 = vld [vmem:[#allocation2 + $0x58] sm:$0x1]
          %v7073 = vld [vmem:[#allocation2 + $0x60] sm:$0xff]
          %v7074 = vld [vmem:[#allocation2 + $0x68] sm:$0xff]
          %v7075 = vld [vmem:[#allocation2 + $0x70] sm:$0xff]
          %v7076 = vld [vmem:[#allocation2 + $0x78] sm:$0xff]
          %v7077 = vld [vmem:[#allocation2 + $0x80] sm:$0xff]
          %v7078 = vld [vmem:[#allocation2 + $0x88] sm:$0xff]
          %v7079 = vld [vmem:[#allocation2 + $0x90] sm:$0x1]
          %v7080 = vld [vmem:[#allocation2 + $0x98] sm:$0x1]
          %v7081 = vld [vmem:[#allocation2 + $0xa0] sm:$0x1]
          %v7082 = vld [vmem:[#allocation2 + $0xa8] sm:$0x1]
          %v7083 = vld [vmem:[#allocation2 + $0xb0] sm:$0x1]
          %v7084 = vld [vmem:[#allocation2 + $0xb8] sm:$0x1]
          %v7085 = vadd.f32 %v7061, %v7062
          %v7086 = vadd.f32 %v7085, %v7063
          %v7087 = vadd.f32 %v7086, %v7064
          %v7088 = vadd.f32 %v7087, %v7065
          %v7089 = vadd.f32 %v7088, %v7066
          %7090 = vadd.xlane.f32.xlu0 %v7089
          %v7091 = vpop.xlane.xlu0 %7090
          %vm7092 = vcmask 1040384
          %v7093 = vsel %vm7092, %v7067, 0.0
          %v7094 = vsel %vm7092, %v7068, 0.0
          %v7095 = vadd.f32 %v7093, %v7094
          %v7096 = vsel %vm7092, %v7069, 0.0
          %v7097 = vadd.f32 %v7095, %v7096
          %v7098 = vsel %vm7092, %v7070, 0.0
          %v7099 = vadd.f32 %v7097, %v7098
          %v7100 = vsel %vm7092, %v7071, 0.0
          %v7101 = vadd.f32 %v7099, %v7100
          %v7102 = vsel %vm7092, %v7072, 0.0
          %v7103 = vadd.f32 %v7101, %v7102
          %7104 = vadd.xlane.f32.xlu0 %v7103
          %v7105 = vpop.xlane.xlu0 %7104
          %v7106 = vadd.f32 %v7073, %v7074
          %v7107 = vadd.f32 %v7106, %v7075
          %v7108 = vadd.f32 %v7107, %v7076
          %v7109 = vadd.f32 %v7108, %v7077
          %v7110 = vadd.f32 %v7109, %v7078
          %7111 = vadd.xlane.f32.xlu0 %v7110
          %v7112 = vpop.xlane.xlu0 %7111
          %v7113 = vsel %vm7092, %v7079, 0.0
          %v7114 = vsel %vm7092, %v7080, 0.0
          %v7115 = vadd.f32 %v7113, %v7114
          %v7116 = vsel %vm7092, %v7081, 0.0
          %v7117 = vadd.f32 %v7115, %v7116
          %v7118 = vsel %vm7092, %v7082, 0.0
          %v7119 = vadd.f32 %v7117, %v7118
          %v7120 = vsel %vm7092, %v7083, 0.0
          %v7121 = vadd.f32 %v7119, %v7120
          %v7122 = vsel %vm7092, %v7084, 0.0
          %v7123 = vadd.f32 %v7121, %v7122
          %7124 = vadd.xlane.f32.xlu0 %v7123
          %v7125 = vpop.xlane.xlu0 %7124
          %v7130 = vlaneseq
          %v7131 = vand.u32 %v7130, 127
          %v7132 = vlaneseq
          %v7133 = vshrl.u32 %v7132, 7
          %v7134 = vsub.s32 %v7131, %v7133
          %v7135 = vrot.slane %v7091, %v7134
          %v7136 = vadd.s32 %v7131, 4294967288
          %v7137 = vlaneseq
          %v7138 = vshrl.u32 %v7137, 7
          %v7139 = vsub.s32 %v7136, %v7138
          %v7140 = vrot.slane %v7105, %v7139
          %vm7141 = vcmask 130112
          %v7142 = vsel %vm7141, %v7140, %v7135
          %v7143 = vlaneseq
          %v7144 = vshrl.u32 %v7143, 7
          %v7145 = vsub.s32 %v7131, %v7144
          %v7146 = vrot.slane %v7112, %v7145
          %v7147 = vlaneseq
          %v7148 = vshrl.u32 %v7147, 7
          %v7149 = vsub.s32 %v7136, %v7148
          %v7150 = vrot.slane %v7125, %v7149
          %v7151 = vsel %vm7141, %v7150, %v7146
          %vm7152 = vcmask 1041409
          %v7153 = vsel %vm7152, %v7151, %v7142
          %vm7155 = vcmask 66560
          %7156 = vst.msk [vmem:[%s218] sm:$0x3] %vm7155, %v7153
        $region40: #{single_layer_ff.1} parent=27 // pred_fallthru
          _
        %p7157 = scmp.lt.s32.totalorder %s20, 1
        %s7158 = scalar_select %p7157, %s20, 1
        %s7159 = smul.addr %s7158, 2
        %s7160 = scalar_lea.vmem %s2, %s7159
        // Predicated region
        $region41: #{single_layer_ff.1} parent=27 // pred_check
          %p7161 = pneg %p106
        $region42: #{single_layer_ff.1} parent=27 // pred_check_branch
          %7163 = sbr.rel (%p7161) target = $region44
        $region43: #{single_layer_ff.1} parent=27 // pred_region
          _
        $region44: #{single_layer_ff.1} parent=27 // pred_fallthru
          _
      $region28: #{single_layer_ff.1} parent=5 // pred_fallthru
        _
      %p7164 = scmp.le.s32.totalorder 2, %s11
      // Predicated region
      $region45: #{single_layer_ff.1} parent=5 // pred_check
        %p7165 = pneg %p7164
      $region46: #{single_layer_ff.1} parent=5 // pred_check_branch
        %7167 = sbr.rel (%p7165) target = $region48
      $region47: #{single_layer_ff.1} parent=5 // pred_region
        %s7168 = ssub.s32 %s11, 2
        // Predicated region
        $region49: #{single_layer_ff.1} parent=47 // pred_check
          %p7169 = pneg %p112
        $region50: #{single_layer_ff.1} parent=47 // pred_check_branch
          %7171 = sbr.rel (%p7169) target = $region52
        $region51: #{single_layer_ff.1} parent=47 // pred_region
          %p7172 = scmp.lt.s32.totalorder %s22, 1
          %s7173 = scalar_select %p7172, %s22, 1
          %s7174 = smul.addr %s7173, 2
          %s7175 = scalar_lea.vmem %s2, %s7174
        $region52: #{single_layer_ff.1} parent=47 // pred_fallthru
          _
      $region48: #{single_layer_ff.1} parent=5 // pred_fallthru
        _
    $region6: #{single_layer_ff.1} parent=1 // loop_footer
      %s15 = sadd.s32 1, %s11
    $region7: #{single_layer_ff.1} parent=1 // loop_footer_branch
      %10 = sbr.rel target = $region3
    $region8: #{single_layer_ff.1} parent=1 // loop_exit
      _
    %7176 = vsyncpa [#allocation4], 1
    %s7177 = scalar_lea.sflag [#allocation4], 1
    %7178 = vsyncpa %s7177, 1

</llo_original>
